<compile_context>
chip_gen: v6e
topology: v6e:2x2x1
jax: 0.10.0
libtpu: 0.0.40
codegen_flags: <defaults>
</compile_context>

<pallas_src>
import jax
import jax.numpy as jnp
from jax.experimental import pallas as pl
from jax.experimental.pallas import tpu as pltpu


def _round_up(x, m):
    return (x + m - 1) // m * m


def _make_down_kernel(Wp, S, M0, Cout, n_convs):
    """Fused Down-block kernel body; one image per grid step."""
    # tap k = ky*3 + kx  ->  flat offset (ky-1)*Wp + (kx-1)
    offsets = [(ky - 1) * Wp + (kx - 1) for ky in range(3) for kx in range(3)]

    def kernel(*refs):
        x0_ref = refs[0]                       # (S, K0)   im2col'd conv0 LHS
        w0_ref = refs[1]                       # (K0, Cout)
        w_refs = refs[2:1 + n_convs]           # (9, Cout, Cout) per later conv
        aff_ref = refs[1 + n_convs]            # (rows, Cout) scales/shifts/bias
        mask_ref = refs[2 + n_convs]           # (S, 1) interior mask
        out_ref = refs[3 + n_convs]            # (S, 2*Cout)  [skip | pooled]
        pad_a = refs[4 + n_convs]              # (Lp, Cout) ping
        pad_b = refs[5 + n_convs]              # (Lp, Cout) pong
        scratch = (pad_a, pad_b)

        mask = mask_ref[...]                   # (S, 1)

        # Zero ONLY the halos (largest |tap offset| / pool reach <= M0 rows);
        # the S interior rows are fully overwritten every step.
        zeros_m = jnp.zeros((M0, Cout), jnp.float32)
        for buf in scratch:
            buf[pl.ds(0, M0), :] = zeros_m
            buf[pl.ds(M0 + S, M0), :] = zeros_m

        # ---- conv0: single lane-dense K=K0 matmul (im2col built in wrapper)
        z = jnp.dot(x0_ref[...], w0_ref[...],
                    preferred_element_type=jnp.float32)
        y = jnp.maximum(z * aff_ref[0:1, :] + aff_ref[1:2, :], 0.0) * mask
        scratch[0][pl.ds(M0, S), :] = y

        def conv(i):
            """3x3 conv i>=1: 9 shifted (S,Cout)x(Cout,Cout) MXU matmuls,
            accumulated in registers (no VMEM accumulator)."""
            src = scratch[(i - 1) % 2]
            w_ref = w_refs[i - 1]
            z = jnp.dot(src[pl.ds(M0 + offsets[0], S), :], w_ref[0],
                        preferred_element_type=jnp.float32)
            for k in range(1, 9):
                z = z + jnp.dot(src[pl.ds(M0 + offsets[k], S), :], w_ref[k],
                                preferred_element_type=jnp.float32)
            return z

        # ---- intermediate convs of layer0: conv -> folded(bias+BN) -> ReLU
        for i in range(1, n_convs - 1):
            z = conv(i)
            y = jnp.maximum(z * aff_ref[2 * i:2 * i + 1, :]
                            + aff_ref[2 * i + 1:2 * i + 2, :], 0.0) * mask
            scratch[i % 2][pl.ds(M0, S), :] = y

        # ---- last conv of layer0: conv + bias only (skip output `_x`).
        # No mask: pad positions are stripped in the wrapper and the pool
        # never samples them.
        L = n_convs - 1
        xskip = conv(L) + aff_ref[2 * L:2 * L + 1, :]

        # ---- layer1: BN + ReLU + 2x2/2 max-pool via 4 shifted raster reads.
        act = jnp.maximum(xskip * aff_ref[2 * L + 1:2 * L + 2, :]
                          + aff_ref[2 * L + 2:2 * L + 3, :], 0.0)
        abuf = scratch[L % 2]                  # buffer not feeding the last conv
        abuf[pl.ds(M0, S), :] = act
        pooled = jnp.maximum(
            jnp.maximum(abuf[pl.ds(M0, S), :], abuf[pl.ds(M0 + 1, S), :]),
            jnp.maximum(abuf[pl.ds(M0 + Wp, S), :],
                        abuf[pl.ds(M0 + Wp + 1, S), :]))

        # Single lane-dense (S, 2*Cout) store: [skip | pooled raster]
        out_ref[...] = jnp.concatenate([xskip, pooled], axis=-1)

    return kernel


def down_forward(x_nchw, params):
    """Pallas forward of `Down`; returns (pooled, skip) in NCHW like PyTorch."""
    conv_ws, conv_bs, bn_g, bn_b, bn_m, bn_v = params
    n_convs = len(conv_ws)
    N, Cin, H, W = x_nchw.shape
    Cout = conv_ws[0].shape[0]
    assert H % 2 == 0 and W % 2 == 0
    eps = 1e-5

    Hp, Wp = H + 2, W + 2
    S = Hp * Wp                        # flat padded raster length per image
    M0 = _round_up(Wp + 1, 8)          # halo >= largest |tap offset| (= Wp+1)
    Lp = M0 + S + M0
    K0 = _round_up(9 * Cin, 128)       # conv0 contraction depth, lane-dense

    # ---- glue: NCHW -> NHWC, im2col over the padded output raster:
    # double spatial pad, stack the 9 shifted (Hp, Wp) windows along channels.
    x = jnp.transpose(x_nchw, (0, 2, 3, 1))
    xpp = jnp.pad(x, ((0, 0), (2, 2), (2, 2), (0, 0)))
    taps = [xpp[:, ky:ky + Hp, kx:kx + Wp, :]
            for ky in range(3) for kx in range(3)]
    x0 = jnp.concatenate(taps, axis=-1).reshape(N, S, 9 * Cin)
    x0 = jnp.pad(x0, ((0, 0), (0, 0), (0, K0 - 9 * Cin)))        # (N, S, K0)

    # ---- weights: conv0 as one (K0, Cout) matrix; later convs per-tap.
    w0 = jnp.transpose(conv_ws[0], (2, 3, 1, 0)).reshape(9 * Cin, Cout)
    w0 = jnp.pad(w0, ((0, K0 - 9 * Cin), (0, 0)))
    w_taps = [jnp.transpose(w, (2, 3, 1, 0)).reshape(9, Cout, Cout)
              for w in conv_ws[1:]]

    # ---- fold conv bias + BatchNorm (inference) into per-channel scale/shift
    rows = []
    for i in range(n_convs - 1):
        g = bn_g[i] / jnp.sqrt(bn_v[i] + eps)
        rows += [g, (conv_bs[i] - bn_m[i]) * g + bn_b[i]]
    rows.append(conv_bs[-1])                                     # last conv bias
    g = bn_g[-1] / jnp.sqrt(bn_v[-1] + eps)
    rows += [g, bn_b[-1] - bn_m[-1] * g]                         # layer1 BN
    aff = jnp.stack(rows, axis=0)
    aff = jnp.pad(aff, ((0, _round_up(aff.shape[0], 8) - aff.shape[0]), (0, 0)))

    # ---- interior mask over one padded raster (zeroes conv-pad positions)
    idx = jnp.arange(S)
    ii, jj = idx // Wp, idx % Wp
    mask = (((ii >= 1) & (ii <= H) & (jj >= 1) & (jj <= W))
            .astype(jnp.float32).reshape(S, 1))

    kernel = _make_down_kernel(Wp, S, M0, Cout, n_convs)

    in_specs = [pl.BlockSpec((None, S, K0), lambda n: (n, 0, 0)),
                pl.BlockSpec((K0, Cout), lambda n: (0, 0))]
    in_specs += [pl.BlockSpec((9, Cout, Cout), lambda n: (0, 0, 0))
                 for _ in range(n_convs - 1)]
    in_specs += [pl.BlockSpec(aff.shape, lambda n: (0, 0)),
                 pl.BlockSpec(mask.shape, lambda n: (0, 0))]
    out_specs = pl.BlockSpec((None, S, 2 * Cout), lambda n: (n, 0, 0))

    out = pl.pallas_call(
        kernel,
        out_shape=jax.ShapeDtypeStruct((N, S, 2 * Cout), jnp.float32),
        grid_spec=pltpu.PrefetchScalarGridSpec(
            num_scalar_prefetch=0,
            grid=(N,),
            in_specs=in_specs,
            out_specs=out_specs,
            scratch_shapes=[
                pltpu.VMEM((Lp, Cout), jnp.float32),        # ping
                pltpu.VMEM((Lp, Cout), jnp.float32),        # pong
            ]),
        compiler_params=pltpu.CompilerParams(
            dimension_semantics=("parallel",)),
    )(x0, w0, *w_taps, aff, mask)

    # strip pad positions (cheap XLA slices) and go back to NCHW
    out = out.reshape(N, Hp, Wp, 2 * Cout)
    skip = out[:, 1:H + 1, 1:W + 1, :Cout]
    pooled = out[:, 1:H + 1:2, 1:W + 1:2, Cout:]
    return (jnp.transpose(pooled, (0, 3, 1, 2)),
            jnp.transpose(skip, (0, 3, 1, 2)))


# --------------------------------------------------------------------------
# Deterministic parameter synthesis (PyTorch layouts) and a pure-JAX reference
# --------------------------------------------------------------------------
def init_params(key, in_channels, out_channels, repeat):
    n_convs = 2 + max(repeat - 2, 0)         # layer0 structure of `Down`
    conv_ws, conv_bs = [], []
    cin = in_channels
    for _ in range(n_convs):
        key, kw, kb = jax.random.split(key, 3)
        s = 1.0 / (cin * 9.0) ** 0.5
        conv_ws.append(jax.random.uniform(kw, (out_channels, cin, 3, 3),
                                          jnp.float32, -s, s))
        conv_bs.append(jax.random.uniform(kb, (out_channels,), jnp.float32, -s, s))
        cin = out_channels
    bn_g, bn_b, bn_m, bn_v = [], [], [], []
    for _ in range(n_convs):                 # n_convs-1 BNs in layer0 + 1 in layer1
        key, k1, k2, k3, k4 = jax.random.split(key, 5)
        bn_g.append(jax.random.uniform(k1, (out_channels,), jnp.float32, 0.5, 1.5))
        bn_b.append(0.1 * jax.random.normal(k2, (out_channels,), jnp.float32))
        bn_m.append(0.1 * jax.random.normal(k3, (out_channels,), jnp.float32))
        bn_v.append(jax.random.uniform(k4, (out_channels,), jnp.float32, 0.5, 1.5))
    return conv_ws, conv_bs, bn_g, bn_b, bn_m, bn_v


def reference_down(x, params):
    """Pure-JAX/XLA reference mirroring the PyTorch module in eval mode."""
    conv_ws, conv_bs, bn_g, bn_b, bn_m, bn_v = params
    n = len(conv_ws)
    eps = 1e-5

    def bn(h, i):
        c = lambda a: a[None, :, None, None]
        return (h - c(bn_m[i])) / jnp.sqrt(c(bn_v[i]) + eps) * c(bn_g[i]) + c(bn_b[i])

    def conv(h, i):
        h = jax.lax.conv_general_dilated(
            h, conv_ws[i], (1, 1), 'SAME',
            dimension_numbers=('NCHW', 'OIHW', 'NCHW'))
        return h + conv_bs[i][None, :, None, None]

    h = x
    for i in range(n - 1):
        h = jnp.maximum(bn(conv(h, i), i), 0.0)
    xskip = conv(h, n - 1)
    y = jnp.maximum(bn(xskip, n - 1), 0.0)
    y = jax.lax.reduce_window(y, -jnp.inf, jax.lax.max,
                              (1, 1, 2, 2), (1, 1, 2, 2), 'VALID')
    return y, xskip


if __name__ == "__main__":
    key = jax.random.PRNGKey(0)
    in_channels, out_channels, repeat = 4, 64, 3
    N, H, W = 2, 16, 16

    kparam, kdata = jax.random.split(key)
    params = init_params(kparam, in_channels, out_channels, repeat)
    x = jax.random.normal(kdata, (N, in_channels, H, W), jnp.float32)

    pooled, skip = jax.jit(down_forward)(x, params)
    (pooled, skip) = jax.block_until_ready((pooled, skip))

    ref_pooled, ref_skip = reference_down(x, params)
    assert pooled.shape == (N, out_channels, H // 2, W // 2), pooled.shape
    assert skip.shape == (N, out_channels, H, W), skip.shape
    assert jnp.allclose(skip, ref_skip, rtol=1e-3, atol=1e-3)
    assert jnp.allclose(pooled, ref_pooled, rtol=1e-3, atol=1e-3)
    print("KERNEL_OK")
</pallas_src>

<mosaic_0001>
module attributes {stable_mosaic.version = 11 : i64} {
  func.func @kernel(%arg0: i32, %arg1: memref<1x324x128xf32, #tpu.memory_space<vmem>>, %arg2: memref<128x64xf32, #tpu.memory_space<vmem>>, %arg3: memref<9x64x64xf32, #tpu.memory_space<vmem>>, %arg4: memref<9x64x64xf32, #tpu.memory_space<vmem>>, %arg5: memref<8x64xf32, #tpu.memory_space<vmem>>, %arg6: memref<324x1xf32, #tpu.memory_space<vmem>>, %arg7: memref<1x324x128xf32, #tpu.memory_space<vmem>>, %arg8: memref<372x64xf32, #tpu.memory_space<vmem>>, %arg9: memref<372x64xf32, #tpu.memory_space<vmem>>) attributes {dimension_semantics = [#tpu.dimension_semantics<parallel>], iteration_bounds = array<i64: 2>, scalar_prefetch = 0 : i64, scratch_operands = 2 : i64, tpu.core_type = #tpu.core_type<tc>, window_params = [{transform_indices = @transform_0, window_bounds = array<i64: 1, 324, 128>}, {pipeline_mode = #tpu.pipeline_mode<synchronous>, transform_indices = @transform_1, window_bounds = array<i64: 128, 64>}, {pipeline_mode = #tpu.pipeline_mode<synchronous>, transform_indices = @transform_2, window_bounds = array<i64: 9, 64, 64>}, {pipeline_mode = #tpu.pipeline_mode<synchronous>, transform_indices = @transform_3, window_bounds = array<i64: 9, 64, 64>}, {pipeline_mode = #tpu.pipeline_mode<synchronous>, transform_indices = @transform_4, window_bounds = array<i64: 8, 64>}, {pipeline_mode = #tpu.pipeline_mode<synchronous>, transform_indices = @transform_5, window_bounds = array<i64: 324, 1>}, {transform_indices = @transform_6, window_bounds = array<i64: 1, 324, 128>}]} {
    %c0 = arith.constant 0 : index
    %c0_0 = arith.constant 0 : index
    %0 = vector.load %arg6[%c0, %c0_0] : memref<324x1xf32, #tpu.memory_space<vmem>>, vector<324x1xf32>
    %cst = arith.constant 0.000000e+00 : f32
    %1 = vector.broadcast %cst : f32 to vector<24x64xf32>
    %c0_1 = arith.constant 0 : index
    %c0_2 = arith.constant 0 : index
    %2 = vector.load %arg8[%c0_1, %c0_2] : memref<372x64xf32, #tpu.memory_space<vmem>>, vector<24x64xf32>
    tpu.vector_store %arg8[%c0_1, %c0_2], %1 {strides = array<i32>} : memref<372x64xf32, #tpu.memory_space<vmem>>, vector<24x64xf32>,
    %c348 = arith.constant 348 : index
    %c0_3 = arith.constant 0 : index
    %3 = vector.load %arg8[%c348, %c0_3] : memref<372x64xf32, #tpu.memory_space<vmem>>, vector<24x64xf32>
    tpu.vector_store %arg8[%c348, %c0_3], %1 {strides = array<i32>} : memref<372x64xf32, #tpu.memory_space<vmem>>, vector<24x64xf32>,
    %c0_4 = arith.constant 0 : index
    %c0_5 = arith.constant 0 : index
    %4 = vector.load %arg9[%c0_4, %c0_5] : memref<372x64xf32, #tpu.memory_space<vmem>>, vector<24x64xf32>
    tpu.vector_store %arg9[%c0_4, %c0_5], %1 {strides = array<i32>} : memref<372x64xf32, #tpu.memory_space<vmem>>, vector<24x64xf32>,
    %c348_6 = arith.constant 348 : index
    %c0_7 = arith.constant 0 : index
    %5 = vector.load %arg9[%c348_6, %c0_7] : memref<372x64xf32, #tpu.memory_space<vmem>>, vector<24x64xf32>
    tpu.vector_store %arg9[%c348_6, %c0_7], %1 {strides = array<i32>} : memref<372x64xf32, #tpu.memory_space<vmem>>, vector<24x64xf32>,
    %c0_8 = arith.constant 0 : index
    %c0_9 = arith.constant 0 : index
    %c0_10 = arith.constant 0 : index
    %6 = vector.load %arg1[%c0_8, %c0_9, %c0_10] : memref<1x324x128xf32, #tpu.memory_space<vmem>>, vector<1x324x128xf32>
    %7 = vector.shape_cast %6 : vector<1x324x128xf32> to vector<324x128xf32>
    %c0_11 = arith.constant 0 : index
    %c0_12 = arith.constant 0 : index
    %8 = vector.load %arg2[%c0_11, %c0_12] : memref<128x64xf32, #tpu.memory_space<vmem>>, vector<128x64xf32>
    %cst_13 = arith.constant dense<0.000000e+00> : vector<324x64xf32>
    %9 = tpu.matmul %7, %8, %cst_13 {dimension_numbers = #tpu.dot_dimension_numbers<[1], [0], [0], [1], [0, 0, 1, 1], [], []>} : vector<324x128xf32>, vector<128x64xf32>, vector<324x64xf32> -> vector<324x64xf32>
    %c0_14 = arith.constant 0 : index
    %c0_15 = arith.constant 0 : index
    %10 = vector.load %arg5[%c0_14, %c0_15] : memref<8x64xf32, #tpu.memory_space<vmem>>, vector<1x64xf32>
    %11 = vector.broadcast %10 : vector<1x64xf32> to vector<324x64xf32>
    %12 = arith.mulf %9, %11 : vector<324x64xf32>
    %c1 = arith.constant 1 : index
    %c0_16 = arith.constant 0 : index
    %13 = vector.load %arg5[%c1, %c0_16] : memref<8x64xf32, #tpu.memory_space<vmem>>, vector<1x64xf32>
    %14 = vector.broadcast %13 : vector<1x64xf32> to vector<324x64xf32>
    %15 = arith.addf %12, %14 : vector<324x64xf32>
    %cst_17 = arith.constant 0.000000e+00 : f32
    %16 = vector.broadcast %cst_17 : f32 to vector<324x64xf32>
    %17 = arith.maximumf %15, %16 : vector<324x64xf32>
    %18 = vector.broadcast %0 : vector<324x1xf32> to vector<324x64xf32>
    %19 = arith.mulf %17, %18 : vector<324x64xf32>
    %c24 = arith.constant 24 : index
    %c0_18 = arith.constant 0 : index
    %20 = vector.load %arg8[%c24, %c0_18] : memref<372x64xf32, #tpu.memory_space<vmem>>, vector<324x64xf32>
    tpu.vector_store %arg8[%c24, %c0_18], %19 {strides = array<i32>} : memref<372x64xf32, #tpu.memory_space<vmem>>, vector<324x64xf32>,
    %c5 = arith.constant 5 : index
    %c0_19 = arith.constant 0 : index
    %21 = vector.load %arg8[%c5, %c0_19] : memref<372x64xf32, #tpu.memory_space<vmem>>, vector<324x64xf32>
    %c0_20 = arith.constant 0 : index
    %c0_21 = arith.constant 0 : index
    %c0_22 = arith.constant 0 : index
    %22 = vector.load %arg3[%c0_20, %c0_21, %c0_22] : memref<9x64x64xf32, #tpu.memory_space<vmem>>, vector<1x64x64xf32>
    %23 = vector.shape_cast %22 : vector<1x64x64xf32> to vector<64x64xf32>
    %cst_23 = arith.constant dense<0.000000e+00> : vector<324x64xf32>
    %24 = tpu.matmul %21, %23, %cst_23 {dimension_numbers = #tpu.dot_dimension_numbers<[1], [0], [0], [1], [0, 0, 1, 1], [], []>} : vector<324x64xf32>, vector<64x64xf32>, vector<324x64xf32> -> vector<324x64xf32>
    %c6 = arith.constant 6 : index
    %c0_24 = arith.constant 0 : index
    %25 = vector.load %arg8[%c6, %c0_24] : memref<372x64xf32, #tpu.memory_space<vmem>>, vector<324x64xf32>
    %c1_25 = arith.constant 1 : index
    %c0_26 = arith.constant 0 : index
    %c0_27 = arith.constant 0 : index
    %26 = vector.load %arg3[%c1_25, %c0_26, %c0_27] : memref<9x64x64xf32, #tpu.memory_space<vmem>>, vector<1x64x64xf32>
    %27 = vector.shape_cast %26 : vector<1x64x64xf32> to vector<64x64xf32>
    %cst_28 = arith.constant dense<0.000000e+00> : vector<324x64xf32>
    %28 = tpu.matmul %25, %27, %cst_28 {dimension_numbers = #tpu.dot_dimension_numbers<[1], [0], [0], [1], [0, 0, 1, 1], [], []>} : vector<324x64xf32>, vector<64x64xf32>, vector<324x64xf32> -> vector<324x64xf32>
    %29 = arith.addf %24, %28 : vector<324x64xf32>
    %c7 = arith.constant 7 : index
    %c0_29 = arith.constant 0 : index
    %30 = vector.load %arg8[%c7, %c0_29] : memref<372x64xf32, #tpu.memory_space<vmem>>, vector<324x64xf32>
    %c2 = arith.constant 2 : index
    %c0_30 = arith.constant 0 : index
    %c0_31 = arith.constant 0 : index
    %31 = vector.load %arg3[%c2, %c0_30, %c0_31] : memref<9x64x64xf32, #tpu.memory_space<vmem>>, vector<1x64x64xf32>
    %32 = vector.shape_cast %31 : vector<1x64x64xf32> to vector<64x64xf32>
    %cst_32 = arith.constant dense<0.000000e+00> : vector<324x64xf32>
    %33 = tpu.matmul %30, %32, %cst_32 {dimension_numbers = #tpu.dot_dimension_numbers<[1], [0], [0], [1], [0, 0, 1, 1], [], []>} : vector<324x64xf32>, vector<64x64xf32>, vector<324x64xf32> -> vector<324x64xf32>
    %34 = arith.addf %29, %33 : vector<324x64xf32>
    %c23 = arith.constant 23 : index
    %c0_33 = arith.constant 0 : index
    %35 = vector.load %arg8[%c23, %c0_33] : memref<372x64xf32, #tpu.memory_space<vmem>>, vector<324x64xf32>
    %c3 = arith.constant 3 : index
    %c0_34 = arith.constant 0 : index
    %c0_35 = arith.constant 0 : index
    %36 = vector.load %arg3[%c3, %c0_34, %c0_35] : memref<9x64x64xf32, #tpu.memory_space<vmem>>, vector<1x64x64xf32>
    %37 = vector.shape_cast %36 : vector<1x64x64xf32> to vector<64x64xf32>
    %cst_36 = arith.constant dense<0.000000e+00> : vector<324x64xf32>
    %38 = tpu.matmul %35, %37, %cst_36 {dimension_numbers = #tpu.dot_dimension_numbers<[1], [0], [0], [1], [0, 0, 1, 1], [], []>} : vector<324x64xf32>, vector<64x64xf32>, vector<324x64xf32> -> vector<324x64xf32>
    %39 = arith.addf %34, %38 : vector<324x64xf32>
    %c24_37 = arith.constant 24 : index
    %c0_38 = arith.constant 0 : index
    %40 = vector.load %arg8[%c24_37, %c0_38] : memref<372x64xf32, #tpu.memory_space<vmem>>, vector<324x64xf32>
    %c4 = arith.constant 4 : index
    %c0_39 = arith.constant 0 : index
    %c0_40 = arith.constant 0 : index
    %41 = vector.load %arg3[%c4, %c0_39, %c0_40] : memref<9x64x64xf32, #tpu.memory_space<vmem>>, vector<1x64x64xf32>
    %42 = vector.shape_cast %41 : vector<1x64x64xf32> to vector<64x64xf32>
    %cst_41 = arith.constant dense<0.000000e+00> : vector<324x64xf32>
    %43 = tpu.matmul %40, %42, %cst_41 {dimension_numbers = #tpu.dot_dimension_numbers<[1], [0], [0], [1], [0, 0, 1, 1], [], []>} : vector<324x64xf32>, vector<64x64xf32>, vector<324x64xf32> -> vector<324x64xf32>
    %44 = arith.addf %39, %43 : vector<324x64xf32>
    %c25 = arith.constant 25 : index
    %c0_42 = arith.constant 0 : index
    %45 = vector.load %arg8[%c25, %c0_42] : memref<372x64xf32, #tpu.memory_space<vmem>>, vector<324x64xf32>
    %c5_43 = arith.constant 5 : index
    %c0_44 = arith.constant 0 : index
    %c0_45 = arith.constant 0 : index
    %46 = vector.load %arg3[%c5_43, %c0_44, %c0_45] : memref<9x64x64xf32, #tpu.memory_space<vmem>>, vector<1x64x64xf32>
    %47 = vector.shape_cast %46 : vector<1x64x64xf32> to vector<64x64xf32>
    %cst_46 = arith.constant dense<0.000000e+00> : vector<324x64xf32>
    %48 = tpu.matmul %45, %47, %cst_46 {dimension_numbers = #tpu.dot_dimension_numbers<[1], [0], [0], [1], [0, 0, 1, 1], [], []>} : vector<324x64xf32>, vector<64x64xf32>, vector<324x64xf32> -> vector<324x64xf32>
    %49 = arith.addf %44, %48 : vector<324x64xf32>
    %c41 = arith.constant 41 : index
    %c0_47 = arith.constant 0 : index
    %50 = vector.load %arg8[%c41, %c0_47] : memref<372x64xf32, #tpu.memory_space<vmem>>, vector<324x64xf32>
    %c6_48 = arith.constant 6 : index
    %c0_49 = arith.constant 0 : index
    %c0_50 = arith.constant 0 : index
    %51 = vector.load %arg3[%c6_48, %c0_49, %c0_50] : memref<9x64x64xf32, #tpu.memory_space<vmem>>, vector<1x64x64xf32>
    %52 = vector.shape_cast %51 : vector<1x64x64xf32> to vector<64x64xf32>
    %cst_51 = arith.constant dense<0.000000e+00> : vector<324x64xf32>
    %53 = tpu.matmul %50, %52, %cst_51 {dimension_numbers = #tpu.dot_dimension_numbers<[1], [0], [0], [1], [0, 0, 1, 1], [], []>} : vector<324x64xf32>, vector<64x64xf32>, vector<324x64xf32> -> vector<324x64xf32>
    %54 = arith.addf %49, %53 : vector<324x64xf32>
    %c42 = arith.constant 42 : index
    %c0_52 = arith.constant 0 : index
    %55 = vector.load %arg8[%c42, %c0_52] : memref<372x64xf32, #tpu.memory_space<vmem>>, vector<324x64xf32>
    %c7_53 = arith.constant 7 : index
    %c0_54 = arith.constant 0 : index
    %c0_55 = arith.constant 0 : index
    %56 = vector.load %arg3[%c7_53, %c0_54, %c0_55] : memref<9x64x64xf32, #tpu.memory_space<vmem>>, vector<1x64x64xf32>
    %57 = vector.shape_cast %56 : vector<1x64x64xf32> to vector<64x64xf32>
    %cst_56 = arith.constant dense<0.000000e+00> : vector<324x64xf32>
    %58 = tpu.matmul %55, %57, %cst_56 {dimension_numbers = #tpu.dot_dimension_numbers<[1], [0], [0], [1], [0, 0, 1, 1], [], []>} : vector<324x64xf32>, vector<64x64xf32>, vector<324x64xf32> -> vector<324x64xf32>
    %59 = arith.addf %54, %58 : vector<324x64xf32>
    %c43 = arith.constant 43 : index
    %c0_57 = arith.constant 0 : index
    %60 = vector.load %arg8[%c43, %c0_57] : memref<372x64xf32, #tpu.memory_space<vmem>>, vector<324x64xf32>
    %c8 = arith.constant 8 : index
    %c0_58 = arith.constant 0 : index
    %c0_59 = arith.constant 0 : index
    %61 = vector.load %arg3[%c8, %c0_58, %c0_59] : memref<9x64x64xf32, #tpu.memory_space<vmem>>, vector<1x64x64xf32>
    %62 = vector.shape_cast %61 : vector<1x64x64xf32> to vector<64x64xf32>
    %cst_60 = arith.constant dense<0.000000e+00> : vector<324x64xf32>
    %63 = tpu.matmul %60, %62, %cst_60 {dimension_numbers = #tpu.dot_dimension_numbers<[1], [0], [0], [1], [0, 0, 1, 1], [], []>} : vector<324x64xf32>, vector<64x64xf32>, vector<324x64xf32> -> vector<324x64xf32>
    %64 = arith.addf %59, %63 : vector<324x64xf32>
    %c2_61 = arith.constant 2 : index
    %c0_62 = arith.constant 0 : index
    %65 = vector.load %arg5[%c2_61, %c0_62] : memref<8x64xf32, #tpu.memory_space<vmem>>, vector<1x64xf32>
    %66 = vector.broadcast %65 : vector<1x64xf32> to vector<324x64xf32>
    %67 = arith.mulf %64, %66 : vector<324x64xf32>
    %c3_63 = arith.constant 3 : index
    %c0_64 = arith.constant 0 : index
    %68 = vector.load %arg5[%c3_63, %c0_64] : memref<8x64xf32, #tpu.memory_space<vmem>>, vector<1x64xf32>
    %69 = vector.broadcast %68 : vector<1x64xf32> to vector<324x64xf32>
    %70 = arith.addf %67, %69 : vector<324x64xf32>
    %cst_65 = arith.constant 0.000000e+00 : f32
    %71 = vector.broadcast %cst_65 : f32 to vector<324x64xf32>
    %72 = arith.maximumf %70, %71 : vector<324x64xf32>
    %73 = vector.broadcast %0 : vector<324x1xf32> to vector<324x64xf32>
    %74 = arith.mulf %72, %73 : vector<324x64xf32>
    %c24_66 = arith.constant 24 : index
    %c0_67 = arith.constant 0 : index
    %75 = vector.load %arg9[%c24_66, %c0_67] : memref<372x64xf32, #tpu.memory_space<vmem>>, vector<324x64xf32>
    tpu.vector_store %arg9[%c24_66, %c0_67], %74 {strides = array<i32>} : memref<372x64xf32, #tpu.memory_space<vmem>>, vector<324x64xf32>,
    %c5_68 = arith.constant 5 : index
    %c0_69 = arith.constant 0 : index
    %76 = vector.load %arg9[%c5_68, %c0_69] : memref<372x64xf32, #tpu.memory_space<vmem>>, vector<324x64xf32>
    %c0_70 = arith.constant 0 : index
    %c0_71 = arith.constant 0 : index
    %c0_72 = arith.constant 0 : index
    %77 = vector.load %arg4[%c0_70, %c0_71, %c0_72] : memref<9x64x64xf32, #tpu.memory_space<vmem>>, vector<1x64x64xf32>
    %78 = vector.shape_cast %77 : vector<1x64x64xf32> to vector<64x64xf32>
    %cst_73 = arith.constant dense<0.000000e+00> : vector<324x64xf32>
    %79 = tpu.matmul %76, %78, %cst_73 {dimension_numbers = #tpu.dot_dimension_numbers<[1], [0], [0], [1], [0, 0, 1, 1], [], []>} : vector<324x64xf32>, vector<64x64xf32>, vector<324x64xf32> -> vector<324x64xf32>
    %c6_74 = arith.constant 6 : index
    %c0_75 = arith.constant 0 : index
    %80 = vector.load %arg9[%c6_74, %c0_75] : memref<372x64xf32, #tpu.memory_space<vmem>>, vector<324x64xf32>
    %c1_76 = arith.constant 1 : index
    %c0_77 = arith.constant 0 : index
    %c0_78 = arith.constant 0 : index
    %81 = vector.load %arg4[%c1_76, %c0_77, %c0_78] : memref<9x64x64xf32, #tpu.memory_space<vmem>>, vector<1x64x64xf32>
    %82 = vector.shape_cast %81 : vector<1x64x64xf32> to vector<64x64xf32>
    %cst_79 = arith.constant dense<0.000000e+00> : vector<324x64xf32>
    %83 = tpu.matmul %80, %82, %cst_79 {dimension_numbers = #tpu.dot_dimension_numbers<[1], [0], [0], [1], [0, 0, 1, 1], [], []>} : vector<324x64xf32>, vector<64x64xf32>, vector<324x64xf32> -> vector<324x64xf32>
    %84 = arith.addf %79, %83 : vector<324x64xf32>
    %c7_80 = arith.constant 7 : index
    %c0_81 = arith.constant 0 : index
    %85 = vector.load %arg9[%c7_80, %c0_81] : memref<372x64xf32, #tpu.memory_space<vmem>>, vector<324x64xf32>
    %c2_82 = arith.constant 2 : index
    %c0_83 = arith.constant 0 : index
    %c0_84 = arith.constant 0 : index
    %86 = vector.load %arg4[%c2_82, %c0_83, %c0_84] : memref<9x64x64xf32, #tpu.memory_space<vmem>>, vector<1x64x64xf32>
    %87 = vector.shape_cast %86 : vector<1x64x64xf32> to vector<64x64xf32>
    %cst_85 = arith.constant dense<0.000000e+00> : vector<324x64xf32>
    %88 = tpu.matmul %85, %87, %cst_85 {dimension_numbers = #tpu.dot_dimension_numbers<[1], [0], [0], [1], [0, 0, 1, 1], [], []>} : vector<324x64xf32>, vector<64x64xf32>, vector<324x64xf32> -> vector<324x64xf32>
    %89 = arith.addf %84, %88 : vector<324x64xf32>
    %c23_86 = arith.constant 23 : index
    %c0_87 = arith.constant 0 : index
    %90 = vector.load %arg9[%c23_86, %c0_87] : memref<372x64xf32, #tpu.memory_space<vmem>>, vector<324x64xf32>
    %c3_88 = arith.constant 3 : index
    %c0_89 = arith.constant 0 : index
    %c0_90 = arith.constant 0 : index
    %91 = vector.load %arg4[%c3_88, %c0_89, %c0_90] : memref<9x64x64xf32, #tpu.memory_space<vmem>>, vector<1x64x64xf32>
    %92 = vector.shape_cast %91 : vector<1x64x64xf32> to vector<64x64xf32>
    %cst_91 = arith.constant dense<0.000000e+00> : vector<324x64xf32>
    %93 = tpu.matmul %90, %92, %cst_91 {dimension_numbers = #tpu.dot_dimension_numbers<[1], [0], [0], [1], [0, 0, 1, 1], [], []>} : vector<324x64xf32>, vector<64x64xf32>, vector<324x64xf32> -> vector<324x64xf32>
    %94 = arith.addf %89, %93 : vector<324x64xf32>
    %c24_92 = arith.constant 24 : index
    %c0_93 = arith.constant 0 : index
    %95 = vector.load %arg9[%c24_92, %c0_93] : memref<372x64xf32, #tpu.memory_space<vmem>>, vector<324x64xf32>
    %c4_94 = arith.constant 4 : index
    %c0_95 = arith.constant 0 : index
    %c0_96 = arith.constant 0 : index
    %96 = vector.load %arg4[%c4_94, %c0_95, %c0_96] : memref<9x64x64xf32, #tpu.memory_space<vmem>>, vector<1x64x64xf32>
    %97 = vector.shape_cast %96 : vector<1x64x64xf32> to vector<64x64xf32>
    %cst_97 = arith.constant dense<0.000000e+00> : vector<324x64xf32>
    %98 = tpu.matmul %95, %97, %cst_97 {dimension_numbers = #tpu.dot_dimension_numbers<[1], [0], [0], [1], [0, 0, 1, 1], [], []>} : vector<324x64xf32>, vector<64x64xf32>, vector<324x64xf32> -> vector<324x64xf32>
    %99 = arith.addf %94, %98 : vector<324x64xf32>
    %c25_98 = arith.constant 25 : index
    %c0_99 = arith.constant 0 : index
    %100 = vector.load %arg9[%c25_98, %c0_99] : memref<372x64xf32, #tpu.memory_space<vmem>>, vector<324x64xf32>
    %c5_100 = arith.constant 5 : index
    %c0_101 = arith.constant 0 : index
    %c0_102 = arith.constant 0 : index
    %101 = vector.load %arg4[%c5_100, %c0_101, %c0_102] : memref<9x64x64xf32, #tpu.memory_space<vmem>>, vector<1x64x64xf32>
    %102 = vector.shape_cast %101 : vector<1x64x64xf32> to vector<64x64xf32>
    %cst_103 = arith.constant dense<0.000000e+00> : vector<324x64xf32>
    %103 = tpu.matmul %100, %102, %cst_103 {dimension_numbers = #tpu.dot_dimension_numbers<[1], [0], [0], [1], [0, 0, 1, 1], [], []>} : vector<324x64xf32>, vector<64x64xf32>, vector<324x64xf32> -> vector<324x64xf32>
    %104 = arith.addf %99, %103 : vector<324x64xf32>
    %c41_104 = arith.constant 41 : index
    %c0_105 = arith.constant 0 : index
    %105 = vector.load %arg9[%c41_104, %c0_105] : memref<372x64xf32, #tpu.memory_space<vmem>>, vector<324x64xf32>
    %c6_106 = arith.constant 6 : index
    %c0_107 = arith.constant 0 : index
    %c0_108 = arith.constant 0 : index
    %106 = vector.load %arg4[%c6_106, %c0_107, %c0_108] : memref<9x64x64xf32, #tpu.memory_space<vmem>>, vector<1x64x64xf32>
    %107 = vector.shape_cast %106 : vector<1x64x64xf32> to vector<64x64xf32>
    %cst_109 = arith.constant dense<0.000000e+00> : vector<324x64xf32>
    %108 = tpu.matmul %105, %107, %cst_109 {dimension_numbers = #tpu.dot_dimension_numbers<[1], [0], [0], [1], [0, 0, 1, 1], [], []>} : vector<324x64xf32>, vector<64x64xf32>, vector<324x64xf32> -> vector<324x64xf32>
    %109 = arith.addf %104, %108 : vector<324x64xf32>
    %c42_110 = arith.constant 42 : index
    %c0_111 = arith.constant 0 : index
    %110 = vector.load %arg9[%c42_110, %c0_111] : memref<372x64xf32, #tpu.memory_space<vmem>>, vector<324x64xf32>
    %c7_112 = arith.constant 7 : index
    %c0_113 = arith.constant 0 : index
    %c0_114 = arith.constant 0 : index
    %111 = vector.load %arg4[%c7_112, %c0_113, %c0_114] : memref<9x64x64xf32, #tpu.memory_space<vmem>>, vector<1x64x64xf32>
    %112 = vector.shape_cast %111 : vector<1x64x64xf32> to vector<64x64xf32>
    %cst_115 = arith.constant dense<0.000000e+00> : vector<324x64xf32>
    %113 = tpu.matmul %110, %112, %cst_115 {dimension_numbers = #tpu.dot_dimension_numbers<[1], [0], [0], [1], [0, 0, 1, 1], [], []>} : vector<324x64xf32>, vector<64x64xf32>, vector<324x64xf32> -> vector<324x64xf32>
    %114 = arith.addf %109, %113 : vector<324x64xf32>
    %c43_116 = arith.constant 43 : index
    %c0_117 = arith.constant 0 : index
    %115 = vector.load %arg9[%c43_116, %c0_117] : memref<372x64xf32, #tpu.memory_space<vmem>>, vector<324x64xf32>
    %c8_118 = arith.constant 8 : index
    %c0_119 = arith.constant 0 : index
    %c0_120 = arith.constant 0 : index
    %116 = vector.load %arg4[%c8_118, %c0_119, %c0_120] : memref<9x64x64xf32, #tpu.memory_space<vmem>>, vector<1x64x64xf32>
    %117 = vector.shape_cast %116 : vector<1x64x64xf32> to vector<64x64xf32>
    %cst_121 = arith.constant dense<0.000000e+00> : vector<324x64xf32>
    %118 = tpu.matmul %115, %117, %cst_121 {dimension_numbers = #tpu.dot_dimension_numbers<[1], [0], [0], [1], [0, 0, 1, 1], [], []>} : vector<324x64xf32>, vector<64x64xf32>, vector<324x64xf32> -> vector<324x64xf32>
    %119 = arith.addf %114, %118 : vector<324x64xf32>
    %c4_122 = arith.constant 4 : index
    %c0_123 = arith.constant 0 : index
    %120 = vector.load %arg5[%c4_122, %c0_123] : memref<8x64xf32, #tpu.memory_space<vmem>>, vector<1x64xf32>
    %121 = vector.broadcast %120 : vector<1x64xf32> to vector<324x64xf32>
    %122 = arith.addf %119, %121 : vector<324x64xf32>
    %c5_124 = arith.constant 5 : index
    %c0_125 = arith.constant 0 : index
    %123 = vector.load %arg5[%c5_124, %c0_125] : memref<8x64xf32, #tpu.memory_space<vmem>>, vector<1x64xf32>
    %124 = vector.broadcast %123 : vector<1x64xf32> to vector<324x64xf32>
    %125 = arith.mulf %122, %124 : vector<324x64xf32>
    %c6_126 = arith.constant 6 : index
    %c0_127 = arith.constant 0 : index
    %126 = vector.load %arg5[%c6_126, %c0_127] : memref<8x64xf32, #tpu.memory_space<vmem>>, vector<1x64xf32>
    %127 = vector.broadcast %126 : vector<1x64xf32> to vector<324x64xf32>
    %128 = arith.addf %125, %127 : vector<324x64xf32>
    %cst_128 = arith.constant 0.000000e+00 : f32
    %129 = vector.broadcast %cst_128 : f32 to vector<324x64xf32>
    %130 = arith.maximumf %128, %129 : vector<324x64xf32>
    %c24_129 = arith.constant 24 : index
    %c0_130 = arith.constant 0 : index
    %131 = vector.load %arg8[%c24_129, %c0_130] : memref<372x64xf32, #tpu.memory_space<vmem>>, vector<324x64xf32>
    tpu.vector_store %arg8[%c24_129, %c0_130], %130 {strides = array<i32>} : memref<372x64xf32, #tpu.memory_space<vmem>>, vector<324x64xf32>,
    %c24_131 = arith.constant 24 : index
    %c0_132 = arith.constant 0 : index
    %132 = vector.load %arg8[%c24_131, %c0_132] : memref<372x64xf32, #tpu.memory_space<vmem>>, vector<324x64xf32>
    %c25_133 = arith.constant 25 : index
    %c0_134 = arith.constant 0 : index
    %133 = vector.load %arg8[%c25_133, %c0_134] : memref<372x64xf32, #tpu.memory_space<vmem>>, vector<324x64xf32>
    %134 = arith.maximumf %132, %133 : vector<324x64xf32>
    %c42_135 = arith.constant 42 : index
    %c0_136 = arith.constant 0 : index
    %135 = vector.load %arg8[%c42_135, %c0_136] : memref<372x64xf32, #tpu.memory_space<vmem>>, vector<324x64xf32>
    %c43_137 = arith.constant 43 : index
    %c0_138 = arith.constant 0 : index
    %136 = vector.load %arg8[%c43_137, %c0_138] : memref<372x64xf32, #tpu.memory_space<vmem>>, vector<324x64xf32>
    %137 = arith.maximumf %135, %136 : vector<324x64xf32>
    %138 = arith.maximumf %134, %137 : vector<324x64xf32>
    %139 = tpu.concatenate %122, %138 in 1 : vector<324x64xf32>, vector<324x64xf32> -> vector<324x128xf32>
    %c0_139 = arith.constant 0 : index
    %c0_140 = arith.constant 0 : index
    %c0_141 = arith.constant 0 : index
    %140 = vector.load %arg7[%c0_139, %c0_140, %c0_141] : memref<1x324x128xf32, #tpu.memory_space<vmem>>, vector<1x324x128xf32>
    %141 = vector.shape_cast %140 : vector<1x324x128xf32> to vector<324x128xf32>
    %142 = vector.shape_cast %139 : vector<324x128xf32> to vector<1x324x128xf32>
    tpu.vector_store %arg7[%c0_139, %c0_140, %c0_141], %142 {strides = array<i32>} : memref<1x324x128xf32, #tpu.memory_space<vmem>>, vector<1x324x128xf32>,
    return
  }
  func.func @transform_0(%arg0: i32) -> (i32, i32, i32) {
    %c0_i32 = arith.constant 0 : i32
    %c0_i32_0 = arith.constant 0 : i32
    %c0_i32_1 = arith.constant 0 : i32
    return %arg0, %c0_i32, %c0_i32_0 : i32, i32, i32
  }
  func.func @transform_1(%arg0: i32) -> (i32, i32) {
    %c0_i32 = arith.constant 0 : i32
    %c0_i32_0 = arith.constant 0 : i32
    %c0_i32_1 = arith.constant 0 : i32
    return %c0_i32, %c0_i32_0 : i32, i32
  }
  func.func @transform_2(%arg0: i32) -> (i32, i32, i32) {
    %c0_i32 = arith.constant 0 : i32
    %c0_i32_0 = arith.constant 0 : i32
    %c0_i32_1 = arith.constant 0 : i32
    %c0_i32_2 = arith.constant 0 : i32
    return %c0_i32, %c0_i32_0, %c0_i32_1 : i32, i32, i32
  }
  func.func @transform_3(%arg0: i32) -> (i32, i32, i32) {
    %c0_i32 = arith.constant 0 : i32
    %c0_i32_0 = arith.constant 0 : i32
    %c0_i32_1 = arith.constant 0 : i32
    %c0_i32_2 = arith.constant 0 : i32
    return %c0_i32, %c0_i32_0, %c0_i32_1 : i32, i32, i32
  }
  func.func @transform_4(%arg0: i32) -> (i32, i32) {
    %c0_i32 = arith.constant 0 : i32
    %c0_i32_0 = arith.constant 0 : i32
    %c0_i32_1 = arith.constant 0 : i32
    return %c0_i32, %c0_i32_0 : i32, i32
  }
  func.func @transform_5(%arg0: i32) -> (i32, i32) {
    %c0_i32 = arith.constant 0 : i32
    %c0_i32_0 = arith.constant 0 : i32
    %c0_i32_1 = arith.constant 0 : i32
    return %c0_i32, %c0_i32_0 : i32, i32
  }
  func.func @transform_6(%arg0: i32) -> (i32, i32, i32) {
    %c0_i32 = arith.constant 0 : i32
    %c0_i32_0 = arith.constant 0 : i32
    %c0_i32_1 = arith.constant 0 : i32
    return %arg0, %c0_i32, %c0_i32_0 : i32, i32, i32
  }
}

</mosaic_0001>

<llo_original>
// kernel: down_forward.1
$region0: #{down_forward.1}
  #allocation0 [shape = 'u32[]', space=smem, size = 0x4, offset = 0x4, fixed_abs, tag = 'smem constant byte address 0x4 - core index']
  #allocation1 [shape = 'u32[144,128]{1,0:T(1,128)}', space=vmem, size = 0x12000, scoped, tag = 'internal scratch']
  #allocation2 [shape = 'f32[372,64]{1,0:T(8,128)}', space=vmem, size = 0x2f000, scoped, tag = 'scratch operand']
  #allocation3 [shape = 'f32[372,64]{1,0:T(8,128)}', space=vmem, size = 0x2f000, scoped, tag = 'scratch operand']
  %s0 = inlined_call_operand.vmem [shape: f32[2,324,128], index: 0, kind: input, shape index: {}]
  %s1 = inlined_call_operand.vmem [shape: f32[128,64], index: 1, kind: input, shape index: {}]
  %s2 = inlined_call_operand.vmem [shape: f32[9,64,64], index: 2, kind: input, shape index: {}]
  %s3 = inlined_call_operand.vmem [shape: f32[9,64,64], index: 3, kind: input, shape index: {}]
  %s4 = inlined_call_operand.vmem [shape: f32[8,64], index: 4, kind: input, shape index: {}]
  %s5 = inlined_call_operand.vmem [shape: f32[324,1], index: 5, kind: input, shape index: {}]
  %s6 = inlined_call_operand.vmem [shape: f32[2,324,128], index: 6, kind: output, shape index: {}]
  %s7 = sld [smem:[#allocation0]]
  $region57: #{down_forward.1} parent=0
    _
  %s9 = ssub.s32 1, %s7
  %s10 = scalar_select 0, %s9, %s7
  loop: start=0, step=1, limit=4
  $region2: #{down_forward.1} parent=0 // loop_pre_header
    _
  $region3: #{down_forward.1} parent=0 // loop_header
    %s12 = sphi 0, %s16
    %p13 = scmp.ge.s32.totalorder %s12, 4
    %s22 = sphi 0, %s24
    %s25 = sphi 0, %s22
    %s26 = sphi 0, %s25
    %s42 = sphi 0, %s26
    %s46 = sphi 0, %s46
    %s48 = sphi 0, %s46
    %s49 = sphi 0, %s48
    %s63 = sphi 0, %s49
    %s67 = sphi 0, %s67
    %s69 = sphi 0, %s67
    %s70 = sphi 0, %s69
    %s84 = sphi 0, %s70
    %s88 = sphi 0, %s88
    %s90 = sphi 0, %s88
    %s91 = sphi 0, %s90
    %s105 = sphi 0, %s91
    %s109 = sphi 0, %s109
    %s111 = sphi 0, %s109
    %s112 = sphi 0, %s111
    %s126 = sphi 0, %s112
    %s130 = sphi 0, %s130
    %s132 = sphi 0, %s130
    %s133 = sphi 0, %s132
    %s147 = sphi 0, %s133
    %s153 = sphi 0, %s155
    %s156 = sphi 0, %s153
    %s157 = sphi 0, %s156
    %s173 = sphi 0, %s157
  $region4: #{down_forward.1} parent=0 // loop_header_branch
    %15 = sbr.rel (%p13) target = $region8
  $region5: #{down_forward.1} parent=0 // loop_body
    %s17 = ssub.s32 %s12, 1
    %s18 = ssub.s32 %s12, 2
    %s19 = sadd.s32 %s12, 1
    %s20 = ssub.s32 %s12, %s19
    %p21 = scmp.eq.s32.totalorder %s20, 0
    %s23 = sadd.s32 %s22, 1
    %s24 = scalar_select %p21, %s22, %s23
    %p27 = pneg %p21
    %p28 = scmp.eq.s32.totalorder %s12, 1
    %p29 = por %p27, %p28
    %p30 = scmp.ne.s32.totalorder %s22, %s25
    %p31 = scmp.eq.s32.totalorder %s12, 0
    %p32 = por %p30, %p31
    %p33 = scmp.ne.s32.totalorder %s22, %s25
    %p34 = scmp.eq.s32.totalorder %s17, 1
    %p35 = por %p33, %p34
    %p36 = scmp.ne.s32.totalorder %s25, %s26
    %p37 = scmp.eq.s32.totalorder %s17, 0
    %p38 = por %p36, %p37
    %p39 = scmp.ne.s32.totalorder %s25, %s26
    %p40 = scmp.eq.s32.totalorder %s18, 1
    %p41 = por %p39, %p40
    %p43 = scmp.ne.s32.totalorder %s26, %s42
    %p44 = scmp.eq.s32.totalorder %s18, 0
    %p45 = por %p43, %p44
    %s47 = sadd.s32 %s46, 1
    %p50 = scmp.eq.s32.totalorder %s12, 1
    %p51 = scmp.ne.s32.totalorder %s46, %s48
    %p52 = scmp.eq.s32.totalorder %s12, 0
    %p53 = por %p51, %p52
    %p54 = scmp.ne.s32.totalorder %s46, %s48
    %p55 = scmp.eq.s32.totalorder %s17, 1
    %p56 = por %p54, %p55
    %p57 = scmp.ne.s32.totalorder %s48, %s49
    %p58 = scmp.eq.s32.totalorder %s17, 0
    %p59 = por %p57, %p58
    %p60 = scmp.ne.s32.totalorder %s48, %s49
    %p61 = scmp.eq.s32.totalorder %s18, 1
    %p62 = por %p60, %p61
    %p64 = scmp.ne.s32.totalorder %s49, %s63
    %p65 = scmp.eq.s32.totalorder %s18, 0
    %p66 = por %p64, %p65
    %s68 = sadd.s32 %s67, 1
    %p71 = scmp.eq.s32.totalorder %s12, 1
    %p72 = scmp.ne.s32.totalorder %s67, %s69
    %p73 = scmp.eq.s32.totalorder %s12, 0
    %p74 = por %p72, %p73
    %p75 = scmp.ne.s32.totalorder %s67, %s69
    %p76 = scmp.eq.s32.totalorder %s17, 1
    %p77 = por %p75, %p76
    %p78 = scmp.ne.s32.totalorder %s69, %s70
    %p79 = scmp.eq.s32.totalorder %s17, 0
    %p80 = por %p78, %p79
    %p81 = scmp.ne.s32.totalorder %s69, %s70
    %p82 = scmp.eq.s32.totalorder %s18, 1
    %p83 = por %p81, %p82
    %p85 = scmp.ne.s32.totalorder %s70, %s84
    %p86 = scmp.eq.s32.totalorder %s18, 0
    %p87 = por %p85, %p86
    %s89 = sadd.s32 %s88, 1
    %p92 = scmp.eq.s32.totalorder %s12, 1
    %p93 = scmp.ne.s32.totalorder %s88, %s90
    %p94 = scmp.eq.s32.totalorder %s12, 0
    %p95 = por %p93, %p94
    %p96 = scmp.ne.s32.totalorder %s88, %s90
    %p97 = scmp.eq.s32.totalorder %s17, 1
    %p98 = por %p96, %p97
    %p99 = scmp.ne.s32.totalorder %s90, %s91
    %p100 = scmp.eq.s32.totalorder %s17, 0
    %p101 = por %p99, %p100
    %p102 = scmp.ne.s32.totalorder %s90, %s91
    %p103 = scmp.eq.s32.totalorder %s18, 1
    %p104 = por %p102, %p103
    %p106 = scmp.ne.s32.totalorder %s91, %s105
    %p107 = scmp.eq.s32.totalorder %s18, 0
    %p108 = por %p106, %p107
    %s110 = sadd.s32 %s109, 1
    %p113 = scmp.eq.s32.totalorder %s12, 1
    %p114 = scmp.ne.s32.totalorder %s109, %s111
    %p115 = scmp.eq.s32.totalorder %s12, 0
    %p116 = por %p114, %p115
    %p117 = scmp.ne.s32.totalorder %s109, %s111
    %p118 = scmp.eq.s32.totalorder %s17, 1
    %p119 = por %p117, %p118
    %p120 = scmp.ne.s32.totalorder %s111, %s112
    %p121 = scmp.eq.s32.totalorder %s17, 0
    %p122 = por %p120, %p121
    %p123 = scmp.ne.s32.totalorder %s111, %s112
    %p124 = scmp.eq.s32.totalorder %s18, 1
    %p125 = por %p123, %p124
    %p127 = scmp.ne.s32.totalorder %s112, %s126
    %p128 = scmp.eq.s32.totalorder %s18, 0
    %p129 = por %p127, %p128
    %s131 = sadd.s32 %s130, 1
    %p134 = scmp.eq.s32.totalorder %s12, 1
    %p135 = scmp.ne.s32.totalorder %s130, %s132
    %p136 = scmp.eq.s32.totalorder %s12, 0
    %p137 = por %p135, %p136
    %p138 = scmp.ne.s32.totalorder %s130, %s132
    %p139 = scmp.eq.s32.totalorder %s17, 1
    %p140 = por %p138, %p139
    %p141 = scmp.ne.s32.totalorder %s132, %s133
    %p142 = scmp.eq.s32.totalorder %s17, 0
    %p143 = por %p141, %p142
    %p144 = scmp.ne.s32.totalorder %s132, %s133
    %p145 = scmp.eq.s32.totalorder %s18, 1
    %p146 = por %p144, %p145
    %p148 = scmp.ne.s32.totalorder %s133, %s147
    %p149 = scmp.eq.s32.totalorder %s18, 0
    %p150 = por %p148, %p149
    %s151 = ssub.s32 %s12, %s19
    %p152 = scmp.eq.s32.totalorder %s151, 0
    %s154 = sadd.s32 %s153, 1
    %s155 = scalar_select %p152, %s153, %s154
    %p158 = pneg %p152
    %p159 = scmp.eq.s32.totalorder %s12, 1
    %p160 = por %p158, %p159
    %p161 = scmp.ne.s32.totalorder %s153, %s156
    %p162 = scmp.eq.s32.totalorder %s12, 0
    %p163 = por %p161, %p162
    %p164 = scmp.ne.s32.totalorder %s153, %s156
    %p165 = scmp.eq.s32.totalorder %s17, 1
    %p166 = por %p164, %p165
    %p167 = scmp.ne.s32.totalorder %s156, %s157
    %p168 = scmp.eq.s32.totalorder %s17, 0
    %p169 = por %p167, %p168
    %p170 = scmp.ne.s32.totalorder %s156, %s157
    %p171 = scmp.eq.s32.totalorder %s18, 1
    %p172 = por %p170, %p171
    %p174 = scmp.ne.s32.totalorder %s157, %s173
    %p175 = scmp.eq.s32.totalorder %s18, 0
    %p176 = por %p174, %p175
    %p177 = scmp.le.s32.totalorder 1, %s12
    %p178 = scmp.lt.s32.totalorder %s12, 3
    %p179 = pnand %p177, %p178
    %p180 = pneg %p179
    // Predicated region
    $region9: #{down_forward.1} parent=5 // pred_check
      _
    $region10: #{down_forward.1} parent=5 // pred_check_branch
      %182 = sbr.rel (%p179) target = $region12
    $region11: #{down_forward.1} parent=5 // pred_region
      %s183 = ssub.s32 %s12, 1
      // Predicated region
      $region13: #{down_forward.1} parent=11 // pred_check
        %p184 = pneg %p59
      $region14: #{down_forward.1} parent=11 // pred_check_branch
        %186 = sbr.rel (%p184) target = $region16
      $region15: #{down_forward.1} parent=11 // pred_region
        _
      $region16: #{down_forward.1} parent=11 // pred_fallthru
        _
      // Predicated region
      $region17: #{down_forward.1} parent=11 // pred_check
        %p187 = pneg %p80
      $region18: #{down_forward.1} parent=11 // pred_check_branch
        %189 = sbr.rel (%p187) target = $region20
      $region19: #{down_forward.1} parent=11 // pred_region
        _
      $region20: #{down_forward.1} parent=11 // pred_fallthru
        _
      // Predicated region
      $region21: #{down_forward.1} parent=11 // pred_check
        %p190 = pneg %p101
      $region22: #{down_forward.1} parent=11 // pred_check_branch
        %192 = sbr.rel (%p190) target = $region24
      $region23: #{down_forward.1} parent=11 // pred_region
        _
      $region24: #{down_forward.1} parent=11 // pred_fallthru
        _
      // Predicated region
      $region25: #{down_forward.1} parent=11 // pred_check
        %p193 = pneg %p122
      $region26: #{down_forward.1} parent=11 // pred_check_branch
        %195 = sbr.rel (%p193) target = $region28
      $region27: #{down_forward.1} parent=11 // pred_region
        _
      $region28: #{down_forward.1} parent=11 // pred_fallthru
        _
      // Predicated region
      $region29: #{down_forward.1} parent=11 // pred_check
        %p196 = pneg %p143
      $region30: #{down_forward.1} parent=11 // pred_check_branch
        %198 = sbr.rel (%p196) target = $region32
      $region31: #{down_forward.1} parent=11 // pred_region
        _
      $region32: #{down_forward.1} parent=11 // pred_fallthru
        _
    $region12: #{down_forward.1} parent=5 // pred_fallthru
      _
    %p199 = scmp.lt.s32.totalorder %s12, 2
    // Predicated region
    $region33: #{down_forward.1} parent=5 // pred_check
      %p200 = pneg %p199
    $region34: #{down_forward.1} parent=5 // pred_check_branch
      %202 = sbr.rel (%p200) target = $region36
    $region35: #{down_forward.1} parent=5 // pred_region
      // Predicated region
      $region37: #{down_forward.1} parent=35 // pred_check
        %p203 = pneg %p32
      $region38: #{down_forward.1} parent=35 // pred_check_branch
        %205 = sbr.rel (%p203) target = $region40
      $region39: #{down_forward.1} parent=35 // pred_region
        %p206 = scmp.lt.s32.totalorder %s12, 1
        %s207 = scalar_select %p206, %s12, 1
        %s208 = smul.addr %s207, 41
        %s209 = smul.addr %s208, 8
        %s210 = scalar_lea.vmem %s0, %s209
      $region40: #{down_forward.1} parent=35 // pred_fallthru
        _
    $region36: #{down_forward.1} parent=5 // pred_fallthru
      _
    %p211 = scmp.le.s32.totalorder 1, %s12
    %p212 = scmp.lt.s32.totalorder %s12, 3
    %p213 = pnand %p211, %p212
    %p214 = pneg %p213
    // Predicated region
    $region41: #{down_forward.1} parent=5 // pred_check
      _
    $region42: #{down_forward.1} parent=5 // pred_check_branch
      %216 = sbr.rel (%p213) target = $region44
    $region43: #{down_forward.1} parent=5 // pred_region
      %s217 = ssub.s32 %s12, 1
      %p218 = scmp.lt.s32.totalorder %s17, 1
      %s219 = scalar_select %p218, %s17, 1
      %s220 = smul.addr %s219, 41
      %s221 = smul.addr %s220, 8
      %s222 = scalar_lea.vmem %s0, %s221
      %p223 = pneg %p38
      %p224 = pneg %p35
      %p225 = pneg %p59
      %p226 = pneg %p56
      %p227 = pneg %p80
      %p228 = pneg %p77
      %p229 = pneg %p101
      %p230 = pneg %p98
      %p231 = pneg %p122
      %p232 = pneg %p119
      %p233 = pneg %p143
      %p234 = pneg %p140
      %p235 = pneg %p169
      %p236 = pneg %p166
      %p237 = scmp.lt.s32.totalorder %s17, 1
      %s238 = scalar_select %p237, %s17, 1
      %s239 = smul.addr %s238, 41
      %s240 = smul.addr %s239, 8
      %s241 = scalar_lea.vmem %s6, %s240
      %p242 = scmp.lt.s32.totalorder %s17, 1
      %s243 = scalar_select %p242, %s17, 1
      %s244 = smul.addr %s243, 41
      %s245 = smul.addr %s244, 8
      %s246 = scalar_lea.vmem %s0, %s245
      %p247 = scmp.lt.s32.totalorder %s17, 1
      %s248 = scalar_select %p247, %s17, 1
      %s249 = smul.addr %s248, 41
      %s250 = smul.addr %s249, 8
      %s251 = scalar_lea.vmem %s6, %s250
      %v252 = vld [vmem:[%s5] sm:$0xff]
      %v253 = vld [vmem:[%s5 + $0x8] sm:$0xff]
      %v254 = vld [vmem:[%s5 + $0x10] sm:$0xff]
      %v255 = vld [vmem:[%s5 + $0x18] sm:$0xff]
      %v256 = vld [vmem:[%s5 + $0x20] sm:$0xff]
      %v257 = vld [vmem:[%s5 + $0x28] sm:$0xff]
      %v258 = vld [vmem:[%s5 + $0x30] sm:$0xff]
      %v259 = vld [vmem:[%s5 + $0x38] sm:$0xff]
      %v260 = vld [vmem:[%s5 + $0x40] sm:$0xff]
      %v261 = vld [vmem:[%s5 + $0x48] sm:$0xff]
      %v262 = vld [vmem:[%s5 + $0x50] sm:$0xff]
      %v263 = vld [vmem:[%s5 + $0x58] sm:$0xff]
      %v264 = vld [vmem:[%s5 + $0x60] sm:$0xff]
      %v265 = vld [vmem:[%s5 + $0x68] sm:$0xff]
      %v266 = vld [vmem:[%s5 + $0x70] sm:$0xff]
      %v267 = vld [vmem:[%s5 + $0x78] sm:$0xff]
      %v268 = vld [vmem:[%s5 + $0x80] sm:$0xff]
      %v269 = vld [vmem:[%s5 + $0x88] sm:$0xff]
      %v270 = vld [vmem:[%s5 + $0x90] sm:$0xff]
      %v271 = vld [vmem:[%s5 + $0x98] sm:$0xff]
      %v272 = vld [vmem:[%s5 + $0xa0] sm:$0xff]
      %v273 = vld [vmem:[%s5 + $0xa8] sm:$0xff]
      %v274 = vld [vmem:[%s5 + $0xb0] sm:$0xff]
      %v275 = vld [vmem:[%s5 + $0xb8] sm:$0xff]
      %v276 = vld [vmem:[%s5 + $0xc0] sm:$0xff]
      %v277 = vld [vmem:[%s5 + $0xc8] sm:$0xff]
      %v278 = vld [vmem:[%s5 + $0xd0] sm:$0xff]
      %v279 = vld [vmem:[%s5 + $0xd8] sm:$0xff]
      %v280 = vld [vmem:[%s5 + $0xe0] sm:$0xff]
      %v281 = vld [vmem:[%s5 + $0xe8] sm:$0xff]
      %v282 = vld [vmem:[%s5 + $0xf0] sm:$0xff]
      %v283 = vld [vmem:[%s5 + $0xf8] sm:$0xff]
      %v284 = vld [vmem:[%s5 + $0x100] sm:$0xff]
      %v285 = vld [vmem:[%s5 + $0x108] sm:$0xff]
      %v286 = vld [vmem:[%s5 + $0x110] sm:$0xff]
      %v287 = vld [vmem:[%s5 + $0x118] sm:$0xff]
      %v288 = vld [vmem:[%s5 + $0x120] sm:$0xff]
      %v289 = vld [vmem:[%s5 + $0x128] sm:$0xff]
      %v290 = vld [vmem:[%s5 + $0x130] sm:$0xff]
      %v291 = vld [vmem:[%s5 + $0x138] sm:$0xff]
      %v292 = vld [vmem:[%s5 + $0x140] sm:$0xf]
      %vm293 = vcmask 523264
      %294 = vst.msk [vmem:[#allocation2] sm:$0xff] %vm293, 0.0
      %295 = vst.msk [vmem:[#allocation2 + $0x8] sm:$0xff] %vm293, 0.0
      %296 = vst.msk [vmem:[#allocation2 + $0x10] sm:$0xff] %vm293, 0.0
      %297 = vst.msk [vmem:[#allocation2 + $0x15c] sm:$0xff] %vm293, 0.0
      %298 = vst.msk [vmem:[#allocation2 + $0x164] sm:$0xff] %vm293, 0.0
      %299 = vst.msk [vmem:[#allocation2 + $0x16c] sm:$0xff] %vm293, 0.0
      %300 = vst.msk [vmem:[#allocation3] sm:$0xff] %vm293, 0.0
      %301 = vst.msk [vmem:[#allocation3 + $0x8] sm:$0xff] %vm293, 0.0
      %302 = vst.msk [vmem:[#allocation3 + $0x10] sm:$0xff] %vm293, 0.0
      %303 = vst.msk [vmem:[#allocation3 + $0x15c] sm:$0xff] %vm293, 0.0
      %304 = vst.msk [vmem:[#allocation3 + $0x164] sm:$0xff] %vm293, 0.0
      %305 = vst.msk [vmem:[#allocation3 + $0x16c] sm:$0xff] %vm293, 0.0
      %v306 = vld [vmem:[%s246] sm:$0xff]
      %v307 = vld [vmem:[%s246 + $0x8] sm:$0xff]
      %v308 = vld [vmem:[%s246 + $0x10] sm:$0xff]
      %v309 = vld [vmem:[%s246 + $0x18] sm:$0xff]
      %v310 = vld [vmem:[%s246 + $0x20] sm:$0xff]
      %v311 = vld [vmem:[%s246 + $0x28] sm:$0xff]
      %v312 = vld [vmem:[%s246 + $0x30] sm:$0xff]
      %v313 = vld [vmem:[%s246 + $0x38] sm:$0xff]
      %v314 = vld [vmem:[%s246 + $0x40] sm:$0xff]
      %v315 = vld [vmem:[%s246 + $0x48] sm:$0xff]
      %v316 = vld [vmem:[%s246 + $0x50] sm:$0xff]
      %v317 = vld [vmem:[%s246 + $0x58] sm:$0xff]
      %v318 = vld [vmem:[%s246 + $0x60] sm:$0xff]
      %v319 = vld [vmem:[%s246 + $0x68] sm:$0xff]
      %v320 = vld [vmem:[%s246 + $0x70] sm:$0xff]
      %v321 = vld [vmem:[%s246 + $0x78] sm:$0xff]
      %v322 = vld [vmem:[%s246 + $0x80] sm:$0xff]
      %v323 = vld [vmem:[%s246 + $0x88] sm:$0xff]
      %v324 = vld [vmem:[%s246 + $0x90] sm:$0xff]
      %v325 = vld [vmem:[%s246 + $0x98] sm:$0xff]
      %v326 = vld [vmem:[%s246 + $0xa0] sm:$0xff]
      %v327 = vld [vmem:[%s246 + $0xa8] sm:$0xff]
      %v328 = vld [vmem:[%s246 + $0xb0] sm:$0xff]
      %v329 = vld [vmem:[%s246 + $0xb8] sm:$0xff]
      %v330 = vld [vmem:[%s246 + $0xc0] sm:$0xff]
      %v331 = vld [vmem:[%s246 + $0xc8] sm:$0xff]
      %v332 = vld [vmem:[%s246 + $0xd0] sm:$0xff]
      %v333 = vld [vmem:[%s246 + $0xd8] sm:$0xff]
      %v334 = vld [vmem:[%s246 + $0xe0] sm:$0xff]
      %v335 = vld [vmem:[%s246 + $0xe8] sm:$0xff]
      %v336 = vld [vmem:[%s246 + $0xf0] sm:$0xff]
      %v337 = vld [vmem:[%s246 + $0xf8] sm:$0xff]
      %v338 = vld [vmem:[%s246 + $0x100] sm:$0xff]
      %v339 = vld [vmem:[%s246 + $0x108] sm:$0xff]
      %v340 = vld [vmem:[%s246 + $0x110] sm:$0xff]
      %v341 = vld [vmem:[%s246 + $0x118] sm:$0xff]
      %v342 = vld [vmem:[%s246 + $0x120] sm:$0xff]
      %v343 = vld [vmem:[%s246 + $0x128] sm:$0xff]
      %v344 = vld [vmem:[%s246 + $0x130] sm:$0xff]
      %v345 = vld [vmem:[%s246 + $0x138] sm:$0xff]
      %v346 = vld [vmem:[%s246 + $0x140] sm:$0xf]
      %v347 = vld [vmem:[%s1] sm:$0xff]
      %v348 = vld [vmem:[%s1 + $0x8] sm:$0xff]
      %v349 = vld [vmem:[%s1 + $0x10] sm:$0xff]
      %v350 = vld [vmem:[%s1 + $0x18] sm:$0xff]
      %v351 = vld [vmem:[%s1 + $0x20] sm:$0xff]
      %v352 = vld [vmem:[%s1 + $0x28] sm:$0xff]
      %v353 = vld [vmem:[%s1 + $0x30] sm:$0xff]
      %v354 = vld [vmem:[%s1 + $0x38] sm:$0xff]
      %v355 = vld [vmem:[%s1 + $0x40] sm:$0xff]
      %v356 = vld [vmem:[%s1 + $0x48] sm:$0xff]
      %v357 = vld [vmem:[%s1 + $0x50] sm:$0xff]
      %v358 = vld [vmem:[%s1 + $0x58] sm:$0xff]
      %v359 = vld [vmem:[%s1 + $0x60] sm:$0xff]
      %v360 = vld [vmem:[%s1 + $0x68] sm:$0xff]
      %v361 = vld [vmem:[%s1 + $0x70] sm:$0xff]
      %v362 = vld [vmem:[%s1 + $0x78] sm:$0xff]
      %363 = vmatprep.subr.mxu0 0.0
      %364 = vmatpush1.msra.mxu0 %v362
      %365 = vmatprep.subr.mxu0 0.0
      %366 = vmatpush1.msra.mxu0 %v361
      %367 = vmatprep.subr.mxu0 0.0
      %368 = vmatpush1.msra.mxu0 %v360
      %369 = vmatprep.subr.mxu0 0.0
      %370 = vmatpush1.msra.mxu0 %v359
      %371 = vmatprep.subr.mxu0 0.0
      %372 = vmatpush1.msra.mxu0 %v358
      %373 = vmatprep.subr.mxu0 0.0
      %374 = vmatpush1.msra.mxu0 %v357
      %375 = vmatprep.subr.mxu0 0.0
      %376 = vmatpush1.msra.mxu0 %v356
      %377 = vmatprep.subr.mxu0 0.0
      %378 = vmatpush1.msra.mxu0 %v355
      %379 = vmatprep.subr.mxu0 0.0
      %380 = vmatpush1.msra.mxu0 %v354
      %381 = vmatprep.subr.mxu0 0.0
      %382 = vmatpush1.msra.mxu0 %v353
      %383 = vmatprep.subr.mxu0 0.0
      %384 = vmatpush1.msra.mxu0 %v352
      %385 = vmatprep.subr.mxu0 0.0
      %386 = vmatpush1.msra.mxu0 %v351
      %387 = vmatprep.subr.mxu0 0.0
      %388 = vmatpush1.msra.mxu0 %v350
      %389 = vmatprep.subr.mxu0 0.0
      %390 = vmatpush1.msra.mxu0 %v349
      %391 = vmatprep.subr.mxu0 0.0
      %392 = vmatpush1.msra.mxu0 %v348
      %393 = vmatprep.subr.mxu0 0.0
      %394 = vmatpush1.msra.mxu0 %v347
      %395 = vmatprep.subr.mxu0 0.0
      %396 = vmatpush2.msra.mxu0 0.0
      %397 = vmatprep.subr.mxu0 0.0
      %398 = vmatpush2.msra.mxu0 0.0
      %399 = vmatprep.subr.mxu0 0.0
      %400 = vmatpush2.msra.mxu0 0.0
      %401 = vmatprep.subr.mxu0 0.0
      %402 = vmatpush2.msra.mxu0 0.0
      %403 = vmatprep.subr.mxu0 0.0
      %404 = vmatpush2.msra.mxu0 0.0
      %405 = vmatprep.subr.mxu0 0.0
      %406 = vmatpush2.msra.mxu0 0.0
      %407 = vmatprep.subr.mxu0 0.0
      %408 = vmatpush2.msra.mxu0 0.0
      %409 = vmatprep.subr.mxu0 0.0
      %410 = vmatpush2.msra.mxu0 0.0
      %411 = vmatprep.subr.mxu0 0.0
      %412 = vmatpush2.msra.mxu0 0.0
      %413 = vmatprep.subr.mxu0 0.0
      %414 = vmatpush2.msra.mxu0 0.0
      %415 = vmatprep.subr.mxu0 0.0
      %416 = vmatpush2.msra.mxu0 0.0
      %417 = vmatprep.subr.mxu0 0.0
      %418 = vmatpush2.msra.mxu0 0.0
      %419 = vmatprep.subr.mxu0 0.0
      %420 = vmatpush2.msra.mxu0 0.0
      %421 = vmatprep.subr.mxu0 0.0
      %422 = vmatpush2.msra.mxu0 0.0
      %423 = vmatprep.subr.mxu0 0.0
      %424 = vmatpush2.msra.mxu0 0.0
      %425 = vmatprep.subr.mxu0 0.0
      %426 = vmatpush2.msra.mxu0 0.0
      %427 = vmatprep.mubr.f32.mxu0 0.0
      %428 = vmatmul.mubr.f32.gmra.mxu0 %v306
      %v429 = vpop.f32.mrf.mxu0
      %v430 = vadd.f32 0.0, %v429
      %v431 = vpop.f32.mrf.mxu0
      %432 = vmatprep.mubr.f32.mxu0 0.0
      %433 = vmatmul.mubr.f32.gmra.mxu0 %v307
      %v434 = vpop.f32.mrf.mxu0
      %v435 = vadd.f32 0.0, %v434
      %v436 = vpop.f32.mrf.mxu0
      %437 = vmatprep.mubr.f32.mxu0 0.0
      %438 = vmatmul.mubr.f32.gmra.mxu0 %v308
      %v439 = vpop.f32.mrf.mxu0
      %v440 = vadd.f32 0.0, %v439
      %v441 = vpop.f32.mrf.mxu0
      %442 = vmatprep.mubr.f32.mxu0 0.0
      %443 = vmatmul.mubr.f32.gmra.mxu0 %v309
      %v444 = vpop.f32.mrf.mxu0
      %v445 = vadd.f32 0.0, %v444
      %v446 = vpop.f32.mrf.mxu0
      %447 = vmatprep.mubr.f32.mxu0 0.0
      %448 = vmatmul.mubr.f32.gmra.mxu0 %v310
      %v449 = vpop.f32.mrf.mxu0
      %v450 = vadd.f32 0.0, %v449
      %v451 = vpop.f32.mrf.mxu0
      %452 = vmatprep.mubr.f32.mxu0 0.0
      %453 = vmatmul.mubr.f32.gmra.mxu0 %v311
      %v454 = vpop.f32.mrf.mxu0
      %v455 = vadd.f32 0.0, %v454
      %v456 = vpop.f32.mrf.mxu0
      %457 = vmatprep.mubr.f32.mxu0 0.0
      %458 = vmatmul.mubr.f32.gmra.mxu0 %v312
      %v459 = vpop.f32.mrf.mxu0
      %v460 = vadd.f32 0.0, %v459
      %v461 = vpop.f32.mrf.mxu0
      %462 = vmatprep.mubr.f32.mxu0 0.0
      %463 = vmatmul.mubr.f32.gmra.mxu0 %v313
      %v464 = vpop.f32.mrf.mxu0
      %v465 = vadd.f32 0.0, %v464
      %v466 = vpop.f32.mrf.mxu0
      %467 = vmatprep.mubr.f32.mxu0 0.0
      %468 = vmatmul.mubr.f32.gmra.mxu0 %v314
      %v469 = vpop.f32.mrf.mxu0
      %v470 = vadd.f32 0.0, %v469
      %v471 = vpop.f32.mrf.mxu0
      %472 = vmatprep.mubr.f32.mxu0 0.0
      %473 = vmatmul.mubr.f32.gmra.mxu0 %v315
      %v474 = vpop.f32.mrf.mxu0
      %v475 = vadd.f32 0.0, %v474
      %v476 = vpop.f32.mrf.mxu0
      %477 = vmatprep.mubr.f32.mxu0 0.0
      %478 = vmatmul.mubr.f32.gmra.mxu0 %v316
      %v479 = vpop.f32.mrf.mxu0
      %v480 = vadd.f32 0.0, %v479
      %v481 = vpop.f32.mrf.mxu0
      %482 = vmatprep.mubr.f32.mxu0 0.0
      %483 = vmatmul.mubr.f32.gmra.mxu0 %v317
      %v484 = vpop.f32.mrf.mxu0
      %v485 = vadd.f32 0.0, %v484
      %v486 = vpop.f32.mrf.mxu0
      %487 = vmatprep.mubr.f32.mxu0 0.0
      %488 = vmatmul.mubr.f32.gmra.mxu0 %v318
      %v489 = vpop.f32.mrf.mxu0
      %v490 = vadd.f32 0.0, %v489
      %v491 = vpop.f32.mrf.mxu0
      %492 = vmatprep.mubr.f32.mxu0 0.0
      %493 = vmatmul.mubr.f32.gmra.mxu0 %v319
      %v494 = vpop.f32.mrf.mxu0
      %v495 = vadd.f32 0.0, %v494
      %v496 = vpop.f32.mrf.mxu0
      %497 = vmatprep.mubr.f32.mxu0 0.0
      %498 = vmatmul.mubr.f32.gmra.mxu0 %v320
      %v499 = vpop.f32.mrf.mxu0
      %v500 = vadd.f32 0.0, %v499
      %v501 = vpop.f32.mrf.mxu0
      %502 = vmatprep.mubr.f32.mxu0 0.0
      %503 = vmatmul.mubr.f32.gmra.mxu0 %v321
      %v504 = vpop.f32.mrf.mxu0
      %v505 = vadd.f32 0.0, %v504
      %v506 = vpop.f32.mrf.mxu0
      %507 = vmatprep.mubr.f32.mxu0 0.0
      %508 = vmatmul.mubr.f32.gmra.mxu0 %v322
      %v509 = vpop.f32.mrf.mxu0
      %v510 = vadd.f32 0.0, %v509
      %v511 = vpop.f32.mrf.mxu0
      %512 = vmatprep.mubr.f32.mxu0 0.0
      %513 = vmatmul.mubr.f32.gmra.mxu0 %v323
      %v514 = vpop.f32.mrf.mxu0
      %v515 = vadd.f32 0.0, %v514
      %v516 = vpop.f32.mrf.mxu0
      %517 = vmatprep.mubr.f32.mxu0 0.0
      %518 = vmatmul.mubr.f32.gmra.mxu0 %v324
      %v519 = vpop.f32.mrf.mxu0
      %v520 = vadd.f32 0.0, %v519
      %v521 = vpop.f32.mrf.mxu0
      %522 = vmatprep.mubr.f32.mxu0 0.0
      %523 = vmatmul.mubr.f32.gmra.mxu0 %v325
      %v524 = vpop.f32.mrf.mxu0
      %v525 = vadd.f32 0.0, %v524
      %v526 = vpop.f32.mrf.mxu0
      %527 = vmatprep.mubr.f32.mxu0 0.0
      %528 = vmatmul.mubr.f32.gmra.mxu0 %v326
      %v529 = vpop.f32.mrf.mxu0
      %v530 = vadd.f32 0.0, %v529
      %v531 = vpop.f32.mrf.mxu0
      %532 = vmatprep.mubr.f32.mxu0 0.0
      %533 = vmatmul.mubr.f32.gmra.mxu0 %v327
      %v534 = vpop.f32.mrf.mxu0
      %v535 = vadd.f32 0.0, %v534
      %v536 = vpop.f32.mrf.mxu0
      %537 = vmatprep.mubr.f32.mxu0 0.0
      %538 = vmatmul.mubr.f32.gmra.mxu0 %v328
      %v539 = vpop.f32.mrf.mxu0
      %v540 = vadd.f32 0.0, %v539
      %v541 = vpop.f32.mrf.mxu0
      %542 = vmatprep.mubr.f32.mxu0 0.0
      %543 = vmatmul.mubr.f32.gmra.mxu0 %v329
      %v544 = vpop.f32.mrf.mxu0
      %v545 = vadd.f32 0.0, %v544
      %v546 = vpop.f32.mrf.mxu0
      %547 = vmatprep.mubr.f32.mxu0 0.0
      %548 = vmatmul.mubr.f32.gmra.mxu0 %v330
      %v549 = vpop.f32.mrf.mxu0
      %v550 = vadd.f32 0.0, %v549
      %v551 = vpop.f32.mrf.mxu0
      %552 = vmatprep.mubr.f32.mxu0 0.0
      %553 = vmatmul.mubr.f32.gmra.mxu0 %v331
      %v554 = vpop.f32.mrf.mxu0
      %v555 = vadd.f32 0.0, %v554
      %v556 = vpop.f32.mrf.mxu0
      %557 = vmatprep.mubr.f32.mxu0 0.0
      %558 = vmatmul.mubr.f32.gmra.mxu0 %v332
      %v559 = vpop.f32.mrf.mxu0
      %v560 = vadd.f32 0.0, %v559
      %v561 = vpop.f32.mrf.mxu0
      %562 = vmatprep.mubr.f32.mxu0 0.0
      %563 = vmatmul.mubr.f32.gmra.mxu0 %v333
      %v564 = vpop.f32.mrf.mxu0
      %v565 = vadd.f32 0.0, %v564
      %v566 = vpop.f32.mrf.mxu0
      %567 = vmatprep.mubr.f32.mxu0 0.0
      %568 = vmatmul.mubr.f32.gmra.mxu0 %v334
      %v569 = vpop.f32.mrf.mxu0
      %v570 = vadd.f32 0.0, %v569
      %v571 = vpop.f32.mrf.mxu0
      %572 = vmatprep.mubr.f32.mxu0 0.0
      %573 = vmatmul.mubr.f32.gmra.mxu0 %v335
      %v574 = vpop.f32.mrf.mxu0
      %v575 = vadd.f32 0.0, %v574
      %v576 = vpop.f32.mrf.mxu0
      %577 = vmatprep.mubr.f32.mxu0 0.0
      %578 = vmatmul.mubr.f32.gmra.mxu0 %v336
      %v579 = vpop.f32.mrf.mxu0
      %v580 = vadd.f32 0.0, %v579
      %v581 = vpop.f32.mrf.mxu0
      %582 = vmatprep.mubr.f32.mxu0 0.0
      %583 = vmatmul.mubr.f32.gmra.mxu0 %v337
      %v584 = vpop.f32.mrf.mxu0
      %v585 = vadd.f32 0.0, %v584
      %v586 = vpop.f32.mrf.mxu0
      %587 = vmatprep.mubr.f32.mxu0 0.0
      %588 = vmatmul.mubr.f32.gmra.mxu0 %v338
      %v589 = vpop.f32.mrf.mxu0
      %v590 = vadd.f32 0.0, %v589
      %v591 = vpop.f32.mrf.mxu0
      %592 = vmatprep.mubr.f32.mxu0 0.0
      %593 = vmatmul.mubr.f32.gmra.mxu0 %v339
      %v594 = vpop.f32.mrf.mxu0
      %v595 = vadd.f32 0.0, %v594
      %v596 = vpop.f32.mrf.mxu0
      %597 = vmatprep.mubr.f32.mxu0 0.0
      %598 = vmatmul.mubr.f32.gmra.mxu0 %v340
      %v599 = vpop.f32.mrf.mxu0
      %v600 = vadd.f32 0.0, %v599
      %v601 = vpop.f32.mrf.mxu0
      %602 = vmatprep.mubr.f32.mxu0 0.0
      %603 = vmatmul.mubr.f32.gmra.mxu0 %v341
      %v604 = vpop.f32.mrf.mxu0
      %v605 = vadd.f32 0.0, %v604
      %v606 = vpop.f32.mrf.mxu0
      %607 = vmatprep.mubr.f32.mxu0 0.0
      %608 = vmatmul.mubr.f32.gmra.mxu0 %v342
      %v609 = vpop.f32.mrf.mxu0
      %v610 = vadd.f32 0.0, %v609
      %v611 = vpop.f32.mrf.mxu0
      %612 = vmatprep.mubr.f32.mxu0 0.0
      %613 = vmatmul.mubr.f32.gmra.mxu0 %v343
      %v614 = vpop.f32.mrf.mxu0
      %v615 = vadd.f32 0.0, %v614
      %v616 = vpop.f32.mrf.mxu0
      %617 = vmatprep.mubr.f32.mxu0 0.0
      %618 = vmatmul.mubr.f32.gmra.mxu0 %v344
      %v619 = vpop.f32.mrf.mxu0
      %v620 = vadd.f32 0.0, %v619
      %v621 = vpop.f32.mrf.mxu0
      %622 = vmatprep.mubr.f32.mxu0 0.0
      %623 = vmatmul.mubr.f32.gmra.mxu0 %v345
      %v624 = vpop.f32.mrf.mxu0
      %v625 = vadd.f32 0.0, %v624
      %v626 = vpop.f32.mrf.mxu0
      %627 = vmatprep.mubr.f32.mxu0 0.0
      %628 = vmatmul.mubr.f32.gmra.mxu0 %v346
      %v629 = vpop.f32.mrf.mxu0
      %v630 = vadd.f32 0.0, %v629
      %v631 = vpop.f32.mrf.mxu0
      %632 = vdwg.mxu0
      %v633 = vld [vmem:[%s4] sm:$0x1]
      %v634 = vlaneseq
      %v635 = vshrl.u32 %v634, 7
      %v636 = vsub.s32 0, %v635
      %v637 = vrot.slane %v633, %v636
      %v638 = vmul.f32 %v430, %v637
      %v639 = vmul.f32 %v435, %v637
      %v640 = vmul.f32 %v440, %v637
      %v641 = vmul.f32 %v445, %v637
      %v642 = vmul.f32 %v450, %v637
      %v643 = vmul.f32 %v455, %v637
      %v644 = vmul.f32 %v460, %v637
      %v645 = vmul.f32 %v465, %v637
      %v646 = vmul.f32 %v470, %v637
      %v647 = vmul.f32 %v475, %v637
      %v648 = vmul.f32 %v480, %v637
      %v649 = vmul.f32 %v485, %v637
      %v650 = vmul.f32 %v490, %v637
      %v651 = vmul.f32 %v495, %v637
      %v652 = vmul.f32 %v500, %v637
      %v653 = vmul.f32 %v505, %v637
      %v654 = vmul.f32 %v510, %v637
      %v655 = vmul.f32 %v515, %v637
      %v656 = vmul.f32 %v520, %v637
      %v657 = vmul.f32 %v525, %v637
      %v658 = vmul.f32 %v530, %v637
      %v659 = vmul.f32 %v535, %v637
      %v660 = vmul.f32 %v540, %v637
      %v661 = vmul.f32 %v545, %v637
      %v662 = vmul.f32 %v550, %v637
      %v663 = vmul.f32 %v555, %v637
      %v664 = vmul.f32 %v560, %v637
      %v665 = vmul.f32 %v565, %v637
      %v666 = vmul.f32 %v570, %v637
      %v667 = vmul.f32 %v575, %v637
      %v668 = vmul.f32 %v580, %v637
      %v669 = vmul.f32 %v585, %v637
      %v670 = vmul.f32 %v590, %v637
      %v671 = vmul.f32 %v595, %v637
      %v672 = vmul.f32 %v600, %v637
      %v673 = vmul.f32 %v605, %v637
      %v674 = vmul.f32 %v610, %v637
      %v675 = vmul.f32 %v615, %v637
      %v676 = vmul.f32 %v620, %v637
      %v677 = vmul.f32 %v625, %v637
      %v678 = vmul.f32 %v630, %v637
      %v679 = vld [vmem:[%s4 + $0x1] sm:$0x1]
      %v680 = vlaneseq
      %v681 = vshrl.u32 %v680, 7
      %v682 = vsub.s32 0, %v681
      %v683 = vrot.slane %v679, %v682
      %v684 = vadd.f32 %v638, %v683
      %v685 = vadd.f32 %v639, %v683
      %v686 = vadd.f32 %v640, %v683
      %v687 = vadd.f32 %v641, %v683
      %v688 = vadd.f32 %v642, %v683
      %v689 = vadd.f32 %v643, %v683
      %v690 = vadd.f32 %v644, %v683
      %v691 = vadd.f32 %v645, %v683
      %v692 = vadd.f32 %v646, %v683
      %v693 = vadd.f32 %v647, %v683
      %v694 = vadd.f32 %v648, %v683
      %v695 = vadd.f32 %v649, %v683
      %v696 = vadd.f32 %v650, %v683
      %v697 = vadd.f32 %v651, %v683
      %v698 = vadd.f32 %v652, %v683
      %v699 = vadd.f32 %v653, %v683
      %v700 = vadd.f32 %v654, %v683
      %v701 = vadd.f32 %v655, %v683
      %v702 = vadd.f32 %v656, %v683
      %v703 = vadd.f32 %v657, %v683
      %v704 = vadd.f32 %v658, %v683
      %v705 = vadd.f32 %v659, %v683
      %v706 = vadd.f32 %v660, %v683
      %v707 = vadd.f32 %v661, %v683
      %v708 = vadd.f32 %v662, %v683
      %v709 = vadd.f32 %v663, %v683
      %v710 = vadd.f32 %v664, %v683
      %v711 = vadd.f32 %v665, %v683
      %v712 = vadd.f32 %v666, %v683
      %v713 = vadd.f32 %v667, %v683
      %v714 = vadd.f32 %v668, %v683
      %v715 = vadd.f32 %v669, %v683
      %v716 = vadd.f32 %v670, %v683
      %v717 = vadd.f32 %v671, %v683
      %v718 = vadd.f32 %v672, %v683
      %v719 = vadd.f32 %v673, %v683
      %v720 = vadd.f32 %v674, %v683
      %v721 = vadd.f32 %v675, %v683
      %v722 = vadd.f32 %v676, %v683
      %v723 = vadd.f32 %v677, %v683
      %v724 = vadd.f32 %v678, %v683
      %v725 = vmax.f32 %v684, 0.0
      %v726 = vmax.f32 %v685, 0.0
      %v727 = vmax.f32 %v686, 0.0
      %v728 = vmax.f32 %v687, 0.0
      %v729 = vmax.f32 %v688, 0.0
      %v730 = vmax.f32 %v689, 0.0
      %v731 = vmax.f32 %v690, 0.0
      %v732 = vmax.f32 %v691, 0.0
      %v733 = vmax.f32 %v692, 0.0
      %v734 = vmax.f32 %v693, 0.0
      %v735 = vmax.f32 %v694, 0.0
      %v736 = vmax.f32 %v695, 0.0
      %v737 = vmax.f32 %v696, 0.0
      %v738 = vmax.f32 %v697, 0.0
      %v739 = vmax.f32 %v698, 0.0
      %v740 = vmax.f32 %v699, 0.0
      %v741 = vmax.f32 %v700, 0.0
      %v742 = vmax.f32 %v701, 0.0
      %v743 = vmax.f32 %v702, 0.0
      %v744 = vmax.f32 %v703, 0.0
      %v745 = vmax.f32 %v704, 0.0
      %v746 = vmax.f32 %v705, 0.0
      %v747 = vmax.f32 %v706, 0.0
      %v748 = vmax.f32 %v707, 0.0
      %v749 = vmax.f32 %v708, 0.0
      %v750 = vmax.f32 %v709, 0.0
      %v751 = vmax.f32 %v710, 0.0
      %v752 = vmax.f32 %v711, 0.0
      %v753 = vmax.f32 %v712, 0.0
      %v754 = vmax.f32 %v713, 0.0
      %v755 = vmax.f32 %v714, 0.0
      %v756 = vmax.f32 %v715, 0.0
      %v757 = vmax.f32 %v716, 0.0
      %v758 = vmax.f32 %v717, 0.0
      %v759 = vmax.f32 %v718, 0.0
      %v760 = vmax.f32 %v719, 0.0
      %v761 = vmax.f32 %v720, 0.0
      %v762 = vmax.f32 %v721, 0.0
      %v763 = vmax.f32 %v722, 0.0
      %v764 = vmax.f32 %v723, 0.0
      %v765 = vmax.f32 %v724, 0.0
      %767 = vset.pattern.permute.xlu0 0
      %768 = vperm.xlu0 %767, %v252
      %v769 = vpop.permute.xlu0 %768
      %772 = vset.pattern.permute.xlu0 0
      %773 = vperm.xlu0 %772, %v253
      %v774 = vpop.permute.xlu0 %773
      %777 = vset.pattern.permute.xlu0 0
      %778 = vperm.xlu0 %777, %v254
      %v779 = vpop.permute.xlu0 %778
      %782 = vset.pattern.permute.xlu0 0
      %783 = vperm.xlu0 %782, %v255
      %v784 = vpop.permute.xlu0 %783
      %787 = vset.pattern.permute.xlu0 0
      %788 = vperm.xlu0 %787, %v256
      %v789 = vpop.permute.xlu0 %788
      %792 = vset.pattern.permute.xlu0 0
      %793 = vperm.xlu0 %792, %v257
      %v794 = vpop.permute.xlu0 %793
      %797 = vset.pattern.permute.xlu0 0
      %798 = vperm.xlu0 %797, %v258
      %v799 = vpop.permute.xlu0 %798
      %802 = vset.pattern.permute.xlu0 0
      %803 = vperm.xlu0 %802, %v259
      %v804 = vpop.permute.xlu0 %803
      %807 = vset.pattern.permute.xlu0 0
      %808 = vperm.xlu0 %807, %v260
      %v809 = vpop.permute.xlu0 %808
      %812 = vset.pattern.permute.xlu0 0
      %813 = vperm.xlu0 %812, %v261
      %v814 = vpop.permute.xlu0 %813
      %817 = vset.pattern.permute.xlu0 0
      %818 = vperm.xlu0 %817, %v262
      %v819 = vpop.permute.xlu0 %818
      %822 = vset.pattern.permute.xlu0 0
      %823 = vperm.xlu0 %822, %v263
      %v824 = vpop.permute.xlu0 %823
      %827 = vset.pattern.permute.xlu0 0
      %828 = vperm.xlu0 %827, %v264
      %v829 = vpop.permute.xlu0 %828
      %832 = vset.pattern.permute.xlu0 0
      %833 = vperm.xlu0 %832, %v265
      %v834 = vpop.permute.xlu0 %833
      %837 = vset.pattern.permute.xlu0 0
      %838 = vperm.xlu0 %837, %v266
      %v839 = vpop.permute.xlu0 %838
      %842 = vset.pattern.permute.xlu0 0
      %843 = vperm.xlu0 %842, %v267
      %v844 = vpop.permute.xlu0 %843
      %847 = vset.pattern.permute.xlu0 0
      %848 = vperm.xlu0 %847, %v268
      %v849 = vpop.permute.xlu0 %848
      %852 = vset.pattern.permute.xlu0 0
      %853 = vperm.xlu0 %852, %v269
      %v854 = vpop.permute.xlu0 %853
      %857 = vset.pattern.permute.xlu0 0
      %858 = vperm.xlu0 %857, %v270
      %v859 = vpop.permute.xlu0 %858
      %862 = vset.pattern.permute.xlu0 0
      %863 = vperm.xlu0 %862, %v271
      %v864 = vpop.permute.xlu0 %863
      %867 = vset.pattern.permute.xlu0 0
      %868 = vperm.xlu0 %867, %v272
      %v869 = vpop.permute.xlu0 %868
      %872 = vset.pattern.permute.xlu0 0
      %873 = vperm.xlu0 %872, %v273
      %v874 = vpop.permute.xlu0 %873
      %877 = vset.pattern.permute.xlu0 0
      %878 = vperm.xlu0 %877, %v274
      %v879 = vpop.permute.xlu0 %878
      %882 = vset.pattern.permute.xlu0 0
      %883 = vperm.xlu0 %882, %v275
      %v884 = vpop.permute.xlu0 %883
      %887 = vset.pattern.permute.xlu0 0
      %888 = vperm.xlu0 %887, %v276
      %v889 = vpop.permute.xlu0 %888
      %892 = vset.pattern.permute.xlu0 0
      %893 = vperm.xlu0 %892, %v277
      %v894 = vpop.permute.xlu0 %893
      %897 = vset.pattern.permute.xlu0 0
      %898 = vperm.xlu0 %897, %v278
      %v899 = vpop.permute.xlu0 %898
      %902 = vset.pattern.permute.xlu0 0
      %903 = vperm.xlu0 %902, %v279
      %v904 = vpop.permute.xlu0 %903
      %907 = vset.pattern.permute.xlu0 0
      %908 = vperm.xlu0 %907, %v280
      %v909 = vpop.permute.xlu0 %908
      %912 = vset.pattern.permute.xlu0 0
      %913 = vperm.xlu0 %912, %v281
      %v914 = vpop.permute.xlu0 %913
      %917 = vset.pattern.permute.xlu0 0
      %918 = vperm.xlu0 %917, %v282
      %v919 = vpop.permute.xlu0 %918
      %922 = vset.pattern.permute.xlu0 0
      %923 = vperm.xlu0 %922, %v283
      %v924 = vpop.permute.xlu0 %923
      %927 = vset.pattern.permute.xlu0 0
      %928 = vperm.xlu0 %927, %v284
      %v929 = vpop.permute.xlu0 %928
      %932 = vset.pattern.permute.xlu0 0
      %933 = vperm.xlu0 %932, %v285
      %v934 = vpop.permute.xlu0 %933
      %937 = vset.pattern.permute.xlu0 0
      %938 = vperm.xlu0 %937, %v286
      %v939 = vpop.permute.xlu0 %938
      %942 = vset.pattern.permute.xlu0 0
      %943 = vperm.xlu0 %942, %v287
      %v944 = vpop.permute.xlu0 %943
      %947 = vset.pattern.permute.xlu0 0
      %948 = vperm.xlu0 %947, %v288
      %v949 = vpop.permute.xlu0 %948
      %952 = vset.pattern.permute.xlu0 0
      %953 = vperm.xlu0 %952, %v289
      %v954 = vpop.permute.xlu0 %953
      %957 = vset.pattern.permute.xlu0 0
      %958 = vperm.xlu0 %957, %v290
      %v959 = vpop.permute.xlu0 %958
      %962 = vset.pattern.permute.xlu0 0
      %963 = vperm.xlu0 %962, %v291
      %v964 = vpop.permute.xlu0 %963
      %967 = vset.pattern.permute.xlu0 0
      %968 = vperm.xlu0 %967, %v292
      %v969 = vpop.permute.xlu0 %968
      %v971 = vmul.f32 %v725, %v769
      %v972 = vmul.f32 %v726, %v774
      %v973 = vmul.f32 %v727, %v779
      %v974 = vmul.f32 %v728, %v784
      %v975 = vmul.f32 %v729, %v789
      %v976 = vmul.f32 %v730, %v794
      %v977 = vmul.f32 %v731, %v799
      %v978 = vmul.f32 %v732, %v804
      %v979 = vmul.f32 %v733, %v809
      %v980 = vmul.f32 %v734, %v814
      %v981 = vmul.f32 %v735, %v819
      %v982 = vmul.f32 %v736, %v824
      %v983 = vmul.f32 %v737, %v829
      %v984 = vmul.f32 %v738, %v834
      %v985 = vmul.f32 %v739, %v839
      %v986 = vmul.f32 %v740, %v844
      %v987 = vmul.f32 %v741, %v849
      %v988 = vmul.f32 %v742, %v854
      %v989 = vmul.f32 %v743, %v859
      %v990 = vmul.f32 %v744, %v864
      %v991 = vmul.f32 %v745, %v869
      %v992 = vmul.f32 %v746, %v874
      %v993 = vmul.f32 %v747, %v879
      %v994 = vmul.f32 %v748, %v884
      %v995 = vmul.f32 %v749, %v889
      %v996 = vmul.f32 %v750, %v894
      %v997 = vmul.f32 %v751, %v899
      %v998 = vmul.f32 %v752, %v904
      %v999 = vmul.f32 %v753, %v909
      %v1000 = vmul.f32 %v754, %v914
      %v1001 = vmul.f32 %v755, %v919
      %v1002 = vmul.f32 %v756, %v924
      %v1003 = vmul.f32 %v757, %v929
      %v1004 = vmul.f32 %v758, %v934
      %v1005 = vmul.f32 %v759, %v939
      %v1006 = vmul.f32 %v760, %v944
      %v1007 = vmul.f32 %v761, %v949
      %v1008 = vmul.f32 %v762, %v954
      %v1009 = vmul.f32 %v763, %v959
      %v1010 = vmul.f32 %v764, %v964
      %v1011 = vmul.f32 %v765, %v969
      %1012 = vst.msk [vmem:[#allocation2 + $0x18] sm:$0xff] %vm293, %v971
      %1013 = vst.msk [vmem:[#allocation2 + $0x20] sm:$0xff] %vm293, %v972
      %1014 = vst.msk [vmem:[#allocation2 + $0x28] sm:$0xff] %vm293, %v973
      %1015 = vst.msk [vmem:[#allocation2 + $0x30] sm:$0xff] %vm293, %v974
      %1016 = vst.msk [vmem:[#allocation2 + $0x38] sm:$0xff] %vm293, %v975
      %1017 = vst.msk [vmem:[#allocation2 + $0x40] sm:$0xff] %vm293, %v976
      %1018 = vst.msk [vmem:[#allocation2 + $0x48] sm:$0xff] %vm293, %v977
      %1019 = vst.msk [vmem:[#allocation2 + $0x50] sm:$0xff] %vm293, %v978
      %1020 = vst.msk [vmem:[#allocation2 + $0x58] sm:$0xff] %vm293, %v979
      %1021 = vst.msk [vmem:[#allocation2 + $0x60] sm:$0xff] %vm293, %v980
      %1022 = vst.msk [vmem:[#allocation2 + $0x68] sm:$0xff] %vm293, %v981
      %1023 = vst.msk [vmem:[#allocation2 + $0x70] sm:$0xff] %vm293, %v982
      %1024 = vst.msk [vmem:[#allocation2 + $0x78] sm:$0xff] %vm293, %v983
      %1025 = vst.msk [vmem:[#allocation2 + $0x80] sm:$0xff] %vm293, %v984
      %1026 = vst.msk [vmem:[#allocation2 + $0x88] sm:$0xff] %vm293, %v985
      %1027 = vst.msk [vmem:[#allocation2 + $0x90] sm:$0xff] %vm293, %v986
      %1028 = vst.msk [vmem:[#allocation2 + $0x98] sm:$0xff] %vm293, %v987
      %1029 = vst.msk [vmem:[#allocation2 + $0xa0] sm:$0xff] %vm293, %v988
      %1030 = vst.msk [vmem:[#allocation2 + $0xa8] sm:$0xff] %vm293, %v989
      %1031 = vst.msk [vmem:[#allocation2 + $0xb0] sm:$0xff] %vm293, %v990
      %1032 = vst.msk [vmem:[#allocation2 + $0xb8] sm:$0xff] %vm293, %v991
      %1033 = vst.msk [vmem:[#allocation2 + $0xc0] sm:$0xff] %vm293, %v992
      %1034 = vst.msk [vmem:[#allocation2 + $0xc8] sm:$0xff] %vm293, %v993
      %1035 = vst.msk [vmem:[#allocation2 + $0xd0] sm:$0xff] %vm293, %v994
      %1036 = vst.msk [vmem:[#allocation2 + $0xd8] sm:$0xff] %vm293, %v995
      %1037 = vst.msk [vmem:[#allocation2 + $0xe0] sm:$0xff] %vm293, %v996
      %1038 = vst.msk [vmem:[#allocation2 + $0xe8] sm:$0xff] %vm293, %v997
      %1039 = vst.msk [vmem:[#allocation2 + $0xf0] sm:$0xff] %vm293, %v998
      %1040 = vst.msk [vmem:[#allocation2 + $0xf8] sm:$0xff] %vm293, %v999
      %1041 = vst.msk [vmem:[#allocation2 + $0x100] sm:$0xff] %vm293, %v1000
      %1042 = vst.msk [vmem:[#allocation2 + $0x108] sm:$0xff] %vm293, %v1001
      %1043 = vst.msk [vmem:[#allocation2 + $0x110] sm:$0xff] %vm293, %v1002
      %1044 = vst.msk [vmem:[#allocation2 + $0x118] sm:$0xff] %vm293, %v1003
      %1045 = vst.msk [vmem:[#allocation2 + $0x120] sm:$0xff] %vm293, %v1004
      %1046 = vst.msk [vmem:[#allocation2 + $0x128] sm:$0xff] %vm293, %v1005
      %1047 = vst.msk [vmem:[#allocation2 + $0x130] sm:$0xff] %vm293, %v1006
      %1048 = vst.msk [vmem:[#allocation2 + $0x138] sm:$0xff] %vm293, %v1007
      %1049 = vst.msk [vmem:[#allocation2 + $0x140] sm:$0xff] %vm293, %v1008
      %1050 = vst.msk [vmem:[#allocation2 + $0x148] sm:$0xff] %vm293, %v1009
      %1051 = vst.msk [vmem:[#allocation2 + $0x150] sm:$0xff] %vm293, %v1010
      %vm1052 = vcmask 519168
      %1053 = vst.msk [vmem:[#allocation2 + $0x158] sm:$0xf] %vm1052, %v1011
      %v1054 = vld [vmem:[#allocation2 + $0x5] sm:$0xff]
      %v1055 = vld [vmem:[#allocation2 + $0xd] sm:$0xff]
      %v1056 = vld [vmem:[#allocation2 + $0x15] sm:$0xff]
      %v1057 = vld [vmem:[#allocation2 + $0x1d] sm:$0xff]
      %v1058 = vld [vmem:[#allocation2 + $0x25] sm:$0xff]
      %v1059 = vld [vmem:[#allocation2 + $0x2d] sm:$0xff]
      %v1060 = vld [vmem:[#allocation2 + $0x35] sm:$0xff]
      %v1061 = vld [vmem:[#allocation2 + $0x3d] sm:$0xff]
      %v1062 = vld [vmem:[#allocation2 + $0x45] sm:$0xff]
      %v1063 = vld [vmem:[#allocation2 + $0x4d] sm:$0xff]
      %v1064 = vld [vmem:[#allocation2 + $0x55] sm:$0xff]
      %v1065 = vld [vmem:[#allocation2 + $0x5d] sm:$0xff]
      %v1066 = vld [vmem:[#allocation2 + $0x65] sm:$0xff]
      %v1067 = vld [vmem:[#allocation2 + $0x6d] sm:$0xff]
      %v1068 = vld [vmem:[#allocation2 + $0x75] sm:$0xff]
      %v1069 = vld [vmem:[#allocation2 + $0x7d] sm:$0xff]
      %v1070 = vld [vmem:[#allocation2 + $0x85] sm:$0xff]
      %v1071 = vld [vmem:[#allocation2 + $0x8d] sm:$0xff]
      %v1072 = vld [vmem:[#allocation2 + $0x95] sm:$0xff]
      %v1073 = vld [vmem:[#allocation2 + $0x9d] sm:$0xff]
      %v1074 = vld [vmem:[#allocation2 + $0xa5] sm:$0xff]
      %v1075 = vld [vmem:[#allocation2 + $0xad] sm:$0xff]
      %v1076 = vld [vmem:[#allocation2 + $0xb5] sm:$0xff]
      %v1077 = vld [vmem:[#allocation2 + $0xbd] sm:$0xff]
      %v1078 = vld [vmem:[#allocation2 + $0xc5] sm:$0xff]
      %v1079 = vld [vmem:[#allocation2 + $0xcd] sm:$0xff]
      %v1080 = vld [vmem:[#allocation2 + $0xd5] sm:$0xff]
      %v1081 = vld [vmem:[#allocation2 + $0xdd] sm:$0xff]
      %v1082 = vld [vmem:[#allocation2 + $0xe5] sm:$0xff]
      %v1083 = vld [vmem:[#allocation2 + $0xed] sm:$0xff]
      %v1084 = vld [vmem:[#allocation2 + $0xf5] sm:$0xff]
      %v1085 = vld [vmem:[#allocation2 + $0xfd] sm:$0xff]
      %v1086 = vld [vmem:[#allocation2 + $0x105] sm:$0xff]
      %v1087 = vld [vmem:[#allocation2 + $0x10d] sm:$0xff]
      %v1088 = vld [vmem:[#allocation2 + $0x115] sm:$0xff]
      %v1089 = vld [vmem:[#allocation2 + $0x11d] sm:$0xff]
      %v1090 = vld [vmem:[#allocation2 + $0x125] sm:$0xff]
      %v1091 = vld [vmem:[#allocation2 + $0x12d] sm:$0xff]
      %v1092 = vld [vmem:[#allocation2 + $0x135] sm:$0xff]
      %v1093 = vld [vmem:[#allocation2 + $0x13d] sm:$0xff]
      %v1094 = vld [vmem:[#allocation2 + $0x145] sm:$0xf]
      %v1095 = vld [vmem:[%s2] sm:$0xff]
      %v1096 = vld [vmem:[%s2 + $0x8] sm:$0xff]
      %v1097 = vld [vmem:[%s2 + $0x10] sm:$0xff]
      %v1098 = vld [vmem:[%s2 + $0x18] sm:$0xff]
      %v1099 = vld [vmem:[%s2 + $0x20] sm:$0xff]
      %v1100 = vld [vmem:[%s2 + $0x28] sm:$0xff]
      %v1101 = vld [vmem:[%s2 + $0x30] sm:$0xff]
      %v1102 = vld [vmem:[%s2 + $0x38] sm:$0xff]
      %v1103 = vld [vmem:[#allocation2 + $0x6] sm:$0xff]
      %v1104 = vld [vmem:[#allocation2 + $0xe] sm:$0xff]
      %v1105 = vld [vmem:[#allocation2 + $0x16] sm:$0xff]
      %v1106 = vld [vmem:[#allocation2 + $0x1e] sm:$0xff]
      %v1107 = vld [vmem:[#allocation2 + $0x26] sm:$0xff]
      %v1108 = vld [vmem:[#allocation2 + $0x2e] sm:$0xff]
      %v1109 = vld [vmem:[#allocation2 + $0x36] sm:$0xff]
      %v1110 = vld [vmem:[#allocation2 + $0x3e] sm:$0xff]
      %v1111 = vld [vmem:[#allocation2 + $0x46] sm:$0xff]
      %v1112 = vld [vmem:[#allocation2 + $0x4e] sm:$0xff]
      %v1113 = vld [vmem:[#allocation2 + $0x56] sm:$0xff]
      %v1114 = vld [vmem:[#allocation2 + $0x5e] sm:$0xff]
      %v1115 = vld [vmem:[#allocation2 + $0x66] sm:$0xff]
      %v1116 = vld [vmem:[#allocation2 + $0x6e] sm:$0xff]
      %v1117 = vld [vmem:[#allocation2 + $0x76] sm:$0xff]
      %v1118 = vld [vmem:[#allocation2 + $0x7e] sm:$0xff]
      %v1119 = vld [vmem:[#allocation2 + $0x86] sm:$0xff]
      %v1120 = vld [vmem:[#allocation2 + $0x8e] sm:$0xff]
      %v1121 = vld [vmem:[#allocation2 + $0x96] sm:$0xff]
      %v1122 = vld [vmem:[#allocation2 + $0x9e] sm:$0xff]
      %v1123 = vld [vmem:[#allocation2 + $0xa6] sm:$0xff]
      %v1124 = vld [vmem:[#allocation2 + $0xae] sm:$0xff]
      %v1125 = vld [vmem:[#allocation2 + $0xb6] sm:$0xff]
      %v1126 = vld [vmem:[#allocation2 + $0xbe] sm:$0xff]
      %v1127 = vld [vmem:[#allocation2 + $0xc6] sm:$0xff]
      %v1128 = vld [vmem:[#allocation2 + $0xce] sm:$0xff]
      %v1129 = vld [vmem:[#allocation2 + $0xd6] sm:$0xff]
      %v1130 = vld [vmem:[#allocation2 + $0xde] sm:$0xff]
      %v1131 = vld [vmem:[#allocation2 + $0xe6] sm:$0xff]
      %v1132 = vld [vmem:[#allocation2 + $0xee] sm:$0xff]
      %v1133 = vld [vmem:[#allocation2 + $0xf6] sm:$0xff]
      %v1134 = vld [vmem:[#allocation2 + $0xfe] sm:$0xff]
      %v1135 = vld [vmem:[#allocation2 + $0x106] sm:$0xff]
      %v1136 = vld [vmem:[#allocation2 + $0x10e] sm:$0xff]
      %v1137 = vld [vmem:[#allocation2 + $0x116] sm:$0xff]
      %v1138 = vld [vmem:[#allocation2 + $0x11e] sm:$0xff]
      %v1139 = vld [vmem:[#allocation2 + $0x126] sm:$0xff]
      %v1140 = vld [vmem:[#allocation2 + $0x12e] sm:$0xff]
      %v1141 = vld [vmem:[#allocation2 + $0x136] sm:$0xff]
      %v1142 = vld [vmem:[#allocation2 + $0x13e] sm:$0xff]
      %v1143 = vld [vmem:[#allocation2 + $0x146] sm:$0xf]
      %s1144 = scalar_lea.vmem %s2, 64
      %v1145 = vld [vmem:[%s1144] sm:$0xff]
      %v1146 = vld [vmem:[%s1144 + $0x8] sm:$0xff]
      %v1147 = vld [vmem:[%s1144 + $0x10] sm:$0xff]
      %v1148 = vld [vmem:[%s1144 + $0x18] sm:$0xff]
      %v1149 = vld [vmem:[%s1144 + $0x20] sm:$0xff]
      %v1150 = vld [vmem:[%s1144 + $0x28] sm:$0xff]
      %v1151 = vld [vmem:[%s1144 + $0x30] sm:$0xff]
      %v1152 = vld [vmem:[%s1144 + $0x38] sm:$0xff]
      %v1154 = vsel %vm293, %v1103, 0
      %v1157 = vsel %vm293, %v1104, 0
      %v1160 = vsel %vm293, %v1105, 0
      %v1163 = vsel %vm293, %v1106, 0
      %v1166 = vsel %vm293, %v1107, 0
      %v1169 = vsel %vm293, %v1108, 0
      %v1172 = vsel %vm293, %v1109, 0
      %v1175 = vsel %vm293, %v1110, 0
      %v1178 = vsel %vm293, %v1111, 0
      %v1181 = vsel %vm293, %v1112, 0
      %v1184 = vsel %vm293, %v1113, 0
      %v1187 = vsel %vm293, %v1114, 0
      %v1190 = vsel %vm293, %v1115, 0
      %v1193 = vsel %vm293, %v1116, 0
      %v1196 = vsel %vm293, %v1117, 0
      %v1199 = vsel %vm293, %v1118, 0
      %v1202 = vsel %vm293, %v1119, 0
      %v1205 = vsel %vm293, %v1120, 0
      %v1208 = vsel %vm293, %v1121, 0
      %v1211 = vsel %vm293, %v1122, 0
      %v1214 = vsel %vm293, %v1123, 0
      %v1217 = vsel %vm293, %v1124, 0
      %v1220 = vsel %vm293, %v1125, 0
      %v1223 = vsel %vm293, %v1126, 0
      %v1226 = vsel %vm293, %v1127, 0
      %v1229 = vsel %vm293, %v1128, 0
      %v1232 = vsel %vm293, %v1129, 0
      %v1235 = vsel %vm293, %v1130, 0
      %v1238 = vsel %vm293, %v1131, 0
      %v1241 = vsel %vm293, %v1132, 0
      %v1244 = vsel %vm293, %v1133, 0
      %v1247 = vsel %vm293, %v1134, 0
      %v1250 = vsel %vm293, %v1135, 0
      %v1253 = vsel %vm293, %v1136, 0
      %v1256 = vsel %vm293, %v1137, 0
      %v1259 = vsel %vm293, %v1138, 0
      %v1262 = vsel %vm293, %v1139, 0
      %v1265 = vsel %vm293, %v1140, 0
      %v1268 = vsel %vm293, %v1141, 0
      %v1271 = vsel %vm293, %v1142, 0
      %v1274 = vsel %vm293, %v1143, 0
      %1276 = vmatprep.subr.mxu0 0.0
      %1277 = vmatpush1.msra.mxu0 0.0
      %1278 = vmatprep.subr.mxu0 0.0
      %1279 = vmatpush1.msra.mxu0 0.0
      %1280 = vmatprep.subr.mxu0 0.0
      %1281 = vmatpush1.msra.mxu0 0.0
      %1282 = vmatprep.subr.mxu0 0.0
      %1283 = vmatpush1.msra.mxu0 0.0
      %1284 = vmatprep.subr.mxu0 0.0
      %1285 = vmatpush1.msra.mxu0 0.0
      %1286 = vmatprep.subr.mxu0 0.0
      %1287 = vmatpush1.msra.mxu0 0.0
      %1288 = vmatprep.subr.mxu0 0.0
      %1289 = vmatpush1.msra.mxu0 0.0
      %1290 = vmatprep.subr.mxu0 0.0
      %1291 = vmatpush1.msra.mxu0 0.0
      %1292 = vmatprep.subr.mxu0 0.0
      %1293 = vmatpush1.msra.mxu0 %v1152
      %1294 = vmatprep.subr.mxu0 0.0
      %1295 = vmatpush1.msra.mxu0 %v1151
      %1296 = vmatprep.subr.mxu0 0.0
      %1297 = vmatpush1.msra.mxu0 %v1150
      %1298 = vmatprep.subr.mxu0 0.0
      %1299 = vmatpush1.msra.mxu0 %v1149
      %1300 = vmatprep.subr.mxu0 0.0
      %1301 = vmatpush1.msra.mxu0 %v1148
      %1302 = vmatprep.subr.mxu0 0.0
      %1303 = vmatpush1.msra.mxu0 %v1147
      %1304 = vmatprep.subr.mxu0 0.0
      %1305 = vmatpush1.msra.mxu0 %v1146
      %1306 = vmatprep.subr.mxu0 0.0
      %1307 = vmatpush1.msra.mxu0 %v1145
      %1308 = vmatprep.subr.mxu0 0.0
      %1309 = vmatpush2.msra.mxu0 0.0
      %1310 = vmatprep.subr.mxu0 0.0
      %1311 = vmatpush2.msra.mxu0 0.0
      %1312 = vmatprep.subr.mxu0 0.0
      %1313 = vmatpush2.msra.mxu0 0.0
      %1314 = vmatprep.subr.mxu0 0.0
      %1315 = vmatpush2.msra.mxu0 0.0
      %1316 = vmatprep.subr.mxu0 0.0
      %1317 = vmatpush2.msra.mxu0 0.0
      %1318 = vmatprep.subr.mxu0 0.0
      %1319 = vmatpush2.msra.mxu0 0.0
      %1320 = vmatprep.subr.mxu0 0.0
      %1321 = vmatpush2.msra.mxu0 0.0
      %1322 = vmatprep.subr.mxu0 0.0
      %1323 = vmatpush2.msra.mxu0 0.0
      %1324 = vmatprep.subr.mxu0 0.0
      %1325 = vmatpush2.msra.mxu0 0.0
      %1326 = vmatprep.subr.mxu0 0.0
      %1327 = vmatpush2.msra.mxu0 0.0
      %1328 = vmatprep.subr.mxu0 0.0
      %1329 = vmatpush2.msra.mxu0 0.0
      %1330 = vmatprep.subr.mxu0 0.0
      %1331 = vmatpush2.msra.mxu0 0.0
      %1332 = vmatprep.subr.mxu0 0.0
      %1333 = vmatpush2.msra.mxu0 0.0
      %1334 = vmatprep.subr.mxu0 0.0
      %1335 = vmatpush2.msra.mxu0 0.0
      %1336 = vmatprep.subr.mxu0 0.0
      %1337 = vmatpush2.msra.mxu0 0.0
      %1338 = vmatprep.subr.mxu0 0.0
      %1339 = vmatpush2.msra.mxu0 0.0
      %1340 = vmatprep.mubr.f32.mxu0 0.0
      %1341 = vmatmul.mubr.f32.gmra.mxu0 %v1154
      %v1342 = vpop.f32.mrf.mxu0
      %v1343 = vadd.f32 0.0, %v1342
      %v1344 = vpop.f32.mrf.mxu0
      %1345 = vmatprep.mubr.f32.mxu0 0.0
      %1346 = vmatmul.mubr.f32.gmra.mxu0 %v1157
      %v1347 = vpop.f32.mrf.mxu0
      %v1348 = vadd.f32 0.0, %v1347
      %v1349 = vpop.f32.mrf.mxu0
      %1350 = vmatprep.mubr.f32.mxu0 0.0
      %1351 = vmatmul.mubr.f32.gmra.mxu0 %v1160
      %v1352 = vpop.f32.mrf.mxu0
      %v1353 = vadd.f32 0.0, %v1352
      %v1354 = vpop.f32.mrf.mxu0
      %1355 = vmatprep.mubr.f32.mxu0 0.0
      %1356 = vmatmul.mubr.f32.gmra.mxu0 %v1163
      %v1357 = vpop.f32.mrf.mxu0
      %v1358 = vadd.f32 0.0, %v1357
      %v1359 = vpop.f32.mrf.mxu0
      %1360 = vmatprep.mubr.f32.mxu0 0.0
      %1361 = vmatmul.mubr.f32.gmra.mxu0 %v1166
      %v1362 = vpop.f32.mrf.mxu0
      %v1363 = vadd.f32 0.0, %v1362
      %v1364 = vpop.f32.mrf.mxu0
      %1365 = vmatprep.mubr.f32.mxu0 0.0
      %1366 = vmatmul.mubr.f32.gmra.mxu0 %v1169
      %v1367 = vpop.f32.mrf.mxu0
      %v1368 = vadd.f32 0.0, %v1367
      %v1369 = vpop.f32.mrf.mxu0
      %1370 = vmatprep.mubr.f32.mxu0 0.0
      %1371 = vmatmul.mubr.f32.gmra.mxu0 %v1172
      %v1372 = vpop.f32.mrf.mxu0
      %v1373 = vadd.f32 0.0, %v1372
      %v1374 = vpop.f32.mrf.mxu0
      %1375 = vmatprep.mubr.f32.mxu0 0.0
      %1376 = vmatmul.mubr.f32.gmra.mxu0 %v1175
      %v1377 = vpop.f32.mrf.mxu0
      %v1378 = vadd.f32 0.0, %v1377
      %v1379 = vpop.f32.mrf.mxu0
      %1380 = vmatprep.mubr.f32.mxu0 0.0
      %1381 = vmatmul.mubr.f32.gmra.mxu0 %v1178
      %v1382 = vpop.f32.mrf.mxu0
      %v1383 = vadd.f32 0.0, %v1382
      %v1384 = vpop.f32.mrf.mxu0
      %1385 = vmatprep.mubr.f32.mxu0 0.0
      %1386 = vmatmul.mubr.f32.gmra.mxu0 %v1181
      %v1387 = vpop.f32.mrf.mxu0
      %v1388 = vadd.f32 0.0, %v1387
      %v1389 = vpop.f32.mrf.mxu0
      %1390 = vmatprep.mubr.f32.mxu0 0.0
      %1391 = vmatmul.mubr.f32.gmra.mxu0 %v1184
      %v1392 = vpop.f32.mrf.mxu0
      %v1393 = vadd.f32 0.0, %v1392
      %v1394 = vpop.f32.mrf.mxu0
      %1395 = vmatprep.mubr.f32.mxu0 0.0
      %1396 = vmatmul.mubr.f32.gmra.mxu0 %v1187
      %v1397 = vpop.f32.mrf.mxu0
      %v1398 = vadd.f32 0.0, %v1397
      %v1399 = vpop.f32.mrf.mxu0
      %1400 = vmatprep.mubr.f32.mxu0 0.0
      %1401 = vmatmul.mubr.f32.gmra.mxu0 %v1190
      %v1402 = vpop.f32.mrf.mxu0
      %v1403 = vadd.f32 0.0, %v1402
      %v1404 = vpop.f32.mrf.mxu0
      %1405 = vmatprep.mubr.f32.mxu0 0.0
      %1406 = vmatmul.mubr.f32.gmra.mxu0 %v1193
      %v1407 = vpop.f32.mrf.mxu0
      %v1408 = vadd.f32 0.0, %v1407
      %v1409 = vpop.f32.mrf.mxu0
      %1410 = vmatprep.mubr.f32.mxu0 0.0
      %1411 = vmatmul.mubr.f32.gmra.mxu0 %v1196
      %v1412 = vpop.f32.mrf.mxu0
      %v1413 = vadd.f32 0.0, %v1412
      %v1414 = vpop.f32.mrf.mxu0
      %1415 = vmatprep.mubr.f32.mxu0 0.0
      %1416 = vmatmul.mubr.f32.gmra.mxu0 %v1199
      %v1417 = vpop.f32.mrf.mxu0
      %v1418 = vadd.f32 0.0, %v1417
      %v1419 = vpop.f32.mrf.mxu0
      %1420 = vmatprep.mubr.f32.mxu0 0.0
      %1421 = vmatmul.mubr.f32.gmra.mxu0 %v1202
      %v1422 = vpop.f32.mrf.mxu0
      %v1423 = vadd.f32 0.0, %v1422
      %v1424 = vpop.f32.mrf.mxu0
      %1425 = vmatprep.mubr.f32.mxu0 0.0
      %1426 = vmatmul.mubr.f32.gmra.mxu0 %v1205
      %v1427 = vpop.f32.mrf.mxu0
      %v1428 = vadd.f32 0.0, %v1427
      %v1429 = vpop.f32.mrf.mxu0
      %1430 = vmatprep.mubr.f32.mxu0 0.0
      %1431 = vmatmul.mubr.f32.gmra.mxu0 %v1208
      %v1432 = vpop.f32.mrf.mxu0
      %v1433 = vadd.f32 0.0, %v1432
      %v1434 = vpop.f32.mrf.mxu0
      %1435 = vmatprep.mubr.f32.mxu0 0.0
      %1436 = vmatmul.mubr.f32.gmra.mxu0 %v1211
      %v1437 = vpop.f32.mrf.mxu0
      %v1438 = vadd.f32 0.0, %v1437
      %v1439 = vpop.f32.mrf.mxu0
      %1440 = vmatprep.mubr.f32.mxu0 0.0
      %1441 = vmatmul.mubr.f32.gmra.mxu0 %v1214
      %v1442 = vpop.f32.mrf.mxu0
      %v1443 = vadd.f32 0.0, %v1442
      %v1444 = vpop.f32.mrf.mxu0
      %1445 = vmatprep.mubr.f32.mxu0 0.0
      %1446 = vmatmul.mubr.f32.gmra.mxu0 %v1217
      %v1447 = vpop.f32.mrf.mxu0
      %v1448 = vadd.f32 0.0, %v1447
      %v1449 = vpop.f32.mrf.mxu0
      %1450 = vmatprep.mubr.f32.mxu0 0.0
      %1451 = vmatmul.mubr.f32.gmra.mxu0 %v1220
      %v1452 = vpop.f32.mrf.mxu0
      %v1453 = vadd.f32 0.0, %v1452
      %v1454 = vpop.f32.mrf.mxu0
      %1455 = vmatprep.mubr.f32.mxu0 0.0
      %1456 = vmatmul.mubr.f32.gmra.mxu0 %v1223
      %v1457 = vpop.f32.mrf.mxu0
      %v1458 = vadd.f32 0.0, %v1457
      %v1459 = vpop.f32.mrf.mxu0
      %1460 = vmatprep.mubr.f32.mxu0 0.0
      %1461 = vmatmul.mubr.f32.gmra.mxu0 %v1226
      %v1462 = vpop.f32.mrf.mxu0
      %v1463 = vadd.f32 0.0, %v1462
      %v1464 = vpop.f32.mrf.mxu0
      %1465 = vmatprep.mubr.f32.mxu0 0.0
      %1466 = vmatmul.mubr.f32.gmra.mxu0 %v1229
      %v1467 = vpop.f32.mrf.mxu0
      %v1468 = vadd.f32 0.0, %v1467
      %v1469 = vpop.f32.mrf.mxu0
      %1470 = vmatprep.mubr.f32.mxu0 0.0
      %1471 = vmatmul.mubr.f32.gmra.mxu0 %v1232
      %v1472 = vpop.f32.mrf.mxu0
      %v1473 = vadd.f32 0.0, %v1472
      %v1474 = vpop.f32.mrf.mxu0
      %1475 = vmatprep.mubr.f32.mxu0 0.0
      %1476 = vmatmul.mubr.f32.gmra.mxu0 %v1235
      %v1477 = vpop.f32.mrf.mxu0
      %v1478 = vadd.f32 0.0, %v1477
      %v1479 = vpop.f32.mrf.mxu0
      %1480 = vmatprep.mubr.f32.mxu0 0.0
      %1481 = vmatmul.mubr.f32.gmra.mxu0 %v1238
      %v1482 = vpop.f32.mrf.mxu0
      %v1483 = vadd.f32 0.0, %v1482
      %v1484 = vpop.f32.mrf.mxu0
      %1485 = vmatprep.mubr.f32.mxu0 0.0
      %1486 = vmatmul.mubr.f32.gmra.mxu0 %v1241
      %v1487 = vpop.f32.mrf.mxu0
      %v1488 = vadd.f32 0.0, %v1487
      %v1489 = vpop.f32.mrf.mxu0
      %1490 = vmatprep.mubr.f32.mxu0 0.0
      %1491 = vmatmul.mubr.f32.gmra.mxu0 %v1244
      %v1492 = vpop.f32.mrf.mxu0
      %v1493 = vadd.f32 0.0, %v1492
      %v1494 = vpop.f32.mrf.mxu0
      %1495 = vmatprep.mubr.f32.mxu0 0.0
      %1496 = vmatmul.mubr.f32.gmra.mxu0 %v1247
      %v1497 = vpop.f32.mrf.mxu0
      %v1498 = vadd.f32 0.0, %v1497
      %v1499 = vpop.f32.mrf.mxu0
      %1500 = vmatprep.mubr.f32.mxu0 0.0
      %1501 = vmatmul.mubr.f32.gmra.mxu0 %v1250
      %v1502 = vpop.f32.mrf.mxu0
      %v1503 = vadd.f32 0.0, %v1502
      %v1504 = vpop.f32.mrf.mxu0
      %1505 = vmatprep.mubr.f32.mxu0 0.0
      %1506 = vmatmul.mubr.f32.gmra.mxu0 %v1253
      %v1507 = vpop.f32.mrf.mxu0
      %v1508 = vadd.f32 0.0, %v1507
      %v1509 = vpop.f32.mrf.mxu0
      %1510 = vmatprep.mubr.f32.mxu0 0.0
      %1511 = vmatmul.mubr.f32.gmra.mxu0 %v1256
      %v1512 = vpop.f32.mrf.mxu0
      %v1513 = vadd.f32 0.0, %v1512
      %v1514 = vpop.f32.mrf.mxu0
      %1515 = vmatprep.mubr.f32.mxu0 0.0
      %1516 = vmatmul.mubr.f32.gmra.mxu0 %v1259
      %v1517 = vpop.f32.mrf.mxu0
      %v1518 = vadd.f32 0.0, %v1517
      %v1519 = vpop.f32.mrf.mxu0
      %1520 = vmatprep.mubr.f32.mxu0 0.0
      %1521 = vmatmul.mubr.f32.gmra.mxu0 %v1262
      %v1522 = vpop.f32.mrf.mxu0
      %v1523 = vadd.f32 0.0, %v1522
      %v1524 = vpop.f32.mrf.mxu0
      %1525 = vmatprep.mubr.f32.mxu0 0.0
      %1526 = vmatmul.mubr.f32.gmra.mxu0 %v1265
      %v1527 = vpop.f32.mrf.mxu0
      %v1528 = vadd.f32 0.0, %v1527
      %v1529 = vpop.f32.mrf.mxu0
      %1530 = vmatprep.mubr.f32.mxu0 0.0
      %1531 = vmatmul.mubr.f32.gmra.mxu0 %v1268
      %v1532 = vpop.f32.mrf.mxu0
      %v1533 = vadd.f32 0.0, %v1532
      %v1534 = vpop.f32.mrf.mxu0
      %1535 = vmatprep.mubr.f32.mxu0 0.0
      %1536 = vmatmul.mubr.f32.gmra.mxu0 %v1271
      %v1537 = vpop.f32.mrf.mxu0
      %v1538 = vadd.f32 0.0, %v1537
      %v1539 = vpop.f32.mrf.mxu0
      %1540 = vmatprep.mubr.f32.mxu0 0.0
      %1541 = vmatmul.mubr.f32.gmra.mxu0 %v1274
      %v1542 = vpop.f32.mrf.mxu0
      %v1543 = vadd.f32 0.0, %v1542
      %v1544 = vpop.f32.mrf.mxu0
      %1545 = vdwg.mxu0
      %v1547 = vsel %vm293, %v1054, 0
      %v1550 = vsel %vm293, %v1055, 0
      %v1553 = vsel %vm293, %v1056, 0
      %v1556 = vsel %vm293, %v1057, 0
      %v1559 = vsel %vm293, %v1058, 0
      %v1562 = vsel %vm293, %v1059, 0
      %v1565 = vsel %vm293, %v1060, 0
      %v1568 = vsel %vm293, %v1061, 0
      %v1571 = vsel %vm293, %v1062, 0
      %v1574 = vsel %vm293, %v1063, 0
      %v1577 = vsel %vm293, %v1064, 0
      %v1580 = vsel %vm293, %v1065, 0
      %v1583 = vsel %vm293, %v1066, 0
      %v1586 = vsel %vm293, %v1067, 0
      %v1589 = vsel %vm293, %v1068, 0
      %v1592 = vsel %vm293, %v1069, 0
      %v1595 = vsel %vm293, %v1070, 0
      %v1598 = vsel %vm293, %v1071, 0
      %v1601 = vsel %vm293, %v1072, 0
      %v1604 = vsel %vm293, %v1073, 0
      %v1607 = vsel %vm293, %v1074, 0
      %v1610 = vsel %vm293, %v1075, 0
      %v1613 = vsel %vm293, %v1076, 0
      %v1616 = vsel %vm293, %v1077, 0
      %v1619 = vsel %vm293, %v1078, 0
      %v1622 = vsel %vm293, %v1079, 0
      %v1625 = vsel %vm293, %v1080, 0
      %v1628 = vsel %vm293, %v1081, 0
      %v1631 = vsel %vm293, %v1082, 0
      %v1634 = vsel %vm293, %v1083, 0
      %v1637 = vsel %vm293, %v1084, 0
      %v1640 = vsel %vm293, %v1085, 0
      %v1643 = vsel %vm293, %v1086, 0
      %v1646 = vsel %vm293, %v1087, 0
      %v1649 = vsel %vm293, %v1088, 0
      %v1652 = vsel %vm293, %v1089, 0
      %v1655 = vsel %vm293, %v1090, 0
      %v1658 = vsel %vm293, %v1091, 0
      %v1661 = vsel %vm293, %v1092, 0
      %v1664 = vsel %vm293, %v1093, 0
      %v1667 = vsel %vm293, %v1094, 0
      %1669 = vmatprep.subr.mxu0 0.0
      %1670 = vmatpush1.msra.mxu0 0.0
      %1671 = vmatprep.subr.mxu0 0.0
      %1672 = vmatpush1.msra.mxu0 0.0
      %1673 = vmatprep.subr.mxu0 0.0
      %1674 = vmatpush1.msra.mxu0 0.0
      %1675 = vmatprep.subr.mxu0 0.0
      %1676 = vmatpush1.msra.mxu0 0.0
      %1677 = vmatprep.subr.mxu0 0.0
      %1678 = vmatpush1.msra.mxu0 0.0
      %1679 = vmatprep.subr.mxu0 0.0
      %1680 = vmatpush1.msra.mxu0 0.0
      %1681 = vmatprep.subr.mxu0 0.0
      %1682 = vmatpush1.msra.mxu0 0.0
      %1683 = vmatprep.subr.mxu0 0.0
      %1684 = vmatpush1.msra.mxu0 0.0
      %1685 = vmatprep.subr.mxu0 0.0
      %1686 = vmatpush1.msra.mxu0 %v1102
      %1687 = vmatprep.subr.mxu0 0.0
      %1688 = vmatpush1.msra.mxu0 %v1101
      %1689 = vmatprep.subr.mxu0 0.0
      %1690 = vmatpush1.msra.mxu0 %v1100
      %1691 = vmatprep.subr.mxu0 0.0
      %1692 = vmatpush1.msra.mxu0 %v1099
      %1693 = vmatprep.subr.mxu0 0.0
      %1694 = vmatpush1.msra.mxu0 %v1098
      %1695 = vmatprep.subr.mxu0 0.0
      %1696 = vmatpush1.msra.mxu0 %v1097
      %1697 = vmatprep.subr.mxu0 0.0
      %1698 = vmatpush1.msra.mxu0 %v1096
      %1699 = vmatprep.subr.mxu0 0.0
      %1700 = vmatpush1.msra.mxu0 %v1095
      %1701 = vmatprep.subr.mxu0 0.0
      %1702 = vmatpush2.msra.mxu0 0.0
      %1703 = vmatprep.subr.mxu0 0.0
      %1704 = vmatpush2.msra.mxu0 0.0
      %1705 = vmatprep.subr.mxu0 0.0
      %1706 = vmatpush2.msra.mxu0 0.0
      %1707 = vmatprep.subr.mxu0 0.0
      %1708 = vmatpush2.msra.mxu0 0.0
      %1709 = vmatprep.subr.mxu0 0.0
      %1710 = vmatpush2.msra.mxu0 0.0
      %1711 = vmatprep.subr.mxu0 0.0
      %1712 = vmatpush2.msra.mxu0 0.0
      %1713 = vmatprep.subr.mxu0 0.0
      %1714 = vmatpush2.msra.mxu0 0.0
      %1715 = vmatprep.subr.mxu0 0.0
      %1716 = vmatpush2.msra.mxu0 0.0
      %1717 = vmatprep.subr.mxu0 0.0
      %1718 = vmatpush2.msra.mxu0 0.0
      %1719 = vmatprep.subr.mxu0 0.0
      %1720 = vmatpush2.msra.mxu0 0.0
      %1721 = vmatprep.subr.mxu0 0.0
      %1722 = vmatpush2.msra.mxu0 0.0
      %1723 = vmatprep.subr.mxu0 0.0
      %1724 = vmatpush2.msra.mxu0 0.0
      %1725 = vmatprep.subr.mxu0 0.0
      %1726 = vmatpush2.msra.mxu0 0.0
      %1727 = vmatprep.subr.mxu0 0.0
      %1728 = vmatpush2.msra.mxu0 0.0
      %1729 = vmatprep.subr.mxu0 0.0
      %1730 = vmatpush2.msra.mxu0 0.0
      %1731 = vmatprep.subr.mxu0 0.0
      %1732 = vmatpush2.msra.mxu0 0.0
      %1733 = vmatprep.mubr.f32.mxu0 0.0
      %1734 = vmatmul.mubr.f32.gmra.mxu0 %v1547
      %v1735 = vpop.f32.mrf.mxu0
      %v1736 = vadd.f32 %v1343, %v1735
      %v1737 = vpop.f32.mrf.mxu0
      %1738 = vmatprep.mubr.f32.mxu0 0.0
      %1739 = vmatmul.mubr.f32.gmra.mxu0 %v1550
      %v1740 = vpop.f32.mrf.mxu0
      %v1741 = vadd.f32 %v1348, %v1740
      %v1742 = vpop.f32.mrf.mxu0
      %1743 = vmatprep.mubr.f32.mxu0 0.0
      %1744 = vmatmul.mubr.f32.gmra.mxu0 %v1553
      %v1745 = vpop.f32.mrf.mxu0
      %v1746 = vadd.f32 %v1353, %v1745
      %v1747 = vpop.f32.mrf.mxu0
      %1748 = vmatprep.mubr.f32.mxu0 0.0
      %1749 = vmatmul.mubr.f32.gmra.mxu0 %v1556
      %v1750 = vpop.f32.mrf.mxu0
      %v1751 = vadd.f32 %v1358, %v1750
      %v1752 = vpop.f32.mrf.mxu0
      %1753 = vmatprep.mubr.f32.mxu0 0.0
      %1754 = vmatmul.mubr.f32.gmra.mxu0 %v1559
      %v1755 = vpop.f32.mrf.mxu0
      %v1756 = vadd.f32 %v1363, %v1755
      %v1757 = vpop.f32.mrf.mxu0
      %1758 = vmatprep.mubr.f32.mxu0 0.0
      %1759 = vmatmul.mubr.f32.gmra.mxu0 %v1562
      %v1760 = vpop.f32.mrf.mxu0
      %v1761 = vadd.f32 %v1368, %v1760
      %v1762 = vpop.f32.mrf.mxu0
      %1763 = vmatprep.mubr.f32.mxu0 0.0
      %1764 = vmatmul.mubr.f32.gmra.mxu0 %v1565
      %v1765 = vpop.f32.mrf.mxu0
      %v1766 = vadd.f32 %v1373, %v1765
      %v1767 = vpop.f32.mrf.mxu0
      %1768 = vmatprep.mubr.f32.mxu0 0.0
      %1769 = vmatmul.mubr.f32.gmra.mxu0 %v1568
      %v1770 = vpop.f32.mrf.mxu0
      %v1771 = vadd.f32 %v1378, %v1770
      %v1772 = vpop.f32.mrf.mxu0
      %1773 = vmatprep.mubr.f32.mxu0 0.0
      %1774 = vmatmul.mubr.f32.gmra.mxu0 %v1571
      %v1775 = vpop.f32.mrf.mxu0
      %v1776 = vadd.f32 %v1383, %v1775
      %v1777 = vpop.f32.mrf.mxu0
      %1778 = vmatprep.mubr.f32.mxu0 0.0
      %1779 = vmatmul.mubr.f32.gmra.mxu0 %v1574
      %v1780 = vpop.f32.mrf.mxu0
      %v1781 = vadd.f32 %v1388, %v1780
      %v1782 = vpop.f32.mrf.mxu0
      %1783 = vmatprep.mubr.f32.mxu0 0.0
      %1784 = vmatmul.mubr.f32.gmra.mxu0 %v1577
      %v1785 = vpop.f32.mrf.mxu0
      %v1786 = vadd.f32 %v1393, %v1785
      %v1787 = vpop.f32.mrf.mxu0
      %1788 = vmatprep.mubr.f32.mxu0 0.0
      %1789 = vmatmul.mubr.f32.gmra.mxu0 %v1580
      %v1790 = vpop.f32.mrf.mxu0
      %v1791 = vadd.f32 %v1398, %v1790
      %v1792 = vpop.f32.mrf.mxu0
      %1793 = vmatprep.mubr.f32.mxu0 0.0
      %1794 = vmatmul.mubr.f32.gmra.mxu0 %v1583
      %v1795 = vpop.f32.mrf.mxu0
      %v1796 = vadd.f32 %v1403, %v1795
      %v1797 = vpop.f32.mrf.mxu0
      %1798 = vmatprep.mubr.f32.mxu0 0.0
      %1799 = vmatmul.mubr.f32.gmra.mxu0 %v1586
      %v1800 = vpop.f32.mrf.mxu0
      %v1801 = vadd.f32 %v1408, %v1800
      %v1802 = vpop.f32.mrf.mxu0
      %1803 = vmatprep.mubr.f32.mxu0 0.0
      %1804 = vmatmul.mubr.f32.gmra.mxu0 %v1589
      %v1805 = vpop.f32.mrf.mxu0
      %v1806 = vadd.f32 %v1413, %v1805
      %v1807 = vpop.f32.mrf.mxu0
      %1808 = vmatprep.mubr.f32.mxu0 0.0
      %1809 = vmatmul.mubr.f32.gmra.mxu0 %v1592
      %v1810 = vpop.f32.mrf.mxu0
      %v1811 = vadd.f32 %v1418, %v1810
      %v1812 = vpop.f32.mrf.mxu0
      %1813 = vmatprep.mubr.f32.mxu0 0.0
      %1814 = vmatmul.mubr.f32.gmra.mxu0 %v1595
      %v1815 = vpop.f32.mrf.mxu0
      %v1816 = vadd.f32 %v1423, %v1815
      %v1817 = vpop.f32.mrf.mxu0
      %1818 = vmatprep.mubr.f32.mxu0 0.0
      %1819 = vmatmul.mubr.f32.gmra.mxu0 %v1598
      %v1820 = vpop.f32.mrf.mxu0
      %v1821 = vadd.f32 %v1428, %v1820
      %v1822 = vpop.f32.mrf.mxu0
      %1823 = vmatprep.mubr.f32.mxu0 0.0
      %1824 = vmatmul.mubr.f32.gmra.mxu0 %v1601
      %v1825 = vpop.f32.mrf.mxu0
      %v1826 = vadd.f32 %v1433, %v1825
      %v1827 = vpop.f32.mrf.mxu0
      %1828 = vmatprep.mubr.f32.mxu0 0.0
      %1829 = vmatmul.mubr.f32.gmra.mxu0 %v1604
      %v1830 = vpop.f32.mrf.mxu0
      %v1831 = vadd.f32 %v1438, %v1830
      %v1832 = vpop.f32.mrf.mxu0
      %1833 = vmatprep.mubr.f32.mxu0 0.0
      %1834 = vmatmul.mubr.f32.gmra.mxu0 %v1607
      %v1835 = vpop.f32.mrf.mxu0
      %v1836 = vadd.f32 %v1443, %v1835
      %v1837 = vpop.f32.mrf.mxu0
      %1838 = vmatprep.mubr.f32.mxu0 0.0
      %1839 = vmatmul.mubr.f32.gmra.mxu0 %v1610
      %v1840 = vpop.f32.mrf.mxu0
      %v1841 = vadd.f32 %v1448, %v1840
      %v1842 = vpop.f32.mrf.mxu0
      %1843 = vmatprep.mubr.f32.mxu0 0.0
      %1844 = vmatmul.mubr.f32.gmra.mxu0 %v1613
      %v1845 = vpop.f32.mrf.mxu0
      %v1846 = vadd.f32 %v1453, %v1845
      %v1847 = vpop.f32.mrf.mxu0
      %1848 = vmatprep.mubr.f32.mxu0 0.0
      %1849 = vmatmul.mubr.f32.gmra.mxu0 %v1616
      %v1850 = vpop.f32.mrf.mxu0
      %v1851 = vadd.f32 %v1458, %v1850
      %v1852 = vpop.f32.mrf.mxu0
      %1853 = vmatprep.mubr.f32.mxu0 0.0
      %1854 = vmatmul.mubr.f32.gmra.mxu0 %v1619
      %v1855 = vpop.f32.mrf.mxu0
      %v1856 = vadd.f32 %v1463, %v1855
      %v1857 = vpop.f32.mrf.mxu0
      %1858 = vmatprep.mubr.f32.mxu0 0.0
      %1859 = vmatmul.mubr.f32.gmra.mxu0 %v1622
      %v1860 = vpop.f32.mrf.mxu0
      %v1861 = vadd.f32 %v1468, %v1860
      %v1862 = vpop.f32.mrf.mxu0
      %1863 = vmatprep.mubr.f32.mxu0 0.0
      %1864 = vmatmul.mubr.f32.gmra.mxu0 %v1625
      %v1865 = vpop.f32.mrf.mxu0
      %v1866 = vadd.f32 %v1473, %v1865
      %v1867 = vpop.f32.mrf.mxu0
      %1868 = vmatprep.mubr.f32.mxu0 0.0
      %1869 = vmatmul.mubr.f32.gmra.mxu0 %v1628
      %v1870 = vpop.f32.mrf.mxu0
      %v1871 = vadd.f32 %v1478, %v1870
      %v1872 = vpop.f32.mrf.mxu0
      %1873 = vmatprep.mubr.f32.mxu0 0.0
      %1874 = vmatmul.mubr.f32.gmra.mxu0 %v1631
      %v1875 = vpop.f32.mrf.mxu0
      %v1876 = vadd.f32 %v1483, %v1875
      %v1877 = vpop.f32.mrf.mxu0
      %1878 = vmatprep.mubr.f32.mxu0 0.0
      %1879 = vmatmul.mubr.f32.gmra.mxu0 %v1634
      %v1880 = vpop.f32.mrf.mxu0
      %v1881 = vadd.f32 %v1488, %v1880
      %v1882 = vpop.f32.mrf.mxu0
      %1883 = vmatprep.mubr.f32.mxu0 0.0
      %1884 = vmatmul.mubr.f32.gmra.mxu0 %v1637
      %v1885 = vpop.f32.mrf.mxu0
      %v1886 = vadd.f32 %v1493, %v1885
      %v1887 = vpop.f32.mrf.mxu0
      %1888 = vmatprep.mubr.f32.mxu0 0.0
      %1889 = vmatmul.mubr.f32.gmra.mxu0 %v1640
      %v1890 = vpop.f32.mrf.mxu0
      %v1891 = vadd.f32 %v1498, %v1890
      %v1892 = vpop.f32.mrf.mxu0
      %1893 = vmatprep.mubr.f32.mxu0 0.0
      %1894 = vmatmul.mubr.f32.gmra.mxu0 %v1643
      %v1895 = vpop.f32.mrf.mxu0
      %v1896 = vadd.f32 %v1503, %v1895
      %v1897 = vpop.f32.mrf.mxu0
      %1898 = vmatprep.mubr.f32.mxu0 0.0
      %1899 = vmatmul.mubr.f32.gmra.mxu0 %v1646
      %v1900 = vpop.f32.mrf.mxu0
      %v1901 = vadd.f32 %v1508, %v1900
      %v1902 = vpop.f32.mrf.mxu0
      %1903 = vmatprep.mubr.f32.mxu0 0.0
      %1904 = vmatmul.mubr.f32.gmra.mxu0 %v1649
      %v1905 = vpop.f32.mrf.mxu0
      %v1906 = vadd.f32 %v1513, %v1905
      %v1907 = vpop.f32.mrf.mxu0
      %1908 = vmatprep.mubr.f32.mxu0 0.0
      %1909 = vmatmul.mubr.f32.gmra.mxu0 %v1652
      %v1910 = vpop.f32.mrf.mxu0
      %v1911 = vadd.f32 %v1518, %v1910
      %v1912 = vpop.f32.mrf.mxu0
      %1913 = vmatprep.mubr.f32.mxu0 0.0
      %1914 = vmatmul.mubr.f32.gmra.mxu0 %v1655
      %v1915 = vpop.f32.mrf.mxu0
      %v1916 = vadd.f32 %v1523, %v1915
      %v1917 = vpop.f32.mrf.mxu0
      %1918 = vmatprep.mubr.f32.mxu0 0.0
      %1919 = vmatmul.mubr.f32.gmra.mxu0 %v1658
      %v1920 = vpop.f32.mrf.mxu0
      %v1921 = vadd.f32 %v1528, %v1920
      %v1922 = vpop.f32.mrf.mxu0
      %1923 = vmatprep.mubr.f32.mxu0 0.0
      %1924 = vmatmul.mubr.f32.gmra.mxu0 %v1661
      %v1925 = vpop.f32.mrf.mxu0
      %v1926 = vadd.f32 %v1533, %v1925
      %v1927 = vpop.f32.mrf.mxu0
      %1928 = vmatprep.mubr.f32.mxu0 0.0
      %1929 = vmatmul.mubr.f32.gmra.mxu0 %v1664
      %v1930 = vpop.f32.mrf.mxu0
      %v1931 = vadd.f32 %v1538, %v1930
      %v1932 = vpop.f32.mrf.mxu0
      %1933 = vmatprep.mubr.f32.mxu0 0.0
      %1934 = vmatmul.mubr.f32.gmra.mxu0 %v1667
      %v1935 = vpop.f32.mrf.mxu0
      %v1936 = vadd.f32 %v1543, %v1935
      %v1937 = vpop.f32.mrf.mxu0
      %1938 = vdwg.mxu0
      %v1939 = vld [vmem:[#allocation2 + $0x7] sm:$0xff]
      %v1940 = vld [vmem:[#allocation2 + $0xf] sm:$0xff]
      %v1941 = vld [vmem:[#allocation2 + $0x17] sm:$0xff]
      %v1942 = vld [vmem:[#allocation2 + $0x1f] sm:$0xff]
      %v1943 = vld [vmem:[#allocation2 + $0x27] sm:$0xff]
      %v1944 = vld [vmem:[#allocation2 + $0x2f] sm:$0xff]
      %v1945 = vld [vmem:[#allocation2 + $0x37] sm:$0xff]
      %v1946 = vld [vmem:[#allocation2 + $0x3f] sm:$0xff]
      %v1947 = vld [vmem:[#allocation2 + $0x47] sm:$0xff]
      %v1948 = vld [vmem:[#allocation2 + $0x4f] sm:$0xff]
      %v1949 = vld [vmem:[#allocation2 + $0x57] sm:$0xff]
      %v1950 = vld [vmem:[#allocation2 + $0x5f] sm:$0xff]
      %v1951 = vld [vmem:[#allocation2 + $0x67] sm:$0xff]
      %v1952 = vld [vmem:[#allocation2 + $0x6f] sm:$0xff]
      %v1953 = vld [vmem:[#allocation2 + $0x77] sm:$0xff]
      %v1954 = vld [vmem:[#allocation2 + $0x7f] sm:$0xff]
      %v1955 = vld [vmem:[#allocation2 + $0x87] sm:$0xff]
      %v1956 = vld [vmem:[#allocation2 + $0x8f] sm:$0xff]
      %v1957 = vld [vmem:[#allocation2 + $0x97] sm:$0xff]
      %v1958 = vld [vmem:[#allocation2 + $0x9f] sm:$0xff]
      %v1959 = vld [vmem:[#allocation2 + $0xa7] sm:$0xff]
      %v1960 = vld [vmem:[#allocation2 + $0xaf] sm:$0xff]
      %v1961 = vld [vmem:[#allocation2 + $0xb7] sm:$0xff]
      %v1962 = vld [vmem:[#allocation2 + $0xbf] sm:$0xff]
      %v1963 = vld [vmem:[#allocation2 + $0xc7] sm:$0xff]
      %v1964 = vld [vmem:[#allocation2 + $0xcf] sm:$0xff]
      %v1965 = vld [vmem:[#allocation2 + $0xd7] sm:$0xff]
      %v1966 = vld [vmem:[#allocation2 + $0xdf] sm:$0xff]
      %v1967 = vld [vmem:[#allocation2 + $0xe7] sm:$0xff]
      %v1968 = vld [vmem:[#allocation2 + $0xef] sm:$0xff]
      %v1969 = vld [vmem:[#allocation2 + $0xf7] sm:$0xff]
      %v1970 = vld [vmem:[#allocation2 + $0xff] sm:$0xff]
      %v1971 = vld [vmem:[#allocation2 + $0x107] sm:$0xff]
      %v1972 = vld [vmem:[#allocation2 + $0x10f] sm:$0xff]
      %v1973 = vld [vmem:[#allocation2 + $0x117] sm:$0xff]
      %v1974 = vld [vmem:[#allocation2 + $0x11f] sm:$0xff]
      %v1975 = vld [vmem:[#allocation2 + $0x127] sm:$0xff]
      %v1976 = vld [vmem:[#allocation2 + $0x12f] sm:$0xff]
      %v1977 = vld [vmem:[#allocation2 + $0x137] sm:$0xff]
      %v1978 = vld [vmem:[#allocation2 + $0x13f] sm:$0xff]
      %v1979 = vld [vmem:[#allocation2 + $0x147] sm:$0xf]
      %s1980 = scalar_lea.vmem %s2, 128
      %v1981 = vld [vmem:[%s1980] sm:$0xff]
      %v1982 = vld [vmem:[%s1980 + $0x8] sm:$0xff]
      %v1983 = vld [vmem:[%s1980 + $0x10] sm:$0xff]
      %v1984 = vld [vmem:[%s1980 + $0x18] sm:$0xff]
      %v1985 = vld [vmem:[%s1980 + $0x20] sm:$0xff]
      %v1986 = vld [vmem:[%s1980 + $0x28] sm:$0xff]
      %v1987 = vld [vmem:[%s1980 + $0x30] sm:$0xff]
      %v1988 = vld [vmem:[%s1980 + $0x38] sm:$0xff]
      %v1990 = vsel %vm293, %v1939, 0
      %v1993 = vsel %vm293, %v1940, 0
      %v1996 = vsel %vm293, %v1941, 0
      %v1999 = vsel %vm293, %v1942, 0
      %v2002 = vsel %vm293, %v1943, 0
      %v2005 = vsel %vm293, %v1944, 0
      %v2008 = vsel %vm293, %v1945, 0
      %v2011 = vsel %vm293, %v1946, 0
      %v2014 = vsel %vm293, %v1947, 0
      %v2017 = vsel %vm293, %v1948, 0
      %v2020 = vsel %vm293, %v1949, 0
      %v2023 = vsel %vm293, %v1950, 0
      %v2026 = vsel %vm293, %v1951, 0
      %v2029 = vsel %vm293, %v1952, 0
      %v2032 = vsel %vm293, %v1953, 0
      %v2035 = vsel %vm293, %v1954, 0
      %v2038 = vsel %vm293, %v1955, 0
      %v2041 = vsel %vm293, %v1956, 0
      %v2044 = vsel %vm293, %v1957, 0
      %v2047 = vsel %vm293, %v1958, 0
      %v2050 = vsel %vm293, %v1959, 0
      %v2053 = vsel %vm293, %v1960, 0
      %v2056 = vsel %vm293, %v1961, 0
      %v2059 = vsel %vm293, %v1962, 0
      %v2062 = vsel %vm293, %v1963, 0
      %v2065 = vsel %vm293, %v1964, 0
      %v2068 = vsel %vm293, %v1965, 0
      %v2071 = vsel %vm293, %v1966, 0
      %v2074 = vsel %vm293, %v1967, 0
      %v2077 = vsel %vm293, %v1968, 0
      %v2080 = vsel %vm293, %v1969, 0
      %v2083 = vsel %vm293, %v1970, 0
      %v2086 = vsel %vm293, %v1971, 0
      %v2089 = vsel %vm293, %v1972, 0
      %v2092 = vsel %vm293, %v1973, 0
      %v2095 = vsel %vm293, %v1974, 0
      %v2098 = vsel %vm293, %v1975, 0
      %v2101 = vsel %vm293, %v1976, 0
      %v2104 = vsel %vm293, %v1977, 0
      %v2107 = vsel %vm293, %v1978, 0
      %v2110 = vsel %vm293, %v1979, 0
      %2112 = vmatprep.subr.mxu0 0.0
      %2113 = vmatpush1.msra.mxu0 0.0
      %2114 = vmatprep.subr.mxu0 0.0
      %2115 = vmatpush1.msra.mxu0 0.0
      %2116 = vmatprep.subr.mxu0 0.0
      %2117 = vmatpush1.msra.mxu0 0.0
      %2118 = vmatprep.subr.mxu0 0.0
      %2119 = vmatpush1.msra.mxu0 0.0
      %2120 = vmatprep.subr.mxu0 0.0
      %2121 = vmatpush1.msra.mxu0 0.0
      %2122 = vmatprep.subr.mxu0 0.0
      %2123 = vmatpush1.msra.mxu0 0.0
      %2124 = vmatprep.subr.mxu0 0.0
      %2125 = vmatpush1.msra.mxu0 0.0
      %2126 = vmatprep.subr.mxu0 0.0
      %2127 = vmatpush1.msra.mxu0 0.0
      %2128 = vmatprep.subr.mxu0 0.0
      %2129 = vmatpush1.msra.mxu0 %v1988
      %2130 = vmatprep.subr.mxu0 0.0
      %2131 = vmatpush1.msra.mxu0 %v1987
      %2132 = vmatprep.subr.mxu0 0.0
      %2133 = vmatpush1.msra.mxu0 %v1986
      %2134 = vmatprep.subr.mxu0 0.0
      %2135 = vmatpush1.msra.mxu0 %v1985
      %2136 = vmatprep.subr.mxu0 0.0
      %2137 = vmatpush1.msra.mxu0 %v1984
      %2138 = vmatprep.subr.mxu0 0.0
      %2139 = vmatpush1.msra.mxu0 %v1983
      %2140 = vmatprep.subr.mxu0 0.0
      %2141 = vmatpush1.msra.mxu0 %v1982
      %2142 = vmatprep.subr.mxu0 0.0
      %2143 = vmatpush1.msra.mxu0 %v1981
      %2144 = vmatprep.subr.mxu0 0.0
      %2145 = vmatpush2.msra.mxu0 0.0
      %2146 = vmatprep.subr.mxu0 0.0
      %2147 = vmatpush2.msra.mxu0 0.0
      %2148 = vmatprep.subr.mxu0 0.0
      %2149 = vmatpush2.msra.mxu0 0.0
      %2150 = vmatprep.subr.mxu0 0.0
      %2151 = vmatpush2.msra.mxu0 0.0
      %2152 = vmatprep.subr.mxu0 0.0
      %2153 = vmatpush2.msra.mxu0 0.0
      %2154 = vmatprep.subr.mxu0 0.0
      %2155 = vmatpush2.msra.mxu0 0.0
      %2156 = vmatprep.subr.mxu0 0.0
      %2157 = vmatpush2.msra.mxu0 0.0
      %2158 = vmatprep.subr.mxu0 0.0
      %2159 = vmatpush2.msra.mxu0 0.0
      %2160 = vmatprep.subr.mxu0 0.0
      %2161 = vmatpush2.msra.mxu0 0.0
      %2162 = vmatprep.subr.mxu0 0.0
      %2163 = vmatpush2.msra.mxu0 0.0
      %2164 = vmatprep.subr.mxu0 0.0
      %2165 = vmatpush2.msra.mxu0 0.0
      %2166 = vmatprep.subr.mxu0 0.0
      %2167 = vmatpush2.msra.mxu0 0.0
      %2168 = vmatprep.subr.mxu0 0.0
      %2169 = vmatpush2.msra.mxu0 0.0
      %2170 = vmatprep.subr.mxu0 0.0
      %2171 = vmatpush2.msra.mxu0 0.0
      %2172 = vmatprep.subr.mxu0 0.0
      %2173 = vmatpush2.msra.mxu0 0.0
      %2174 = vmatprep.subr.mxu0 0.0
      %2175 = vmatpush2.msra.mxu0 0.0
      %2176 = vmatprep.mubr.f32.mxu0 0.0
      %2177 = vmatmul.mubr.f32.gmra.mxu0 %v1990
      %v2178 = vpop.f32.mrf.mxu0
      %v2179 = vadd.f32 0.0, %v2178
      %v2180 = vpop.f32.mrf.mxu0
      %2181 = vmatprep.mubr.f32.mxu0 0.0
      %2182 = vmatmul.mubr.f32.gmra.mxu0 %v1993
      %v2183 = vpop.f32.mrf.mxu0
      %v2184 = vadd.f32 0.0, %v2183
      %v2185 = vpop.f32.mrf.mxu0
      %2186 = vmatprep.mubr.f32.mxu0 0.0
      %2187 = vmatmul.mubr.f32.gmra.mxu0 %v1996
      %v2188 = vpop.f32.mrf.mxu0
      %v2189 = vadd.f32 0.0, %v2188
      %v2190 = vpop.f32.mrf.mxu0
      %2191 = vmatprep.mubr.f32.mxu0 0.0
      %2192 = vmatmul.mubr.f32.gmra.mxu0 %v1999
      %v2193 = vpop.f32.mrf.mxu0
      %v2194 = vadd.f32 0.0, %v2193
      %v2195 = vpop.f32.mrf.mxu0
      %2196 = vmatprep.mubr.f32.mxu0 0.0
      %2197 = vmatmul.mubr.f32.gmra.mxu0 %v2002
      %v2198 = vpop.f32.mrf.mxu0
      %v2199 = vadd.f32 0.0, %v2198
      %v2200 = vpop.f32.mrf.mxu0
      %2201 = vmatprep.mubr.f32.mxu0 0.0
      %2202 = vmatmul.mubr.f32.gmra.mxu0 %v2005
      %v2203 = vpop.f32.mrf.mxu0
      %v2204 = vadd.f32 0.0, %v2203
      %v2205 = vpop.f32.mrf.mxu0
      %2206 = vmatprep.mubr.f32.mxu0 0.0
      %2207 = vmatmul.mubr.f32.gmra.mxu0 %v2008
      %v2208 = vpop.f32.mrf.mxu0
      %v2209 = vadd.f32 0.0, %v2208
      %v2210 = vpop.f32.mrf.mxu0
      %2211 = vmatprep.mubr.f32.mxu0 0.0
      %2212 = vmatmul.mubr.f32.gmra.mxu0 %v2011
      %v2213 = vpop.f32.mrf.mxu0
      %v2214 = vadd.f32 0.0, %v2213
      %v2215 = vpop.f32.mrf.mxu0
      %2216 = vmatprep.mubr.f32.mxu0 0.0
      %2217 = vmatmul.mubr.f32.gmra.mxu0 %v2014
      %v2218 = vpop.f32.mrf.mxu0
      %v2219 = vadd.f32 0.0, %v2218
      %v2220 = vpop.f32.mrf.mxu0
      %2221 = vmatprep.mubr.f32.mxu0 0.0
      %2222 = vmatmul.mubr.f32.gmra.mxu0 %v2017
      %v2223 = vpop.f32.mrf.mxu0
      %v2224 = vadd.f32 0.0, %v2223
      %v2225 = vpop.f32.mrf.mxu0
      %2226 = vmatprep.mubr.f32.mxu0 0.0
      %2227 = vmatmul.mubr.f32.gmra.mxu0 %v2020
      %v2228 = vpop.f32.mrf.mxu0
      %v2229 = vadd.f32 0.0, %v2228
      %v2230 = vpop.f32.mrf.mxu0
      %2231 = vmatprep.mubr.f32.mxu0 0.0
      %2232 = vmatmul.mubr.f32.gmra.mxu0 %v2023
      %v2233 = vpop.f32.mrf.mxu0
      %v2234 = vadd.f32 0.0, %v2233
      %v2235 = vpop.f32.mrf.mxu0
      %2236 = vmatprep.mubr.f32.mxu0 0.0
      %2237 = vmatmul.mubr.f32.gmra.mxu0 %v2026
      %v2238 = vpop.f32.mrf.mxu0
      %v2239 = vadd.f32 0.0, %v2238
      %v2240 = vpop.f32.mrf.mxu0
      %2241 = vmatprep.mubr.f32.mxu0 0.0
      %2242 = vmatmul.mubr.f32.gmra.mxu0 %v2029
      %v2243 = vpop.f32.mrf.mxu0
      %v2244 = vadd.f32 0.0, %v2243
      %v2245 = vpop.f32.mrf.mxu0
      %2246 = vmatprep.mubr.f32.mxu0 0.0
      %2247 = vmatmul.mubr.f32.gmra.mxu0 %v2032
      %v2248 = vpop.f32.mrf.mxu0
      %v2249 = vadd.f32 0.0, %v2248
      %v2250 = vpop.f32.mrf.mxu0
      %2251 = vmatprep.mubr.f32.mxu0 0.0
      %2252 = vmatmul.mubr.f32.gmra.mxu0 %v2035
      %v2253 = vpop.f32.mrf.mxu0
      %v2254 = vadd.f32 0.0, %v2253
      %v2255 = vpop.f32.mrf.mxu0
      %2256 = vmatprep.mubr.f32.mxu0 0.0
      %2257 = vmatmul.mubr.f32.gmra.mxu0 %v2038
      %v2258 = vpop.f32.mrf.mxu0
      %v2259 = vadd.f32 0.0, %v2258
      %v2260 = vpop.f32.mrf.mxu0
      %2261 = vmatprep.mubr.f32.mxu0 0.0
      %2262 = vmatmul.mubr.f32.gmra.mxu0 %v2041
      %v2263 = vpop.f32.mrf.mxu0
      %v2264 = vadd.f32 0.0, %v2263
      %v2265 = vpop.f32.mrf.mxu0
      %2266 = vmatprep.mubr.f32.mxu0 0.0
      %2267 = vmatmul.mubr.f32.gmra.mxu0 %v2044
      %v2268 = vpop.f32.mrf.mxu0
      %v2269 = vadd.f32 0.0, %v2268
      %v2270 = vpop.f32.mrf.mxu0
      %2271 = vmatprep.mubr.f32.mxu0 0.0
      %2272 = vmatmul.mubr.f32.gmra.mxu0 %v2047
      %v2273 = vpop.f32.mrf.mxu0
      %v2274 = vadd.f32 0.0, %v2273
      %v2275 = vpop.f32.mrf.mxu0
      %2276 = vmatprep.mubr.f32.mxu0 0.0
      %2277 = vmatmul.mubr.f32.gmra.mxu0 %v2050
      %v2278 = vpop.f32.mrf.mxu0
      %v2279 = vadd.f32 0.0, %v2278
      %v2280 = vpop.f32.mrf.mxu0
      %2281 = vmatprep.mubr.f32.mxu0 0.0
      %2282 = vmatmul.mubr.f32.gmra.mxu0 %v2053
      %v2283 = vpop.f32.mrf.mxu0
      %v2284 = vadd.f32 0.0, %v2283
      %v2285 = vpop.f32.mrf.mxu0
      %2286 = vmatprep.mubr.f32.mxu0 0.0
      %2287 = vmatmul.mubr.f32.gmra.mxu0 %v2056
      %v2288 = vpop.f32.mrf.mxu0
      %v2289 = vadd.f32 0.0, %v2288
      %v2290 = vpop.f32.mrf.mxu0
      %2291 = vmatprep.mubr.f32.mxu0 0.0
      %2292 = vmatmul.mubr.f32.gmra.mxu0 %v2059
      %v2293 = vpop.f32.mrf.mxu0
      %v2294 = vadd.f32 0.0, %v2293
      %v2295 = vpop.f32.mrf.mxu0
      %2296 = vmatprep.mubr.f32.mxu0 0.0
      %2297 = vmatmul.mubr.f32.gmra.mxu0 %v2062
      %v2298 = vpop.f32.mrf.mxu0
      %v2299 = vadd.f32 0.0, %v2298
      %v2300 = vpop.f32.mrf.mxu0
      %2301 = vmatprep.mubr.f32.mxu0 0.0
      %2302 = vmatmul.mubr.f32.gmra.mxu0 %v2065
      %v2303 = vpop.f32.mrf.mxu0
      %v2304 = vadd.f32 0.0, %v2303
      %v2305 = vpop.f32.mrf.mxu0
      %2306 = vmatprep.mubr.f32.mxu0 0.0
      %2307 = vmatmul.mubr.f32.gmra.mxu0 %v2068
      %v2308 = vpop.f32.mrf.mxu0
      %v2309 = vadd.f32 0.0, %v2308
      %v2310 = vpop.f32.mrf.mxu0
      %2311 = vmatprep.mubr.f32.mxu0 0.0
      %2312 = vmatmul.mubr.f32.gmra.mxu0 %v2071
      %v2313 = vpop.f32.mrf.mxu0
      %v2314 = vadd.f32 0.0, %v2313
      %v2315 = vpop.f32.mrf.mxu0
      %2316 = vmatprep.mubr.f32.mxu0 0.0
      %2317 = vmatmul.mubr.f32.gmra.mxu0 %v2074
      %v2318 = vpop.f32.mrf.mxu0
      %v2319 = vadd.f32 0.0, %v2318
      %v2320 = vpop.f32.mrf.mxu0
      %2321 = vmatprep.mubr.f32.mxu0 0.0
      %2322 = vmatmul.mubr.f32.gmra.mxu0 %v2077
      %v2323 = vpop.f32.mrf.mxu0
      %v2324 = vadd.f32 0.0, %v2323
      %v2325 = vpop.f32.mrf.mxu0
      %2326 = vmatprep.mubr.f32.mxu0 0.0
      %2327 = vmatmul.mubr.f32.gmra.mxu0 %v2080
      %v2328 = vpop.f32.mrf.mxu0
      %v2329 = vadd.f32 0.0, %v2328
      %v2330 = vpop.f32.mrf.mxu0
      %2331 = vmatprep.mubr.f32.mxu0 0.0
      %2332 = vmatmul.mubr.f32.gmra.mxu0 %v2083
      %v2333 = vpop.f32.mrf.mxu0
      %v2334 = vadd.f32 0.0, %v2333
      %v2335 = vpop.f32.mrf.mxu0
      %2336 = vmatprep.mubr.f32.mxu0 0.0
      %2337 = vmatmul.mubr.f32.gmra.mxu0 %v2086
      %v2338 = vpop.f32.mrf.mxu0
      %v2339 = vadd.f32 0.0, %v2338
      %v2340 = vpop.f32.mrf.mxu0
      %2341 = vmatprep.mubr.f32.mxu0 0.0
      %2342 = vmatmul.mubr.f32.gmra.mxu0 %v2089
      %v2343 = vpop.f32.mrf.mxu0
      %v2344 = vadd.f32 0.0, %v2343
      %v2345 = vpop.f32.mrf.mxu0
      %2346 = vmatprep.mubr.f32.mxu0 0.0
      %2347 = vmatmul.mubr.f32.gmra.mxu0 %v2092
      %v2348 = vpop.f32.mrf.mxu0
      %v2349 = vadd.f32 0.0, %v2348
      %v2350 = vpop.f32.mrf.mxu0
      %2351 = vmatprep.mubr.f32.mxu0 0.0
      %2352 = vmatmul.mubr.f32.gmra.mxu0 %v2095
      %v2353 = vpop.f32.mrf.mxu0
      %v2354 = vadd.f32 0.0, %v2353
      %v2355 = vpop.f32.mrf.mxu0
      %2356 = vmatprep.mubr.f32.mxu0 0.0
      %2357 = vmatmul.mubr.f32.gmra.mxu0 %v2098
      %v2358 = vpop.f32.mrf.mxu0
      %v2359 = vadd.f32 0.0, %v2358
      %v2360 = vpop.f32.mrf.mxu0
      %2361 = vmatprep.mubr.f32.mxu0 0.0
      %2362 = vmatmul.mubr.f32.gmra.mxu0 %v2101
      %v2363 = vpop.f32.mrf.mxu0
      %v2364 = vadd.f32 0.0, %v2363
      %v2365 = vpop.f32.mrf.mxu0
      %2366 = vmatprep.mubr.f32.mxu0 0.0
      %2367 = vmatmul.mubr.f32.gmra.mxu0 %v2104
      %v2368 = vpop.f32.mrf.mxu0
      %v2369 = vadd.f32 0.0, %v2368
      %v2370 = vpop.f32.mrf.mxu0
      %2371 = vmatprep.mubr.f32.mxu0 0.0
      %2372 = vmatmul.mubr.f32.gmra.mxu0 %v2107
      %v2373 = vpop.f32.mrf.mxu0
      %v2374 = vadd.f32 0.0, %v2373
      %v2375 = vpop.f32.mrf.mxu0
      %2376 = vmatprep.mubr.f32.mxu0 0.0
      %2377 = vmatmul.mubr.f32.gmra.mxu0 %v2110
      %v2378 = vpop.f32.mrf.mxu0
      %v2379 = vadd.f32 0.0, %v2378
      %v2380 = vpop.f32.mrf.mxu0
      %2381 = vdwg.mxu0
      %v2382 = vadd.f32 %v1736, %v2179
      %v2383 = vadd.f32 %v1741, %v2184
      %v2384 = vadd.f32 %v1746, %v2189
      %v2385 = vadd.f32 %v1751, %v2194
      %v2386 = vadd.f32 %v1756, %v2199
      %v2387 = vadd.f32 %v1761, %v2204
      %v2388 = vadd.f32 %v1766, %v2209
      %v2389 = vadd.f32 %v1771, %v2214
      %v2390 = vadd.f32 %v1776, %v2219
      %v2391 = vadd.f32 %v1781, %v2224
      %v2392 = vadd.f32 %v1786, %v2229
      %v2393 = vadd.f32 %v1791, %v2234
      %v2394 = vadd.f32 %v1796, %v2239
      %v2395 = vadd.f32 %v1801, %v2244
      %v2396 = vadd.f32 %v1806, %v2249
      %v2397 = vadd.f32 %v1811, %v2254
      %v2398 = vadd.f32 %v1816, %v2259
      %v2399 = vadd.f32 %v1821, %v2264
      %v2400 = vadd.f32 %v1826, %v2269
      %v2401 = vadd.f32 %v1831, %v2274
      %v2402 = vadd.f32 %v1836, %v2279
      %v2403 = vadd.f32 %v1841, %v2284
      %v2404 = vadd.f32 %v1846, %v2289
      %v2405 = vadd.f32 %v1851, %v2294
      %v2406 = vadd.f32 %v1856, %v2299
      %v2407 = vadd.f32 %v1861, %v2304
      %v2408 = vadd.f32 %v1866, %v2309
      %v2409 = vadd.f32 %v1871, %v2314
      %v2410 = vadd.f32 %v1876, %v2319
      %v2411 = vadd.f32 %v1881, %v2324
      %v2412 = vadd.f32 %v1886, %v2329
      %v2413 = vadd.f32 %v1891, %v2334
      %v2414 = vadd.f32 %v1896, %v2339
      %v2415 = vadd.f32 %v1901, %v2344
      %v2416 = vadd.f32 %v1906, %v2349
      %v2417 = vadd.f32 %v1911, %v2354
      %v2418 = vadd.f32 %v1916, %v2359
      %v2419 = vadd.f32 %v1921, %v2364
      %v2420 = vadd.f32 %v1926, %v2369
      %v2421 = vadd.f32 %v1931, %v2374
      %v2422 = vadd.f32 %v1936, %v2379
      %v2423 = vld [vmem:[#allocation2 + $0x17] sm:$0xff]
      %v2424 = vld [vmem:[#allocation2 + $0x1f] sm:$0xff]
      %v2425 = vld [vmem:[#allocation2 + $0x27] sm:$0xff]
      %v2426 = vld [vmem:[#allocation2 + $0x2f] sm:$0xff]
      %v2427 = vld [vmem:[#allocation2 + $0x37] sm:$0xff]
      %v2428 = vld [vmem:[#allocation2 + $0x3f] sm:$0xff]
      %v2429 = vld [vmem:[#allocation2 + $0x47] sm:$0xff]
      %v2430 = vld [vmem:[#allocation2 + $0x4f] sm:$0xff]
      %v2431 = vld [vmem:[#allocation2 + $0x57] sm:$0xff]
      %v2432 = vld [vmem:[#allocation2 + $0x5f] sm:$0xff]
      %v2433 = vld [vmem:[#allocation2 + $0x67] sm:$0xff]
      %v2434 = vld [vmem:[#allocation2 + $0x6f] sm:$0xff]
      %v2435 = vld [vmem:[#allocation2 + $0x77] sm:$0xff]
      %v2436 = vld [vmem:[#allocation2 + $0x7f] sm:$0xff]
      %v2437 = vld [vmem:[#allocation2 + $0x87] sm:$0xff]
      %v2438 = vld [vmem:[#allocation2 + $0x8f] sm:$0xff]
      %v2439 = vld [vmem:[#allocation2 + $0x97] sm:$0xff]
      %v2440 = vld [vmem:[#allocation2 + $0x9f] sm:$0xff]
      %v2441 = vld [vmem:[#allocation2 + $0xa7] sm:$0xff]
      %v2442 = vld [vmem:[#allocation2 + $0xaf] sm:$0xff]
      %v2443 = vld [vmem:[#allocation2 + $0xb7] sm:$0xff]
      %v2444 = vld [vmem:[#allocation2 + $0xbf] sm:$0xff]
      %v2445 = vld [vmem:[#allocation2 + $0xc7] sm:$0xff]
      %v2446 = vld [vmem:[#allocation2 + $0xcf] sm:$0xff]
      %v2447 = vld [vmem:[#allocation2 + $0xd7] sm:$0xff]
      %v2448 = vld [vmem:[#allocation2 + $0xdf] sm:$0xff]
      %v2449 = vld [vmem:[#allocation2 + $0xe7] sm:$0xff]
      %v2450 = vld [vmem:[#allocation2 + $0xef] sm:$0xff]
      %v2451 = vld [vmem:[#allocation2 + $0xf7] sm:$0xff]
      %v2452 = vld [vmem:[#allocation2 + $0xff] sm:$0xff]
      %v2453 = vld [vmem:[#allocation2 + $0x107] sm:$0xff]
      %v2454 = vld [vmem:[#allocation2 + $0x10f] sm:$0xff]
      %v2455 = vld [vmem:[#allocation2 + $0x117] sm:$0xff]
      %v2456 = vld [vmem:[#allocation2 + $0x11f] sm:$0xff]
      %v2457 = vld [vmem:[#allocation2 + $0x127] sm:$0xff]
      %v2458 = vld [vmem:[#allocation2 + $0x12f] sm:$0xff]
      %v2459 = vld [vmem:[#allocation2 + $0x137] sm:$0xff]
      %v2460 = vld [vmem:[#allocation2 + $0x13f] sm:$0xff]
      %v2461 = vld [vmem:[#allocation2 + $0x147] sm:$0xff]
      %v2462 = vld [vmem:[#allocation2 + $0x14f] sm:$0xff]
      %v2463 = vld [vmem:[#allocation2 + $0x157] sm:$0xf]
      %s2464 = scalar_lea.vmem %s2, 192
      %v2465 = vld [vmem:[%s2464] sm:$0xff]
      %v2466 = vld [vmem:[%s2464 + $0x8] sm:$0xff]
      %v2467 = vld [vmem:[%s2464 + $0x10] sm:$0xff]
      %v2468 = vld [vmem:[%s2464 + $0x18] sm:$0xff]
      %v2469 = vld [vmem:[%s2464 + $0x20] sm:$0xff]
      %v2470 = vld [vmem:[%s2464 + $0x28] sm:$0xff]
      %v2471 = vld [vmem:[%s2464 + $0x30] sm:$0xff]
      %v2472 = vld [vmem:[%s2464 + $0x38] sm:$0xff]
      %v2474 = vsel %vm293, %v2423, 0
      %v2477 = vsel %vm293, %v2424, 0
      %v2480 = vsel %vm293, %v2425, 0
      %v2483 = vsel %vm293, %v2426, 0
      %v2486 = vsel %vm293, %v2427, 0
      %v2489 = vsel %vm293, %v2428, 0
      %v2492 = vsel %vm293, %v2429, 0
      %v2495 = vsel %vm293, %v2430, 0
      %v2498 = vsel %vm293, %v2431, 0
      %v2501 = vsel %vm293, %v2432, 0
      %v2504 = vsel %vm293, %v2433, 0
      %v2507 = vsel %vm293, %v2434, 0
      %v2510 = vsel %vm293, %v2435, 0
      %v2513 = vsel %vm293, %v2436, 0
      %v2516 = vsel %vm293, %v2437, 0
      %v2519 = vsel %vm293, %v2438, 0
      %v2522 = vsel %vm293, %v2439, 0
      %v2525 = vsel %vm293, %v2440, 0
      %v2528 = vsel %vm293, %v2441, 0
      %v2531 = vsel %vm293, %v2442, 0
      %v2534 = vsel %vm293, %v2443, 0
      %v2537 = vsel %vm293, %v2444, 0
      %v2540 = vsel %vm293, %v2445, 0
      %v2543 = vsel %vm293, %v2446, 0
      %v2546 = vsel %vm293, %v2447, 0
      %v2549 = vsel %vm293, %v2448, 0
      %v2552 = vsel %vm293, %v2449, 0
      %v2555 = vsel %vm293, %v2450, 0
      %v2558 = vsel %vm293, %v2451, 0
      %v2561 = vsel %vm293, %v2452, 0
      %v2564 = vsel %vm293, %v2453, 0
      %v2567 = vsel %vm293, %v2454, 0
      %v2570 = vsel %vm293, %v2455, 0
      %v2573 = vsel %vm293, %v2456, 0
      %v2576 = vsel %vm293, %v2457, 0
      %v2579 = vsel %vm293, %v2458, 0
      %v2582 = vsel %vm293, %v2459, 0
      %v2585 = vsel %vm293, %v2460, 0
      %v2588 = vsel %vm293, %v2461, 0
      %v2591 = vsel %vm293, %v2462, 0
      %v2594 = vsel %vm293, %v2463, 0
      %2596 = vmatprep.subr.mxu0 0.0
      %2597 = vmatpush1.msra.mxu0 0.0
      %2598 = vmatprep.subr.mxu0 0.0
      %2599 = vmatpush1.msra.mxu0 0.0
      %2600 = vmatprep.subr.mxu0 0.0
      %2601 = vmatpush1.msra.mxu0 0.0
      %2602 = vmatprep.subr.mxu0 0.0
      %2603 = vmatpush1.msra.mxu0 0.0
      %2604 = vmatprep.subr.mxu0 0.0
      %2605 = vmatpush1.msra.mxu0 0.0
      %2606 = vmatprep.subr.mxu0 0.0
      %2607 = vmatpush1.msra.mxu0 0.0
      %2608 = vmatprep.subr.mxu0 0.0
      %2609 = vmatpush1.msra.mxu0 0.0
      %2610 = vmatprep.subr.mxu0 0.0
      %2611 = vmatpush1.msra.mxu0 0.0
      %2612 = vmatprep.subr.mxu0 0.0
      %2613 = vmatpush1.msra.mxu0 %v2472
      %2614 = vmatprep.subr.mxu0 0.0
      %2615 = vmatpush1.msra.mxu0 %v2471
      %2616 = vmatprep.subr.mxu0 0.0
      %2617 = vmatpush1.msra.mxu0 %v2470
      %2618 = vmatprep.subr.mxu0 0.0
      %2619 = vmatpush1.msra.mxu0 %v2469
      %2620 = vmatprep.subr.mxu0 0.0
      %2621 = vmatpush1.msra.mxu0 %v2468
      %2622 = vmatprep.subr.mxu0 0.0
      %2623 = vmatpush1.msra.mxu0 %v2467
      %2624 = vmatprep.subr.mxu0 0.0
      %2625 = vmatpush1.msra.mxu0 %v2466
      %2626 = vmatprep.subr.mxu0 0.0
      %2627 = vmatpush1.msra.mxu0 %v2465
      %2628 = vmatprep.subr.mxu0 0.0
      %2629 = vmatpush2.msra.mxu0 0.0
      %2630 = vmatprep.subr.mxu0 0.0
      %2631 = vmatpush2.msra.mxu0 0.0
      %2632 = vmatprep.subr.mxu0 0.0
      %2633 = vmatpush2.msra.mxu0 0.0
      %2634 = vmatprep.subr.mxu0 0.0
      %2635 = vmatpush2.msra.mxu0 0.0
      %2636 = vmatprep.subr.mxu0 0.0
      %2637 = vmatpush2.msra.mxu0 0.0
      %2638 = vmatprep.subr.mxu0 0.0
      %2639 = vmatpush2.msra.mxu0 0.0
      %2640 = vmatprep.subr.mxu0 0.0
      %2641 = vmatpush2.msra.mxu0 0.0
      %2642 = vmatprep.subr.mxu0 0.0
      %2643 = vmatpush2.msra.mxu0 0.0
      %2644 = vmatprep.subr.mxu0 0.0
      %2645 = vmatpush2.msra.mxu0 0.0
      %2646 = vmatprep.subr.mxu0 0.0
      %2647 = vmatpush2.msra.mxu0 0.0
      %2648 = vmatprep.subr.mxu0 0.0
      %2649 = vmatpush2.msra.mxu0 0.0
      %2650 = vmatprep.subr.mxu0 0.0
      %2651 = vmatpush2.msra.mxu0 0.0
      %2652 = vmatprep.subr.mxu0 0.0
      %2653 = vmatpush2.msra.mxu0 0.0
      %2654 = vmatprep.subr.mxu0 0.0
      %2655 = vmatpush2.msra.mxu0 0.0
      %2656 = vmatprep.subr.mxu0 0.0
      %2657 = vmatpush2.msra.mxu0 0.0
      %2658 = vmatprep.subr.mxu0 0.0
      %2659 = vmatpush2.msra.mxu0 0.0
      %2660 = vmatprep.mubr.f32.mxu0 0.0
      %2661 = vmatmul.mubr.f32.gmra.mxu0 %v2474
      %v2662 = vpop.f32.mrf.mxu0
      %v2663 = vadd.f32 0.0, %v2662
      %v2664 = vpop.f32.mrf.mxu0
      %2665 = vmatprep.mubr.f32.mxu0 0.0
      %2666 = vmatmul.mubr.f32.gmra.mxu0 %v2477
      %v2667 = vpop.f32.mrf.mxu0
      %v2668 = vadd.f32 0.0, %v2667
      %v2669 = vpop.f32.mrf.mxu0
      %2670 = vmatprep.mubr.f32.mxu0 0.0
      %2671 = vmatmul.mubr.f32.gmra.mxu0 %v2480
      %v2672 = vpop.f32.mrf.mxu0
      %v2673 = vadd.f32 0.0, %v2672
      %v2674 = vpop.f32.mrf.mxu0
      %2675 = vmatprep.mubr.f32.mxu0 0.0
      %2676 = vmatmul.mubr.f32.gmra.mxu0 %v2483
      %v2677 = vpop.f32.mrf.mxu0
      %v2678 = vadd.f32 0.0, %v2677
      %v2679 = vpop.f32.mrf.mxu0
      %2680 = vmatprep.mubr.f32.mxu0 0.0
      %2681 = vmatmul.mubr.f32.gmra.mxu0 %v2486
      %v2682 = vpop.f32.mrf.mxu0
      %v2683 = vadd.f32 0.0, %v2682
      %v2684 = vpop.f32.mrf.mxu0
      %2685 = vmatprep.mubr.f32.mxu0 0.0
      %2686 = vmatmul.mubr.f32.gmra.mxu0 %v2489
      %v2687 = vpop.f32.mrf.mxu0
      %v2688 = vadd.f32 0.0, %v2687
      %v2689 = vpop.f32.mrf.mxu0
      %2690 = vmatprep.mubr.f32.mxu0 0.0
      %2691 = vmatmul.mubr.f32.gmra.mxu0 %v2492
      %v2692 = vpop.f32.mrf.mxu0
      %v2693 = vadd.f32 0.0, %v2692
      %v2694 = vpop.f32.mrf.mxu0
      %2695 = vmatprep.mubr.f32.mxu0 0.0
      %2696 = vmatmul.mubr.f32.gmra.mxu0 %v2495
      %v2697 = vpop.f32.mrf.mxu0
      %v2698 = vadd.f32 0.0, %v2697
      %v2699 = vpop.f32.mrf.mxu0
      %2700 = vmatprep.mubr.f32.mxu0 0.0
      %2701 = vmatmul.mubr.f32.gmra.mxu0 %v2498
      %v2702 = vpop.f32.mrf.mxu0
      %v2703 = vadd.f32 0.0, %v2702
      %v2704 = vpop.f32.mrf.mxu0
      %2705 = vmatprep.mubr.f32.mxu0 0.0
      %2706 = vmatmul.mubr.f32.gmra.mxu0 %v2501
      %v2707 = vpop.f32.mrf.mxu0
      %v2708 = vadd.f32 0.0, %v2707
      %v2709 = vpop.f32.mrf.mxu0
      %2710 = vmatprep.mubr.f32.mxu0 0.0
      %2711 = vmatmul.mubr.f32.gmra.mxu0 %v2504
      %v2712 = vpop.f32.mrf.mxu0
      %v2713 = vadd.f32 0.0, %v2712
      %v2714 = vpop.f32.mrf.mxu0
      %2715 = vmatprep.mubr.f32.mxu0 0.0
      %2716 = vmatmul.mubr.f32.gmra.mxu0 %v2507
      %v2717 = vpop.f32.mrf.mxu0
      %v2718 = vadd.f32 0.0, %v2717
      %v2719 = vpop.f32.mrf.mxu0
      %2720 = vmatprep.mubr.f32.mxu0 0.0
      %2721 = vmatmul.mubr.f32.gmra.mxu0 %v2510
      %v2722 = vpop.f32.mrf.mxu0
      %v2723 = vadd.f32 0.0, %v2722
      %v2724 = vpop.f32.mrf.mxu0
      %2725 = vmatprep.mubr.f32.mxu0 0.0
      %2726 = vmatmul.mubr.f32.gmra.mxu0 %v2513
      %v2727 = vpop.f32.mrf.mxu0
      %v2728 = vadd.f32 0.0, %v2727
      %v2729 = vpop.f32.mrf.mxu0
      %2730 = vmatprep.mubr.f32.mxu0 0.0
      %2731 = vmatmul.mubr.f32.gmra.mxu0 %v2516
      %v2732 = vpop.f32.mrf.mxu0
      %v2733 = vadd.f32 0.0, %v2732
      %v2734 = vpop.f32.mrf.mxu0
      %2735 = vmatprep.mubr.f32.mxu0 0.0
      %2736 = vmatmul.mubr.f32.gmra.mxu0 %v2519
      %v2737 = vpop.f32.mrf.mxu0
      %v2738 = vadd.f32 0.0, %v2737
      %v2739 = vpop.f32.mrf.mxu0
      %2740 = vmatprep.mubr.f32.mxu0 0.0
      %2741 = vmatmul.mubr.f32.gmra.mxu0 %v2522
      %v2742 = vpop.f32.mrf.mxu0
      %v2743 = vadd.f32 0.0, %v2742
      %v2744 = vpop.f32.mrf.mxu0
      %2745 = vmatprep.mubr.f32.mxu0 0.0
      %2746 = vmatmul.mubr.f32.gmra.mxu0 %v2525
      %v2747 = vpop.f32.mrf.mxu0
      %v2748 = vadd.f32 0.0, %v2747
      %v2749 = vpop.f32.mrf.mxu0
      %2750 = vmatprep.mubr.f32.mxu0 0.0
      %2751 = vmatmul.mubr.f32.gmra.mxu0 %v2528
      %v2752 = vpop.f32.mrf.mxu0
      %v2753 = vadd.f32 0.0, %v2752
      %v2754 = vpop.f32.mrf.mxu0
      %2755 = vmatprep.mubr.f32.mxu0 0.0
      %2756 = vmatmul.mubr.f32.gmra.mxu0 %v2531
      %v2757 = vpop.f32.mrf.mxu0
      %v2758 = vadd.f32 0.0, %v2757
      %v2759 = vpop.f32.mrf.mxu0
      %2760 = vmatprep.mubr.f32.mxu0 0.0
      %2761 = vmatmul.mubr.f32.gmra.mxu0 %v2534
      %v2762 = vpop.f32.mrf.mxu0
      %v2763 = vadd.f32 0.0, %v2762
      %v2764 = vpop.f32.mrf.mxu0
      %2765 = vmatprep.mubr.f32.mxu0 0.0
      %2766 = vmatmul.mubr.f32.gmra.mxu0 %v2537
      %v2767 = vpop.f32.mrf.mxu0
      %v2768 = vadd.f32 0.0, %v2767
      %v2769 = vpop.f32.mrf.mxu0
      %2770 = vmatprep.mubr.f32.mxu0 0.0
      %2771 = vmatmul.mubr.f32.gmra.mxu0 %v2540
      %v2772 = vpop.f32.mrf.mxu0
      %v2773 = vadd.f32 0.0, %v2772
      %v2774 = vpop.f32.mrf.mxu0
      %2775 = vmatprep.mubr.f32.mxu0 0.0
      %2776 = vmatmul.mubr.f32.gmra.mxu0 %v2543
      %v2777 = vpop.f32.mrf.mxu0
      %v2778 = vadd.f32 0.0, %v2777
      %v2779 = vpop.f32.mrf.mxu0
      %2780 = vmatprep.mubr.f32.mxu0 0.0
      %2781 = vmatmul.mubr.f32.gmra.mxu0 %v2546
      %v2782 = vpop.f32.mrf.mxu0
      %v2783 = vadd.f32 0.0, %v2782
      %v2784 = vpop.f32.mrf.mxu0
      %2785 = vmatprep.mubr.f32.mxu0 0.0
      %2786 = vmatmul.mubr.f32.gmra.mxu0 %v2549
      %v2787 = vpop.f32.mrf.mxu0
      %v2788 = vadd.f32 0.0, %v2787
      %v2789 = vpop.f32.mrf.mxu0
      %2790 = vmatprep.mubr.f32.mxu0 0.0
      %2791 = vmatmul.mubr.f32.gmra.mxu0 %v2552
      %v2792 = vpop.f32.mrf.mxu0
      %v2793 = vadd.f32 0.0, %v2792
      %v2794 = vpop.f32.mrf.mxu0
      %2795 = vmatprep.mubr.f32.mxu0 0.0
      %2796 = vmatmul.mubr.f32.gmra.mxu0 %v2555
      %v2797 = vpop.f32.mrf.mxu0
      %v2798 = vadd.f32 0.0, %v2797
      %v2799 = vpop.f32.mrf.mxu0
      %2800 = vmatprep.mubr.f32.mxu0 0.0
      %2801 = vmatmul.mubr.f32.gmra.mxu0 %v2558
      %v2802 = vpop.f32.mrf.mxu0
      %v2803 = vadd.f32 0.0, %v2802
      %v2804 = vpop.f32.mrf.mxu0
      %2805 = vmatprep.mubr.f32.mxu0 0.0
      %2806 = vmatmul.mubr.f32.gmra.mxu0 %v2561
      %v2807 = vpop.f32.mrf.mxu0
      %v2808 = vadd.f32 0.0, %v2807
      %v2809 = vpop.f32.mrf.mxu0
      %2810 = vmatprep.mubr.f32.mxu0 0.0
      %2811 = vmatmul.mubr.f32.gmra.mxu0 %v2564
      %v2812 = vpop.f32.mrf.mxu0
      %v2813 = vadd.f32 0.0, %v2812
      %v2814 = vpop.f32.mrf.mxu0
      %2815 = vmatprep.mubr.f32.mxu0 0.0
      %2816 = vmatmul.mubr.f32.gmra.mxu0 %v2567
      %v2817 = vpop.f32.mrf.mxu0
      %v2818 = vadd.f32 0.0, %v2817
      %v2819 = vpop.f32.mrf.mxu0
      %2820 = vmatprep.mubr.f32.mxu0 0.0
      %2821 = vmatmul.mubr.f32.gmra.mxu0 %v2570
      %v2822 = vpop.f32.mrf.mxu0
      %v2823 = vadd.f32 0.0, %v2822
      %v2824 = vpop.f32.mrf.mxu0
      %2825 = vmatprep.mubr.f32.mxu0 0.0
      %2826 = vmatmul.mubr.f32.gmra.mxu0 %v2573
      %v2827 = vpop.f32.mrf.mxu0
      %v2828 = vadd.f32 0.0, %v2827
      %v2829 = vpop.f32.mrf.mxu0
      %2830 = vmatprep.mubr.f32.mxu0 0.0
      %2831 = vmatmul.mubr.f32.gmra.mxu0 %v2576
      %v2832 = vpop.f32.mrf.mxu0
      %v2833 = vadd.f32 0.0, %v2832
      %v2834 = vpop.f32.mrf.mxu0
      %2835 = vmatprep.mubr.f32.mxu0 0.0
      %2836 = vmatmul.mubr.f32.gmra.mxu0 %v2579
      %v2837 = vpop.f32.mrf.mxu0
      %v2838 = vadd.f32 0.0, %v2837
      %v2839 = vpop.f32.mrf.mxu0
      %2840 = vmatprep.mubr.f32.mxu0 0.0
      %2841 = vmatmul.mubr.f32.gmra.mxu0 %v2582
      %v2842 = vpop.f32.mrf.mxu0
      %v2843 = vadd.f32 0.0, %v2842
      %v2844 = vpop.f32.mrf.mxu0
      %2845 = vmatprep.mubr.f32.mxu0 0.0
      %2846 = vmatmul.mubr.f32.gmra.mxu0 %v2585
      %v2847 = vpop.f32.mrf.mxu0
      %v2848 = vadd.f32 0.0, %v2847
      %v2849 = vpop.f32.mrf.mxu0
      %2850 = vmatprep.mubr.f32.mxu0 0.0
      %2851 = vmatmul.mubr.f32.gmra.mxu0 %v2588
      %v2852 = vpop.f32.mrf.mxu0
      %v2853 = vadd.f32 0.0, %v2852
      %v2854 = vpop.f32.mrf.mxu0
      %2855 = vmatprep.mubr.f32.mxu0 0.0
      %2856 = vmatmul.mubr.f32.gmra.mxu0 %v2591
      %v2857 = vpop.f32.mrf.mxu0
      %v2858 = vadd.f32 0.0, %v2857
      %v2859 = vpop.f32.mrf.mxu0
      %2860 = vmatprep.mubr.f32.mxu0 0.0
      %2861 = vmatmul.mubr.f32.gmra.mxu0 %v2594
      %v2862 = vpop.f32.mrf.mxu0
      %v2863 = vadd.f32 0.0, %v2862
      %v2864 = vpop.f32.mrf.mxu0
      %2865 = vdwg.mxu0
      %v2866 = vadd.f32 %v2382, %v2663
      %v2867 = vadd.f32 %v2383, %v2668
      %v2868 = vadd.f32 %v2384, %v2673
      %v2869 = vadd.f32 %v2385, %v2678
      %v2870 = vadd.f32 %v2386, %v2683
      %v2871 = vadd.f32 %v2387, %v2688
      %v2872 = vadd.f32 %v2388, %v2693
      %v2873 = vadd.f32 %v2389, %v2698
      %v2874 = vadd.f32 %v2390, %v2703
      %v2875 = vadd.f32 %v2391, %v2708
      %v2876 = vadd.f32 %v2392, %v2713
      %v2877 = vadd.f32 %v2393, %v2718
      %v2878 = vadd.f32 %v2394, %v2723
      %v2879 = vadd.f32 %v2395, %v2728
      %v2880 = vadd.f32 %v2396, %v2733
      %v2881 = vadd.f32 %v2397, %v2738
      %v2882 = vadd.f32 %v2398, %v2743
      %v2883 = vadd.f32 %v2399, %v2748
      %v2884 = vadd.f32 %v2400, %v2753
      %v2885 = vadd.f32 %v2401, %v2758
      %v2886 = vadd.f32 %v2402, %v2763
      %v2887 = vadd.f32 %v2403, %v2768
      %v2888 = vadd.f32 %v2404, %v2773
      %v2889 = vadd.f32 %v2405, %v2778
      %v2890 = vadd.f32 %v2406, %v2783
      %v2891 = vadd.f32 %v2407, %v2788
      %v2892 = vadd.f32 %v2408, %v2793
      %v2893 = vadd.f32 %v2409, %v2798
      %v2894 = vadd.f32 %v2410, %v2803
      %v2895 = vadd.f32 %v2411, %v2808
      %v2896 = vadd.f32 %v2412, %v2813
      %v2897 = vadd.f32 %v2413, %v2818
      %v2898 = vadd.f32 %v2414, %v2823
      %v2899 = vadd.f32 %v2415, %v2828
      %v2900 = vadd.f32 %v2416, %v2833
      %v2901 = vadd.f32 %v2417, %v2838
      %v2902 = vadd.f32 %v2418, %v2843
      %v2903 = vadd.f32 %v2419, %v2848
      %v2904 = vadd.f32 %v2420, %v2853
      %v2905 = vadd.f32 %v2421, %v2858
      %v2906 = vadd.f32 %v2422, %v2863
      %v2907 = vld [vmem:[#allocation2 + $0x18] sm:$0xff]
      %v2908 = vld [vmem:[#allocation2 + $0x20] sm:$0xff]
      %v2909 = vld [vmem:[#allocation2 + $0x28] sm:$0xff]
      %v2910 = vld [vmem:[#allocation2 + $0x30] sm:$0xff]
      %v2911 = vld [vmem:[#allocation2 + $0x38] sm:$0xff]
      %v2912 = vld [vmem:[#allocation2 + $0x40] sm:$0xff]
      %v2913 = vld [vmem:[#allocation2 + $0x48] sm:$0xff]
      %v2914 = vld [vmem:[#allocation2 + $0x50] sm:$0xff]
      %v2915 = vld [vmem:[#allocation2 + $0x58] sm:$0xff]
      %v2916 = vld [vmem:[#allocation2 + $0x60] sm:$0xff]
      %v2917 = vld [vmem:[#allocation2 + $0x68] sm:$0xff]
      %v2918 = vld [vmem:[#allocation2 + $0x70] sm:$0xff]
      %v2919 = vld [vmem:[#allocation2 + $0x78] sm:$0xff]
      %v2920 = vld [vmem:[#allocation2 + $0x80] sm:$0xff]
      %v2921 = vld [vmem:[#allocation2 + $0x88] sm:$0xff]
      %v2922 = vld [vmem:[#allocation2 + $0x90] sm:$0xff]
      %v2923 = vld [vmem:[#allocation2 + $0x98] sm:$0xff]
      %v2924 = vld [vmem:[#allocation2 + $0xa0] sm:$0xff]
      %v2925 = vld [vmem:[#allocation2 + $0xa8] sm:$0xff]
      %v2926 = vld [vmem:[#allocation2 + $0xb0] sm:$0xff]
      %v2927 = vld [vmem:[#allocation2 + $0xb8] sm:$0xff]
      %v2928 = vld [vmem:[#allocation2 + $0xc0] sm:$0xff]
      %v2929 = vld [vmem:[#allocation2 + $0xc8] sm:$0xff]
      %v2930 = vld [vmem:[#allocation2 + $0xd0] sm:$0xff]
      %v2931 = vld [vmem:[#allocation2 + $0xd8] sm:$0xff]
      %v2932 = vld [vmem:[#allocation2 + $0xe0] sm:$0xff]
      %v2933 = vld [vmem:[#allocation2 + $0xe8] sm:$0xff]
      %v2934 = vld [vmem:[#allocation2 + $0xf0] sm:$0xff]
      %v2935 = vld [vmem:[#allocation2 + $0xf8] sm:$0xff]
      %v2936 = vld [vmem:[#allocation2 + $0x100] sm:$0xff]
      %v2937 = vld [vmem:[#allocation2 + $0x108] sm:$0xff]
      %v2938 = vld [vmem:[#allocation2 + $0x110] sm:$0xff]
      %v2939 = vld [vmem:[#allocation2 + $0x118] sm:$0xff]
      %v2940 = vld [vmem:[#allocation2 + $0x120] sm:$0xff]
      %v2941 = vld [vmem:[#allocation2 + $0x128] sm:$0xff]
      %v2942 = vld [vmem:[#allocation2 + $0x130] sm:$0xff]
      %v2943 = vld [vmem:[#allocation2 + $0x138] sm:$0xff]
      %v2944 = vld [vmem:[#allocation2 + $0x140] sm:$0xff]
      %v2945 = vld [vmem:[#allocation2 + $0x148] sm:$0xff]
      %v2946 = vld [vmem:[#allocation2 + $0x150] sm:$0xff]
      %v2947 = vld [vmem:[#allocation2 + $0x158] sm:$0xf]
      %s2948 = scalar_lea.vmem %s2, 256
      %v2949 = vld [vmem:[%s2948] sm:$0xff]
      %v2950 = vld [vmem:[%s2948 + $0x8] sm:$0xff]
      %v2951 = vld [vmem:[%s2948 + $0x10] sm:$0xff]
      %v2952 = vld [vmem:[%s2948 + $0x18] sm:$0xff]
      %v2953 = vld [vmem:[%s2948 + $0x20] sm:$0xff]
      %v2954 = vld [vmem:[%s2948 + $0x28] sm:$0xff]
      %v2955 = vld [vmem:[%s2948 + $0x30] sm:$0xff]
      %v2956 = vld [vmem:[%s2948 + $0x38] sm:$0xff]
      %v2958 = vsel %vm293, %v2907, 0
      %v2961 = vsel %vm293, %v2908, 0
      %v2964 = vsel %vm293, %v2909, 0
      %v2967 = vsel %vm293, %v2910, 0
      %v2970 = vsel %vm293, %v2911, 0
      %v2973 = vsel %vm293, %v2912, 0
      %v2976 = vsel %vm293, %v2913, 0
      %v2979 = vsel %vm293, %v2914, 0
      %v2982 = vsel %vm293, %v2915, 0
      %v2985 = vsel %vm293, %v2916, 0
      %v2988 = vsel %vm293, %v2917, 0
      %v2991 = vsel %vm293, %v2918, 0
      %v2994 = vsel %vm293, %v2919, 0
      %v2997 = vsel %vm293, %v2920, 0
      %v3000 = vsel %vm293, %v2921, 0
      %v3003 = vsel %vm293, %v2922, 0
      %v3006 = vsel %vm293, %v2923, 0
      %v3009 = vsel %vm293, %v2924, 0
      %v3012 = vsel %vm293, %v2925, 0
      %v3015 = vsel %vm293, %v2926, 0
      %v3018 = vsel %vm293, %v2927, 0
      %v3021 = vsel %vm293, %v2928, 0
      %v3024 = vsel %vm293, %v2929, 0
      %v3027 = vsel %vm293, %v2930, 0
      %v3030 = vsel %vm293, %v2931, 0
      %v3033 = vsel %vm293, %v2932, 0
      %v3036 = vsel %vm293, %v2933, 0
      %v3039 = vsel %vm293, %v2934, 0
      %v3042 = vsel %vm293, %v2935, 0
      %v3045 = vsel %vm293, %v2936, 0
      %v3048 = vsel %vm293, %v2937, 0
      %v3051 = vsel %vm293, %v2938, 0
      %v3054 = vsel %vm293, %v2939, 0
      %v3057 = vsel %vm293, %v2940, 0
      %v3060 = vsel %vm293, %v2941, 0
      %v3063 = vsel %vm293, %v2942, 0
      %v3066 = vsel %vm293, %v2943, 0
      %v3069 = vsel %vm293, %v2944, 0
      %v3072 = vsel %vm293, %v2945, 0
      %v3075 = vsel %vm293, %v2946, 0
      %v3078 = vsel %vm293, %v2947, 0
      %3080 = vmatprep.subr.mxu0 0.0
      %3081 = vmatpush1.msra.mxu0 0.0
      %3082 = vmatprep.subr.mxu0 0.0
      %3083 = vmatpush1.msra.mxu0 0.0
      %3084 = vmatprep.subr.mxu0 0.0
      %3085 = vmatpush1.msra.mxu0 0.0
      %3086 = vmatprep.subr.mxu0 0.0
      %3087 = vmatpush1.msra.mxu0 0.0
      %3088 = vmatprep.subr.mxu0 0.0
      %3089 = vmatpush1.msra.mxu0 0.0
      %3090 = vmatprep.subr.mxu0 0.0
      %3091 = vmatpush1.msra.mxu0 0.0
      %3092 = vmatprep.subr.mxu0 0.0
      %3093 = vmatpush1.msra.mxu0 0.0
      %3094 = vmatprep.subr.mxu0 0.0
      %3095 = vmatpush1.msra.mxu0 0.0
      %3096 = vmatprep.subr.mxu0 0.0
      %3097 = vmatpush1.msra.mxu0 %v2956
      %3098 = vmatprep.subr.mxu0 0.0
      %3099 = vmatpush1.msra.mxu0 %v2955
      %3100 = vmatprep.subr.mxu0 0.0
      %3101 = vmatpush1.msra.mxu0 %v2954
      %3102 = vmatprep.subr.mxu0 0.0
      %3103 = vmatpush1.msra.mxu0 %v2953
      %3104 = vmatprep.subr.mxu0 0.0
      %3105 = vmatpush1.msra.mxu0 %v2952
      %3106 = vmatprep.subr.mxu0 0.0
      %3107 = vmatpush1.msra.mxu0 %v2951
      %3108 = vmatprep.subr.mxu0 0.0
      %3109 = vmatpush1.msra.mxu0 %v2950
      %3110 = vmatprep.subr.mxu0 0.0
      %3111 = vmatpush1.msra.mxu0 %v2949
      %3112 = vmatprep.subr.mxu0 0.0
      %3113 = vmatpush2.msra.mxu0 0.0
      %3114 = vmatprep.subr.mxu0 0.0
      %3115 = vmatpush2.msra.mxu0 0.0
      %3116 = vmatprep.subr.mxu0 0.0
      %3117 = vmatpush2.msra.mxu0 0.0
      %3118 = vmatprep.subr.mxu0 0.0
      %3119 = vmatpush2.msra.mxu0 0.0
      %3120 = vmatprep.subr.mxu0 0.0
      %3121 = vmatpush2.msra.mxu0 0.0
      %3122 = vmatprep.subr.mxu0 0.0
      %3123 = vmatpush2.msra.mxu0 0.0
      %3124 = vmatprep.subr.mxu0 0.0
      %3125 = vmatpush2.msra.mxu0 0.0
      %3126 = vmatprep.subr.mxu0 0.0
      %3127 = vmatpush2.msra.mxu0 0.0
      %3128 = vmatprep.subr.mxu0 0.0
      %3129 = vmatpush2.msra.mxu0 0.0
      %3130 = vmatprep.subr.mxu0 0.0
      %3131 = vmatpush2.msra.mxu0 0.0
      %3132 = vmatprep.subr.mxu0 0.0
      %3133 = vmatpush2.msra.mxu0 0.0
      %3134 = vmatprep.subr.mxu0 0.0
      %3135 = vmatpush2.msra.mxu0 0.0
      %3136 = vmatprep.subr.mxu0 0.0
      %3137 = vmatpush2.msra.mxu0 0.0
      %3138 = vmatprep.subr.mxu0 0.0
      %3139 = vmatpush2.msra.mxu0 0.0
      %3140 = vmatprep.subr.mxu0 0.0
      %3141 = vmatpush2.msra.mxu0 0.0
      %3142 = vmatprep.subr.mxu0 0.0
      %3143 = vmatpush2.msra.mxu0 0.0
      %3144 = vmatprep.mubr.f32.mxu0 0.0
      %3145 = vmatmul.mubr.f32.gmra.mxu0 %v2958
      %v3146 = vpop.f32.mrf.mxu0
      %v3147 = vadd.f32 0.0, %v3146
      %v3148 = vpop.f32.mrf.mxu0
      %3149 = vmatprep.mubr.f32.mxu0 0.0
      %3150 = vmatmul.mubr.f32.gmra.mxu0 %v2961
      %v3151 = vpop.f32.mrf.mxu0
      %v3152 = vadd.f32 0.0, %v3151
      %v3153 = vpop.f32.mrf.mxu0
      %3154 = vmatprep.mubr.f32.mxu0 0.0
      %3155 = vmatmul.mubr.f32.gmra.mxu0 %v2964
      %v3156 = vpop.f32.mrf.mxu0
      %v3157 = vadd.f32 0.0, %v3156
      %v3158 = vpop.f32.mrf.mxu0
      %3159 = vmatprep.mubr.f32.mxu0 0.0
      %3160 = vmatmul.mubr.f32.gmra.mxu0 %v2967
      %v3161 = vpop.f32.mrf.mxu0
      %v3162 = vadd.f32 0.0, %v3161
      %v3163 = vpop.f32.mrf.mxu0
      %3164 = vmatprep.mubr.f32.mxu0 0.0
      %3165 = vmatmul.mubr.f32.gmra.mxu0 %v2970
      %v3166 = vpop.f32.mrf.mxu0
      %v3167 = vadd.f32 0.0, %v3166
      %v3168 = vpop.f32.mrf.mxu0
      %3169 = vmatprep.mubr.f32.mxu0 0.0
      %3170 = vmatmul.mubr.f32.gmra.mxu0 %v2973
      %v3171 = vpop.f32.mrf.mxu0
      %v3172 = vadd.f32 0.0, %v3171
      %v3173 = vpop.f32.mrf.mxu0
      %3174 = vmatprep.mubr.f32.mxu0 0.0
      %3175 = vmatmul.mubr.f32.gmra.mxu0 %v2976
      %v3176 = vpop.f32.mrf.mxu0
      %v3177 = vadd.f32 0.0, %v3176
      %v3178 = vpop.f32.mrf.mxu0
      %3179 = vmatprep.mubr.f32.mxu0 0.0
      %3180 = vmatmul.mubr.f32.gmra.mxu0 %v2979
      %v3181 = vpop.f32.mrf.mxu0
      %v3182 = vadd.f32 0.0, %v3181
      %v3183 = vpop.f32.mrf.mxu0
      %3184 = vmatprep.mubr.f32.mxu0 0.0
      %3185 = vmatmul.mubr.f32.gmra.mxu0 %v2982
      %v3186 = vpop.f32.mrf.mxu0
      %v3187 = vadd.f32 0.0, %v3186
      %v3188 = vpop.f32.mrf.mxu0
      %3189 = vmatprep.mubr.f32.mxu0 0.0
      %3190 = vmatmul.mubr.f32.gmra.mxu0 %v2985
      %v3191 = vpop.f32.mrf.mxu0
      %v3192 = vadd.f32 0.0, %v3191
      %v3193 = vpop.f32.mrf.mxu0
      %3194 = vmatprep.mubr.f32.mxu0 0.0
      %3195 = vmatmul.mubr.f32.gmra.mxu0 %v2988
      %v3196 = vpop.f32.mrf.mxu0
      %v3197 = vadd.f32 0.0, %v3196
      %v3198 = vpop.f32.mrf.mxu0
      %3199 = vmatprep.mubr.f32.mxu0 0.0
      %3200 = vmatmul.mubr.f32.gmra.mxu0 %v2991
      %v3201 = vpop.f32.mrf.mxu0
      %v3202 = vadd.f32 0.0, %v3201
      %v3203 = vpop.f32.mrf.mxu0
      %3204 = vmatprep.mubr.f32.mxu0 0.0
      %3205 = vmatmul.mubr.f32.gmra.mxu0 %v2994
      %v3206 = vpop.f32.mrf.mxu0
      %v3207 = vadd.f32 0.0, %v3206
      %v3208 = vpop.f32.mrf.mxu0
      %3209 = vmatprep.mubr.f32.mxu0 0.0
      %3210 = vmatmul.mubr.f32.gmra.mxu0 %v2997
      %v3211 = vpop.f32.mrf.mxu0
      %v3212 = vadd.f32 0.0, %v3211
      %v3213 = vpop.f32.mrf.mxu0
      %3214 = vmatprep.mubr.f32.mxu0 0.0
      %3215 = vmatmul.mubr.f32.gmra.mxu0 %v3000
      %v3216 = vpop.f32.mrf.mxu0
      %v3217 = vadd.f32 0.0, %v3216
      %v3218 = vpop.f32.mrf.mxu0
      %3219 = vmatprep.mubr.f32.mxu0 0.0
      %3220 = vmatmul.mubr.f32.gmra.mxu0 %v3003
      %v3221 = vpop.f32.mrf.mxu0
      %v3222 = vadd.f32 0.0, %v3221
      %v3223 = vpop.f32.mrf.mxu0
      %3224 = vmatprep.mubr.f32.mxu0 0.0
      %3225 = vmatmul.mubr.f32.gmra.mxu0 %v3006
      %v3226 = vpop.f32.mrf.mxu0
      %v3227 = vadd.f32 0.0, %v3226
      %v3228 = vpop.f32.mrf.mxu0
      %3229 = vmatprep.mubr.f32.mxu0 0.0
      %3230 = vmatmul.mubr.f32.gmra.mxu0 %v3009
      %v3231 = vpop.f32.mrf.mxu0
      %v3232 = vadd.f32 0.0, %v3231
      %v3233 = vpop.f32.mrf.mxu0
      %3234 = vmatprep.mubr.f32.mxu0 0.0
      %3235 = vmatmul.mubr.f32.gmra.mxu0 %v3012
      %v3236 = vpop.f32.mrf.mxu0
      %v3237 = vadd.f32 0.0, %v3236
      %v3238 = vpop.f32.mrf.mxu0
      %3239 = vmatprep.mubr.f32.mxu0 0.0
      %3240 = vmatmul.mubr.f32.gmra.mxu0 %v3015
      %v3241 = vpop.f32.mrf.mxu0
      %v3242 = vadd.f32 0.0, %v3241
      %v3243 = vpop.f32.mrf.mxu0
      %3244 = vmatprep.mubr.f32.mxu0 0.0
      %3245 = vmatmul.mubr.f32.gmra.mxu0 %v3018
      %v3246 = vpop.f32.mrf.mxu0
      %v3247 = vadd.f32 0.0, %v3246
      %v3248 = vpop.f32.mrf.mxu0
      %3249 = vmatprep.mubr.f32.mxu0 0.0
      %3250 = vmatmul.mubr.f32.gmra.mxu0 %v3021
      %v3251 = vpop.f32.mrf.mxu0
      %v3252 = vadd.f32 0.0, %v3251
      %v3253 = vpop.f32.mrf.mxu0
      %3254 = vmatprep.mubr.f32.mxu0 0.0
      %3255 = vmatmul.mubr.f32.gmra.mxu0 %v3024
      %v3256 = vpop.f32.mrf.mxu0
      %v3257 = vadd.f32 0.0, %v3256
      %v3258 = vpop.f32.mrf.mxu0
      %3259 = vmatprep.mubr.f32.mxu0 0.0
      %3260 = vmatmul.mubr.f32.gmra.mxu0 %v3027
      %v3261 = vpop.f32.mrf.mxu0
      %v3262 = vadd.f32 0.0, %v3261
      %v3263 = vpop.f32.mrf.mxu0
      %3264 = vmatprep.mubr.f32.mxu0 0.0
      %3265 = vmatmul.mubr.f32.gmra.mxu0 %v3030
      %v3266 = vpop.f32.mrf.mxu0
      %v3267 = vadd.f32 0.0, %v3266
      %v3268 = vpop.f32.mrf.mxu0
      %3269 = vmatprep.mubr.f32.mxu0 0.0
      %3270 = vmatmul.mubr.f32.gmra.mxu0 %v3033
      %v3271 = vpop.f32.mrf.mxu0
      %v3272 = vadd.f32 0.0, %v3271
      %v3273 = vpop.f32.mrf.mxu0
      %3274 = vmatprep.mubr.f32.mxu0 0.0
      %3275 = vmatmul.mubr.f32.gmra.mxu0 %v3036
      %v3276 = vpop.f32.mrf.mxu0
      %v3277 = vadd.f32 0.0, %v3276
      %v3278 = vpop.f32.mrf.mxu0
      %3279 = vmatprep.mubr.f32.mxu0 0.0
      %3280 = vmatmul.mubr.f32.gmra.mxu0 %v3039
      %v3281 = vpop.f32.mrf.mxu0
      %v3282 = vadd.f32 0.0, %v3281
      %v3283 = vpop.f32.mrf.mxu0
      %3284 = vmatprep.mubr.f32.mxu0 0.0
      %3285 = vmatmul.mubr.f32.gmra.mxu0 %v3042
      %v3286 = vpop.f32.mrf.mxu0
      %v3287 = vadd.f32 0.0, %v3286
      %v3288 = vpop.f32.mrf.mxu0
      %3289 = vmatprep.mubr.f32.mxu0 0.0
      %3290 = vmatmul.mubr.f32.gmra.mxu0 %v3045
      %v3291 = vpop.f32.mrf.mxu0
      %v3292 = vadd.f32 0.0, %v3291
      %v3293 = vpop.f32.mrf.mxu0
      %3294 = vmatprep.mubr.f32.mxu0 0.0
      %3295 = vmatmul.mubr.f32.gmra.mxu0 %v3048
      %v3296 = vpop.f32.mrf.mxu0
      %v3297 = vadd.f32 0.0, %v3296
      %v3298 = vpop.f32.mrf.mxu0
      %3299 = vmatprep.mubr.f32.mxu0 0.0
      %3300 = vmatmul.mubr.f32.gmra.mxu0 %v3051
      %v3301 = vpop.f32.mrf.mxu0
      %v3302 = vadd.f32 0.0, %v3301
      %v3303 = vpop.f32.mrf.mxu0
      %3304 = vmatprep.mubr.f32.mxu0 0.0
      %3305 = vmatmul.mubr.f32.gmra.mxu0 %v3054
      %v3306 = vpop.f32.mrf.mxu0
      %v3307 = vadd.f32 0.0, %v3306
      %v3308 = vpop.f32.mrf.mxu0
      %3309 = vmatprep.mubr.f32.mxu0 0.0
      %3310 = vmatmul.mubr.f32.gmra.mxu0 %v3057
      %v3311 = vpop.f32.mrf.mxu0
      %v3312 = vadd.f32 0.0, %v3311
      %v3313 = vpop.f32.mrf.mxu0
      %3314 = vmatprep.mubr.f32.mxu0 0.0
      %3315 = vmatmul.mubr.f32.gmra.mxu0 %v3060
      %v3316 = vpop.f32.mrf.mxu0
      %v3317 = vadd.f32 0.0, %v3316
      %v3318 = vpop.f32.mrf.mxu0
      %3319 = vmatprep.mubr.f32.mxu0 0.0
      %3320 = vmatmul.mubr.f32.gmra.mxu0 %v3063
      %v3321 = vpop.f32.mrf.mxu0
      %v3322 = vadd.f32 0.0, %v3321
      %v3323 = vpop.f32.mrf.mxu0
      %3324 = vmatprep.mubr.f32.mxu0 0.0
      %3325 = vmatmul.mubr.f32.gmra.mxu0 %v3066
      %v3326 = vpop.f32.mrf.mxu0
      %v3327 = vadd.f32 0.0, %v3326
      %v3328 = vpop.f32.mrf.mxu0
      %3329 = vmatprep.mubr.f32.mxu0 0.0
      %3330 = vmatmul.mubr.f32.gmra.mxu0 %v3069
      %v3331 = vpop.f32.mrf.mxu0
      %v3332 = vadd.f32 0.0, %v3331
      %v3333 = vpop.f32.mrf.mxu0
      %3334 = vmatprep.mubr.f32.mxu0 0.0
      %3335 = vmatmul.mubr.f32.gmra.mxu0 %v3072
      %v3336 = vpop.f32.mrf.mxu0
      %v3337 = vadd.f32 0.0, %v3336
      %v3338 = vpop.f32.mrf.mxu0
      %3339 = vmatprep.mubr.f32.mxu0 0.0
      %3340 = vmatmul.mubr.f32.gmra.mxu0 %v3075
      %v3341 = vpop.f32.mrf.mxu0
      %v3342 = vadd.f32 0.0, %v3341
      %v3343 = vpop.f32.mrf.mxu0
      %3344 = vmatprep.mubr.f32.mxu0 0.0
      %3345 = vmatmul.mubr.f32.gmra.mxu0 %v3078
      %v3346 = vpop.f32.mrf.mxu0
      %v3347 = vadd.f32 0.0, %v3346
      %v3348 = vpop.f32.mrf.mxu0
      %3349 = vdwg.mxu0
      %v3350 = vadd.f32 %v2866, %v3147
      %v3351 = vadd.f32 %v2867, %v3152
      %v3352 = vadd.f32 %v2868, %v3157
      %v3353 = vadd.f32 %v2869, %v3162
      %v3354 = vadd.f32 %v2870, %v3167
      %v3355 = vadd.f32 %v2871, %v3172
      %v3356 = vadd.f32 %v2872, %v3177
      %v3357 = vadd.f32 %v2873, %v3182
      %v3358 = vadd.f32 %v2874, %v3187
      %v3359 = vadd.f32 %v2875, %v3192
      %v3360 = vadd.f32 %v2876, %v3197
      %v3361 = vadd.f32 %v2877, %v3202
      %v3362 = vadd.f32 %v2878, %v3207
      %v3363 = vadd.f32 %v2879, %v3212
      %v3364 = vadd.f32 %v2880, %v3217
      %v3365 = vadd.f32 %v2881, %v3222
      %v3366 = vadd.f32 %v2882, %v3227
      %v3367 = vadd.f32 %v2883, %v3232
      %v3368 = vadd.f32 %v2884, %v3237
      %v3369 = vadd.f32 %v2885, %v3242
      %v3370 = vadd.f32 %v2886, %v3247
      %v3371 = vadd.f32 %v2887, %v3252
      %v3372 = vadd.f32 %v2888, %v3257
      %v3373 = vadd.f32 %v2889, %v3262
      %v3374 = vadd.f32 %v2890, %v3267
      %v3375 = vadd.f32 %v2891, %v3272
      %v3376 = vadd.f32 %v2892, %v3277
      %v3377 = vadd.f32 %v2893, %v3282
      %v3378 = vadd.f32 %v2894, %v3287
      %v3379 = vadd.f32 %v2895, %v3292
      %v3380 = vadd.f32 %v2896, %v3297
      %v3381 = vadd.f32 %v2897, %v3302
      %v3382 = vadd.f32 %v2898, %v3307
      %v3383 = vadd.f32 %v2899, %v3312
      %v3384 = vadd.f32 %v2900, %v3317
      %v3385 = vadd.f32 %v2901, %v3322
      %v3386 = vadd.f32 %v2902, %v3327
      %v3387 = vadd.f32 %v2903, %v3332
      %v3388 = vadd.f32 %v2904, %v3337
      %v3389 = vadd.f32 %v2905, %v3342
      %v3390 = vadd.f32 %v2906, %v3347
      %v3391 = vld [vmem:[#allocation2 + $0x19] sm:$0xff]
      %v3392 = vld [vmem:[#allocation2 + $0x21] sm:$0xff]
      %v3393 = vld [vmem:[#allocation2 + $0x29] sm:$0xff]
      %v3394 = vld [vmem:[#allocation2 + $0x31] sm:$0xff]
      %v3395 = vld [vmem:[#allocation2 + $0x39] sm:$0xff]
      %v3396 = vld [vmem:[#allocation2 + $0x41] sm:$0xff]
      %v3397 = vld [vmem:[#allocation2 + $0x49] sm:$0xff]
      %v3398 = vld [vmem:[#allocation2 + $0x51] sm:$0xff]
      %v3399 = vld [vmem:[#allocation2 + $0x59] sm:$0xff]
      %v3400 = vld [vmem:[#allocation2 + $0x61] sm:$0xff]
      %v3401 = vld [vmem:[#allocation2 + $0x69] sm:$0xff]
      %v3402 = vld [vmem:[#allocation2 + $0x71] sm:$0xff]
      %v3403 = vld [vmem:[#allocation2 + $0x79] sm:$0xff]
      %v3404 = vld [vmem:[#allocation2 + $0x81] sm:$0xff]
      %v3405 = vld [vmem:[#allocation2 + $0x89] sm:$0xff]
      %v3406 = vld [vmem:[#allocation2 + $0x91] sm:$0xff]
      %v3407 = vld [vmem:[#allocation2 + $0x99] sm:$0xff]
      %v3408 = vld [vmem:[#allocation2 + $0xa1] sm:$0xff]
      %v3409 = vld [vmem:[#allocation2 + $0xa9] sm:$0xff]
      %v3410 = vld [vmem:[#allocation2 + $0xb1] sm:$0xff]
      %v3411 = vld [vmem:[#allocation2 + $0xb9] sm:$0xff]
      %v3412 = vld [vmem:[#allocation2 + $0xc1] sm:$0xff]
      %v3413 = vld [vmem:[#allocation2 + $0xc9] sm:$0xff]
      %v3414 = vld [vmem:[#allocation2 + $0xd1] sm:$0xff]
      %v3415 = vld [vmem:[#allocation2 + $0xd9] sm:$0xff]
      %v3416 = vld [vmem:[#allocation2 + $0xe1] sm:$0xff]
      %v3417 = vld [vmem:[#allocation2 + $0xe9] sm:$0xff]
      %v3418 = vld [vmem:[#allocation2 + $0xf1] sm:$0xff]
      %v3419 = vld [vmem:[#allocation2 + $0xf9] sm:$0xff]
      %v3420 = vld [vmem:[#allocation2 + $0x101] sm:$0xff]
      %v3421 = vld [vmem:[#allocation2 + $0x109] sm:$0xff]
      %v3422 = vld [vmem:[#allocation2 + $0x111] sm:$0xff]
      %v3423 = vld [vmem:[#allocation2 + $0x119] sm:$0xff]
      %v3424 = vld [vmem:[#allocation2 + $0x121] sm:$0xff]
      %v3425 = vld [vmem:[#allocation2 + $0x129] sm:$0xff]
      %v3426 = vld [vmem:[#allocation2 + $0x131] sm:$0xff]
      %v3427 = vld [vmem:[#allocation2 + $0x139] sm:$0xff]
      %v3428 = vld [vmem:[#allocation2 + $0x141] sm:$0xff]
      %v3429 = vld [vmem:[#allocation2 + $0x149] sm:$0xff]
      %v3430 = vld [vmem:[#allocation2 + $0x151] sm:$0xff]
      %v3431 = vld [vmem:[#allocation2 + $0x159] sm:$0xf]
      %s3432 = scalar_lea.vmem %s2, 320
      %v3433 = vld [vmem:[%s3432] sm:$0xff]
      %v3434 = vld [vmem:[%s3432 + $0x8] sm:$0xff]
      %v3435 = vld [vmem:[%s3432 + $0x10] sm:$0xff]
      %v3436 = vld [vmem:[%s3432 + $0x18] sm:$0xff]
      %v3437 = vld [vmem:[%s3432 + $0x20] sm:$0xff]
      %v3438 = vld [vmem:[%s3432 + $0x28] sm:$0xff]
      %v3439 = vld [vmem:[%s3432 + $0x30] sm:$0xff]
      %v3440 = vld [vmem:[%s3432 + $0x38] sm:$0xff]
      %v3442 = vsel %vm293, %v3391, 0
      %v3445 = vsel %vm293, %v3392, 0
      %v3448 = vsel %vm293, %v3393, 0
      %v3451 = vsel %vm293, %v3394, 0
      %v3454 = vsel %vm293, %v3395, 0
      %v3457 = vsel %vm293, %v3396, 0
      %v3460 = vsel %vm293, %v3397, 0
      %v3463 = vsel %vm293, %v3398, 0
      %v3466 = vsel %vm293, %v3399, 0
      %v3469 = vsel %vm293, %v3400, 0
      %v3472 = vsel %vm293, %v3401, 0
      %v3475 = vsel %vm293, %v3402, 0
      %v3478 = vsel %vm293, %v3403, 0
      %v3481 = vsel %vm293, %v3404, 0
      %v3484 = vsel %vm293, %v3405, 0
      %v3487 = vsel %vm293, %v3406, 0
      %v3490 = vsel %vm293, %v3407, 0
      %v3493 = vsel %vm293, %v3408, 0
      %v3496 = vsel %vm293, %v3409, 0
      %v3499 = vsel %vm293, %v3410, 0
      %v3502 = vsel %vm293, %v3411, 0
      %v3505 = vsel %vm293, %v3412, 0
      %v3508 = vsel %vm293, %v3413, 0
      %v3511 = vsel %vm293, %v3414, 0
      %v3514 = vsel %vm293, %v3415, 0
      %v3517 = vsel %vm293, %v3416, 0
      %v3520 = vsel %vm293, %v3417, 0
      %v3523 = vsel %vm293, %v3418, 0
      %v3526 = vsel %vm293, %v3419, 0
      %v3529 = vsel %vm293, %v3420, 0
      %v3532 = vsel %vm293, %v3421, 0
      %v3535 = vsel %vm293, %v3422, 0
      %v3538 = vsel %vm293, %v3423, 0
      %v3541 = vsel %vm293, %v3424, 0
      %v3544 = vsel %vm293, %v3425, 0
      %v3547 = vsel %vm293, %v3426, 0
      %v3550 = vsel %vm293, %v3427, 0
      %v3553 = vsel %vm293, %v3428, 0
      %v3556 = vsel %vm293, %v3429, 0
      %v3559 = vsel %vm293, %v3430, 0
      %v3562 = vsel %vm293, %v3431, 0
      %3564 = vmatprep.subr.mxu0 0.0
      %3565 = vmatpush1.msra.mxu0 0.0
      %3566 = vmatprep.subr.mxu0 0.0
      %3567 = vmatpush1.msra.mxu0 0.0
      %3568 = vmatprep.subr.mxu0 0.0
      %3569 = vmatpush1.msra.mxu0 0.0
      %3570 = vmatprep.subr.mxu0 0.0
      %3571 = vmatpush1.msra.mxu0 0.0
      %3572 = vmatprep.subr.mxu0 0.0
      %3573 = vmatpush1.msra.mxu0 0.0
      %3574 = vmatprep.subr.mxu0 0.0
      %3575 = vmatpush1.msra.mxu0 0.0
      %3576 = vmatprep.subr.mxu0 0.0
      %3577 = vmatpush1.msra.mxu0 0.0
      %3578 = vmatprep.subr.mxu0 0.0
      %3579 = vmatpush1.msra.mxu0 0.0
      %3580 = vmatprep.subr.mxu0 0.0
      %3581 = vmatpush1.msra.mxu0 %v3440
      %3582 = vmatprep.subr.mxu0 0.0
      %3583 = vmatpush1.msra.mxu0 %v3439
      %3584 = vmatprep.subr.mxu0 0.0
      %3585 = vmatpush1.msra.mxu0 %v3438
      %3586 = vmatprep.subr.mxu0 0.0
      %3587 = vmatpush1.msra.mxu0 %v3437
      %3588 = vmatprep.subr.mxu0 0.0
      %3589 = vmatpush1.msra.mxu0 %v3436
      %3590 = vmatprep.subr.mxu0 0.0
      %3591 = vmatpush1.msra.mxu0 %v3435
      %3592 = vmatprep.subr.mxu0 0.0
      %3593 = vmatpush1.msra.mxu0 %v3434
      %3594 = vmatprep.subr.mxu0 0.0
      %3595 = vmatpush1.msra.mxu0 %v3433
      %3596 = vmatprep.subr.mxu0 0.0
      %3597 = vmatpush2.msra.mxu0 0.0
      %3598 = vmatprep.subr.mxu0 0.0
      %3599 = vmatpush2.msra.mxu0 0.0
      %3600 = vmatprep.subr.mxu0 0.0
      %3601 = vmatpush2.msra.mxu0 0.0
      %3602 = vmatprep.subr.mxu0 0.0
      %3603 = vmatpush2.msra.mxu0 0.0
      %3604 = vmatprep.subr.mxu0 0.0
      %3605 = vmatpush2.msra.mxu0 0.0
      %3606 = vmatprep.subr.mxu0 0.0
      %3607 = vmatpush2.msra.mxu0 0.0
      %3608 = vmatprep.subr.mxu0 0.0
      %3609 = vmatpush2.msra.mxu0 0.0
      %3610 = vmatprep.subr.mxu0 0.0
      %3611 = vmatpush2.msra.mxu0 0.0
      %3612 = vmatprep.subr.mxu0 0.0
      %3613 = vmatpush2.msra.mxu0 0.0
      %3614 = vmatprep.subr.mxu0 0.0
      %3615 = vmatpush2.msra.mxu0 0.0
      %3616 = vmatprep.subr.mxu0 0.0
      %3617 = vmatpush2.msra.mxu0 0.0
      %3618 = vmatprep.subr.mxu0 0.0
      %3619 = vmatpush2.msra.mxu0 0.0
      %3620 = vmatprep.subr.mxu0 0.0
      %3621 = vmatpush2.msra.mxu0 0.0
      %3622 = vmatprep.subr.mxu0 0.0
      %3623 = vmatpush2.msra.mxu0 0.0
      %3624 = vmatprep.subr.mxu0 0.0
      %3625 = vmatpush2.msra.mxu0 0.0
      %3626 = vmatprep.subr.mxu0 0.0
      %3627 = vmatpush2.msra.mxu0 0.0
      %3628 = vmatprep.mubr.f32.mxu0 0.0
      %3629 = vmatmul.mubr.f32.gmra.mxu0 %v3442
      %v3630 = vpop.f32.mrf.mxu0
      %v3631 = vadd.f32 0.0, %v3630
      %v3632 = vpop.f32.mrf.mxu0
      %3633 = vmatprep.mubr.f32.mxu0 0.0
      %3634 = vmatmul.mubr.f32.gmra.mxu0 %v3445
      %v3635 = vpop.f32.mrf.mxu0
      %v3636 = vadd.f32 0.0, %v3635
      %v3637 = vpop.f32.mrf.mxu0
      %3638 = vmatprep.mubr.f32.mxu0 0.0
      %3639 = vmatmul.mubr.f32.gmra.mxu0 %v3448
      %v3640 = vpop.f32.mrf.mxu0
      %v3641 = vadd.f32 0.0, %v3640
      %v3642 = vpop.f32.mrf.mxu0
      %3643 = vmatprep.mubr.f32.mxu0 0.0
      %3644 = vmatmul.mubr.f32.gmra.mxu0 %v3451
      %v3645 = vpop.f32.mrf.mxu0
      %v3646 = vadd.f32 0.0, %v3645
      %v3647 = vpop.f32.mrf.mxu0
      %3648 = vmatprep.mubr.f32.mxu0 0.0
      %3649 = vmatmul.mubr.f32.gmra.mxu0 %v3454
      %v3650 = vpop.f32.mrf.mxu0
      %v3651 = vadd.f32 0.0, %v3650
      %v3652 = vpop.f32.mrf.mxu0
      %3653 = vmatprep.mubr.f32.mxu0 0.0
      %3654 = vmatmul.mubr.f32.gmra.mxu0 %v3457
      %v3655 = vpop.f32.mrf.mxu0
      %v3656 = vadd.f32 0.0, %v3655
      %v3657 = vpop.f32.mrf.mxu0
      %3658 = vmatprep.mubr.f32.mxu0 0.0
      %3659 = vmatmul.mubr.f32.gmra.mxu0 %v3460
      %v3660 = vpop.f32.mrf.mxu0
      %v3661 = vadd.f32 0.0, %v3660
      %v3662 = vpop.f32.mrf.mxu0
      %3663 = vmatprep.mubr.f32.mxu0 0.0
      %3664 = vmatmul.mubr.f32.gmra.mxu0 %v3463
      %v3665 = vpop.f32.mrf.mxu0
      %v3666 = vadd.f32 0.0, %v3665
      %v3667 = vpop.f32.mrf.mxu0
      %3668 = vmatprep.mubr.f32.mxu0 0.0
      %3669 = vmatmul.mubr.f32.gmra.mxu0 %v3466
      %v3670 = vpop.f32.mrf.mxu0
      %v3671 = vadd.f32 0.0, %v3670
      %v3672 = vpop.f32.mrf.mxu0
      %3673 = vmatprep.mubr.f32.mxu0 0.0
      %3674 = vmatmul.mubr.f32.gmra.mxu0 %v3469
      %v3675 = vpop.f32.mrf.mxu0
      %v3676 = vadd.f32 0.0, %v3675
      %v3677 = vpop.f32.mrf.mxu0
      %3678 = vmatprep.mubr.f32.mxu0 0.0
      %3679 = vmatmul.mubr.f32.gmra.mxu0 %v3472
      %v3680 = vpop.f32.mrf.mxu0
      %v3681 = vadd.f32 0.0, %v3680
      %v3682 = vpop.f32.mrf.mxu0
      %3683 = vmatprep.mubr.f32.mxu0 0.0
      %3684 = vmatmul.mubr.f32.gmra.mxu0 %v3475
      %v3685 = vpop.f32.mrf.mxu0
      %v3686 = vadd.f32 0.0, %v3685
      %v3687 = vpop.f32.mrf.mxu0
      %3688 = vmatprep.mubr.f32.mxu0 0.0
      %3689 = vmatmul.mubr.f32.gmra.mxu0 %v3478
      %v3690 = vpop.f32.mrf.mxu0
      %v3691 = vadd.f32 0.0, %v3690
      %v3692 = vpop.f32.mrf.mxu0
      %3693 = vmatprep.mubr.f32.mxu0 0.0
      %3694 = vmatmul.mubr.f32.gmra.mxu0 %v3481
      %v3695 = vpop.f32.mrf.mxu0
      %v3696 = vadd.f32 0.0, %v3695
      %v3697 = vpop.f32.mrf.mxu0
      %3698 = vmatprep.mubr.f32.mxu0 0.0
      %3699 = vmatmul.mubr.f32.gmra.mxu0 %v3484
      %v3700 = vpop.f32.mrf.mxu0
      %v3701 = vadd.f32 0.0, %v3700
      %v3702 = vpop.f32.mrf.mxu0
      %3703 = vmatprep.mubr.f32.mxu0 0.0
      %3704 = vmatmul.mubr.f32.gmra.mxu0 %v3487
      %v3705 = vpop.f32.mrf.mxu0
      %v3706 = vadd.f32 0.0, %v3705
      %v3707 = vpop.f32.mrf.mxu0
      %3708 = vmatprep.mubr.f32.mxu0 0.0
      %3709 = vmatmul.mubr.f32.gmra.mxu0 %v3490
      %v3710 = vpop.f32.mrf.mxu0
      %v3711 = vadd.f32 0.0, %v3710
      %v3712 = vpop.f32.mrf.mxu0
      %3713 = vmatprep.mubr.f32.mxu0 0.0
      %3714 = vmatmul.mubr.f32.gmra.mxu0 %v3493
      %v3715 = vpop.f32.mrf.mxu0
      %v3716 = vadd.f32 0.0, %v3715
      %v3717 = vpop.f32.mrf.mxu0
      %3718 = vmatprep.mubr.f32.mxu0 0.0
      %3719 = vmatmul.mubr.f32.gmra.mxu0 %v3496
      %v3720 = vpop.f32.mrf.mxu0
      %v3721 = vadd.f32 0.0, %v3720
      %v3722 = vpop.f32.mrf.mxu0
      %3723 = vmatprep.mubr.f32.mxu0 0.0
      %3724 = vmatmul.mubr.f32.gmra.mxu0 %v3499
      %v3725 = vpop.f32.mrf.mxu0
      %v3726 = vadd.f32 0.0, %v3725
      %v3727 = vpop.f32.mrf.mxu0
      %3728 = vmatprep.mubr.f32.mxu0 0.0
      %3729 = vmatmul.mubr.f32.gmra.mxu0 %v3502
      %v3730 = vpop.f32.mrf.mxu0
      %v3731 = vadd.f32 0.0, %v3730
      %v3732 = vpop.f32.mrf.mxu0
      %3733 = vmatprep.mubr.f32.mxu0 0.0
      %3734 = vmatmul.mubr.f32.gmra.mxu0 %v3505
      %v3735 = vpop.f32.mrf.mxu0
      %v3736 = vadd.f32 0.0, %v3735
      %v3737 = vpop.f32.mrf.mxu0
      %3738 = vmatprep.mubr.f32.mxu0 0.0
      %3739 = vmatmul.mubr.f32.gmra.mxu0 %v3508
      %v3740 = vpop.f32.mrf.mxu0
      %v3741 = vadd.f32 0.0, %v3740
      %v3742 = vpop.f32.mrf.mxu0
      %3743 = vmatprep.mubr.f32.mxu0 0.0
      %3744 = vmatmul.mubr.f32.gmra.mxu0 %v3511
      %v3745 = vpop.f32.mrf.mxu0
      %v3746 = vadd.f32 0.0, %v3745
      %v3747 = vpop.f32.mrf.mxu0
      %3748 = vmatprep.mubr.f32.mxu0 0.0
      %3749 = vmatmul.mubr.f32.gmra.mxu0 %v3514
      %v3750 = vpop.f32.mrf.mxu0
      %v3751 = vadd.f32 0.0, %v3750
      %v3752 = vpop.f32.mrf.mxu0
      %3753 = vmatprep.mubr.f32.mxu0 0.0
      %3754 = vmatmul.mubr.f32.gmra.mxu0 %v3517
      %v3755 = vpop.f32.mrf.mxu0
      %v3756 = vadd.f32 0.0, %v3755
      %v3757 = vpop.f32.mrf.mxu0
      %3758 = vmatprep.mubr.f32.mxu0 0.0
      %3759 = vmatmul.mubr.f32.gmra.mxu0 %v3520
      %v3760 = vpop.f32.mrf.mxu0
      %v3761 = vadd.f32 0.0, %v3760
      %v3762 = vpop.f32.mrf.mxu0
      %3763 = vmatprep.mubr.f32.mxu0 0.0
      %3764 = vmatmul.mubr.f32.gmra.mxu0 %v3523
      %v3765 = vpop.f32.mrf.mxu0
      %v3766 = vadd.f32 0.0, %v3765
      %v3767 = vpop.f32.mrf.mxu0
      %3768 = vmatprep.mubr.f32.mxu0 0.0
      %3769 = vmatmul.mubr.f32.gmra.mxu0 %v3526
      %v3770 = vpop.f32.mrf.mxu0
      %v3771 = vadd.f32 0.0, %v3770
      %v3772 = vpop.f32.mrf.mxu0
      %3773 = vmatprep.mubr.f32.mxu0 0.0
      %3774 = vmatmul.mubr.f32.gmra.mxu0 %v3529
      %v3775 = vpop.f32.mrf.mxu0
      %v3776 = vadd.f32 0.0, %v3775
      %v3777 = vpop.f32.mrf.mxu0
      %3778 = vmatprep.mubr.f32.mxu0 0.0
      %3779 = vmatmul.mubr.f32.gmra.mxu0 %v3532
      %v3780 = vpop.f32.mrf.mxu0
      %v3781 = vadd.f32 0.0, %v3780
      %v3782 = vpop.f32.mrf.mxu0
      %3783 = vmatprep.mubr.f32.mxu0 0.0
      %3784 = vmatmul.mubr.f32.gmra.mxu0 %v3535
      %v3785 = vpop.f32.mrf.mxu0
      %v3786 = vadd.f32 0.0, %v3785
      %v3787 = vpop.f32.mrf.mxu0
      %3788 = vmatprep.mubr.f32.mxu0 0.0
      %3789 = vmatmul.mubr.f32.gmra.mxu0 %v3538
      %v3790 = vpop.f32.mrf.mxu0
      %v3791 = vadd.f32 0.0, %v3790
      %v3792 = vpop.f32.mrf.mxu0
      %3793 = vmatprep.mubr.f32.mxu0 0.0
      %3794 = vmatmul.mubr.f32.gmra.mxu0 %v3541
      %v3795 = vpop.f32.mrf.mxu0
      %v3796 = vadd.f32 0.0, %v3795
      %v3797 = vpop.f32.mrf.mxu0
      %3798 = vmatprep.mubr.f32.mxu0 0.0
      %3799 = vmatmul.mubr.f32.gmra.mxu0 %v3544
      %v3800 = vpop.f32.mrf.mxu0
      %v3801 = vadd.f32 0.0, %v3800
      %v3802 = vpop.f32.mrf.mxu0
      %3803 = vmatprep.mubr.f32.mxu0 0.0
      %3804 = vmatmul.mubr.f32.gmra.mxu0 %v3547
      %v3805 = vpop.f32.mrf.mxu0
      %v3806 = vadd.f32 0.0, %v3805
      %v3807 = vpop.f32.mrf.mxu0
      %3808 = vmatprep.mubr.f32.mxu0 0.0
      %3809 = vmatmul.mubr.f32.gmra.mxu0 %v3550
      %v3810 = vpop.f32.mrf.mxu0
      %v3811 = vadd.f32 0.0, %v3810
      %v3812 = vpop.f32.mrf.mxu0
      %3813 = vmatprep.mubr.f32.mxu0 0.0
      %3814 = vmatmul.mubr.f32.gmra.mxu0 %v3553
      %v3815 = vpop.f32.mrf.mxu0
      %v3816 = vadd.f32 0.0, %v3815
      %v3817 = vpop.f32.mrf.mxu0
      %3818 = vmatprep.mubr.f32.mxu0 0.0
      %3819 = vmatmul.mubr.f32.gmra.mxu0 %v3556
      %v3820 = vpop.f32.mrf.mxu0
      %v3821 = vadd.f32 0.0, %v3820
      %v3822 = vpop.f32.mrf.mxu0
      %3823 = vmatprep.mubr.f32.mxu0 0.0
      %3824 = vmatmul.mubr.f32.gmra.mxu0 %v3559
      %v3825 = vpop.f32.mrf.mxu0
      %v3826 = vadd.f32 0.0, %v3825
      %v3827 = vpop.f32.mrf.mxu0
      %3828 = vmatprep.mubr.f32.mxu0 0.0
      %3829 = vmatmul.mubr.f32.gmra.mxu0 %v3562
      %v3830 = vpop.f32.mrf.mxu0
      %v3831 = vadd.f32 0.0, %v3830
      %v3832 = vpop.f32.mrf.mxu0
      %3833 = vdwg.mxu0
      %v3834 = vadd.f32 %v3350, %v3631
      %v3835 = vadd.f32 %v3351, %v3636
      %v3836 = vadd.f32 %v3352, %v3641
      %v3837 = vadd.f32 %v3353, %v3646
      %v3838 = vadd.f32 %v3354, %v3651
      %v3839 = vadd.f32 %v3355, %v3656
      %v3840 = vadd.f32 %v3356, %v3661
      %v3841 = vadd.f32 %v3357, %v3666
      %v3842 = vadd.f32 %v3358, %v3671
      %v3843 = vadd.f32 %v3359, %v3676
      %v3844 = vadd.f32 %v3360, %v3681
      %v3845 = vadd.f32 %v3361, %v3686
      %v3846 = vadd.f32 %v3362, %v3691
      %v3847 = vadd.f32 %v3363, %v3696
      %v3848 = vadd.f32 %v3364, %v3701
      %v3849 = vadd.f32 %v3365, %v3706
      %v3850 = vadd.f32 %v3366, %v3711
      %v3851 = vadd.f32 %v3367, %v3716
      %v3852 = vadd.f32 %v3368, %v3721
      %v3853 = vadd.f32 %v3369, %v3726
      %v3854 = vadd.f32 %v3370, %v3731
      %v3855 = vadd.f32 %v3371, %v3736
      %v3856 = vadd.f32 %v3372, %v3741
      %v3857 = vadd.f32 %v3373, %v3746
      %v3858 = vadd.f32 %v3374, %v3751
      %v3859 = vadd.f32 %v3375, %v3756
      %v3860 = vadd.f32 %v3376, %v3761
      %v3861 = vadd.f32 %v3377, %v3766
      %v3862 = vadd.f32 %v3378, %v3771
      %v3863 = vadd.f32 %v3379, %v3776
      %v3864 = vadd.f32 %v3380, %v3781
      %v3865 = vadd.f32 %v3381, %v3786
      %v3866 = vadd.f32 %v3382, %v3791
      %v3867 = vadd.f32 %v3383, %v3796
      %v3868 = vadd.f32 %v3384, %v3801
      %v3869 = vadd.f32 %v3385, %v3806
      %v3870 = vadd.f32 %v3386, %v3811
      %v3871 = vadd.f32 %v3387, %v3816
      %v3872 = vadd.f32 %v3388, %v3821
      %v3873 = vadd.f32 %v3389, %v3826
      %v3874 = vadd.f32 %v3390, %v3831
      %v3875 = vld [vmem:[#allocation2 + $0x29] sm:$0xff]
      %v3876 = vld [vmem:[#allocation2 + $0x31] sm:$0xff]
      %v3877 = vld [vmem:[#allocation2 + $0x39] sm:$0xff]
      %v3878 = vld [vmem:[#allocation2 + $0x41] sm:$0xff]
      %v3879 = vld [vmem:[#allocation2 + $0x49] sm:$0xff]
      %v3880 = vld [vmem:[#allocation2 + $0x51] sm:$0xff]
      %v3881 = vld [vmem:[#allocation2 + $0x59] sm:$0xff]
      %v3882 = vld [vmem:[#allocation2 + $0x61] sm:$0xff]
      %v3883 = vld [vmem:[#allocation2 + $0x69] sm:$0xff]
      %v3884 = vld [vmem:[#allocation2 + $0x71] sm:$0xff]
      %v3885 = vld [vmem:[#allocation2 + $0x79] sm:$0xff]
      %v3886 = vld [vmem:[#allocation2 + $0x81] sm:$0xff]
      %v3887 = vld [vmem:[#allocation2 + $0x89] sm:$0xff]
      %v3888 = vld [vmem:[#allocation2 + $0x91] sm:$0xff]
      %v3889 = vld [vmem:[#allocation2 + $0x99] sm:$0xff]
      %v3890 = vld [vmem:[#allocation2 + $0xa1] sm:$0xff]
      %v3891 = vld [vmem:[#allocation2 + $0xa9] sm:$0xff]
      %v3892 = vld [vmem:[#allocation2 + $0xb1] sm:$0xff]
      %v3893 = vld [vmem:[#allocation2 + $0xb9] sm:$0xff]
      %v3894 = vld [vmem:[#allocation2 + $0xc1] sm:$0xff]
      %v3895 = vld [vmem:[#allocation2 + $0xc9] sm:$0xff]
      %v3896 = vld [vmem:[#allocation2 + $0xd1] sm:$0xff]
      %v3897 = vld [vmem:[#allocation2 + $0xd9] sm:$0xff]
      %v3898 = vld [vmem:[#allocation2 + $0xe1] sm:$0xff]
      %v3899 = vld [vmem:[#allocation2 + $0xe9] sm:$0xff]
      %v3900 = vld [vmem:[#allocation2 + $0xf1] sm:$0xff]
      %v3901 = vld [vmem:[#allocation2 + $0xf9] sm:$0xff]
      %v3902 = vld [vmem:[#allocation2 + $0x101] sm:$0xff]
      %v3903 = vld [vmem:[#allocation2 + $0x109] sm:$0xff]
      %v3904 = vld [vmem:[#allocation2 + $0x111] sm:$0xff]
      %v3905 = vld [vmem:[#allocation2 + $0x119] sm:$0xff]
      %v3906 = vld [vmem:[#allocation2 + $0x121] sm:$0xff]
      %v3907 = vld [vmem:[#allocation2 + $0x129] sm:$0xff]
      %v3908 = vld [vmem:[#allocation2 + $0x131] sm:$0xff]
      %v3909 = vld [vmem:[#allocation2 + $0x139] sm:$0xff]
      %v3910 = vld [vmem:[#allocation2 + $0x141] sm:$0xff]
      %v3911 = vld [vmem:[#allocation2 + $0x149] sm:$0xff]
      %v3912 = vld [vmem:[#allocation2 + $0x151] sm:$0xff]
      %v3913 = vld [vmem:[#allocation2 + $0x159] sm:$0xff]
      %v3914 = vld [vmem:[#allocation2 + $0x161] sm:$0xff]
      %v3915 = vld [vmem:[#allocation2 + $0x169] sm:$0xf]
      %s3916 = scalar_lea.vmem %s2, 384
      %v3917 = vld [vmem:[%s3916] sm:$0xff]
      %v3918 = vld [vmem:[%s3916 + $0x8] sm:$0xff]
      %v3919 = vld [vmem:[%s3916 + $0x10] sm:$0xff]
      %v3920 = vld [vmem:[%s3916 + $0x18] sm:$0xff]
      %v3921 = vld [vmem:[%s3916 + $0x20] sm:$0xff]
      %v3922 = vld [vmem:[%s3916 + $0x28] sm:$0xff]
      %v3923 = vld [vmem:[%s3916 + $0x30] sm:$0xff]
      %v3924 = vld [vmem:[%s3916 + $0x38] sm:$0xff]
      %v3926 = vsel %vm293, %v3875, 0
      %v3929 = vsel %vm293, %v3876, 0
      %v3932 = vsel %vm293, %v3877, 0
      %v3935 = vsel %vm293, %v3878, 0
      %v3938 = vsel %vm293, %v3879, 0
      %v3941 = vsel %vm293, %v3880, 0
      %v3944 = vsel %vm293, %v3881, 0
      %v3947 = vsel %vm293, %v3882, 0
      %v3950 = vsel %vm293, %v3883, 0
      %v3953 = vsel %vm293, %v3884, 0
      %v3956 = vsel %vm293, %v3885, 0
      %v3959 = vsel %vm293, %v3886, 0
      %v3962 = vsel %vm293, %v3887, 0
      %v3965 = vsel %vm293, %v3888, 0
      %v3968 = vsel %vm293, %v3889, 0
      %v3971 = vsel %vm293, %v3890, 0
      %v3974 = vsel %vm293, %v3891, 0
      %v3977 = vsel %vm293, %v3892, 0
      %v3980 = vsel %vm293, %v3893, 0
      %v3983 = vsel %vm293, %v3894, 0
      %v3986 = vsel %vm293, %v3895, 0
      %v3989 = vsel %vm293, %v3896, 0
      %v3992 = vsel %vm293, %v3897, 0
      %v3995 = vsel %vm293, %v3898, 0
      %v3998 = vsel %vm293, %v3899, 0
      %v4001 = vsel %vm293, %v3900, 0
      %v4004 = vsel %vm293, %v3901, 0
      %v4007 = vsel %vm293, %v3902, 0
      %v4010 = vsel %vm293, %v3903, 0
      %v4013 = vsel %vm293, %v3904, 0
      %v4016 = vsel %vm293, %v3905, 0
      %v4019 = vsel %vm293, %v3906, 0
      %v4022 = vsel %vm293, %v3907, 0
      %v4025 = vsel %vm293, %v3908, 0
      %v4028 = vsel %vm293, %v3909, 0
      %v4031 = vsel %vm293, %v3910, 0
      %v4034 = vsel %vm293, %v3911, 0
      %v4037 = vsel %vm293, %v3912, 0
      %v4040 = vsel %vm293, %v3913, 0
      %v4043 = vsel %vm293, %v3914, 0
      %v4046 = vsel %vm293, %v3915, 0
      %4048 = vmatprep.subr.mxu0 0.0
      %4049 = vmatpush1.msra.mxu0 0.0
      %4050 = vmatprep.subr.mxu0 0.0
      %4051 = vmatpush1.msra.mxu0 0.0
      %4052 = vmatprep.subr.mxu0 0.0
      %4053 = vmatpush1.msra.mxu0 0.0
      %4054 = vmatprep.subr.mxu0 0.0
      %4055 = vmatpush1.msra.mxu0 0.0
      %4056 = vmatprep.subr.mxu0 0.0
      %4057 = vmatpush1.msra.mxu0 0.0
      %4058 = vmatprep.subr.mxu0 0.0
      %4059 = vmatpush1.msra.mxu0 0.0
      %4060 = vmatprep.subr.mxu0 0.0
      %4061 = vmatpush1.msra.mxu0 0.0
      %4062 = vmatprep.subr.mxu0 0.0
      %4063 = vmatpush1.msra.mxu0 0.0
      %4064 = vmatprep.subr.mxu0 0.0
      %4065 = vmatpush1.msra.mxu0 %v3924
      %4066 = vmatprep.subr.mxu0 0.0
      %4067 = vmatpush1.msra.mxu0 %v3923
      %4068 = vmatprep.subr.mxu0 0.0
      %4069 = vmatpush1.msra.mxu0 %v3922
      %4070 = vmatprep.subr.mxu0 0.0
      %4071 = vmatpush1.msra.mxu0 %v3921
      %4072 = vmatprep.subr.mxu0 0.0
      %4073 = vmatpush1.msra.mxu0 %v3920
      %4074 = vmatprep.subr.mxu0 0.0
      %4075 = vmatpush1.msra.mxu0 %v3919
      %4076 = vmatprep.subr.mxu0 0.0
      %4077 = vmatpush1.msra.mxu0 %v3918
      %4078 = vmatprep.subr.mxu0 0.0
      %4079 = vmatpush1.msra.mxu0 %v3917
      %4080 = vmatprep.subr.mxu0 0.0
      %4081 = vmatpush2.msra.mxu0 0.0
      %4082 = vmatprep.subr.mxu0 0.0
      %4083 = vmatpush2.msra.mxu0 0.0
      %4084 = vmatprep.subr.mxu0 0.0
      %4085 = vmatpush2.msra.mxu0 0.0
      %4086 = vmatprep.subr.mxu0 0.0
      %4087 = vmatpush2.msra.mxu0 0.0
      %4088 = vmatprep.subr.mxu0 0.0
      %4089 = vmatpush2.msra.mxu0 0.0
      %4090 = vmatprep.subr.mxu0 0.0
      %4091 = vmatpush2.msra.mxu0 0.0
      %4092 = vmatprep.subr.mxu0 0.0
      %4093 = vmatpush2.msra.mxu0 0.0
      %4094 = vmatprep.subr.mxu0 0.0
      %4095 = vmatpush2.msra.mxu0 0.0
      %4096 = vmatprep.subr.mxu0 0.0
      %4097 = vmatpush2.msra.mxu0 0.0
      %4098 = vmatprep.subr.mxu0 0.0
      %4099 = vmatpush2.msra.mxu0 0.0
      %4100 = vmatprep.subr.mxu0 0.0
      %4101 = vmatpush2.msra.mxu0 0.0
      %4102 = vmatprep.subr.mxu0 0.0
      %4103 = vmatpush2.msra.mxu0 0.0
      %4104 = vmatprep.subr.mxu0 0.0
      %4105 = vmatpush2.msra.mxu0 0.0
      %4106 = vmatprep.subr.mxu0 0.0
      %4107 = vmatpush2.msra.mxu0 0.0
      %4108 = vmatprep.subr.mxu0 0.0
      %4109 = vmatpush2.msra.mxu0 0.0
      %4110 = vmatprep.subr.mxu0 0.0
      %4111 = vmatpush2.msra.mxu0 0.0
      %4112 = vmatprep.mubr.f32.mxu0 0.0
      %4113 = vmatmul.mubr.f32.gmra.mxu0 %v3926
      %v4114 = vpop.f32.mrf.mxu0
      %v4115 = vadd.f32 0.0, %v4114
      %v4116 = vpop.f32.mrf.mxu0
      %4117 = vmatprep.mubr.f32.mxu0 0.0
      %4118 = vmatmul.mubr.f32.gmra.mxu0 %v3929
      %v4119 = vpop.f32.mrf.mxu0
      %v4120 = vadd.f32 0.0, %v4119
      %v4121 = vpop.f32.mrf.mxu0
      %4122 = vmatprep.mubr.f32.mxu0 0.0
      %4123 = vmatmul.mubr.f32.gmra.mxu0 %v3932
      %v4124 = vpop.f32.mrf.mxu0
      %v4125 = vadd.f32 0.0, %v4124
      %v4126 = vpop.f32.mrf.mxu0
      %4127 = vmatprep.mubr.f32.mxu0 0.0
      %4128 = vmatmul.mubr.f32.gmra.mxu0 %v3935
      %v4129 = vpop.f32.mrf.mxu0
      %v4130 = vadd.f32 0.0, %v4129
      %v4131 = vpop.f32.mrf.mxu0
      %4132 = vmatprep.mubr.f32.mxu0 0.0
      %4133 = vmatmul.mubr.f32.gmra.mxu0 %v3938
      %v4134 = vpop.f32.mrf.mxu0
      %v4135 = vadd.f32 0.0, %v4134
      %v4136 = vpop.f32.mrf.mxu0
      %4137 = vmatprep.mubr.f32.mxu0 0.0
      %4138 = vmatmul.mubr.f32.gmra.mxu0 %v3941
      %v4139 = vpop.f32.mrf.mxu0
      %v4140 = vadd.f32 0.0, %v4139
      %v4141 = vpop.f32.mrf.mxu0
      %4142 = vmatprep.mubr.f32.mxu0 0.0
      %4143 = vmatmul.mubr.f32.gmra.mxu0 %v3944
      %v4144 = vpop.f32.mrf.mxu0
      %v4145 = vadd.f32 0.0, %v4144
      %v4146 = vpop.f32.mrf.mxu0
      %4147 = vmatprep.mubr.f32.mxu0 0.0
      %4148 = vmatmul.mubr.f32.gmra.mxu0 %v3947
      %v4149 = vpop.f32.mrf.mxu0
      %v4150 = vadd.f32 0.0, %v4149
      %v4151 = vpop.f32.mrf.mxu0
      %4152 = vmatprep.mubr.f32.mxu0 0.0
      %4153 = vmatmul.mubr.f32.gmra.mxu0 %v3950
      %v4154 = vpop.f32.mrf.mxu0
      %v4155 = vadd.f32 0.0, %v4154
      %v4156 = vpop.f32.mrf.mxu0
      %4157 = vmatprep.mubr.f32.mxu0 0.0
      %4158 = vmatmul.mubr.f32.gmra.mxu0 %v3953
      %v4159 = vpop.f32.mrf.mxu0
      %v4160 = vadd.f32 0.0, %v4159
      %v4161 = vpop.f32.mrf.mxu0
      %4162 = vmatprep.mubr.f32.mxu0 0.0
      %4163 = vmatmul.mubr.f32.gmra.mxu0 %v3956
      %v4164 = vpop.f32.mrf.mxu0
      %v4165 = vadd.f32 0.0, %v4164
      %v4166 = vpop.f32.mrf.mxu0
      %4167 = vmatprep.mubr.f32.mxu0 0.0
      %4168 = vmatmul.mubr.f32.gmra.mxu0 %v3959
      %v4169 = vpop.f32.mrf.mxu0
      %v4170 = vadd.f32 0.0, %v4169
      %v4171 = vpop.f32.mrf.mxu0
      %4172 = vmatprep.mubr.f32.mxu0 0.0
      %4173 = vmatmul.mubr.f32.gmra.mxu0 %v3962
      %v4174 = vpop.f32.mrf.mxu0
      %v4175 = vadd.f32 0.0, %v4174
      %v4176 = vpop.f32.mrf.mxu0
      %4177 = vmatprep.mubr.f32.mxu0 0.0
      %4178 = vmatmul.mubr.f32.gmra.mxu0 %v3965
      %v4179 = vpop.f32.mrf.mxu0
      %v4180 = vadd.f32 0.0, %v4179
      %v4181 = vpop.f32.mrf.mxu0
      %4182 = vmatprep.mubr.f32.mxu0 0.0
      %4183 = vmatmul.mubr.f32.gmra.mxu0 %v3968
      %v4184 = vpop.f32.mrf.mxu0
      %v4185 = vadd.f32 0.0, %v4184
      %v4186 = vpop.f32.mrf.mxu0
      %4187 = vmatprep.mubr.f32.mxu0 0.0
      %4188 = vmatmul.mubr.f32.gmra.mxu0 %v3971
      %v4189 = vpop.f32.mrf.mxu0
      %v4190 = vadd.f32 0.0, %v4189
      %v4191 = vpop.f32.mrf.mxu0
      %4192 = vmatprep.mubr.f32.mxu0 0.0
      %4193 = vmatmul.mubr.f32.gmra.mxu0 %v3974
      %v4194 = vpop.f32.mrf.mxu0
      %v4195 = vadd.f32 0.0, %v4194
      %v4196 = vpop.f32.mrf.mxu0
      %4197 = vmatprep.mubr.f32.mxu0 0.0
      %4198 = vmatmul.mubr.f32.gmra.mxu0 %v3977
      %v4199 = vpop.f32.mrf.mxu0
      %v4200 = vadd.f32 0.0, %v4199
      %v4201 = vpop.f32.mrf.mxu0
      %4202 = vmatprep.mubr.f32.mxu0 0.0
      %4203 = vmatmul.mubr.f32.gmra.mxu0 %v3980
      %v4204 = vpop.f32.mrf.mxu0
      %v4205 = vadd.f32 0.0, %v4204
      %v4206 = vpop.f32.mrf.mxu0
      %4207 = vmatprep.mubr.f32.mxu0 0.0
      %4208 = vmatmul.mubr.f32.gmra.mxu0 %v3983
      %v4209 = vpop.f32.mrf.mxu0
      %v4210 = vadd.f32 0.0, %v4209
      %v4211 = vpop.f32.mrf.mxu0
      %4212 = vmatprep.mubr.f32.mxu0 0.0
      %4213 = vmatmul.mubr.f32.gmra.mxu0 %v3986
      %v4214 = vpop.f32.mrf.mxu0
      %v4215 = vadd.f32 0.0, %v4214
      %v4216 = vpop.f32.mrf.mxu0
      %4217 = vmatprep.mubr.f32.mxu0 0.0
      %4218 = vmatmul.mubr.f32.gmra.mxu0 %v3989
      %v4219 = vpop.f32.mrf.mxu0
      %v4220 = vadd.f32 0.0, %v4219
      %v4221 = vpop.f32.mrf.mxu0
      %4222 = vmatprep.mubr.f32.mxu0 0.0
      %4223 = vmatmul.mubr.f32.gmra.mxu0 %v3992
      %v4224 = vpop.f32.mrf.mxu0
      %v4225 = vadd.f32 0.0, %v4224
      %v4226 = vpop.f32.mrf.mxu0
      %4227 = vmatprep.mubr.f32.mxu0 0.0
      %4228 = vmatmul.mubr.f32.gmra.mxu0 %v3995
      %v4229 = vpop.f32.mrf.mxu0
      %v4230 = vadd.f32 0.0, %v4229
      %v4231 = vpop.f32.mrf.mxu0
      %4232 = vmatprep.mubr.f32.mxu0 0.0
      %4233 = vmatmul.mubr.f32.gmra.mxu0 %v3998
      %v4234 = vpop.f32.mrf.mxu0
      %v4235 = vadd.f32 0.0, %v4234
      %v4236 = vpop.f32.mrf.mxu0
      %4237 = vmatprep.mubr.f32.mxu0 0.0
      %4238 = vmatmul.mubr.f32.gmra.mxu0 %v4001
      %v4239 = vpop.f32.mrf.mxu0
      %v4240 = vadd.f32 0.0, %v4239
      %v4241 = vpop.f32.mrf.mxu0
      %4242 = vmatprep.mubr.f32.mxu0 0.0
      %4243 = vmatmul.mubr.f32.gmra.mxu0 %v4004
      %v4244 = vpop.f32.mrf.mxu0
      %v4245 = vadd.f32 0.0, %v4244
      %v4246 = vpop.f32.mrf.mxu0
      %4247 = vmatprep.mubr.f32.mxu0 0.0
      %4248 = vmatmul.mubr.f32.gmra.mxu0 %v4007
      %v4249 = vpop.f32.mrf.mxu0
      %v4250 = vadd.f32 0.0, %v4249
      %v4251 = vpop.f32.mrf.mxu0
      %4252 = vmatprep.mubr.f32.mxu0 0.0
      %4253 = vmatmul.mubr.f32.gmra.mxu0 %v4010
      %v4254 = vpop.f32.mrf.mxu0
      %v4255 = vadd.f32 0.0, %v4254
      %v4256 = vpop.f32.mrf.mxu0
      %4257 = vmatprep.mubr.f32.mxu0 0.0
      %4258 = vmatmul.mubr.f32.gmra.mxu0 %v4013
      %v4259 = vpop.f32.mrf.mxu0
      %v4260 = vadd.f32 0.0, %v4259
      %v4261 = vpop.f32.mrf.mxu0
      %4262 = vmatprep.mubr.f32.mxu0 0.0
      %4263 = vmatmul.mubr.f32.gmra.mxu0 %v4016
      %v4264 = vpop.f32.mrf.mxu0
      %v4265 = vadd.f32 0.0, %v4264
      %v4266 = vpop.f32.mrf.mxu0
      %4267 = vmatprep.mubr.f32.mxu0 0.0
      %4268 = vmatmul.mubr.f32.gmra.mxu0 %v4019
      %v4269 = vpop.f32.mrf.mxu0
      %v4270 = vadd.f32 0.0, %v4269
      %v4271 = vpop.f32.mrf.mxu0
      %4272 = vmatprep.mubr.f32.mxu0 0.0
      %4273 = vmatmul.mubr.f32.gmra.mxu0 %v4022
      %v4274 = vpop.f32.mrf.mxu0
      %v4275 = vadd.f32 0.0, %v4274
      %v4276 = vpop.f32.mrf.mxu0
      %4277 = vmatprep.mubr.f32.mxu0 0.0
      %4278 = vmatmul.mubr.f32.gmra.mxu0 %v4025
      %v4279 = vpop.f32.mrf.mxu0
      %v4280 = vadd.f32 0.0, %v4279
      %v4281 = vpop.f32.mrf.mxu0
      %4282 = vmatprep.mubr.f32.mxu0 0.0
      %4283 = vmatmul.mubr.f32.gmra.mxu0 %v4028
      %v4284 = vpop.f32.mrf.mxu0
      %v4285 = vadd.f32 0.0, %v4284
      %v4286 = vpop.f32.mrf.mxu0
      %4287 = vmatprep.mubr.f32.mxu0 0.0
      %4288 = vmatmul.mubr.f32.gmra.mxu0 %v4031
      %v4289 = vpop.f32.mrf.mxu0
      %v4290 = vadd.f32 0.0, %v4289
      %v4291 = vpop.f32.mrf.mxu0
      %4292 = vmatprep.mubr.f32.mxu0 0.0
      %4293 = vmatmul.mubr.f32.gmra.mxu0 %v4034
      %v4294 = vpop.f32.mrf.mxu0
      %v4295 = vadd.f32 0.0, %v4294
      %v4296 = vpop.f32.mrf.mxu0
      %4297 = vmatprep.mubr.f32.mxu0 0.0
      %4298 = vmatmul.mubr.f32.gmra.mxu0 %v4037
      %v4299 = vpop.f32.mrf.mxu0
      %v4300 = vadd.f32 0.0, %v4299
      %v4301 = vpop.f32.mrf.mxu0
      %4302 = vmatprep.mubr.f32.mxu0 0.0
      %4303 = vmatmul.mubr.f32.gmra.mxu0 %v4040
      %v4304 = vpop.f32.mrf.mxu0
      %v4305 = vadd.f32 0.0, %v4304
      %v4306 = vpop.f32.mrf.mxu0
      %4307 = vmatprep.mubr.f32.mxu0 0.0
      %4308 = vmatmul.mubr.f32.gmra.mxu0 %v4043
      %v4309 = vpop.f32.mrf.mxu0
      %v4310 = vadd.f32 0.0, %v4309
      %v4311 = vpop.f32.mrf.mxu0
      %4312 = vmatprep.mubr.f32.mxu0 0.0
      %4313 = vmatmul.mubr.f32.gmra.mxu0 %v4046
      %v4314 = vpop.f32.mrf.mxu0
      %v4315 = vadd.f32 0.0, %v4314
      %v4316 = vpop.f32.mrf.mxu0
      %4317 = vdwg.mxu0
      %v4318 = vadd.f32 %v3834, %v4115
      %v4319 = vadd.f32 %v3835, %v4120
      %v4320 = vadd.f32 %v3836, %v4125
      %v4321 = vadd.f32 %v3837, %v4130
      %v4322 = vadd.f32 %v3838, %v4135
      %v4323 = vadd.f32 %v3839, %v4140
      %v4324 = vadd.f32 %v3840, %v4145
      %v4325 = vadd.f32 %v3841, %v4150
      %v4326 = vadd.f32 %v3842, %v4155
      %v4327 = vadd.f32 %v3843, %v4160
      %v4328 = vadd.f32 %v3844, %v4165
      %v4329 = vadd.f32 %v3845, %v4170
      %v4330 = vadd.f32 %v3846, %v4175
      %v4331 = vadd.f32 %v3847, %v4180
      %v4332 = vadd.f32 %v3848, %v4185
      %v4333 = vadd.f32 %v3849, %v4190
      %v4334 = vadd.f32 %v3850, %v4195
      %v4335 = vadd.f32 %v3851, %v4200
      %v4336 = vadd.f32 %v3852, %v4205
      %v4337 = vadd.f32 %v3853, %v4210
      %v4338 = vadd.f32 %v3854, %v4215
      %v4339 = vadd.f32 %v3855, %v4220
      %v4340 = vadd.f32 %v3856, %v4225
      %v4341 = vadd.f32 %v3857, %v4230
      %v4342 = vadd.f32 %v3858, %v4235
      %v4343 = vadd.f32 %v3859, %v4240
      %v4344 = vadd.f32 %v3860, %v4245
      %v4345 = vadd.f32 %v3861, %v4250
      %v4346 = vadd.f32 %v3862, %v4255
      %v4347 = vadd.f32 %v3863, %v4260
      %v4348 = vadd.f32 %v3864, %v4265
      %v4349 = vadd.f32 %v3865, %v4270
      %v4350 = vadd.f32 %v3866, %v4275
      %v4351 = vadd.f32 %v3867, %v4280
      %v4352 = vadd.f32 %v3868, %v4285
      %v4353 = vadd.f32 %v3869, %v4290
      %v4354 = vadd.f32 %v3870, %v4295
      %v4355 = vadd.f32 %v3871, %v4300
      %v4356 = vadd.f32 %v3872, %v4305
      %v4357 = vadd.f32 %v3873, %v4310
      %v4358 = vadd.f32 %v3874, %v4315
      %v4359 = vld [vmem:[#allocation2 + $0x2a] sm:$0xff]
      %v4360 = vld [vmem:[#allocation2 + $0x32] sm:$0xff]
      %v4361 = vld [vmem:[#allocation2 + $0x3a] sm:$0xff]
      %v4362 = vld [vmem:[#allocation2 + $0x42] sm:$0xff]
      %v4363 = vld [vmem:[#allocation2 + $0x4a] sm:$0xff]
      %v4364 = vld [vmem:[#allocation2 + $0x52] sm:$0xff]
      %v4365 = vld [vmem:[#allocation2 + $0x5a] sm:$0xff]
      %v4366 = vld [vmem:[#allocation2 + $0x62] sm:$0xff]
      %v4367 = vld [vmem:[#allocation2 + $0x6a] sm:$0xff]
      %v4368 = vld [vmem:[#allocation2 + $0x72] sm:$0xff]
      %v4369 = vld [vmem:[#allocation2 + $0x7a] sm:$0xff]
      %v4370 = vld [vmem:[#allocation2 + $0x82] sm:$0xff]
      %v4371 = vld [vmem:[#allocation2 + $0x8a] sm:$0xff]
      %v4372 = vld [vmem:[#allocation2 + $0x92] sm:$0xff]
      %v4373 = vld [vmem:[#allocation2 + $0x9a] sm:$0xff]
      %v4374 = vld [vmem:[#allocation2 + $0xa2] sm:$0xff]
      %v4375 = vld [vmem:[#allocation2 + $0xaa] sm:$0xff]
      %v4376 = vld [vmem:[#allocation2 + $0xb2] sm:$0xff]
      %v4377 = vld [vmem:[#allocation2 + $0xba] sm:$0xff]
      %v4378 = vld [vmem:[#allocation2 + $0xc2] sm:$0xff]
      %v4379 = vld [vmem:[#allocation2 + $0xca] sm:$0xff]
      %v4380 = vld [vmem:[#allocation2 + $0xd2] sm:$0xff]
      %v4381 = vld [vmem:[#allocation2 + $0xda] sm:$0xff]
      %v4382 = vld [vmem:[#allocation2 + $0xe2] sm:$0xff]
      %v4383 = vld [vmem:[#allocation2 + $0xea] sm:$0xff]
      %v4384 = vld [vmem:[#allocation2 + $0xf2] sm:$0xff]
      %v4385 = vld [vmem:[#allocation2 + $0xfa] sm:$0xff]
      %v4386 = vld [vmem:[#allocation2 + $0x102] sm:$0xff]
      %v4387 = vld [vmem:[#allocation2 + $0x10a] sm:$0xff]
      %v4388 = vld [vmem:[#allocation2 + $0x112] sm:$0xff]
      %v4389 = vld [vmem:[#allocation2 + $0x11a] sm:$0xff]
      %v4390 = vld [vmem:[#allocation2 + $0x122] sm:$0xff]
      %v4391 = vld [vmem:[#allocation2 + $0x12a] sm:$0xff]
      %v4392 = vld [vmem:[#allocation2 + $0x132] sm:$0xff]
      %v4393 = vld [vmem:[#allocation2 + $0x13a] sm:$0xff]
      %v4394 = vld [vmem:[#allocation2 + $0x142] sm:$0xff]
      %v4395 = vld [vmem:[#allocation2 + $0x14a] sm:$0xff]
      %v4396 = vld [vmem:[#allocation2 + $0x152] sm:$0xff]
      %v4397 = vld [vmem:[#allocation2 + $0x15a] sm:$0xff]
      %v4398 = vld [vmem:[#allocation2 + $0x162] sm:$0xff]
      %v4399 = vld [vmem:[#allocation2 + $0x16a] sm:$0xf]
      %s4400 = scalar_lea.vmem %s2, 448
      %v4401 = vld [vmem:[%s4400] sm:$0xff]
      %v4402 = vld [vmem:[%s4400 + $0x8] sm:$0xff]
      %v4403 = vld [vmem:[%s4400 + $0x10] sm:$0xff]
      %v4404 = vld [vmem:[%s4400 + $0x18] sm:$0xff]
      %v4405 = vld [vmem:[%s4400 + $0x20] sm:$0xff]
      %v4406 = vld [vmem:[%s4400 + $0x28] sm:$0xff]
      %v4407 = vld [vmem:[%s4400 + $0x30] sm:$0xff]
      %v4408 = vld [vmem:[%s4400 + $0x38] sm:$0xff]
      %v4410 = vsel %vm293, %v4359, 0
      %v4413 = vsel %vm293, %v4360, 0
      %v4416 = vsel %vm293, %v4361, 0
      %v4419 = vsel %vm293, %v4362, 0
      %v4422 = vsel %vm293, %v4363, 0
      %v4425 = vsel %vm293, %v4364, 0
      %v4428 = vsel %vm293, %v4365, 0
      %v4431 = vsel %vm293, %v4366, 0
      %v4434 = vsel %vm293, %v4367, 0
      %v4437 = vsel %vm293, %v4368, 0
      %v4440 = vsel %vm293, %v4369, 0
      %v4443 = vsel %vm293, %v4370, 0
      %v4446 = vsel %vm293, %v4371, 0
      %v4449 = vsel %vm293, %v4372, 0
      %v4452 = vsel %vm293, %v4373, 0
      %v4455 = vsel %vm293, %v4374, 0
      %v4458 = vsel %vm293, %v4375, 0
      %v4461 = vsel %vm293, %v4376, 0
      %v4464 = vsel %vm293, %v4377, 0
      %v4467 = vsel %vm293, %v4378, 0
      %v4470 = vsel %vm293, %v4379, 0
      %v4473 = vsel %vm293, %v4380, 0
      %v4476 = vsel %vm293, %v4381, 0
      %v4479 = vsel %vm293, %v4382, 0
      %v4482 = vsel %vm293, %v4383, 0
      %v4485 = vsel %vm293, %v4384, 0
      %v4488 = vsel %vm293, %v4385, 0
      %v4491 = vsel %vm293, %v4386, 0
      %v4494 = vsel %vm293, %v4387, 0
      %v4497 = vsel %vm293, %v4388, 0
      %v4500 = vsel %vm293, %v4389, 0
      %v4503 = vsel %vm293, %v4390, 0
      %v4506 = vsel %vm293, %v4391, 0
      %v4509 = vsel %vm293, %v4392, 0
      %v4512 = vsel %vm293, %v4393, 0
      %v4515 = vsel %vm293, %v4394, 0
      %v4518 = vsel %vm293, %v4395, 0
      %v4521 = vsel %vm293, %v4396, 0
      %v4524 = vsel %vm293, %v4397, 0
      %v4527 = vsel %vm293, %v4398, 0
      %v4530 = vsel %vm293, %v4399, 0
      %4532 = vmatprep.subr.mxu0 0.0
      %4533 = vmatpush1.msra.mxu0 0.0
      %4534 = vmatprep.subr.mxu0 0.0
      %4535 = vmatpush1.msra.mxu0 0.0
      %4536 = vmatprep.subr.mxu0 0.0
      %4537 = vmatpush1.msra.mxu0 0.0
      %4538 = vmatprep.subr.mxu0 0.0
      %4539 = vmatpush1.msra.mxu0 0.0
      %4540 = vmatprep.subr.mxu0 0.0
      %4541 = vmatpush1.msra.mxu0 0.0
      %4542 = vmatprep.subr.mxu0 0.0
      %4543 = vmatpush1.msra.mxu0 0.0
      %4544 = vmatprep.subr.mxu0 0.0
      %4545 = vmatpush1.msra.mxu0 0.0
      %4546 = vmatprep.subr.mxu0 0.0
      %4547 = vmatpush1.msra.mxu0 0.0
      %4548 = vmatprep.subr.mxu0 0.0
      %4549 = vmatpush1.msra.mxu0 %v4408
      %4550 = vmatprep.subr.mxu0 0.0
      %4551 = vmatpush1.msra.mxu0 %v4407
      %4552 = vmatprep.subr.mxu0 0.0
      %4553 = vmatpush1.msra.mxu0 %v4406
      %4554 = vmatprep.subr.mxu0 0.0
      %4555 = vmatpush1.msra.mxu0 %v4405
      %4556 = vmatprep.subr.mxu0 0.0
      %4557 = vmatpush1.msra.mxu0 %v4404
      %4558 = vmatprep.subr.mxu0 0.0
      %4559 = vmatpush1.msra.mxu0 %v4403
      %4560 = vmatprep.subr.mxu0 0.0
      %4561 = vmatpush1.msra.mxu0 %v4402
      %4562 = vmatprep.subr.mxu0 0.0
      %4563 = vmatpush1.msra.mxu0 %v4401
      %4564 = vmatprep.subr.mxu0 0.0
      %4565 = vmatpush2.msra.mxu0 0.0
      %4566 = vmatprep.subr.mxu0 0.0
      %4567 = vmatpush2.msra.mxu0 0.0
      %4568 = vmatprep.subr.mxu0 0.0
      %4569 = vmatpush2.msra.mxu0 0.0
      %4570 = vmatprep.subr.mxu0 0.0
      %4571 = vmatpush2.msra.mxu0 0.0
      %4572 = vmatprep.subr.mxu0 0.0
      %4573 = vmatpush2.msra.mxu0 0.0
      %4574 = vmatprep.subr.mxu0 0.0
      %4575 = vmatpush2.msra.mxu0 0.0
      %4576 = vmatprep.subr.mxu0 0.0
      %4577 = vmatpush2.msra.mxu0 0.0
      %4578 = vmatprep.subr.mxu0 0.0
      %4579 = vmatpush2.msra.mxu0 0.0
      %4580 = vmatprep.subr.mxu0 0.0
      %4581 = vmatpush2.msra.mxu0 0.0
      %4582 = vmatprep.subr.mxu0 0.0
      %4583 = vmatpush2.msra.mxu0 0.0
      %4584 = vmatprep.subr.mxu0 0.0
      %4585 = vmatpush2.msra.mxu0 0.0
      %4586 = vmatprep.subr.mxu0 0.0
      %4587 = vmatpush2.msra.mxu0 0.0
      %4588 = vmatprep.subr.mxu0 0.0
      %4589 = vmatpush2.msra.mxu0 0.0
      %4590 = vmatprep.subr.mxu0 0.0
      %4591 = vmatpush2.msra.mxu0 0.0
      %4592 = vmatprep.subr.mxu0 0.0
      %4593 = vmatpush2.msra.mxu0 0.0
      %4594 = vmatprep.subr.mxu0 0.0
      %4595 = vmatpush2.msra.mxu0 0.0
      %4596 = vmatprep.mubr.f32.mxu0 0.0
      %4597 = vmatmul.mubr.f32.gmra.mxu0 %v4410
      %v4598 = vpop.f32.mrf.mxu0
      %v4599 = vadd.f32 0.0, %v4598
      %v4600 = vpop.f32.mrf.mxu0
      %4601 = vmatprep.mubr.f32.mxu0 0.0
      %4602 = vmatmul.mubr.f32.gmra.mxu0 %v4413
      %v4603 = vpop.f32.mrf.mxu0
      %v4604 = vadd.f32 0.0, %v4603
      %v4605 = vpop.f32.mrf.mxu0
      %4606 = vmatprep.mubr.f32.mxu0 0.0
      %4607 = vmatmul.mubr.f32.gmra.mxu0 %v4416
      %v4608 = vpop.f32.mrf.mxu0
      %v4609 = vadd.f32 0.0, %v4608
      %v4610 = vpop.f32.mrf.mxu0
      %4611 = vmatprep.mubr.f32.mxu0 0.0
      %4612 = vmatmul.mubr.f32.gmra.mxu0 %v4419
      %v4613 = vpop.f32.mrf.mxu0
      %v4614 = vadd.f32 0.0, %v4613
      %v4615 = vpop.f32.mrf.mxu0
      %4616 = vmatprep.mubr.f32.mxu0 0.0
      %4617 = vmatmul.mubr.f32.gmra.mxu0 %v4422
      %v4618 = vpop.f32.mrf.mxu0
      %v4619 = vadd.f32 0.0, %v4618
      %v4620 = vpop.f32.mrf.mxu0
      %4621 = vmatprep.mubr.f32.mxu0 0.0
      %4622 = vmatmul.mubr.f32.gmra.mxu0 %v4425
      %v4623 = vpop.f32.mrf.mxu0
      %v4624 = vadd.f32 0.0, %v4623
      %v4625 = vpop.f32.mrf.mxu0
      %4626 = vmatprep.mubr.f32.mxu0 0.0
      %4627 = vmatmul.mubr.f32.gmra.mxu0 %v4428
      %v4628 = vpop.f32.mrf.mxu0
      %v4629 = vadd.f32 0.0, %v4628
      %v4630 = vpop.f32.mrf.mxu0
      %4631 = vmatprep.mubr.f32.mxu0 0.0
      %4632 = vmatmul.mubr.f32.gmra.mxu0 %v4431
      %v4633 = vpop.f32.mrf.mxu0
      %v4634 = vadd.f32 0.0, %v4633
      %v4635 = vpop.f32.mrf.mxu0
      %4636 = vmatprep.mubr.f32.mxu0 0.0
      %4637 = vmatmul.mubr.f32.gmra.mxu0 %v4434
      %v4638 = vpop.f32.mrf.mxu0
      %v4639 = vadd.f32 0.0, %v4638
      %v4640 = vpop.f32.mrf.mxu0
      %4641 = vmatprep.mubr.f32.mxu0 0.0
      %4642 = vmatmul.mubr.f32.gmra.mxu0 %v4437
      %v4643 = vpop.f32.mrf.mxu0
      %v4644 = vadd.f32 0.0, %v4643
      %v4645 = vpop.f32.mrf.mxu0
      %4646 = vmatprep.mubr.f32.mxu0 0.0
      %4647 = vmatmul.mubr.f32.gmra.mxu0 %v4440
      %v4648 = vpop.f32.mrf.mxu0
      %v4649 = vadd.f32 0.0, %v4648
      %v4650 = vpop.f32.mrf.mxu0
      %4651 = vmatprep.mubr.f32.mxu0 0.0
      %4652 = vmatmul.mubr.f32.gmra.mxu0 %v4443
      %v4653 = vpop.f32.mrf.mxu0
      %v4654 = vadd.f32 0.0, %v4653
      %v4655 = vpop.f32.mrf.mxu0
      %4656 = vmatprep.mubr.f32.mxu0 0.0
      %4657 = vmatmul.mubr.f32.gmra.mxu0 %v4446
      %v4658 = vpop.f32.mrf.mxu0
      %v4659 = vadd.f32 0.0, %v4658
      %v4660 = vpop.f32.mrf.mxu0
      %4661 = vmatprep.mubr.f32.mxu0 0.0
      %4662 = vmatmul.mubr.f32.gmra.mxu0 %v4449
      %v4663 = vpop.f32.mrf.mxu0
      %v4664 = vadd.f32 0.0, %v4663
      %v4665 = vpop.f32.mrf.mxu0
      %4666 = vmatprep.mubr.f32.mxu0 0.0
      %4667 = vmatmul.mubr.f32.gmra.mxu0 %v4452
      %v4668 = vpop.f32.mrf.mxu0
      %v4669 = vadd.f32 0.0, %v4668
      %v4670 = vpop.f32.mrf.mxu0
      %4671 = vmatprep.mubr.f32.mxu0 0.0
      %4672 = vmatmul.mubr.f32.gmra.mxu0 %v4455
      %v4673 = vpop.f32.mrf.mxu0
      %v4674 = vadd.f32 0.0, %v4673
      %v4675 = vpop.f32.mrf.mxu0
      %4676 = vmatprep.mubr.f32.mxu0 0.0
      %4677 = vmatmul.mubr.f32.gmra.mxu0 %v4458
      %v4678 = vpop.f32.mrf.mxu0
      %v4679 = vadd.f32 0.0, %v4678
      %v4680 = vpop.f32.mrf.mxu0
      %4681 = vmatprep.mubr.f32.mxu0 0.0
      %4682 = vmatmul.mubr.f32.gmra.mxu0 %v4461
      %v4683 = vpop.f32.mrf.mxu0
      %v4684 = vadd.f32 0.0, %v4683
      %v4685 = vpop.f32.mrf.mxu0
      %4686 = vmatprep.mubr.f32.mxu0 0.0
      %4687 = vmatmul.mubr.f32.gmra.mxu0 %v4464
      %v4688 = vpop.f32.mrf.mxu0
      %v4689 = vadd.f32 0.0, %v4688
      %v4690 = vpop.f32.mrf.mxu0
      %4691 = vmatprep.mubr.f32.mxu0 0.0
      %4692 = vmatmul.mubr.f32.gmra.mxu0 %v4467
      %v4693 = vpop.f32.mrf.mxu0
      %v4694 = vadd.f32 0.0, %v4693
      %v4695 = vpop.f32.mrf.mxu0
      %4696 = vmatprep.mubr.f32.mxu0 0.0
      %4697 = vmatmul.mubr.f32.gmra.mxu0 %v4470
      %v4698 = vpop.f32.mrf.mxu0
      %v4699 = vadd.f32 0.0, %v4698
      %v4700 = vpop.f32.mrf.mxu0
      %4701 = vmatprep.mubr.f32.mxu0 0.0
      %4702 = vmatmul.mubr.f32.gmra.mxu0 %v4473
      %v4703 = vpop.f32.mrf.mxu0
      %v4704 = vadd.f32 0.0, %v4703
      %v4705 = vpop.f32.mrf.mxu0
      %4706 = vmatprep.mubr.f32.mxu0 0.0
      %4707 = vmatmul.mubr.f32.gmra.mxu0 %v4476
      %v4708 = vpop.f32.mrf.mxu0
      %v4709 = vadd.f32 0.0, %v4708
      %v4710 = vpop.f32.mrf.mxu0
      %4711 = vmatprep.mubr.f32.mxu0 0.0
      %4712 = vmatmul.mubr.f32.gmra.mxu0 %v4479
      %v4713 = vpop.f32.mrf.mxu0
      %v4714 = vadd.f32 0.0, %v4713
      %v4715 = vpop.f32.mrf.mxu0
      %4716 = vmatprep.mubr.f32.mxu0 0.0
      %4717 = vmatmul.mubr.f32.gmra.mxu0 %v4482
      %v4718 = vpop.f32.mrf.mxu0
      %v4719 = vadd.f32 0.0, %v4718
      %v4720 = vpop.f32.mrf.mxu0
      %4721 = vmatprep.mubr.f32.mxu0 0.0
      %4722 = vmatmul.mubr.f32.gmra.mxu0 %v4485
      %v4723 = vpop.f32.mrf.mxu0
      %v4724 = vadd.f32 0.0, %v4723
      %v4725 = vpop.f32.mrf.mxu0
      %4726 = vmatprep.mubr.f32.mxu0 0.0
      %4727 = vmatmul.mubr.f32.gmra.mxu0 %v4488
      %v4728 = vpop.f32.mrf.mxu0
      %v4729 = vadd.f32 0.0, %v4728
      %v4730 = vpop.f32.mrf.mxu0
      %4731 = vmatprep.mubr.f32.mxu0 0.0
      %4732 = vmatmul.mubr.f32.gmra.mxu0 %v4491
      %v4733 = vpop.f32.mrf.mxu0
      %v4734 = vadd.f32 0.0, %v4733
      %v4735 = vpop.f32.mrf.mxu0
      %4736 = vmatprep.mubr.f32.mxu0 0.0
      %4737 = vmatmul.mubr.f32.gmra.mxu0 %v4494
      %v4738 = vpop.f32.mrf.mxu0
      %v4739 = vadd.f32 0.0, %v4738
      %v4740 = vpop.f32.mrf.mxu0
      %4741 = vmatprep.mubr.f32.mxu0 0.0
      %4742 = vmatmul.mubr.f32.gmra.mxu0 %v4497
      %v4743 = vpop.f32.mrf.mxu0
      %v4744 = vadd.f32 0.0, %v4743
      %v4745 = vpop.f32.mrf.mxu0
      %4746 = vmatprep.mubr.f32.mxu0 0.0
      %4747 = vmatmul.mubr.f32.gmra.mxu0 %v4500
      %v4748 = vpop.f32.mrf.mxu0
      %v4749 = vadd.f32 0.0, %v4748
      %v4750 = vpop.f32.mrf.mxu0
      %4751 = vmatprep.mubr.f32.mxu0 0.0
      %4752 = vmatmul.mubr.f32.gmra.mxu0 %v4503
      %v4753 = vpop.f32.mrf.mxu0
      %v4754 = vadd.f32 0.0, %v4753
      %v4755 = vpop.f32.mrf.mxu0
      %4756 = vmatprep.mubr.f32.mxu0 0.0
      %4757 = vmatmul.mubr.f32.gmra.mxu0 %v4506
      %v4758 = vpop.f32.mrf.mxu0
      %v4759 = vadd.f32 0.0, %v4758
      %v4760 = vpop.f32.mrf.mxu0
      %4761 = vmatprep.mubr.f32.mxu0 0.0
      %4762 = vmatmul.mubr.f32.gmra.mxu0 %v4509
      %v4763 = vpop.f32.mrf.mxu0
      %v4764 = vadd.f32 0.0, %v4763
      %v4765 = vpop.f32.mrf.mxu0
      %4766 = vmatprep.mubr.f32.mxu0 0.0
      %4767 = vmatmul.mubr.f32.gmra.mxu0 %v4512
      %v4768 = vpop.f32.mrf.mxu0
      %v4769 = vadd.f32 0.0, %v4768
      %v4770 = vpop.f32.mrf.mxu0
      %4771 = vmatprep.mubr.f32.mxu0 0.0
      %4772 = vmatmul.mubr.f32.gmra.mxu0 %v4515
      %v4773 = vpop.f32.mrf.mxu0
      %v4774 = vadd.f32 0.0, %v4773
      %v4775 = vpop.f32.mrf.mxu0
      %4776 = vmatprep.mubr.f32.mxu0 0.0
      %4777 = vmatmul.mubr.f32.gmra.mxu0 %v4518
      %v4778 = vpop.f32.mrf.mxu0
      %v4779 = vadd.f32 0.0, %v4778
      %v4780 = vpop.f32.mrf.mxu0
      %4781 = vmatprep.mubr.f32.mxu0 0.0
      %4782 = vmatmul.mubr.f32.gmra.mxu0 %v4521
      %v4783 = vpop.f32.mrf.mxu0
      %v4784 = vadd.f32 0.0, %v4783
      %v4785 = vpop.f32.mrf.mxu0
      %4786 = vmatprep.mubr.f32.mxu0 0.0
      %4787 = vmatmul.mubr.f32.gmra.mxu0 %v4524
      %v4788 = vpop.f32.mrf.mxu0
      %v4789 = vadd.f32 0.0, %v4788
      %v4790 = vpop.f32.mrf.mxu0
      %4791 = vmatprep.mubr.f32.mxu0 0.0
      %4792 = vmatmul.mubr.f32.gmra.mxu0 %v4527
      %v4793 = vpop.f32.mrf.mxu0
      %v4794 = vadd.f32 0.0, %v4793
      %v4795 = vpop.f32.mrf.mxu0
      %4796 = vmatprep.mubr.f32.mxu0 0.0
      %4797 = vmatmul.mubr.f32.gmra.mxu0 %v4530
      %v4798 = vpop.f32.mrf.mxu0
      %v4799 = vadd.f32 0.0, %v4798
      %v4800 = vpop.f32.mrf.mxu0
      %4801 = vdwg.mxu0
      %v4802 = vadd.f32 %v4318, %v4599
      %v4803 = vadd.f32 %v4319, %v4604
      %v4804 = vadd.f32 %v4320, %v4609
      %v4805 = vadd.f32 %v4321, %v4614
      %v4806 = vadd.f32 %v4322, %v4619
      %v4807 = vadd.f32 %v4323, %v4624
      %v4808 = vadd.f32 %v4324, %v4629
      %v4809 = vadd.f32 %v4325, %v4634
      %v4810 = vadd.f32 %v4326, %v4639
      %v4811 = vadd.f32 %v4327, %v4644
      %v4812 = vadd.f32 %v4328, %v4649
      %v4813 = vadd.f32 %v4329, %v4654
      %v4814 = vadd.f32 %v4330, %v4659
      %v4815 = vadd.f32 %v4331, %v4664
      %v4816 = vadd.f32 %v4332, %v4669
      %v4817 = vadd.f32 %v4333, %v4674
      %v4818 = vadd.f32 %v4334, %v4679
      %v4819 = vadd.f32 %v4335, %v4684
      %v4820 = vadd.f32 %v4336, %v4689
      %v4821 = vadd.f32 %v4337, %v4694
      %v4822 = vadd.f32 %v4338, %v4699
      %v4823 = vadd.f32 %v4339, %v4704
      %v4824 = vadd.f32 %v4340, %v4709
      %v4825 = vadd.f32 %v4341, %v4714
      %v4826 = vadd.f32 %v4342, %v4719
      %v4827 = vadd.f32 %v4343, %v4724
      %v4828 = vadd.f32 %v4344, %v4729
      %v4829 = vadd.f32 %v4345, %v4734
      %v4830 = vadd.f32 %v4346, %v4739
      %v4831 = vadd.f32 %v4347, %v4744
      %v4832 = vadd.f32 %v4348, %v4749
      %v4833 = vadd.f32 %v4349, %v4754
      %v4834 = vadd.f32 %v4350, %v4759
      %v4835 = vadd.f32 %v4351, %v4764
      %v4836 = vadd.f32 %v4352, %v4769
      %v4837 = vadd.f32 %v4353, %v4774
      %v4838 = vadd.f32 %v4354, %v4779
      %v4839 = vadd.f32 %v4355, %v4784
      %v4840 = vadd.f32 %v4356, %v4789
      %v4841 = vadd.f32 %v4357, %v4794
      %v4842 = vadd.f32 %v4358, %v4799
      %v4843 = vld [vmem:[#allocation2 + $0x2b] sm:$0xff]
      %v4844 = vld [vmem:[#allocation2 + $0x33] sm:$0xff]
      %v4845 = vld [vmem:[#allocation2 + $0x3b] sm:$0xff]
      %v4846 = vld [vmem:[#allocation2 + $0x43] sm:$0xff]
      %v4847 = vld [vmem:[#allocation2 + $0x4b] sm:$0xff]
      %v4848 = vld [vmem:[#allocation2 + $0x53] sm:$0xff]
      %v4849 = vld [vmem:[#allocation2 + $0x5b] sm:$0xff]
      %v4850 = vld [vmem:[#allocation2 + $0x63] sm:$0xff]
      %v4851 = vld [vmem:[#allocation2 + $0x6b] sm:$0xff]
      %v4852 = vld [vmem:[#allocation2 + $0x73] sm:$0xff]
      %v4853 = vld [vmem:[#allocation2 + $0x7b] sm:$0xff]
      %v4854 = vld [vmem:[#allocation2 + $0x83] sm:$0xff]
      %v4855 = vld [vmem:[#allocation2 + $0x8b] sm:$0xff]
      %v4856 = vld [vmem:[#allocation2 + $0x93] sm:$0xff]
      %v4857 = vld [vmem:[#allocation2 + $0x9b] sm:$0xff]
      %v4858 = vld [vmem:[#allocation2 + $0xa3] sm:$0xff]
      %v4859 = vld [vmem:[#allocation2 + $0xab] sm:$0xff]
      %v4860 = vld [vmem:[#allocation2 + $0xb3] sm:$0xff]
      %v4861 = vld [vmem:[#allocation2 + $0xbb] sm:$0xff]
      %v4862 = vld [vmem:[#allocation2 + $0xc3] sm:$0xff]
      %v4863 = vld [vmem:[#allocation2 + $0xcb] sm:$0xff]
      %v4864 = vld [vmem:[#allocation2 + $0xd3] sm:$0xff]
      %v4865 = vld [vmem:[#allocation2 + $0xdb] sm:$0xff]
      %v4866 = vld [vmem:[#allocation2 + $0xe3] sm:$0xff]
      %v4867 = vld [vmem:[#allocation2 + $0xeb] sm:$0xff]
      %v4868 = vld [vmem:[#allocation2 + $0xf3] sm:$0xff]
      %v4869 = vld [vmem:[#allocation2 + $0xfb] sm:$0xff]
      %v4870 = vld [vmem:[#allocation2 + $0x103] sm:$0xff]
      %v4871 = vld [vmem:[#allocation2 + $0x10b] sm:$0xff]
      %v4872 = vld [vmem:[#allocation2 + $0x113] sm:$0xff]
      %v4873 = vld [vmem:[#allocation2 + $0x11b] sm:$0xff]
      %v4874 = vld [vmem:[#allocation2 + $0x123] sm:$0xff]
      %v4875 = vld [vmem:[#allocation2 + $0x12b] sm:$0xff]
      %v4876 = vld [vmem:[#allocation2 + $0x133] sm:$0xff]
      %v4877 = vld [vmem:[#allocation2 + $0x13b] sm:$0xff]
      %v4878 = vld [vmem:[#allocation2 + $0x143] sm:$0xff]
      %v4879 = vld [vmem:[#allocation2 + $0x14b] sm:$0xff]
      %v4880 = vld [vmem:[#allocation2 + $0x153] sm:$0xff]
      %v4881 = vld [vmem:[#allocation2 + $0x15b] sm:$0xff]
      %v4882 = vld [vmem:[#allocation2 + $0x163] sm:$0xff]
      %v4883 = vld [vmem:[#allocation2 + $0x16b] sm:$0xf]
      %s4884 = scalar_lea.vmem %s2, 512
      %v4885 = vld [vmem:[%s4884] sm:$0xff]
      %v4886 = vld [vmem:[%s4884 + $0x8] sm:$0xff]
      %v4887 = vld [vmem:[%s4884 + $0x10] sm:$0xff]
      %v4888 = vld [vmem:[%s4884 + $0x18] sm:$0xff]
      %v4889 = vld [vmem:[%s4884 + $0x20] sm:$0xff]
      %v4890 = vld [vmem:[%s4884 + $0x28] sm:$0xff]
      %v4891 = vld [vmem:[%s4884 + $0x30] sm:$0xff]
      %v4892 = vld [vmem:[%s4884 + $0x38] sm:$0xff]
      %v4894 = vsel %vm293, %v4843, 0
      %v4897 = vsel %vm293, %v4844, 0
      %v4900 = vsel %vm293, %v4845, 0
      %v4903 = vsel %vm293, %v4846, 0
      %v4906 = vsel %vm293, %v4847, 0
      %v4909 = vsel %vm293, %v4848, 0
      %v4912 = vsel %vm293, %v4849, 0
      %v4915 = vsel %vm293, %v4850, 0
      %v4918 = vsel %vm293, %v4851, 0
      %v4921 = vsel %vm293, %v4852, 0
      %v4924 = vsel %vm293, %v4853, 0
      %v4927 = vsel %vm293, %v4854, 0
      %v4930 = vsel %vm293, %v4855, 0
      %v4933 = vsel %vm293, %v4856, 0
      %v4936 = vsel %vm293, %v4857, 0
      %v4939 = vsel %vm293, %v4858, 0
      %v4942 = vsel %vm293, %v4859, 0
      %v4945 = vsel %vm293, %v4860, 0
      %v4948 = vsel %vm293, %v4861, 0
      %v4951 = vsel %vm293, %v4862, 0
      %v4954 = vsel %vm293, %v4863, 0
      %v4957 = vsel %vm293, %v4864, 0
      %v4960 = vsel %vm293, %v4865, 0
      %v4963 = vsel %vm293, %v4866, 0
      %v4966 = vsel %vm293, %v4867, 0
      %v4969 = vsel %vm293, %v4868, 0
      %v4972 = vsel %vm293, %v4869, 0
      %v4975 = vsel %vm293, %v4870, 0
      %v4978 = vsel %vm293, %v4871, 0
      %v4981 = vsel %vm293, %v4872, 0
      %v4984 = vsel %vm293, %v4873, 0
      %v4987 = vsel %vm293, %v4874, 0
      %v4990 = vsel %vm293, %v4875, 0
      %v4993 = vsel %vm293, %v4876, 0
      %v4996 = vsel %vm293, %v4877, 0
      %v4999 = vsel %vm293, %v4878, 0
      %v5002 = vsel %vm293, %v4879, 0
      %v5005 = vsel %vm293, %v4880, 0
      %v5008 = vsel %vm293, %v4881, 0
      %v5011 = vsel %vm293, %v4882, 0
      %v5014 = vsel %vm293, %v4883, 0
      %5016 = vmatprep.subr.mxu0 0.0
      %5017 = vmatpush1.msra.mxu0 0.0
      %5018 = vmatprep.subr.mxu0 0.0
      %5019 = vmatpush1.msra.mxu0 0.0
      %5020 = vmatprep.subr.mxu0 0.0
      %5021 = vmatpush1.msra.mxu0 0.0
      %5022 = vmatprep.subr.mxu0 0.0
      %5023 = vmatpush1.msra.mxu0 0.0
      %5024 = vmatprep.subr.mxu0 0.0
      %5025 = vmatpush1.msra.mxu0 0.0
      %5026 = vmatprep.subr.mxu0 0.0
      %5027 = vmatpush1.msra.mxu0 0.0
      %5028 = vmatprep.subr.mxu0 0.0
      %5029 = vmatpush1.msra.mxu0 0.0
      %5030 = vmatprep.subr.mxu0 0.0
      %5031 = vmatpush1.msra.mxu0 0.0
      %5032 = vmatprep.subr.mxu0 0.0
      %5033 = vmatpush1.msra.mxu0 %v4892
      %5034 = vmatprep.subr.mxu0 0.0
      %5035 = vmatpush1.msra.mxu0 %v4891
      %5036 = vmatprep.subr.mxu0 0.0
      %5037 = vmatpush1.msra.mxu0 %v4890
      %5038 = vmatprep.subr.mxu0 0.0
      %5039 = vmatpush1.msra.mxu0 %v4889
      %5040 = vmatprep.subr.mxu0 0.0
      %5041 = vmatpush1.msra.mxu0 %v4888
      %5042 = vmatprep.subr.mxu0 0.0
      %5043 = vmatpush1.msra.mxu0 %v4887
      %5044 = vmatprep.subr.mxu0 0.0
      %5045 = vmatpush1.msra.mxu0 %v4886
      %5046 = vmatprep.subr.mxu0 0.0
      %5047 = vmatpush1.msra.mxu0 %v4885
      %5048 = vmatprep.subr.mxu0 0.0
      %5049 = vmatpush2.msra.mxu0 0.0
      %5050 = vmatprep.subr.mxu0 0.0
      %5051 = vmatpush2.msra.mxu0 0.0
      %5052 = vmatprep.subr.mxu0 0.0
      %5053 = vmatpush2.msra.mxu0 0.0
      %5054 = vmatprep.subr.mxu0 0.0
      %5055 = vmatpush2.msra.mxu0 0.0
      %5056 = vmatprep.subr.mxu0 0.0
      %5057 = vmatpush2.msra.mxu0 0.0
      %5058 = vmatprep.subr.mxu0 0.0
      %5059 = vmatpush2.msra.mxu0 0.0
      %5060 = vmatprep.subr.mxu0 0.0
      %5061 = vmatpush2.msra.mxu0 0.0
      %5062 = vmatprep.subr.mxu0 0.0
      %5063 = vmatpush2.msra.mxu0 0.0
      %5064 = vmatprep.subr.mxu0 0.0
      %5065 = vmatpush2.msra.mxu0 0.0
      %5066 = vmatprep.subr.mxu0 0.0
      %5067 = vmatpush2.msra.mxu0 0.0
      %5068 = vmatprep.subr.mxu0 0.0
      %5069 = vmatpush2.msra.mxu0 0.0
      %5070 = vmatprep.subr.mxu0 0.0
      %5071 = vmatpush2.msra.mxu0 0.0
      %5072 = vmatprep.subr.mxu0 0.0
      %5073 = vmatpush2.msra.mxu0 0.0
      %5074 = vmatprep.subr.mxu0 0.0
      %5075 = vmatpush2.msra.mxu0 0.0
      %5076 = vmatprep.subr.mxu0 0.0
      %5077 = vmatpush2.msra.mxu0 0.0
      %5078 = vmatprep.subr.mxu0 0.0
      %5079 = vmatpush2.msra.mxu0 0.0
      %5080 = vmatprep.mubr.f32.mxu0 0.0
      %5081 = vmatmul.mubr.f32.gmra.mxu0 %v4894
      %v5082 = vpop.f32.mrf.mxu0
      %v5083 = vadd.f32 0.0, %v5082
      %v5084 = vpop.f32.mrf.mxu0
      %5085 = vmatprep.mubr.f32.mxu0 0.0
      %5086 = vmatmul.mubr.f32.gmra.mxu0 %v4897
      %v5087 = vpop.f32.mrf.mxu0
      %v5088 = vadd.f32 0.0, %v5087
      %v5089 = vpop.f32.mrf.mxu0
      %5090 = vmatprep.mubr.f32.mxu0 0.0
      %5091 = vmatmul.mubr.f32.gmra.mxu0 %v4900
      %v5092 = vpop.f32.mrf.mxu0
      %v5093 = vadd.f32 0.0, %v5092
      %v5094 = vpop.f32.mrf.mxu0
      %5095 = vmatprep.mubr.f32.mxu0 0.0
      %5096 = vmatmul.mubr.f32.gmra.mxu0 %v4903
      %v5097 = vpop.f32.mrf.mxu0
      %v5098 = vadd.f32 0.0, %v5097
      %v5099 = vpop.f32.mrf.mxu0
      %5100 = vmatprep.mubr.f32.mxu0 0.0
      %5101 = vmatmul.mubr.f32.gmra.mxu0 %v4906
      %v5102 = vpop.f32.mrf.mxu0
      %v5103 = vadd.f32 0.0, %v5102
      %v5104 = vpop.f32.mrf.mxu0
      %5105 = vmatprep.mubr.f32.mxu0 0.0
      %5106 = vmatmul.mubr.f32.gmra.mxu0 %v4909
      %v5107 = vpop.f32.mrf.mxu0
      %v5108 = vadd.f32 0.0, %v5107
      %v5109 = vpop.f32.mrf.mxu0
      %5110 = vmatprep.mubr.f32.mxu0 0.0
      %5111 = vmatmul.mubr.f32.gmra.mxu0 %v4912
      %v5112 = vpop.f32.mrf.mxu0
      %v5113 = vadd.f32 0.0, %v5112
      %v5114 = vpop.f32.mrf.mxu0
      %5115 = vmatprep.mubr.f32.mxu0 0.0
      %5116 = vmatmul.mubr.f32.gmra.mxu0 %v4915
      %v5117 = vpop.f32.mrf.mxu0
      %v5118 = vadd.f32 0.0, %v5117
      %v5119 = vpop.f32.mrf.mxu0
      %5120 = vmatprep.mubr.f32.mxu0 0.0
      %5121 = vmatmul.mubr.f32.gmra.mxu0 %v4918
      %v5122 = vpop.f32.mrf.mxu0
      %v5123 = vadd.f32 0.0, %v5122
      %v5124 = vpop.f32.mrf.mxu0
      %5125 = vmatprep.mubr.f32.mxu0 0.0
      %5126 = vmatmul.mubr.f32.gmra.mxu0 %v4921
      %v5127 = vpop.f32.mrf.mxu0
      %v5128 = vadd.f32 0.0, %v5127
      %v5129 = vpop.f32.mrf.mxu0
      %5130 = vmatprep.mubr.f32.mxu0 0.0
      %5131 = vmatmul.mubr.f32.gmra.mxu0 %v4924
      %v5132 = vpop.f32.mrf.mxu0
      %v5133 = vadd.f32 0.0, %v5132
      %v5134 = vpop.f32.mrf.mxu0
      %5135 = vmatprep.mubr.f32.mxu0 0.0
      %5136 = vmatmul.mubr.f32.gmra.mxu0 %v4927
      %v5137 = vpop.f32.mrf.mxu0
      %v5138 = vadd.f32 0.0, %v5137
      %v5139 = vpop.f32.mrf.mxu0
      %5140 = vmatprep.mubr.f32.mxu0 0.0
      %5141 = vmatmul.mubr.f32.gmra.mxu0 %v4930
      %v5142 = vpop.f32.mrf.mxu0
      %v5143 = vadd.f32 0.0, %v5142
      %v5144 = vpop.f32.mrf.mxu0
      %5145 = vmatprep.mubr.f32.mxu0 0.0
      %5146 = vmatmul.mubr.f32.gmra.mxu0 %v4933
      %v5147 = vpop.f32.mrf.mxu0
      %v5148 = vadd.f32 0.0, %v5147
      %v5149 = vpop.f32.mrf.mxu0
      %5150 = vmatprep.mubr.f32.mxu0 0.0
      %5151 = vmatmul.mubr.f32.gmra.mxu0 %v4936
      %v5152 = vpop.f32.mrf.mxu0
      %v5153 = vadd.f32 0.0, %v5152
      %v5154 = vpop.f32.mrf.mxu0
      %5155 = vmatprep.mubr.f32.mxu0 0.0
      %5156 = vmatmul.mubr.f32.gmra.mxu0 %v4939
      %v5157 = vpop.f32.mrf.mxu0
      %v5158 = vadd.f32 0.0, %v5157
      %v5159 = vpop.f32.mrf.mxu0
      %5160 = vmatprep.mubr.f32.mxu0 0.0
      %5161 = vmatmul.mubr.f32.gmra.mxu0 %v4942
      %v5162 = vpop.f32.mrf.mxu0
      %v5163 = vadd.f32 0.0, %v5162
      %v5164 = vpop.f32.mrf.mxu0
      %5165 = vmatprep.mubr.f32.mxu0 0.0
      %5166 = vmatmul.mubr.f32.gmra.mxu0 %v4945
      %v5167 = vpop.f32.mrf.mxu0
      %v5168 = vadd.f32 0.0, %v5167
      %v5169 = vpop.f32.mrf.mxu0
      %5170 = vmatprep.mubr.f32.mxu0 0.0
      %5171 = vmatmul.mubr.f32.gmra.mxu0 %v4948
      %v5172 = vpop.f32.mrf.mxu0
      %v5173 = vadd.f32 0.0, %v5172
      %v5174 = vpop.f32.mrf.mxu0
      %5175 = vmatprep.mubr.f32.mxu0 0.0
      %5176 = vmatmul.mubr.f32.gmra.mxu0 %v4951
      %v5177 = vpop.f32.mrf.mxu0
      %v5178 = vadd.f32 0.0, %v5177
      %v5179 = vpop.f32.mrf.mxu0
      %5180 = vmatprep.mubr.f32.mxu0 0.0
      %5181 = vmatmul.mubr.f32.gmra.mxu0 %v4954
      %v5182 = vpop.f32.mrf.mxu0
      %v5183 = vadd.f32 0.0, %v5182
      %v5184 = vpop.f32.mrf.mxu0
      %5185 = vmatprep.mubr.f32.mxu0 0.0
      %5186 = vmatmul.mubr.f32.gmra.mxu0 %v4957
      %v5187 = vpop.f32.mrf.mxu0
      %v5188 = vadd.f32 0.0, %v5187
      %v5189 = vpop.f32.mrf.mxu0
      %5190 = vmatprep.mubr.f32.mxu0 0.0
      %5191 = vmatmul.mubr.f32.gmra.mxu0 %v4960
      %v5192 = vpop.f32.mrf.mxu0
      %v5193 = vadd.f32 0.0, %v5192
      %v5194 = vpop.f32.mrf.mxu0
      %5195 = vmatprep.mubr.f32.mxu0 0.0
      %5196 = vmatmul.mubr.f32.gmra.mxu0 %v4963
      %v5197 = vpop.f32.mrf.mxu0
      %v5198 = vadd.f32 0.0, %v5197
      %v5199 = vpop.f32.mrf.mxu0
      %5200 = vmatprep.mubr.f32.mxu0 0.0
      %5201 = vmatmul.mubr.f32.gmra.mxu0 %v4966
      %v5202 = vpop.f32.mrf.mxu0
      %v5203 = vadd.f32 0.0, %v5202
      %v5204 = vpop.f32.mrf.mxu0
      %5205 = vmatprep.mubr.f32.mxu0 0.0
      %5206 = vmatmul.mubr.f32.gmra.mxu0 %v4969
      %v5207 = vpop.f32.mrf.mxu0
      %v5208 = vadd.f32 0.0, %v5207
      %v5209 = vpop.f32.mrf.mxu0
      %5210 = vmatprep.mubr.f32.mxu0 0.0
      %5211 = vmatmul.mubr.f32.gmra.mxu0 %v4972
      %v5212 = vpop.f32.mrf.mxu0
      %v5213 = vadd.f32 0.0, %v5212
      %v5214 = vpop.f32.mrf.mxu0
      %5215 = vmatprep.mubr.f32.mxu0 0.0
      %5216 = vmatmul.mubr.f32.gmra.mxu0 %v4975
      %v5217 = vpop.f32.mrf.mxu0
      %v5218 = vadd.f32 0.0, %v5217
      %v5219 = vpop.f32.mrf.mxu0
      %5220 = vmatprep.mubr.f32.mxu0 0.0
      %5221 = vmatmul.mubr.f32.gmra.mxu0 %v4978
      %v5222 = vpop.f32.mrf.mxu0
      %v5223 = vadd.f32 0.0, %v5222
      %v5224 = vpop.f32.mrf.mxu0
      %5225 = vmatprep.mubr.f32.mxu0 0.0
      %5226 = vmatmul.mubr.f32.gmra.mxu0 %v4981
      %v5227 = vpop.f32.mrf.mxu0
      %v5228 = vadd.f32 0.0, %v5227
      %v5229 = vpop.f32.mrf.mxu0
      %5230 = vmatprep.mubr.f32.mxu0 0.0
      %5231 = vmatmul.mubr.f32.gmra.mxu0 %v4984
      %v5232 = vpop.f32.mrf.mxu0
      %v5233 = vadd.f32 0.0, %v5232
      %v5234 = vpop.f32.mrf.mxu0
      %5235 = vmatprep.mubr.f32.mxu0 0.0
      %5236 = vmatmul.mubr.f32.gmra.mxu0 %v4987
      %v5237 = vpop.f32.mrf.mxu0
      %v5238 = vadd.f32 0.0, %v5237
      %v5239 = vpop.f32.mrf.mxu0
      %5240 = vmatprep.mubr.f32.mxu0 0.0
      %5241 = vmatmul.mubr.f32.gmra.mxu0 %v4990
      %v5242 = vpop.f32.mrf.mxu0
      %v5243 = vadd.f32 0.0, %v5242
      %v5244 = vpop.f32.mrf.mxu0
      %5245 = vmatprep.mubr.f32.mxu0 0.0
      %5246 = vmatmul.mubr.f32.gmra.mxu0 %v4993
      %v5247 = vpop.f32.mrf.mxu0
      %v5248 = vadd.f32 0.0, %v5247
      %v5249 = vpop.f32.mrf.mxu0
      %5250 = vmatprep.mubr.f32.mxu0 0.0
      %5251 = vmatmul.mubr.f32.gmra.mxu0 %v4996
      %v5252 = vpop.f32.mrf.mxu0
      %v5253 = vadd.f32 0.0, %v5252
      %v5254 = vpop.f32.mrf.mxu0
      %5255 = vmatprep.mubr.f32.mxu0 0.0
      %5256 = vmatmul.mubr.f32.gmra.mxu0 %v4999
      %v5257 = vpop.f32.mrf.mxu0
      %v5258 = vadd.f32 0.0, %v5257
      %v5259 = vpop.f32.mrf.mxu0
      %5260 = vmatprep.mubr.f32.mxu0 0.0
      %5261 = vmatmul.mubr.f32.gmra.mxu0 %v5002
      %v5262 = vpop.f32.mrf.mxu0
      %v5263 = vadd.f32 0.0, %v5262
      %v5264 = vpop.f32.mrf.mxu0
      %5265 = vmatprep.mubr.f32.mxu0 0.0
      %5266 = vmatmul.mubr.f32.gmra.mxu0 %v5005
      %v5267 = vpop.f32.mrf.mxu0
      %v5268 = vadd.f32 0.0, %v5267
      %v5269 = vpop.f32.mrf.mxu0
      %5270 = vmatprep.mubr.f32.mxu0 0.0
      %5271 = vmatmul.mubr.f32.gmra.mxu0 %v5008
      %v5272 = vpop.f32.mrf.mxu0
      %v5273 = vadd.f32 0.0, %v5272
      %v5274 = vpop.f32.mrf.mxu0
      %5275 = vmatprep.mubr.f32.mxu0 0.0
      %5276 = vmatmul.mubr.f32.gmra.mxu0 %v5011
      %v5277 = vpop.f32.mrf.mxu0
      %v5278 = vadd.f32 0.0, %v5277
      %v5279 = vpop.f32.mrf.mxu0
      %5280 = vmatprep.mubr.f32.mxu0 0.0
      %5281 = vmatmul.mubr.f32.gmra.mxu0 %v5014
      %v5282 = vpop.f32.mrf.mxu0
      %v5283 = vadd.f32 0.0, %v5282
      %v5284 = vpop.f32.mrf.mxu0
      %5285 = vdwg.mxu0
      %v5286 = vadd.f32 %v4802, %v5083
      %v5287 = vadd.f32 %v4803, %v5088
      %v5288 = vadd.f32 %v4804, %v5093
      %v5289 = vadd.f32 %v4805, %v5098
      %v5290 = vadd.f32 %v4806, %v5103
      %v5291 = vadd.f32 %v4807, %v5108
      %v5292 = vadd.f32 %v4808, %v5113
      %v5293 = vadd.f32 %v4809, %v5118
      %v5294 = vadd.f32 %v4810, %v5123
      %v5295 = vadd.f32 %v4811, %v5128
      %v5296 = vadd.f32 %v4812, %v5133
      %v5297 = vadd.f32 %v4813, %v5138
      %v5298 = vadd.f32 %v4814, %v5143
      %v5299 = vadd.f32 %v4815, %v5148
      %v5300 = vadd.f32 %v4816, %v5153
      %v5301 = vadd.f32 %v4817, %v5158
      %v5302 = vadd.f32 %v4818, %v5163
      %v5303 = vadd.f32 %v4819, %v5168
      %v5304 = vadd.f32 %v4820, %v5173
      %v5305 = vadd.f32 %v4821, %v5178
      %v5306 = vadd.f32 %v4822, %v5183
      %v5307 = vadd.f32 %v4823, %v5188
      %v5308 = vadd.f32 %v4824, %v5193
      %v5309 = vadd.f32 %v4825, %v5198
      %v5310 = vadd.f32 %v4826, %v5203
      %v5311 = vadd.f32 %v4827, %v5208
      %v5312 = vadd.f32 %v4828, %v5213
      %v5313 = vadd.f32 %v4829, %v5218
      %v5314 = vadd.f32 %v4830, %v5223
      %v5315 = vadd.f32 %v4831, %v5228
      %v5316 = vadd.f32 %v4832, %v5233
      %v5317 = vadd.f32 %v4833, %v5238
      %v5318 = vadd.f32 %v4834, %v5243
      %v5319 = vadd.f32 %v4835, %v5248
      %v5320 = vadd.f32 %v4836, %v5253
      %v5321 = vadd.f32 %v4837, %v5258
      %v5322 = vadd.f32 %v4838, %v5263
      %v5323 = vadd.f32 %v4839, %v5268
      %v5324 = vadd.f32 %v4840, %v5273
      %v5325 = vadd.f32 %v4841, %v5278
      %v5326 = vadd.f32 %v4842, %v5283
      %v5327 = vld [vmem:[%s4 + $0x2] sm:$0x1]
      %v5328 = vlaneseq
      %v5329 = vshrl.u32 %v5328, 7
      %v5330 = vsub.s32 0, %v5329
      %v5331 = vrot.slane %v5327, %v5330
      %v5332 = vmul.f32 %v5286, %v5331
      %v5333 = vmul.f32 %v5287, %v5331
      %v5334 = vmul.f32 %v5288, %v5331
      %v5335 = vmul.f32 %v5289, %v5331
      %v5336 = vmul.f32 %v5290, %v5331
      %v5337 = vmul.f32 %v5291, %v5331
      %v5338 = vmul.f32 %v5292, %v5331
      %v5339 = vmul.f32 %v5293, %v5331
      %v5340 = vmul.f32 %v5294, %v5331
      %v5341 = vmul.f32 %v5295, %v5331
      %v5342 = vmul.f32 %v5296, %v5331
      %v5343 = vmul.f32 %v5297, %v5331
      %v5344 = vmul.f32 %v5298, %v5331
      %v5345 = vmul.f32 %v5299, %v5331
      %v5346 = vmul.f32 %v5300, %v5331
      %v5347 = vmul.f32 %v5301, %v5331
      %v5348 = vmul.f32 %v5302, %v5331
      %v5349 = vmul.f32 %v5303, %v5331
      %v5350 = vmul.f32 %v5304, %v5331
      %v5351 = vmul.f32 %v5305, %v5331
      %v5352 = vmul.f32 %v5306, %v5331
      %v5353 = vmul.f32 %v5307, %v5331
      %v5354 = vmul.f32 %v5308, %v5331
      %v5355 = vmul.f32 %v5309, %v5331
      %v5356 = vmul.f32 %v5310, %v5331
      %v5357 = vmul.f32 %v5311, %v5331
      %v5358 = vmul.f32 %v5312, %v5331
      %v5359 = vmul.f32 %v5313, %v5331
      %v5360 = vmul.f32 %v5314, %v5331
      %v5361 = vmul.f32 %v5315, %v5331
      %v5362 = vmul.f32 %v5316, %v5331
      %v5363 = vmul.f32 %v5317, %v5331
      %v5364 = vmul.f32 %v5318, %v5331
      %v5365 = vmul.f32 %v5319, %v5331
      %v5366 = vmul.f32 %v5320, %v5331
      %v5367 = vmul.f32 %v5321, %v5331
      %v5368 = vmul.f32 %v5322, %v5331
      %v5369 = vmul.f32 %v5323, %v5331
      %v5370 = vmul.f32 %v5324, %v5331
      %v5371 = vmul.f32 %v5325, %v5331
      %v5372 = vmul.f32 %v5326, %v5331
      %v5373 = vld [vmem:[%s4 + $0x3] sm:$0x1]
      %v5374 = vlaneseq
      %v5375 = vshrl.u32 %v5374, 7
      %v5376 = vsub.s32 0, %v5375
      %v5377 = vrot.slane %v5373, %v5376
      %v5378 = vadd.f32 %v5332, %v5377
      %v5379 = vadd.f32 %v5333, %v5377
      %v5380 = vadd.f32 %v5334, %v5377
      %v5381 = vadd.f32 %v5335, %v5377
      %v5382 = vadd.f32 %v5336, %v5377
      %v5383 = vadd.f32 %v5337, %v5377
      %v5384 = vadd.f32 %v5338, %v5377
      %v5385 = vadd.f32 %v5339, %v5377
      %v5386 = vadd.f32 %v5340, %v5377
      %v5387 = vadd.f32 %v5341, %v5377
      %v5388 = vadd.f32 %v5342, %v5377
      %v5389 = vadd.f32 %v5343, %v5377
      %v5390 = vadd.f32 %v5344, %v5377
      %v5391 = vadd.f32 %v5345, %v5377
      %v5392 = vadd.f32 %v5346, %v5377
      %v5393 = vadd.f32 %v5347, %v5377
      %v5394 = vadd.f32 %v5348, %v5377
      %v5395 = vadd.f32 %v5349, %v5377
      %v5396 = vadd.f32 %v5350, %v5377
      %v5397 = vadd.f32 %v5351, %v5377
      %v5398 = vadd.f32 %v5352, %v5377
      %v5399 = vadd.f32 %v5353, %v5377
      %v5400 = vadd.f32 %v5354, %v5377
      %v5401 = vadd.f32 %v5355, %v5377
      %v5402 = vadd.f32 %v5356, %v5377
      %v5403 = vadd.f32 %v5357, %v5377
      %v5404 = vadd.f32 %v5358, %v5377
      %v5405 = vadd.f32 %v5359, %v5377
      %v5406 = vadd.f32 %v5360, %v5377
      %v5407 = vadd.f32 %v5361, %v5377
      %v5408 = vadd.f32 %v5362, %v5377
      %v5409 = vadd.f32 %v5363, %v5377
      %v5410 = vadd.f32 %v5364, %v5377
      %v5411 = vadd.f32 %v5365, %v5377
      %v5412 = vadd.f32 %v5366, %v5377
      %v5413 = vadd.f32 %v5367, %v5377
      %v5414 = vadd.f32 %v5368, %v5377
      %v5415 = vadd.f32 %v5369, %v5377
      %v5416 = vadd.f32 %v5370, %v5377
      %v5417 = vadd.f32 %v5371, %v5377
      %v5418 = vadd.f32 %v5372, %v5377
      %v5419 = vmax.f32 %v5378, 0.0
      %v5420 = vmax.f32 %v5379, 0.0
      %v5421 = vmax.f32 %v5380, 0.0
      %v5422 = vmax.f32 %v5381, 0.0
      %v5423 = vmax.f32 %v5382, 0.0
      %v5424 = vmax.f32 %v5383, 0.0
      %v5425 = vmax.f32 %v5384, 0.0
      %v5426 = vmax.f32 %v5385, 0.0
      %v5427 = vmax.f32 %v5386, 0.0
      %v5428 = vmax.f32 %v5387, 0.0
      %v5429 = vmax.f32 %v5388, 0.0
      %v5430 = vmax.f32 %v5389, 0.0
      %v5431 = vmax.f32 %v5390, 0.0
      %v5432 = vmax.f32 %v5391, 0.0
      %v5433 = vmax.f32 %v5392, 0.0
      %v5434 = vmax.f32 %v5393, 0.0
      %v5435 = vmax.f32 %v5394, 0.0
      %v5436 = vmax.f32 %v5395, 0.0
      %v5437 = vmax.f32 %v5396, 0.0
      %v5438 = vmax.f32 %v5397, 0.0
      %v5439 = vmax.f32 %v5398, 0.0
      %v5440 = vmax.f32 %v5399, 0.0
      %v5441 = vmax.f32 %v5400, 0.0
      %v5442 = vmax.f32 %v5401, 0.0
      %v5443 = vmax.f32 %v5402, 0.0
      %v5444 = vmax.f32 %v5403, 0.0
      %v5445 = vmax.f32 %v5404, 0.0
      %v5446 = vmax.f32 %v5405, 0.0
      %v5447 = vmax.f32 %v5406, 0.0
      %v5448 = vmax.f32 %v5407, 0.0
      %v5449 = vmax.f32 %v5408, 0.0
      %v5450 = vmax.f32 %v5409, 0.0
      %v5451 = vmax.f32 %v5410, 0.0
      %v5452 = vmax.f32 %v5411, 0.0
      %v5453 = vmax.f32 %v5412, 0.0
      %v5454 = vmax.f32 %v5413, 0.0
      %v5455 = vmax.f32 %v5414, 0.0
      %v5456 = vmax.f32 %v5415, 0.0
      %v5457 = vmax.f32 %v5416, 0.0
      %v5458 = vmax.f32 %v5417, 0.0
      %v5459 = vmax.f32 %v5418, 0.0
      %v5460 = vmul.f32 %v5419, %v769
      %v5461 = vmul.f32 %v5420, %v774
      %v5462 = vmul.f32 %v5421, %v779
      %v5463 = vmul.f32 %v5422, %v784
      %v5464 = vmul.f32 %v5423, %v789
      %v5465 = vmul.f32 %v5424, %v794
      %v5466 = vmul.f32 %v5425, %v799
      %v5467 = vmul.f32 %v5426, %v804
      %v5468 = vmul.f32 %v5427, %v809
      %v5469 = vmul.f32 %v5428, %v814
      %v5470 = vmul.f32 %v5429, %v819
      %v5471 = vmul.f32 %v5430, %v824
      %v5472 = vmul.f32 %v5431, %v829
      %v5473 = vmul.f32 %v5432, %v834
      %v5474 = vmul.f32 %v5433, %v839
      %v5475 = vmul.f32 %v5434, %v844
      %v5476 = vmul.f32 %v5435, %v849
      %v5477 = vmul.f32 %v5436, %v854
      %v5478 = vmul.f32 %v5437, %v859
      %v5479 = vmul.f32 %v5438, %v864
      %v5480 = vmul.f32 %v5439, %v869
      %v5481 = vmul.f32 %v5440, %v874
      %v5482 = vmul.f32 %v5441, %v879
      %v5483 = vmul.f32 %v5442, %v884
      %v5484 = vmul.f32 %v5443, %v889
      %v5485 = vmul.f32 %v5444, %v894
      %v5486 = vmul.f32 %v5445, %v899
      %v5487 = vmul.f32 %v5446, %v904
      %v5488 = vmul.f32 %v5447, %v909
      %v5489 = vmul.f32 %v5448, %v914
      %v5490 = vmul.f32 %v5449, %v919
      %v5491 = vmul.f32 %v5450, %v924
      %v5492 = vmul.f32 %v5451, %v929
      %v5493 = vmul.f32 %v5452, %v934
      %v5494 = vmul.f32 %v5453, %v939
      %v5495 = vmul.f32 %v5454, %v944
      %v5496 = vmul.f32 %v5455, %v949
      %v5497 = vmul.f32 %v5456, %v954
      %v5498 = vmul.f32 %v5457, %v959
      %v5499 = vmul.f32 %v5458, %v964
      %v5500 = vmul.f32 %v5459, %v969
      %5501 = vst.msk [vmem:[#allocation3 + $0x18] sm:$0xff] %vm293, %v5460
      %5502 = vst.msk [vmem:[#allocation3 + $0x20] sm:$0xff] %vm293, %v5461
      %5503 = vst.msk [vmem:[#allocation3 + $0x28] sm:$0xff] %vm293, %v5462
      %5504 = vst.msk [vmem:[#allocation3 + $0x30] sm:$0xff] %vm293, %v5463
      %5505 = vst.msk [vmem:[#allocation3 + $0x38] sm:$0xff] %vm293, %v5464
      %5506 = vst.msk [vmem:[#allocation3 + $0x40] sm:$0xff] %vm293, %v5465
      %5507 = vst.msk [vmem:[#allocation3 + $0x48] sm:$0xff] %vm293, %v5466
      %5508 = vst.msk [vmem:[#allocation3 + $0x50] sm:$0xff] %vm293, %v5467
      %5509 = vst.msk [vmem:[#allocation3 + $0x58] sm:$0xff] %vm293, %v5468
      %5510 = vst.msk [vmem:[#allocation3 + $0x60] sm:$0xff] %vm293, %v5469
      %5511 = vst.msk [vmem:[#allocation3 + $0x68] sm:$0xff] %vm293, %v5470
      %5512 = vst.msk [vmem:[#allocation3 + $0x70] sm:$0xff] %vm293, %v5471
      %5513 = vst.msk [vmem:[#allocation3 + $0x78] sm:$0xff] %vm293, %v5472
      %5514 = vst.msk [vmem:[#allocation3 + $0x80] sm:$0xff] %vm293, %v5473
      %5515 = vst.msk [vmem:[#allocation3 + $0x88] sm:$0xff] %vm293, %v5474
      %5516 = vst.msk [vmem:[#allocation3 + $0x90] sm:$0xff] %vm293, %v5475
      %5517 = vst.msk [vmem:[#allocation3 + $0x98] sm:$0xff] %vm293, %v5476
      %5518 = vst.msk [vmem:[#allocation3 + $0xa0] sm:$0xff] %vm293, %v5477
      %5519 = vst.msk [vmem:[#allocation3 + $0xa8] sm:$0xff] %vm293, %v5478
      %5520 = vst.msk [vmem:[#allocation3 + $0xb0] sm:$0xff] %vm293, %v5479
      %5521 = vst.msk [vmem:[#allocation3 + $0xb8] sm:$0xff] %vm293, %v5480
      %5522 = vst.msk [vmem:[#allocation3 + $0xc0] sm:$0xff] %vm293, %v5481
      %5523 = vst.msk [vmem:[#allocation3 + $0xc8] sm:$0xff] %vm293, %v5482
      %5524 = vst.msk [vmem:[#allocation3 + $0xd0] sm:$0xff] %vm293, %v5483
      %5525 = vst.msk [vmem:[#allocation3 + $0xd8] sm:$0xff] %vm293, %v5484
      %5526 = vst.msk [vmem:[#allocation3 + $0xe0] sm:$0xff] %vm293, %v5485
      %5527 = vst.msk [vmem:[#allocation3 + $0xe8] sm:$0xff] %vm293, %v5486
      %5528 = vst.msk [vmem:[#allocation3 + $0xf0] sm:$0xff] %vm293, %v5487
      %5529 = vst.msk [vmem:[#allocation3 + $0xf8] sm:$0xff] %vm293, %v5488
      %5530 = vst.msk [vmem:[#allocation3 + $0x100] sm:$0xff] %vm293, %v5489
      %5531 = vst.msk [vmem:[#allocation3 + $0x108] sm:$0xff] %vm293, %v5490
      %5532 = vst.msk [vmem:[#allocation3 + $0x110] sm:$0xff] %vm293, %v5491
      %5533 = vst.msk [vmem:[#allocation3 + $0x118] sm:$0xff] %vm293, %v5492
      %5534 = vst.msk [vmem:[#allocation3 + $0x120] sm:$0xff] %vm293, %v5493
      %5535 = vst.msk [vmem:[#allocation3 + $0x128] sm:$0xff] %vm293, %v5494
      %5536 = vst.msk [vmem:[#allocation3 + $0x130] sm:$0xff] %vm293, %v5495
      %5537 = vst.msk [vmem:[#allocation3 + $0x138] sm:$0xff] %vm293, %v5496
      %5538 = vst.msk [vmem:[#allocation3 + $0x140] sm:$0xff] %vm293, %v5497
      %5539 = vst.msk [vmem:[#allocation3 + $0x148] sm:$0xff] %vm293, %v5498
      %5540 = vst.msk [vmem:[#allocation3 + $0x150] sm:$0xff] %vm293, %v5499
      %5541 = vst.msk [vmem:[#allocation3 + $0x158] sm:$0xf] %vm1052, %v5500
      %v5542 = vld [vmem:[#allocation3 + $0x5] sm:$0xff]
      %v5543 = vld [vmem:[#allocation3 + $0xd] sm:$0xff]
      %v5544 = vld [vmem:[#allocation3 + $0x15] sm:$0xff]
      %v5545 = vld [vmem:[#allocation3 + $0x1d] sm:$0xff]
      %v5546 = vld [vmem:[#allocation3 + $0x25] sm:$0xff]
      %v5547 = vld [vmem:[#allocation3 + $0x2d] sm:$0xff]
      %v5548 = vld [vmem:[#allocation3 + $0x35] sm:$0xff]
      %v5549 = vld [vmem:[#allocation3 + $0x3d] sm:$0xff]
      %v5550 = vld [vmem:[#allocation3 + $0x45] sm:$0xff]
      %v5551 = vld [vmem:[#allocation3 + $0x4d] sm:$0xff]
      %v5552 = vld [vmem:[#allocation3 + $0x55] sm:$0xff]
      %v5553 = vld [vmem:[#allocation3 + $0x5d] sm:$0xff]
      %v5554 = vld [vmem:[#allocation3 + $0x65] sm:$0xff]
      %v5555 = vld [vmem:[#allocation3 + $0x6d] sm:$0xff]
      %v5556 = vld [vmem:[#allocation3 + $0x75] sm:$0xff]
      %v5557 = vld [vmem:[#allocation3 + $0x7d] sm:$0xff]
      %v5558 = vld [vmem:[#allocation3 + $0x85] sm:$0xff]
      %v5559 = vld [vmem:[#allocation3 + $0x8d] sm:$0xff]
      %v5560 = vld [vmem:[#allocation3 + $0x95] sm:$0xff]
      %v5561 = vld [vmem:[#allocation3 + $0x9d] sm:$0xff]
      %v5562 = vld [vmem:[#allocation3 + $0xa5] sm:$0xff]
      %v5563 = vld [vmem:[#allocation3 + $0xad] sm:$0xff]
      %v5564 = vld [vmem:[#allocation3 + $0xb5] sm:$0xff]
      %v5565 = vld [vmem:[#allocation3 + $0xbd] sm:$0xff]
      %v5566 = vld [vmem:[#allocation3 + $0xc5] sm:$0xff]
      %v5567 = vld [vmem:[#allocation3 + $0xcd] sm:$0xff]
      %v5568 = vld [vmem:[#allocation3 + $0xd5] sm:$0xff]
      %v5569 = vld [vmem:[#allocation3 + $0xdd] sm:$0xff]
      %v5570 = vld [vmem:[#allocation3 + $0xe5] sm:$0xff]
      %v5571 = vld [vmem:[#allocation3 + $0xed] sm:$0xff]
      %v5572 = vld [vmem:[#allocation3 + $0xf5] sm:$0xff]
      %v5573 = vld [vmem:[#allocation3 + $0xfd] sm:$0xff]
      %v5574 = vld [vmem:[#allocation3 + $0x105] sm:$0xff]
      %v5575 = vld [vmem:[#allocation3 + $0x10d] sm:$0xff]
      %v5576 = vld [vmem:[#allocation3 + $0x115] sm:$0xff]
      %v5577 = vld [vmem:[#allocation3 + $0x11d] sm:$0xff]
      %v5578 = vld [vmem:[#allocation3 + $0x125] sm:$0xff]
      %v5579 = vld [vmem:[#allocation3 + $0x12d] sm:$0xff]
      %v5580 = vld [vmem:[#allocation3 + $0x135] sm:$0xff]
      %v5581 = vld [vmem:[#allocation3 + $0x13d] sm:$0xff]
      %v5582 = vld [vmem:[#allocation3 + $0x145] sm:$0xf]
      %v5583 = vld [vmem:[%s3] sm:$0xff]
      %v5584 = vld [vmem:[%s3 + $0x8] sm:$0xff]
      %v5585 = vld [vmem:[%s3 + $0x10] sm:$0xff]
      %v5586 = vld [vmem:[%s3 + $0x18] sm:$0xff]
      %v5587 = vld [vmem:[%s3 + $0x20] sm:$0xff]
      %v5588 = vld [vmem:[%s3 + $0x28] sm:$0xff]
      %v5589 = vld [vmem:[%s3 + $0x30] sm:$0xff]
      %v5590 = vld [vmem:[%s3 + $0x38] sm:$0xff]
      %v5591 = vld [vmem:[#allocation3 + $0x6] sm:$0xff]
      %v5592 = vld [vmem:[#allocation3 + $0xe] sm:$0xff]
      %v5593 = vld [vmem:[#allocation3 + $0x16] sm:$0xff]
      %v5594 = vld [vmem:[#allocation3 + $0x1e] sm:$0xff]
      %v5595 = vld [vmem:[#allocation3 + $0x26] sm:$0xff]
      %v5596 = vld [vmem:[#allocation3 + $0x2e] sm:$0xff]
      %v5597 = vld [vmem:[#allocation3 + $0x36] sm:$0xff]
      %v5598 = vld [vmem:[#allocation3 + $0x3e] sm:$0xff]
      %v5599 = vld [vmem:[#allocation3 + $0x46] sm:$0xff]
      %v5600 = vld [vmem:[#allocation3 + $0x4e] sm:$0xff]
      %v5601 = vld [vmem:[#allocation3 + $0x56] sm:$0xff]
      %v5602 = vld [vmem:[#allocation3 + $0x5e] sm:$0xff]
      %v5603 = vld [vmem:[#allocation3 + $0x66] sm:$0xff]
      %v5604 = vld [vmem:[#allocation3 + $0x6e] sm:$0xff]
      %v5605 = vld [vmem:[#allocation3 + $0x76] sm:$0xff]
      %v5606 = vld [vmem:[#allocation3 + $0x7e] sm:$0xff]
      %v5607 = vld [vmem:[#allocation3 + $0x86] sm:$0xff]
      %v5608 = vld [vmem:[#allocation3 + $0x8e] sm:$0xff]
      %v5609 = vld [vmem:[#allocation3 + $0x96] sm:$0xff]
      %v5610 = vld [vmem:[#allocation3 + $0x9e] sm:$0xff]
      %v5611 = vld [vmem:[#allocation3 + $0xa6] sm:$0xff]
      %v5612 = vld [vmem:[#allocation3 + $0xae] sm:$0xff]
      %v5613 = vld [vmem:[#allocation3 + $0xb6] sm:$0xff]
      %v5614 = vld [vmem:[#allocation3 + $0xbe] sm:$0xff]
      %v5615 = vld [vmem:[#allocation3 + $0xc6] sm:$0xff]
      %v5616 = vld [vmem:[#allocation3 + $0xce] sm:$0xff]
      %v5617 = vld [vmem:[#allocation3 + $0xd6] sm:$0xff]
      %v5618 = vld [vmem:[#allocation3 + $0xde] sm:$0xff]
      %v5619 = vld [vmem:[#allocation3 + $0xe6] sm:$0xff]
      %v5620 = vld [vmem:[#allocation3 + $0xee] sm:$0xff]
      %v5621 = vld [vmem:[#allocation3 + $0xf6] sm:$0xff]
      %v5622 = vld [vmem:[#allocation3 + $0xfe] sm:$0xff]
      %v5623 = vld [vmem:[#allocation3 + $0x106] sm:$0xff]
      %v5624 = vld [vmem:[#allocation3 + $0x10e] sm:$0xff]
      %v5625 = vld [vmem:[#allocation3 + $0x116] sm:$0xff]
      %v5626 = vld [vmem:[#allocation3 + $0x11e] sm:$0xff]
      %v5627 = vld [vmem:[#allocation3 + $0x126] sm:$0xff]
      %v5628 = vld [vmem:[#allocation3 + $0x12e] sm:$0xff]
      %v5629 = vld [vmem:[#allocation3 + $0x136] sm:$0xff]
      %v5630 = vld [vmem:[#allocation3 + $0x13e] sm:$0xff]
      %v5631 = vld [vmem:[#allocation3 + $0x146] sm:$0xf]
      %s5632 = scalar_lea.vmem %s3, 64
      %v5633 = vld [vmem:[%s5632] sm:$0xff]
      %v5634 = vld [vmem:[%s5632 + $0x8] sm:$0xff]
      %v5635 = vld [vmem:[%s5632 + $0x10] sm:$0xff]
      %v5636 = vld [vmem:[%s5632 + $0x18] sm:$0xff]
      %v5637 = vld [vmem:[%s5632 + $0x20] sm:$0xff]
      %v5638 = vld [vmem:[%s5632 + $0x28] sm:$0xff]
      %v5639 = vld [vmem:[%s5632 + $0x30] sm:$0xff]
      %v5640 = vld [vmem:[%s5632 + $0x38] sm:$0xff]
      %v5642 = vsel %vm293, %v5591, 0
      %v5645 = vsel %vm293, %v5592, 0
      %v5648 = vsel %vm293, %v5593, 0
      %v5651 = vsel %vm293, %v5594, 0
      %v5654 = vsel %vm293, %v5595, 0
      %v5657 = vsel %vm293, %v5596, 0
      %v5660 = vsel %vm293, %v5597, 0
      %v5663 = vsel %vm293, %v5598, 0
      %v5666 = vsel %vm293, %v5599, 0
      %v5669 = vsel %vm293, %v5600, 0
      %v5672 = vsel %vm293, %v5601, 0
      %v5675 = vsel %vm293, %v5602, 0
      %v5678 = vsel %vm293, %v5603, 0
      %v5681 = vsel %vm293, %v5604, 0
      %v5684 = vsel %vm293, %v5605, 0
      %v5687 = vsel %vm293, %v5606, 0
      %v5690 = vsel %vm293, %v5607, 0
      %v5693 = vsel %vm293, %v5608, 0
      %v5696 = vsel %vm293, %v5609, 0
      %v5699 = vsel %vm293, %v5610, 0
      %v5702 = vsel %vm293, %v5611, 0
      %v5705 = vsel %vm293, %v5612, 0
      %v5708 = vsel %vm293, %v5613, 0
      %v5711 = vsel %vm293, %v5614, 0
      %v5714 = vsel %vm293, %v5615, 0
      %v5717 = vsel %vm293, %v5616, 0
      %v5720 = vsel %vm293, %v5617, 0
      %v5723 = vsel %vm293, %v5618, 0
      %v5726 = vsel %vm293, %v5619, 0
      %v5729 = vsel %vm293, %v5620, 0
      %v5732 = vsel %vm293, %v5621, 0
      %v5735 = vsel %vm293, %v5622, 0
      %v5738 = vsel %vm293, %v5623, 0
      %v5741 = vsel %vm293, %v5624, 0
      %v5744 = vsel %vm293, %v5625, 0
      %v5747 = vsel %vm293, %v5626, 0
      %v5750 = vsel %vm293, %v5627, 0
      %v5753 = vsel %vm293, %v5628, 0
      %v5756 = vsel %vm293, %v5629, 0
      %v5759 = vsel %vm293, %v5630, 0
      %v5762 = vsel %vm293, %v5631, 0
      %5764 = vmatprep.subr.mxu0 0.0
      %5765 = vmatpush1.msra.mxu0 0.0
      %5766 = vmatprep.subr.mxu0 0.0
      %5767 = vmatpush1.msra.mxu0 0.0
      %5768 = vmatprep.subr.mxu0 0.0
      %5769 = vmatpush1.msra.mxu0 0.0
      %5770 = vmatprep.subr.mxu0 0.0
      %5771 = vmatpush1.msra.mxu0 0.0
      %5772 = vmatprep.subr.mxu0 0.0
      %5773 = vmatpush1.msra.mxu0 0.0
      %5774 = vmatprep.subr.mxu0 0.0
      %5775 = vmatpush1.msra.mxu0 0.0
      %5776 = vmatprep.subr.mxu0 0.0
      %5777 = vmatpush1.msra.mxu0 0.0
      %5778 = vmatprep.subr.mxu0 0.0
      %5779 = vmatpush1.msra.mxu0 0.0
      %5780 = vmatprep.subr.mxu0 0.0
      %5781 = vmatpush1.msra.mxu0 %v5640
      %5782 = vmatprep.subr.mxu0 0.0
      %5783 = vmatpush1.msra.mxu0 %v5639
      %5784 = vmatprep.subr.mxu0 0.0
      %5785 = vmatpush1.msra.mxu0 %v5638
      %5786 = vmatprep.subr.mxu0 0.0
      %5787 = vmatpush1.msra.mxu0 %v5637
      %5788 = vmatprep.subr.mxu0 0.0
      %5789 = vmatpush1.msra.mxu0 %v5636
      %5790 = vmatprep.subr.mxu0 0.0
      %5791 = vmatpush1.msra.mxu0 %v5635
      %5792 = vmatprep.subr.mxu0 0.0
      %5793 = vmatpush1.msra.mxu0 %v5634
      %5794 = vmatprep.subr.mxu0 0.0
      %5795 = vmatpush1.msra.mxu0 %v5633
      %5796 = vmatprep.subr.mxu0 0.0
      %5797 = vmatpush2.msra.mxu0 0.0
      %5798 = vmatprep.subr.mxu0 0.0
      %5799 = vmatpush2.msra.mxu0 0.0
      %5800 = vmatprep.subr.mxu0 0.0
      %5801 = vmatpush2.msra.mxu0 0.0
      %5802 = vmatprep.subr.mxu0 0.0
      %5803 = vmatpush2.msra.mxu0 0.0
      %5804 = vmatprep.subr.mxu0 0.0
      %5805 = vmatpush2.msra.mxu0 0.0
      %5806 = vmatprep.subr.mxu0 0.0
      %5807 = vmatpush2.msra.mxu0 0.0
      %5808 = vmatprep.subr.mxu0 0.0
      %5809 = vmatpush2.msra.mxu0 0.0
      %5810 = vmatprep.subr.mxu0 0.0
      %5811 = vmatpush2.msra.mxu0 0.0
      %5812 = vmatprep.subr.mxu0 0.0
      %5813 = vmatpush2.msra.mxu0 0.0
      %5814 = vmatprep.subr.mxu0 0.0
      %5815 = vmatpush2.msra.mxu0 0.0
      %5816 = vmatprep.subr.mxu0 0.0
      %5817 = vmatpush2.msra.mxu0 0.0
      %5818 = vmatprep.subr.mxu0 0.0
      %5819 = vmatpush2.msra.mxu0 0.0
      %5820 = vmatprep.subr.mxu0 0.0
      %5821 = vmatpush2.msra.mxu0 0.0
      %5822 = vmatprep.subr.mxu0 0.0
      %5823 = vmatpush2.msra.mxu0 0.0
      %5824 = vmatprep.subr.mxu0 0.0
      %5825 = vmatpush2.msra.mxu0 0.0
      %5826 = vmatprep.subr.mxu0 0.0
      %5827 = vmatpush2.msra.mxu0 0.0
      %5828 = vmatprep.mubr.f32.mxu0 0.0
      %5829 = vmatmul.mubr.f32.gmra.mxu0 %v5642
      %v5830 = vpop.f32.mrf.mxu0
      %v5831 = vadd.f32 0.0, %v5830
      %v5832 = vpop.f32.mrf.mxu0
      %5833 = vmatprep.mubr.f32.mxu0 0.0
      %5834 = vmatmul.mubr.f32.gmra.mxu0 %v5645
      %v5835 = vpop.f32.mrf.mxu0
      %v5836 = vadd.f32 0.0, %v5835
      %v5837 = vpop.f32.mrf.mxu0
      %5838 = vmatprep.mubr.f32.mxu0 0.0
      %5839 = vmatmul.mubr.f32.gmra.mxu0 %v5648
      %v5840 = vpop.f32.mrf.mxu0
      %v5841 = vadd.f32 0.0, %v5840
      %v5842 = vpop.f32.mrf.mxu0
      %5843 = vmatprep.mubr.f32.mxu0 0.0
      %5844 = vmatmul.mubr.f32.gmra.mxu0 %v5651
      %v5845 = vpop.f32.mrf.mxu0
      %v5846 = vadd.f32 0.0, %v5845
      %v5847 = vpop.f32.mrf.mxu0
      %5848 = vmatprep.mubr.f32.mxu0 0.0
      %5849 = vmatmul.mubr.f32.gmra.mxu0 %v5654
      %v5850 = vpop.f32.mrf.mxu0
      %v5851 = vadd.f32 0.0, %v5850
      %v5852 = vpop.f32.mrf.mxu0
      %5853 = vmatprep.mubr.f32.mxu0 0.0
      %5854 = vmatmul.mubr.f32.gmra.mxu0 %v5657
      %v5855 = vpop.f32.mrf.mxu0
      %v5856 = vadd.f32 0.0, %v5855
      %v5857 = vpop.f32.mrf.mxu0
      %5858 = vmatprep.mubr.f32.mxu0 0.0
      %5859 = vmatmul.mubr.f32.gmra.mxu0 %v5660
      %v5860 = vpop.f32.mrf.mxu0
      %v5861 = vadd.f32 0.0, %v5860
      %v5862 = vpop.f32.mrf.mxu0
      %5863 = vmatprep.mubr.f32.mxu0 0.0
      %5864 = vmatmul.mubr.f32.gmra.mxu0 %v5663
      %v5865 = vpop.f32.mrf.mxu0
      %v5866 = vadd.f32 0.0, %v5865
      %v5867 = vpop.f32.mrf.mxu0
      %5868 = vmatprep.mubr.f32.mxu0 0.0
      %5869 = vmatmul.mubr.f32.gmra.mxu0 %v5666
      %v5870 = vpop.f32.mrf.mxu0
      %v5871 = vadd.f32 0.0, %v5870
      %v5872 = vpop.f32.mrf.mxu0
      %5873 = vmatprep.mubr.f32.mxu0 0.0
      %5874 = vmatmul.mubr.f32.gmra.mxu0 %v5669
      %v5875 = vpop.f32.mrf.mxu0
      %v5876 = vadd.f32 0.0, %v5875
      %v5877 = vpop.f32.mrf.mxu0
      %5878 = vmatprep.mubr.f32.mxu0 0.0
      %5879 = vmatmul.mubr.f32.gmra.mxu0 %v5672
      %v5880 = vpop.f32.mrf.mxu0
      %v5881 = vadd.f32 0.0, %v5880
      %v5882 = vpop.f32.mrf.mxu0
      %5883 = vmatprep.mubr.f32.mxu0 0.0
      %5884 = vmatmul.mubr.f32.gmra.mxu0 %v5675
      %v5885 = vpop.f32.mrf.mxu0
      %v5886 = vadd.f32 0.0, %v5885
      %v5887 = vpop.f32.mrf.mxu0
      %5888 = vmatprep.mubr.f32.mxu0 0.0
      %5889 = vmatmul.mubr.f32.gmra.mxu0 %v5678
      %v5890 = vpop.f32.mrf.mxu0
      %v5891 = vadd.f32 0.0, %v5890
      %v5892 = vpop.f32.mrf.mxu0
      %5893 = vmatprep.mubr.f32.mxu0 0.0
      %5894 = vmatmul.mubr.f32.gmra.mxu0 %v5681
      %v5895 = vpop.f32.mrf.mxu0
      %v5896 = vadd.f32 0.0, %v5895
      %v5897 = vpop.f32.mrf.mxu0
      %5898 = vmatprep.mubr.f32.mxu0 0.0
      %5899 = vmatmul.mubr.f32.gmra.mxu0 %v5684
      %v5900 = vpop.f32.mrf.mxu0
      %v5901 = vadd.f32 0.0, %v5900
      %v5902 = vpop.f32.mrf.mxu0
      %5903 = vmatprep.mubr.f32.mxu0 0.0
      %5904 = vmatmul.mubr.f32.gmra.mxu0 %v5687
      %v5905 = vpop.f32.mrf.mxu0
      %v5906 = vadd.f32 0.0, %v5905
      %v5907 = vpop.f32.mrf.mxu0
      %5908 = vmatprep.mubr.f32.mxu0 0.0
      %5909 = vmatmul.mubr.f32.gmra.mxu0 %v5690
      %v5910 = vpop.f32.mrf.mxu0
      %v5911 = vadd.f32 0.0, %v5910
      %v5912 = vpop.f32.mrf.mxu0
      %5913 = vmatprep.mubr.f32.mxu0 0.0
      %5914 = vmatmul.mubr.f32.gmra.mxu0 %v5693
      %v5915 = vpop.f32.mrf.mxu0
      %v5916 = vadd.f32 0.0, %v5915
      %v5917 = vpop.f32.mrf.mxu0
      %5918 = vmatprep.mubr.f32.mxu0 0.0
      %5919 = vmatmul.mubr.f32.gmra.mxu0 %v5696
      %v5920 = vpop.f32.mrf.mxu0
      %v5921 = vadd.f32 0.0, %v5920
      %v5922 = vpop.f32.mrf.mxu0
      %5923 = vmatprep.mubr.f32.mxu0 0.0
      %5924 = vmatmul.mubr.f32.gmra.mxu0 %v5699
      %v5925 = vpop.f32.mrf.mxu0
      %v5926 = vadd.f32 0.0, %v5925
      %v5927 = vpop.f32.mrf.mxu0
      %5928 = vmatprep.mubr.f32.mxu0 0.0
      %5929 = vmatmul.mubr.f32.gmra.mxu0 %v5702
      %v5930 = vpop.f32.mrf.mxu0
      %v5931 = vadd.f32 0.0, %v5930
      %v5932 = vpop.f32.mrf.mxu0
      %5933 = vmatprep.mubr.f32.mxu0 0.0
      %5934 = vmatmul.mubr.f32.gmra.mxu0 %v5705
      %v5935 = vpop.f32.mrf.mxu0
      %v5936 = vadd.f32 0.0, %v5935
      %v5937 = vpop.f32.mrf.mxu0
      %5938 = vmatprep.mubr.f32.mxu0 0.0
      %5939 = vmatmul.mubr.f32.gmra.mxu0 %v5708
      %v5940 = vpop.f32.mrf.mxu0
      %v5941 = vadd.f32 0.0, %v5940
      %v5942 = vpop.f32.mrf.mxu0
      %5943 = vmatprep.mubr.f32.mxu0 0.0
      %5944 = vmatmul.mubr.f32.gmra.mxu0 %v5711
      %v5945 = vpop.f32.mrf.mxu0
      %v5946 = vadd.f32 0.0, %v5945
      %v5947 = vpop.f32.mrf.mxu0
      %5948 = vmatprep.mubr.f32.mxu0 0.0
      %5949 = vmatmul.mubr.f32.gmra.mxu0 %v5714
      %v5950 = vpop.f32.mrf.mxu0
      %v5951 = vadd.f32 0.0, %v5950
      %v5952 = vpop.f32.mrf.mxu0
      %5953 = vmatprep.mubr.f32.mxu0 0.0
      %5954 = vmatmul.mubr.f32.gmra.mxu0 %v5717
      %v5955 = vpop.f32.mrf.mxu0
      %v5956 = vadd.f32 0.0, %v5955
      %v5957 = vpop.f32.mrf.mxu0
      %5958 = vmatprep.mubr.f32.mxu0 0.0
      %5959 = vmatmul.mubr.f32.gmra.mxu0 %v5720
      %v5960 = vpop.f32.mrf.mxu0
      %v5961 = vadd.f32 0.0, %v5960
      %v5962 = vpop.f32.mrf.mxu0
      %5963 = vmatprep.mubr.f32.mxu0 0.0
      %5964 = vmatmul.mubr.f32.gmra.mxu0 %v5723
      %v5965 = vpop.f32.mrf.mxu0
      %v5966 = vadd.f32 0.0, %v5965
      %v5967 = vpop.f32.mrf.mxu0
      %5968 = vmatprep.mubr.f32.mxu0 0.0
      %5969 = vmatmul.mubr.f32.gmra.mxu0 %v5726
      %v5970 = vpop.f32.mrf.mxu0
      %v5971 = vadd.f32 0.0, %v5970
      %v5972 = vpop.f32.mrf.mxu0
      %5973 = vmatprep.mubr.f32.mxu0 0.0
      %5974 = vmatmul.mubr.f32.gmra.mxu0 %v5729
      %v5975 = vpop.f32.mrf.mxu0
      %v5976 = vadd.f32 0.0, %v5975
      %v5977 = vpop.f32.mrf.mxu0
      %5978 = vmatprep.mubr.f32.mxu0 0.0
      %5979 = vmatmul.mubr.f32.gmra.mxu0 %v5732
      %v5980 = vpop.f32.mrf.mxu0
      %v5981 = vadd.f32 0.0, %v5980
      %v5982 = vpop.f32.mrf.mxu0
      %5983 = vmatprep.mubr.f32.mxu0 0.0
      %5984 = vmatmul.mubr.f32.gmra.mxu0 %v5735
      %v5985 = vpop.f32.mrf.mxu0
      %v5986 = vadd.f32 0.0, %v5985
      %v5987 = vpop.f32.mrf.mxu0
      %5988 = vmatprep.mubr.f32.mxu0 0.0
      %5989 = vmatmul.mubr.f32.gmra.mxu0 %v5738
      %v5990 = vpop.f32.mrf.mxu0
      %v5991 = vadd.f32 0.0, %v5990
      %v5992 = vpop.f32.mrf.mxu0
      %5993 = vmatprep.mubr.f32.mxu0 0.0
      %5994 = vmatmul.mubr.f32.gmra.mxu0 %v5741
      %v5995 = vpop.f32.mrf.mxu0
      %v5996 = vadd.f32 0.0, %v5995
      %v5997 = vpop.f32.mrf.mxu0
      %5998 = vmatprep.mubr.f32.mxu0 0.0
      %5999 = vmatmul.mubr.f32.gmra.mxu0 %v5744
      %v6000 = vpop.f32.mrf.mxu0
      %v6001 = vadd.f32 0.0, %v6000
      %v6002 = vpop.f32.mrf.mxu0
      %6003 = vmatprep.mubr.f32.mxu0 0.0
      %6004 = vmatmul.mubr.f32.gmra.mxu0 %v5747
      %v6005 = vpop.f32.mrf.mxu0
      %v6006 = vadd.f32 0.0, %v6005
      %v6007 = vpop.f32.mrf.mxu0
      %6008 = vmatprep.mubr.f32.mxu0 0.0
      %6009 = vmatmul.mubr.f32.gmra.mxu0 %v5750
      %v6010 = vpop.f32.mrf.mxu0
      %v6011 = vadd.f32 0.0, %v6010
      %v6012 = vpop.f32.mrf.mxu0
      %6013 = vmatprep.mubr.f32.mxu0 0.0
      %6014 = vmatmul.mubr.f32.gmra.mxu0 %v5753
      %v6015 = vpop.f32.mrf.mxu0
      %v6016 = vadd.f32 0.0, %v6015
      %v6017 = vpop.f32.mrf.mxu0
      %6018 = vmatprep.mubr.f32.mxu0 0.0
      %6019 = vmatmul.mubr.f32.gmra.mxu0 %v5756
      %v6020 = vpop.f32.mrf.mxu0
      %v6021 = vadd.f32 0.0, %v6020
      %v6022 = vpop.f32.mrf.mxu0
      %6023 = vmatprep.mubr.f32.mxu0 0.0
      %6024 = vmatmul.mubr.f32.gmra.mxu0 %v5759
      %v6025 = vpop.f32.mrf.mxu0
      %v6026 = vadd.f32 0.0, %v6025
      %v6027 = vpop.f32.mrf.mxu0
      %6028 = vmatprep.mubr.f32.mxu0 0.0
      %6029 = vmatmul.mubr.f32.gmra.mxu0 %v5762
      %v6030 = vpop.f32.mrf.mxu0
      %v6031 = vadd.f32 0.0, %v6030
      %v6032 = vpop.f32.mrf.mxu0
      %6033 = vdwg.mxu0
      %v6035 = vsel %vm293, %v5542, 0
      %v6038 = vsel %vm293, %v5543, 0
      %v6041 = vsel %vm293, %v5544, 0
      %v6044 = vsel %vm293, %v5545, 0
      %v6047 = vsel %vm293, %v5546, 0
      %v6050 = vsel %vm293, %v5547, 0
      %v6053 = vsel %vm293, %v5548, 0
      %v6056 = vsel %vm293, %v5549, 0
      %v6059 = vsel %vm293, %v5550, 0
      %v6062 = vsel %vm293, %v5551, 0
      %v6065 = vsel %vm293, %v5552, 0
      %v6068 = vsel %vm293, %v5553, 0
      %v6071 = vsel %vm293, %v5554, 0
      %v6074 = vsel %vm293, %v5555, 0
      %v6077 = vsel %vm293, %v5556, 0
      %v6080 = vsel %vm293, %v5557, 0
      %v6083 = vsel %vm293, %v5558, 0
      %v6086 = vsel %vm293, %v5559, 0
      %v6089 = vsel %vm293, %v5560, 0
      %v6092 = vsel %vm293, %v5561, 0
      %v6095 = vsel %vm293, %v5562, 0
      %v6098 = vsel %vm293, %v5563, 0
      %v6101 = vsel %vm293, %v5564, 0
      %v6104 = vsel %vm293, %v5565, 0
      %v6107 = vsel %vm293, %v5566, 0
      %v6110 = vsel %vm293, %v5567, 0
      %v6113 = vsel %vm293, %v5568, 0
      %v6116 = vsel %vm293, %v5569, 0
      %v6119 = vsel %vm293, %v5570, 0
      %v6122 = vsel %vm293, %v5571, 0
      %v6125 = vsel %vm293, %v5572, 0
      %v6128 = vsel %vm293, %v5573, 0
      %v6131 = vsel %vm293, %v5574, 0
      %v6134 = vsel %vm293, %v5575, 0
      %v6137 = vsel %vm293, %v5576, 0
      %v6140 = vsel %vm293, %v5577, 0
      %v6143 = vsel %vm293, %v5578, 0
      %v6146 = vsel %vm293, %v5579, 0
      %v6149 = vsel %vm293, %v5580, 0
      %v6152 = vsel %vm293, %v5581, 0
      %v6155 = vsel %vm293, %v5582, 0
      %6157 = vmatprep.subr.mxu0 0.0
      %6158 = vmatpush1.msra.mxu0 0.0
      %6159 = vmatprep.subr.mxu0 0.0
      %6160 = vmatpush1.msra.mxu0 0.0
      %6161 = vmatprep.subr.mxu0 0.0
      %6162 = vmatpush1.msra.mxu0 0.0
      %6163 = vmatprep.subr.mxu0 0.0
      %6164 = vmatpush1.msra.mxu0 0.0
      %6165 = vmatprep.subr.mxu0 0.0
      %6166 = vmatpush1.msra.mxu0 0.0
      %6167 = vmatprep.subr.mxu0 0.0
      %6168 = vmatpush1.msra.mxu0 0.0
      %6169 = vmatprep.subr.mxu0 0.0
      %6170 = vmatpush1.msra.mxu0 0.0
      %6171 = vmatprep.subr.mxu0 0.0
      %6172 = vmatpush1.msra.mxu0 0.0
      %6173 = vmatprep.subr.mxu0 0.0
      %6174 = vmatpush1.msra.mxu0 %v5590
      %6175 = vmatprep.subr.mxu0 0.0
      %6176 = vmatpush1.msra.mxu0 %v5589
      %6177 = vmatprep.subr.mxu0 0.0
      %6178 = vmatpush1.msra.mxu0 %v5588
      %6179 = vmatprep.subr.mxu0 0.0
      %6180 = vmatpush1.msra.mxu0 %v5587
      %6181 = vmatprep.subr.mxu0 0.0
      %6182 = vmatpush1.msra.mxu0 %v5586
      %6183 = vmatprep.subr.mxu0 0.0
      %6184 = vmatpush1.msra.mxu0 %v5585
      %6185 = vmatprep.subr.mxu0 0.0
      %6186 = vmatpush1.msra.mxu0 %v5584
      %6187 = vmatprep.subr.mxu0 0.0
      %6188 = vmatpush1.msra.mxu0 %v5583
      %6189 = vmatprep.subr.mxu0 0.0
      %6190 = vmatpush2.msra.mxu0 0.0
      %6191 = vmatprep.subr.mxu0 0.0
      %6192 = vmatpush2.msra.mxu0 0.0
      %6193 = vmatprep.subr.mxu0 0.0
      %6194 = vmatpush2.msra.mxu0 0.0
      %6195 = vmatprep.subr.mxu0 0.0
      %6196 = vmatpush2.msra.mxu0 0.0
      %6197 = vmatprep.subr.mxu0 0.0
      %6198 = vmatpush2.msra.mxu0 0.0
      %6199 = vmatprep.subr.mxu0 0.0
      %6200 = vmatpush2.msra.mxu0 0.0
      %6201 = vmatprep.subr.mxu0 0.0
      %6202 = vmatpush2.msra.mxu0 0.0
      %6203 = vmatprep.subr.mxu0 0.0
      %6204 = vmatpush2.msra.mxu0 0.0
      %6205 = vmatprep.subr.mxu0 0.0
      %6206 = vmatpush2.msra.mxu0 0.0
      %6207 = vmatprep.subr.mxu0 0.0
      %6208 = vmatpush2.msra.mxu0 0.0
      %6209 = vmatprep.subr.mxu0 0.0
      %6210 = vmatpush2.msra.mxu0 0.0
      %6211 = vmatprep.subr.mxu0 0.0
      %6212 = vmatpush2.msra.mxu0 0.0
      %6213 = vmatprep.subr.mxu0 0.0
      %6214 = vmatpush2.msra.mxu0 0.0
      %6215 = vmatprep.subr.mxu0 0.0
      %6216 = vmatpush2.msra.mxu0 0.0
      %6217 = vmatprep.subr.mxu0 0.0
      %6218 = vmatpush2.msra.mxu0 0.0
      %6219 = vmatprep.subr.mxu0 0.0
      %6220 = vmatpush2.msra.mxu0 0.0
      %6221 = vmatprep.mubr.f32.mxu0 0.0
      %6222 = vmatmul.mubr.f32.gmra.mxu0 %v6035
      %v6223 = vpop.f32.mrf.mxu0
      %v6224 = vadd.f32 %v5831, %v6223
      %v6225 = vpop.f32.mrf.mxu0
      %6226 = vmatprep.mubr.f32.mxu0 0.0
      %6227 = vmatmul.mubr.f32.gmra.mxu0 %v6038
      %v6228 = vpop.f32.mrf.mxu0
      %v6229 = vadd.f32 %v5836, %v6228
      %v6230 = vpop.f32.mrf.mxu0
      %6231 = vmatprep.mubr.f32.mxu0 0.0
      %6232 = vmatmul.mubr.f32.gmra.mxu0 %v6041
      %v6233 = vpop.f32.mrf.mxu0
      %v6234 = vadd.f32 %v5841, %v6233
      %v6235 = vpop.f32.mrf.mxu0
      %6236 = vmatprep.mubr.f32.mxu0 0.0
      %6237 = vmatmul.mubr.f32.gmra.mxu0 %v6044
      %v6238 = vpop.f32.mrf.mxu0
      %v6239 = vadd.f32 %v5846, %v6238
      %v6240 = vpop.f32.mrf.mxu0
      %6241 = vmatprep.mubr.f32.mxu0 0.0
      %6242 = vmatmul.mubr.f32.gmra.mxu0 %v6047
      %v6243 = vpop.f32.mrf.mxu0
      %v6244 = vadd.f32 %v5851, %v6243
      %v6245 = vpop.f32.mrf.mxu0
      %6246 = vmatprep.mubr.f32.mxu0 0.0
      %6247 = vmatmul.mubr.f32.gmra.mxu0 %v6050
      %v6248 = vpop.f32.mrf.mxu0
      %v6249 = vadd.f32 %v5856, %v6248
      %v6250 = vpop.f32.mrf.mxu0
      %6251 = vmatprep.mubr.f32.mxu0 0.0
      %6252 = vmatmul.mubr.f32.gmra.mxu0 %v6053
      %v6253 = vpop.f32.mrf.mxu0
      %v6254 = vadd.f32 %v5861, %v6253
      %v6255 = vpop.f32.mrf.mxu0
      %6256 = vmatprep.mubr.f32.mxu0 0.0
      %6257 = vmatmul.mubr.f32.gmra.mxu0 %v6056
      %v6258 = vpop.f32.mrf.mxu0
      %v6259 = vadd.f32 %v5866, %v6258
      %v6260 = vpop.f32.mrf.mxu0
      %6261 = vmatprep.mubr.f32.mxu0 0.0
      %6262 = vmatmul.mubr.f32.gmra.mxu0 %v6059
      %v6263 = vpop.f32.mrf.mxu0
      %v6264 = vadd.f32 %v5871, %v6263
      %v6265 = vpop.f32.mrf.mxu0
      %6266 = vmatprep.mubr.f32.mxu0 0.0
      %6267 = vmatmul.mubr.f32.gmra.mxu0 %v6062
      %v6268 = vpop.f32.mrf.mxu0
      %v6269 = vadd.f32 %v5876, %v6268
      %v6270 = vpop.f32.mrf.mxu0
      %6271 = vmatprep.mubr.f32.mxu0 0.0
      %6272 = vmatmul.mubr.f32.gmra.mxu0 %v6065
      %v6273 = vpop.f32.mrf.mxu0
      %v6274 = vadd.f32 %v5881, %v6273
      %v6275 = vpop.f32.mrf.mxu0
      %6276 = vmatprep.mubr.f32.mxu0 0.0
      %6277 = vmatmul.mubr.f32.gmra.mxu0 %v6068
      %v6278 = vpop.f32.mrf.mxu0
      %v6279 = vadd.f32 %v5886, %v6278
      %v6280 = vpop.f32.mrf.mxu0
      %6281 = vmatprep.mubr.f32.mxu0 0.0
      %6282 = vmatmul.mubr.f32.gmra.mxu0 %v6071
      %v6283 = vpop.f32.mrf.mxu0
      %v6284 = vadd.f32 %v5891, %v6283
      %v6285 = vpop.f32.mrf.mxu0
      %6286 = vmatprep.mubr.f32.mxu0 0.0
      %6287 = vmatmul.mubr.f32.gmra.mxu0 %v6074
      %v6288 = vpop.f32.mrf.mxu0
      %v6289 = vadd.f32 %v5896, %v6288
      %v6290 = vpop.f32.mrf.mxu0
      %6291 = vmatprep.mubr.f32.mxu0 0.0
      %6292 = vmatmul.mubr.f32.gmra.mxu0 %v6077
      %v6293 = vpop.f32.mrf.mxu0
      %v6294 = vadd.f32 %v5901, %v6293
      %v6295 = vpop.f32.mrf.mxu0
      %6296 = vmatprep.mubr.f32.mxu0 0.0
      %6297 = vmatmul.mubr.f32.gmra.mxu0 %v6080
      %v6298 = vpop.f32.mrf.mxu0
      %v6299 = vadd.f32 %v5906, %v6298
      %v6300 = vpop.f32.mrf.mxu0
      %6301 = vmatprep.mubr.f32.mxu0 0.0
      %6302 = vmatmul.mubr.f32.gmra.mxu0 %v6083
      %v6303 = vpop.f32.mrf.mxu0
      %v6304 = vadd.f32 %v5911, %v6303
      %v6305 = vpop.f32.mrf.mxu0
      %6306 = vmatprep.mubr.f32.mxu0 0.0
      %6307 = vmatmul.mubr.f32.gmra.mxu0 %v6086
      %v6308 = vpop.f32.mrf.mxu0
      %v6309 = vadd.f32 %v5916, %v6308
      %v6310 = vpop.f32.mrf.mxu0
      %6311 = vmatprep.mubr.f32.mxu0 0.0
      %6312 = vmatmul.mubr.f32.gmra.mxu0 %v6089
      %v6313 = vpop.f32.mrf.mxu0
      %v6314 = vadd.f32 %v5921, %v6313
      %v6315 = vpop.f32.mrf.mxu0
      %6316 = vmatprep.mubr.f32.mxu0 0.0
      %6317 = vmatmul.mubr.f32.gmra.mxu0 %v6092
      %v6318 = vpop.f32.mrf.mxu0
      %v6319 = vadd.f32 %v5926, %v6318
      %v6320 = vpop.f32.mrf.mxu0
      %6321 = vmatprep.mubr.f32.mxu0 0.0
      %6322 = vmatmul.mubr.f32.gmra.mxu0 %v6095
      %v6323 = vpop.f32.mrf.mxu0
      %v6324 = vadd.f32 %v5931, %v6323
      %v6325 = vpop.f32.mrf.mxu0
      %6326 = vmatprep.mubr.f32.mxu0 0.0
      %6327 = vmatmul.mubr.f32.gmra.mxu0 %v6098
      %v6328 = vpop.f32.mrf.mxu0
      %v6329 = vadd.f32 %v5936, %v6328
      %v6330 = vpop.f32.mrf.mxu0
      %6331 = vmatprep.mubr.f32.mxu0 0.0
      %6332 = vmatmul.mubr.f32.gmra.mxu0 %v6101
      %v6333 = vpop.f32.mrf.mxu0
      %v6334 = vadd.f32 %v5941, %v6333
      %v6335 = vpop.f32.mrf.mxu0
      %6336 = vmatprep.mubr.f32.mxu0 0.0
      %6337 = vmatmul.mubr.f32.gmra.mxu0 %v6104
      %v6338 = vpop.f32.mrf.mxu0
      %v6339 = vadd.f32 %v5946, %v6338
      %v6340 = vpop.f32.mrf.mxu0
      %6341 = vmatprep.mubr.f32.mxu0 0.0
      %6342 = vmatmul.mubr.f32.gmra.mxu0 %v6107
      %v6343 = vpop.f32.mrf.mxu0
      %v6344 = vadd.f32 %v5951, %v6343
      %v6345 = vpop.f32.mrf.mxu0
      %6346 = vmatprep.mubr.f32.mxu0 0.0
      %6347 = vmatmul.mubr.f32.gmra.mxu0 %v6110
      %v6348 = vpop.f32.mrf.mxu0
      %v6349 = vadd.f32 %v5956, %v6348
      %v6350 = vpop.f32.mrf.mxu0
      %6351 = vmatprep.mubr.f32.mxu0 0.0
      %6352 = vmatmul.mubr.f32.gmra.mxu0 %v6113
      %v6353 = vpop.f32.mrf.mxu0
      %v6354 = vadd.f32 %v5961, %v6353
      %v6355 = vpop.f32.mrf.mxu0
      %6356 = vmatprep.mubr.f32.mxu0 0.0
      %6357 = vmatmul.mubr.f32.gmra.mxu0 %v6116
      %v6358 = vpop.f32.mrf.mxu0
      %v6359 = vadd.f32 %v5966, %v6358
      %v6360 = vpop.f32.mrf.mxu0
      %6361 = vmatprep.mubr.f32.mxu0 0.0
      %6362 = vmatmul.mubr.f32.gmra.mxu0 %v6119
      %v6363 = vpop.f32.mrf.mxu0
      %v6364 = vadd.f32 %v5971, %v6363
      %v6365 = vpop.f32.mrf.mxu0
      %6366 = vmatprep.mubr.f32.mxu0 0.0
      %6367 = vmatmul.mubr.f32.gmra.mxu0 %v6122
      %v6368 = vpop.f32.mrf.mxu0
      %v6369 = vadd.f32 %v5976, %v6368
      %v6370 = vpop.f32.mrf.mxu0
      %6371 = vmatprep.mubr.f32.mxu0 0.0
      %6372 = vmatmul.mubr.f32.gmra.mxu0 %v6125
      %v6373 = vpop.f32.mrf.mxu0
      %v6374 = vadd.f32 %v5981, %v6373
      %v6375 = vpop.f32.mrf.mxu0
      %6376 = vmatprep.mubr.f32.mxu0 0.0
      %6377 = vmatmul.mubr.f32.gmra.mxu0 %v6128
      %v6378 = vpop.f32.mrf.mxu0
      %v6379 = vadd.f32 %v5986, %v6378
      %v6380 = vpop.f32.mrf.mxu0
      %6381 = vmatprep.mubr.f32.mxu0 0.0
      %6382 = vmatmul.mubr.f32.gmra.mxu0 %v6131
      %v6383 = vpop.f32.mrf.mxu0
      %v6384 = vadd.f32 %v5991, %v6383
      %v6385 = vpop.f32.mrf.mxu0
      %6386 = vmatprep.mubr.f32.mxu0 0.0
      %6387 = vmatmul.mubr.f32.gmra.mxu0 %v6134
      %v6388 = vpop.f32.mrf.mxu0
      %v6389 = vadd.f32 %v5996, %v6388
      %v6390 = vpop.f32.mrf.mxu0
      %6391 = vmatprep.mubr.f32.mxu0 0.0
      %6392 = vmatmul.mubr.f32.gmra.mxu0 %v6137
      %v6393 = vpop.f32.mrf.mxu0
      %v6394 = vadd.f32 %v6001, %v6393
      %v6395 = vpop.f32.mrf.mxu0
      %6396 = vmatprep.mubr.f32.mxu0 0.0
      %6397 = vmatmul.mubr.f32.gmra.mxu0 %v6140
      %v6398 = vpop.f32.mrf.mxu0
      %v6399 = vadd.f32 %v6006, %v6398
      %v6400 = vpop.f32.mrf.mxu0
      %6401 = vmatprep.mubr.f32.mxu0 0.0
      %6402 = vmatmul.mubr.f32.gmra.mxu0 %v6143
      %v6403 = vpop.f32.mrf.mxu0
      %v6404 = vadd.f32 %v6011, %v6403
      %v6405 = vpop.f32.mrf.mxu0
      %6406 = vmatprep.mubr.f32.mxu0 0.0
      %6407 = vmatmul.mubr.f32.gmra.mxu0 %v6146
      %v6408 = vpop.f32.mrf.mxu0
      %v6409 = vadd.f32 %v6016, %v6408
      %v6410 = vpop.f32.mrf.mxu0
      %6411 = vmatprep.mubr.f32.mxu0 0.0
      %6412 = vmatmul.mubr.f32.gmra.mxu0 %v6149
      %v6413 = vpop.f32.mrf.mxu0
      %v6414 = vadd.f32 %v6021, %v6413
      %v6415 = vpop.f32.mrf.mxu0
      %6416 = vmatprep.mubr.f32.mxu0 0.0
      %6417 = vmatmul.mubr.f32.gmra.mxu0 %v6152
      %v6418 = vpop.f32.mrf.mxu0
      %v6419 = vadd.f32 %v6026, %v6418
      %v6420 = vpop.f32.mrf.mxu0
      %6421 = vmatprep.mubr.f32.mxu0 0.0
      %6422 = vmatmul.mubr.f32.gmra.mxu0 %v6155
      %v6423 = vpop.f32.mrf.mxu0
      %v6424 = vadd.f32 %v6031, %v6423
      %v6425 = vpop.f32.mrf.mxu0
      %6426 = vdwg.mxu0
      %v6427 = vld [vmem:[#allocation3 + $0x7] sm:$0xff]
      %v6428 = vld [vmem:[#allocation3 + $0xf] sm:$0xff]
      %v6429 = vld [vmem:[#allocation3 + $0x17] sm:$0xff]
      %v6430 = vld [vmem:[#allocation3 + $0x1f] sm:$0xff]
      %v6431 = vld [vmem:[#allocation3 + $0x27] sm:$0xff]
      %v6432 = vld [vmem:[#allocation3 + $0x2f] sm:$0xff]
      %v6433 = vld [vmem:[#allocation3 + $0x37] sm:$0xff]
      %v6434 = vld [vmem:[#allocation3 + $0x3f] sm:$0xff]
      %v6435 = vld [vmem:[#allocation3 + $0x47] sm:$0xff]
      %v6436 = vld [vmem:[#allocation3 + $0x4f] sm:$0xff]
      %v6437 = vld [vmem:[#allocation3 + $0x57] sm:$0xff]
      %v6438 = vld [vmem:[#allocation3 + $0x5f] sm:$0xff]
      %v6439 = vld [vmem:[#allocation3 + $0x67] sm:$0xff]
      %v6440 = vld [vmem:[#allocation3 + $0x6f] sm:$0xff]
      %v6441 = vld [vmem:[#allocation3 + $0x77] sm:$0xff]
      %v6442 = vld [vmem:[#allocation3 + $0x7f] sm:$0xff]
      %v6443 = vld [vmem:[#allocation3 + $0x87] sm:$0xff]
      %v6444 = vld [vmem:[#allocation3 + $0x8f] sm:$0xff]
      %v6445 = vld [vmem:[#allocation3 + $0x97] sm:$0xff]
      %v6446 = vld [vmem:[#allocation3 + $0x9f] sm:$0xff]
      %v6447 = vld [vmem:[#allocation3 + $0xa7] sm:$0xff]
      %v6448 = vld [vmem:[#allocation3 + $0xaf] sm:$0xff]
      %v6449 = vld [vmem:[#allocation3 + $0xb7] sm:$0xff]
      %v6450 = vld [vmem:[#allocation3 + $0xbf] sm:$0xff]
      %v6451 = vld [vmem:[#allocation3 + $0xc7] sm:$0xff]
      %v6452 = vld [vmem:[#allocation3 + $0xcf] sm:$0xff]
      %v6453 = vld [vmem:[#allocation3 + $0xd7] sm:$0xff]
      %v6454 = vld [vmem:[#allocation3 + $0xdf] sm:$0xff]
      %v6455 = vld [vmem:[#allocation3 + $0xe7] sm:$0xff]
      %v6456 = vld [vmem:[#allocation3 + $0xef] sm:$0xff]
      %v6457 = vld [vmem:[#allocation3 + $0xf7] sm:$0xff]
      %v6458 = vld [vmem:[#allocation3 + $0xff] sm:$0xff]
      %v6459 = vld [vmem:[#allocation3 + $0x107] sm:$0xff]
      %v6460 = vld [vmem:[#allocation3 + $0x10f] sm:$0xff]
      %v6461 = vld [vmem:[#allocation3 + $0x117] sm:$0xff]
      %v6462 = vld [vmem:[#allocation3 + $0x11f] sm:$0xff]
      %v6463 = vld [vmem:[#allocation3 + $0x127] sm:$0xff]
      %v6464 = vld [vmem:[#allocation3 + $0x12f] sm:$0xff]
      %v6465 = vld [vmem:[#allocation3 + $0x137] sm:$0xff]
      %v6466 = vld [vmem:[#allocation3 + $0x13f] sm:$0xff]
      %v6467 = vld [vmem:[#allocation3 + $0x147] sm:$0xf]
      %s6468 = scalar_lea.vmem %s3, 128
      %v6469 = vld [vmem:[%s6468] sm:$0xff]
      %v6470 = vld [vmem:[%s6468 + $0x8] sm:$0xff]
      %v6471 = vld [vmem:[%s6468 + $0x10] sm:$0xff]
      %v6472 = vld [vmem:[%s6468 + $0x18] sm:$0xff]
      %v6473 = vld [vmem:[%s6468 + $0x20] sm:$0xff]
      %v6474 = vld [vmem:[%s6468 + $0x28] sm:$0xff]
      %v6475 = vld [vmem:[%s6468 + $0x30] sm:$0xff]
      %v6476 = vld [vmem:[%s6468 + $0x38] sm:$0xff]
      %v6478 = vsel %vm293, %v6427, 0
      %v6481 = vsel %vm293, %v6428, 0
      %v6484 = vsel %vm293, %v6429, 0
      %v6487 = vsel %vm293, %v6430, 0
      %v6490 = vsel %vm293, %v6431, 0
      %v6493 = vsel %vm293, %v6432, 0
      %v6496 = vsel %vm293, %v6433, 0
      %v6499 = vsel %vm293, %v6434, 0
      %v6502 = vsel %vm293, %v6435, 0
      %v6505 = vsel %vm293, %v6436, 0
      %v6508 = vsel %vm293, %v6437, 0
      %v6511 = vsel %vm293, %v6438, 0
      %v6514 = vsel %vm293, %v6439, 0
      %v6517 = vsel %vm293, %v6440, 0
      %v6520 = vsel %vm293, %v6441, 0
      %v6523 = vsel %vm293, %v6442, 0
      %v6526 = vsel %vm293, %v6443, 0
      %v6529 = vsel %vm293, %v6444, 0
      %v6532 = vsel %vm293, %v6445, 0
      %v6535 = vsel %vm293, %v6446, 0
      %v6538 = vsel %vm293, %v6447, 0
      %v6541 = vsel %vm293, %v6448, 0
      %v6544 = vsel %vm293, %v6449, 0
      %v6547 = vsel %vm293, %v6450, 0
      %v6550 = vsel %vm293, %v6451, 0
      %v6553 = vsel %vm293, %v6452, 0
      %v6556 = vsel %vm293, %v6453, 0
      %v6559 = vsel %vm293, %v6454, 0
      %v6562 = vsel %vm293, %v6455, 0
      %v6565 = vsel %vm293, %v6456, 0
      %v6568 = vsel %vm293, %v6457, 0
      %v6571 = vsel %vm293, %v6458, 0
      %v6574 = vsel %vm293, %v6459, 0
      %v6577 = vsel %vm293, %v6460, 0
      %v6580 = vsel %vm293, %v6461, 0
      %v6583 = vsel %vm293, %v6462, 0
      %v6586 = vsel %vm293, %v6463, 0
      %v6589 = vsel %vm293, %v6464, 0
      %v6592 = vsel %vm293, %v6465, 0
      %v6595 = vsel %vm293, %v6466, 0
      %v6598 = vsel %vm293, %v6467, 0
      %6600 = vmatprep.subr.mxu0 0.0
      %6601 = vmatpush1.msra.mxu0 0.0
      %6602 = vmatprep.subr.mxu0 0.0
      %6603 = vmatpush1.msra.mxu0 0.0
      %6604 = vmatprep.subr.mxu0 0.0
      %6605 = vmatpush1.msra.mxu0 0.0
      %6606 = vmatprep.subr.mxu0 0.0
      %6607 = vmatpush1.msra.mxu0 0.0
      %6608 = vmatprep.subr.mxu0 0.0
      %6609 = vmatpush1.msra.mxu0 0.0
      %6610 = vmatprep.subr.mxu0 0.0
      %6611 = vmatpush1.msra.mxu0 0.0
      %6612 = vmatprep.subr.mxu0 0.0
      %6613 = vmatpush1.msra.mxu0 0.0
      %6614 = vmatprep.subr.mxu0 0.0
      %6615 = vmatpush1.msra.mxu0 0.0
      %6616 = vmatprep.subr.mxu0 0.0
      %6617 = vmatpush1.msra.mxu0 %v6476
      %6618 = vmatprep.subr.mxu0 0.0
      %6619 = vmatpush1.msra.mxu0 %v6475
      %6620 = vmatprep.subr.mxu0 0.0
      %6621 = vmatpush1.msra.mxu0 %v6474
      %6622 = vmatprep.subr.mxu0 0.0
      %6623 = vmatpush1.msra.mxu0 %v6473
      %6624 = vmatprep.subr.mxu0 0.0
      %6625 = vmatpush1.msra.mxu0 %v6472
      %6626 = vmatprep.subr.mxu0 0.0
      %6627 = vmatpush1.msra.mxu0 %v6471
      %6628 = vmatprep.subr.mxu0 0.0
      %6629 = vmatpush1.msra.mxu0 %v6470
      %6630 = vmatprep.subr.mxu0 0.0
      %6631 = vmatpush1.msra.mxu0 %v6469
      %6632 = vmatprep.subr.mxu0 0.0
      %6633 = vmatpush2.msra.mxu0 0.0
      %6634 = vmatprep.subr.mxu0 0.0
      %6635 = vmatpush2.msra.mxu0 0.0
      %6636 = vmatprep.subr.mxu0 0.0
      %6637 = vmatpush2.msra.mxu0 0.0
      %6638 = vmatprep.subr.mxu0 0.0
      %6639 = vmatpush2.msra.mxu0 0.0
      %6640 = vmatprep.subr.mxu0 0.0
      %6641 = vmatpush2.msra.mxu0 0.0
      %6642 = vmatprep.subr.mxu0 0.0
      %6643 = vmatpush2.msra.mxu0 0.0
      %6644 = vmatprep.subr.mxu0 0.0
      %6645 = vmatpush2.msra.mxu0 0.0
      %6646 = vmatprep.subr.mxu0 0.0
      %6647 = vmatpush2.msra.mxu0 0.0
      %6648 = vmatprep.subr.mxu0 0.0
      %6649 = vmatpush2.msra.mxu0 0.0
      %6650 = vmatprep.subr.mxu0 0.0
      %6651 = vmatpush2.msra.mxu0 0.0
      %6652 = vmatprep.subr.mxu0 0.0
      %6653 = vmatpush2.msra.mxu0 0.0
      %6654 = vmatprep.subr.mxu0 0.0
      %6655 = vmatpush2.msra.mxu0 0.0
      %6656 = vmatprep.subr.mxu0 0.0
      %6657 = vmatpush2.msra.mxu0 0.0
      %6658 = vmatprep.subr.mxu0 0.0
      %6659 = vmatpush2.msra.mxu0 0.0
      %6660 = vmatprep.subr.mxu0 0.0
      %6661 = vmatpush2.msra.mxu0 0.0
      %6662 = vmatprep.subr.mxu0 0.0
      %6663 = vmatpush2.msra.mxu0 0.0
      %6664 = vmatprep.mubr.f32.mxu0 0.0
      %6665 = vmatmul.mubr.f32.gmra.mxu0 %v6478
      %v6666 = vpop.f32.mrf.mxu0
      %v6667 = vadd.f32 0.0, %v6666
      %v6668 = vpop.f32.mrf.mxu0
      %6669 = vmatprep.mubr.f32.mxu0 0.0
      %6670 = vmatmul.mubr.f32.gmra.mxu0 %v6481
      %v6671 = vpop.f32.mrf.mxu0
      %v6672 = vadd.f32 0.0, %v6671
      %v6673 = vpop.f32.mrf.mxu0
      %6674 = vmatprep.mubr.f32.mxu0 0.0
      %6675 = vmatmul.mubr.f32.gmra.mxu0 %v6484
      %v6676 = vpop.f32.mrf.mxu0
      %v6677 = vadd.f32 0.0, %v6676
      %v6678 = vpop.f32.mrf.mxu0
      %6679 = vmatprep.mubr.f32.mxu0 0.0
      %6680 = vmatmul.mubr.f32.gmra.mxu0 %v6487
      %v6681 = vpop.f32.mrf.mxu0
      %v6682 = vadd.f32 0.0, %v6681
      %v6683 = vpop.f32.mrf.mxu0
      %6684 = vmatprep.mubr.f32.mxu0 0.0
      %6685 = vmatmul.mubr.f32.gmra.mxu0 %v6490
      %v6686 = vpop.f32.mrf.mxu0
      %v6687 = vadd.f32 0.0, %v6686
      %v6688 = vpop.f32.mrf.mxu0
      %6689 = vmatprep.mubr.f32.mxu0 0.0
      %6690 = vmatmul.mubr.f32.gmra.mxu0 %v6493
      %v6691 = vpop.f32.mrf.mxu0
      %v6692 = vadd.f32 0.0, %v6691
      %v6693 = vpop.f32.mrf.mxu0
      %6694 = vmatprep.mubr.f32.mxu0 0.0
      %6695 = vmatmul.mubr.f32.gmra.mxu0 %v6496
      %v6696 = vpop.f32.mrf.mxu0
      %v6697 = vadd.f32 0.0, %v6696
      %v6698 = vpop.f32.mrf.mxu0
      %6699 = vmatprep.mubr.f32.mxu0 0.0
      %6700 = vmatmul.mubr.f32.gmra.mxu0 %v6499
      %v6701 = vpop.f32.mrf.mxu0
      %v6702 = vadd.f32 0.0, %v6701
      %v6703 = vpop.f32.mrf.mxu0
      %6704 = vmatprep.mubr.f32.mxu0 0.0
      %6705 = vmatmul.mubr.f32.gmra.mxu0 %v6502
      %v6706 = vpop.f32.mrf.mxu0
      %v6707 = vadd.f32 0.0, %v6706
      %v6708 = vpop.f32.mrf.mxu0
      %6709 = vmatprep.mubr.f32.mxu0 0.0
      %6710 = vmatmul.mubr.f32.gmra.mxu0 %v6505
      %v6711 = vpop.f32.mrf.mxu0
      %v6712 = vadd.f32 0.0, %v6711
      %v6713 = vpop.f32.mrf.mxu0
      %6714 = vmatprep.mubr.f32.mxu0 0.0
      %6715 = vmatmul.mubr.f32.gmra.mxu0 %v6508
      %v6716 = vpop.f32.mrf.mxu0
      %v6717 = vadd.f32 0.0, %v6716
      %v6718 = vpop.f32.mrf.mxu0
      %6719 = vmatprep.mubr.f32.mxu0 0.0
      %6720 = vmatmul.mubr.f32.gmra.mxu0 %v6511
      %v6721 = vpop.f32.mrf.mxu0
      %v6722 = vadd.f32 0.0, %v6721
      %v6723 = vpop.f32.mrf.mxu0
      %6724 = vmatprep.mubr.f32.mxu0 0.0
      %6725 = vmatmul.mubr.f32.gmra.mxu0 %v6514
      %v6726 = vpop.f32.mrf.mxu0
      %v6727 = vadd.f32 0.0, %v6726
      %v6728 = vpop.f32.mrf.mxu0
      %6729 = vmatprep.mubr.f32.mxu0 0.0
      %6730 = vmatmul.mubr.f32.gmra.mxu0 %v6517
      %v6731 = vpop.f32.mrf.mxu0
      %v6732 = vadd.f32 0.0, %v6731
      %v6733 = vpop.f32.mrf.mxu0
      %6734 = vmatprep.mubr.f32.mxu0 0.0
      %6735 = vmatmul.mubr.f32.gmra.mxu0 %v6520
      %v6736 = vpop.f32.mrf.mxu0
      %v6737 = vadd.f32 0.0, %v6736
      %v6738 = vpop.f32.mrf.mxu0
      %6739 = vmatprep.mubr.f32.mxu0 0.0
      %6740 = vmatmul.mubr.f32.gmra.mxu0 %v6523
      %v6741 = vpop.f32.mrf.mxu0
      %v6742 = vadd.f32 0.0, %v6741
      %v6743 = vpop.f32.mrf.mxu0
      %6744 = vmatprep.mubr.f32.mxu0 0.0
      %6745 = vmatmul.mubr.f32.gmra.mxu0 %v6526
      %v6746 = vpop.f32.mrf.mxu0
      %v6747 = vadd.f32 0.0, %v6746
      %v6748 = vpop.f32.mrf.mxu0
      %6749 = vmatprep.mubr.f32.mxu0 0.0
      %6750 = vmatmul.mubr.f32.gmra.mxu0 %v6529
      %v6751 = vpop.f32.mrf.mxu0
      %v6752 = vadd.f32 0.0, %v6751
      %v6753 = vpop.f32.mrf.mxu0
      %6754 = vmatprep.mubr.f32.mxu0 0.0
      %6755 = vmatmul.mubr.f32.gmra.mxu0 %v6532
      %v6756 = vpop.f32.mrf.mxu0
      %v6757 = vadd.f32 0.0, %v6756
      %v6758 = vpop.f32.mrf.mxu0
      %6759 = vmatprep.mubr.f32.mxu0 0.0
      %6760 = vmatmul.mubr.f32.gmra.mxu0 %v6535
      %v6761 = vpop.f32.mrf.mxu0
      %v6762 = vadd.f32 0.0, %v6761
      %v6763 = vpop.f32.mrf.mxu0
      %6764 = vmatprep.mubr.f32.mxu0 0.0
      %6765 = vmatmul.mubr.f32.gmra.mxu0 %v6538
      %v6766 = vpop.f32.mrf.mxu0
      %v6767 = vadd.f32 0.0, %v6766
      %v6768 = vpop.f32.mrf.mxu0
      %6769 = vmatprep.mubr.f32.mxu0 0.0
      %6770 = vmatmul.mubr.f32.gmra.mxu0 %v6541
      %v6771 = vpop.f32.mrf.mxu0
      %v6772 = vadd.f32 0.0, %v6771
      %v6773 = vpop.f32.mrf.mxu0
      %6774 = vmatprep.mubr.f32.mxu0 0.0
      %6775 = vmatmul.mubr.f32.gmra.mxu0 %v6544
      %v6776 = vpop.f32.mrf.mxu0
      %v6777 = vadd.f32 0.0, %v6776
      %v6778 = vpop.f32.mrf.mxu0
      %6779 = vmatprep.mubr.f32.mxu0 0.0
      %6780 = vmatmul.mubr.f32.gmra.mxu0 %v6547
      %v6781 = vpop.f32.mrf.mxu0
      %v6782 = vadd.f32 0.0, %v6781
      %v6783 = vpop.f32.mrf.mxu0
      %6784 = vmatprep.mubr.f32.mxu0 0.0
      %6785 = vmatmul.mubr.f32.gmra.mxu0 %v6550
      %v6786 = vpop.f32.mrf.mxu0
      %v6787 = vadd.f32 0.0, %v6786
      %v6788 = vpop.f32.mrf.mxu0
      %6789 = vmatprep.mubr.f32.mxu0 0.0
      %6790 = vmatmul.mubr.f32.gmra.mxu0 %v6553
      %v6791 = vpop.f32.mrf.mxu0
      %v6792 = vadd.f32 0.0, %v6791
      %v6793 = vpop.f32.mrf.mxu0
      %6794 = vmatprep.mubr.f32.mxu0 0.0
      %6795 = vmatmul.mubr.f32.gmra.mxu0 %v6556
      %v6796 = vpop.f32.mrf.mxu0
      %v6797 = vadd.f32 0.0, %v6796
      %v6798 = vpop.f32.mrf.mxu0
      %6799 = vmatprep.mubr.f32.mxu0 0.0
      %6800 = vmatmul.mubr.f32.gmra.mxu0 %v6559
      %v6801 = vpop.f32.mrf.mxu0
      %v6802 = vadd.f32 0.0, %v6801
      %v6803 = vpop.f32.mrf.mxu0
      %6804 = vmatprep.mubr.f32.mxu0 0.0
      %6805 = vmatmul.mubr.f32.gmra.mxu0 %v6562
      %v6806 = vpop.f32.mrf.mxu0
      %v6807 = vadd.f32 0.0, %v6806
      %v6808 = vpop.f32.mrf.mxu0
      %6809 = vmatprep.mubr.f32.mxu0 0.0
      %6810 = vmatmul.mubr.f32.gmra.mxu0 %v6565
      %v6811 = vpop.f32.mrf.mxu0
      %v6812 = vadd.f32 0.0, %v6811
      %v6813 = vpop.f32.mrf.mxu0
      %6814 = vmatprep.mubr.f32.mxu0 0.0
      %6815 = vmatmul.mubr.f32.gmra.mxu0 %v6568
      %v6816 = vpop.f32.mrf.mxu0
      %v6817 = vadd.f32 0.0, %v6816
      %v6818 = vpop.f32.mrf.mxu0
      %6819 = vmatprep.mubr.f32.mxu0 0.0
      %6820 = vmatmul.mubr.f32.gmra.mxu0 %v6571
      %v6821 = vpop.f32.mrf.mxu0
      %v6822 = vadd.f32 0.0, %v6821
      %v6823 = vpop.f32.mrf.mxu0
      %6824 = vmatprep.mubr.f32.mxu0 0.0
      %6825 = vmatmul.mubr.f32.gmra.mxu0 %v6574
      %v6826 = vpop.f32.mrf.mxu0
      %v6827 = vadd.f32 0.0, %v6826
      %v6828 = vpop.f32.mrf.mxu0
      %6829 = vmatprep.mubr.f32.mxu0 0.0
      %6830 = vmatmul.mubr.f32.gmra.mxu0 %v6577
      %v6831 = vpop.f32.mrf.mxu0
      %v6832 = vadd.f32 0.0, %v6831
      %v6833 = vpop.f32.mrf.mxu0
      %6834 = vmatprep.mubr.f32.mxu0 0.0
      %6835 = vmatmul.mubr.f32.gmra.mxu0 %v6580
      %v6836 = vpop.f32.mrf.mxu0
      %v6837 = vadd.f32 0.0, %v6836
      %v6838 = vpop.f32.mrf.mxu0
      %6839 = vmatprep.mubr.f32.mxu0 0.0
      %6840 = vmatmul.mubr.f32.gmra.mxu0 %v6583
      %v6841 = vpop.f32.mrf.mxu0
      %v6842 = vadd.f32 0.0, %v6841
      %v6843 = vpop.f32.mrf.mxu0
      %6844 = vmatprep.mubr.f32.mxu0 0.0
      %6845 = vmatmul.mubr.f32.gmra.mxu0 %v6586
      %v6846 = vpop.f32.mrf.mxu0
      %v6847 = vadd.f32 0.0, %v6846
      %v6848 = vpop.f32.mrf.mxu0
      %6849 = vmatprep.mubr.f32.mxu0 0.0
      %6850 = vmatmul.mubr.f32.gmra.mxu0 %v6589
      %v6851 = vpop.f32.mrf.mxu0
      %v6852 = vadd.f32 0.0, %v6851
      %v6853 = vpop.f32.mrf.mxu0
      %6854 = vmatprep.mubr.f32.mxu0 0.0
      %6855 = vmatmul.mubr.f32.gmra.mxu0 %v6592
      %v6856 = vpop.f32.mrf.mxu0
      %v6857 = vadd.f32 0.0, %v6856
      %v6858 = vpop.f32.mrf.mxu0
      %6859 = vmatprep.mubr.f32.mxu0 0.0
      %6860 = vmatmul.mubr.f32.gmra.mxu0 %v6595
      %v6861 = vpop.f32.mrf.mxu0
      %v6862 = vadd.f32 0.0, %v6861
      %v6863 = vpop.f32.mrf.mxu0
      %6864 = vmatprep.mubr.f32.mxu0 0.0
      %6865 = vmatmul.mubr.f32.gmra.mxu0 %v6598
      %v6866 = vpop.f32.mrf.mxu0
      %v6867 = vadd.f32 0.0, %v6866
      %v6868 = vpop.f32.mrf.mxu0
      %6869 = vdwg.mxu0
      %v6870 = vadd.f32 %v6224, %v6667
      %v6871 = vadd.f32 %v6229, %v6672
      %v6872 = vadd.f32 %v6234, %v6677
      %v6873 = vadd.f32 %v6239, %v6682
      %v6874 = vadd.f32 %v6244, %v6687
      %v6875 = vadd.f32 %v6249, %v6692
      %v6876 = vadd.f32 %v6254, %v6697
      %v6877 = vadd.f32 %v6259, %v6702
      %v6878 = vadd.f32 %v6264, %v6707
      %v6879 = vadd.f32 %v6269, %v6712
      %v6880 = vadd.f32 %v6274, %v6717
      %v6881 = vadd.f32 %v6279, %v6722
      %v6882 = vadd.f32 %v6284, %v6727
      %v6883 = vadd.f32 %v6289, %v6732
      %v6884 = vadd.f32 %v6294, %v6737
      %v6885 = vadd.f32 %v6299, %v6742
      %v6886 = vadd.f32 %v6304, %v6747
      %v6887 = vadd.f32 %v6309, %v6752
      %v6888 = vadd.f32 %v6314, %v6757
      %v6889 = vadd.f32 %v6319, %v6762
      %v6890 = vadd.f32 %v6324, %v6767
      %v6891 = vadd.f32 %v6329, %v6772
      %v6892 = vadd.f32 %v6334, %v6777
      %v6893 = vadd.f32 %v6339, %v6782
      %v6894 = vadd.f32 %v6344, %v6787
      %v6895 = vadd.f32 %v6349, %v6792
      %v6896 = vadd.f32 %v6354, %v6797
      %v6897 = vadd.f32 %v6359, %v6802
      %v6898 = vadd.f32 %v6364, %v6807
      %v6899 = vadd.f32 %v6369, %v6812
      %v6900 = vadd.f32 %v6374, %v6817
      %v6901 = vadd.f32 %v6379, %v6822
      %v6902 = vadd.f32 %v6384, %v6827
      %v6903 = vadd.f32 %v6389, %v6832
      %v6904 = vadd.f32 %v6394, %v6837
      %v6905 = vadd.f32 %v6399, %v6842
      %v6906 = vadd.f32 %v6404, %v6847
      %v6907 = vadd.f32 %v6409, %v6852
      %v6908 = vadd.f32 %v6414, %v6857
      %v6909 = vadd.f32 %v6419, %v6862
      %v6910 = vadd.f32 %v6424, %v6867
      %v6911 = vld [vmem:[#allocation3 + $0x17] sm:$0xff]
      %v6912 = vld [vmem:[#allocation3 + $0x1f] sm:$0xff]
      %v6913 = vld [vmem:[#allocation3 + $0x27] sm:$0xff]
      %v6914 = vld [vmem:[#allocation3 + $0x2f] sm:$0xff]
      %v6915 = vld [vmem:[#allocation3 + $0x37] sm:$0xff]
      %v6916 = vld [vmem:[#allocation3 + $0x3f] sm:$0xff]
      %v6917 = vld [vmem:[#allocation3 + $0x47] sm:$0xff]
      %v6918 = vld [vmem:[#allocation3 + $0x4f] sm:$0xff]
      %v6919 = vld [vmem:[#allocation3 + $0x57] sm:$0xff]
      %v6920 = vld [vmem:[#allocation3 + $0x5f] sm:$0xff]
      %v6921 = vld [vmem:[#allocation3 + $0x67] sm:$0xff]
      %v6922 = vld [vmem:[#allocation3 + $0x6f] sm:$0xff]
      %v6923 = vld [vmem:[#allocation3 + $0x77] sm:$0xff]
      %v6924 = vld [vmem:[#allocation3 + $0x7f] sm:$0xff]
      %v6925 = vld [vmem:[#allocation3 + $0x87] sm:$0xff]
      %v6926 = vld [vmem:[#allocation3 + $0x8f] sm:$0xff]
      %v6927 = vld [vmem:[#allocation3 + $0x97] sm:$0xff]
      %v6928 = vld [vmem:[#allocation3 + $0x9f] sm:$0xff]
      %v6929 = vld [vmem:[#allocation3 + $0xa7] sm:$0xff]
      %v6930 = vld [vmem:[#allocation3 + $0xaf] sm:$0xff]
      %v6931 = vld [vmem:[#allocation3 + $0xb7] sm:$0xff]
      %v6932 = vld [vmem:[#allocation3 + $0xbf] sm:$0xff]
      %v6933 = vld [vmem:[#allocation3 + $0xc7] sm:$0xff]
      %v6934 = vld [vmem:[#allocation3 + $0xcf] sm:$0xff]
      %v6935 = vld [vmem:[#allocation3 + $0xd7] sm:$0xff]
      %v6936 = vld [vmem:[#allocation3 + $0xdf] sm:$0xff]
      %v6937 = vld [vmem:[#allocation3 + $0xe7] sm:$0xff]
      %v6938 = vld [vmem:[#allocation3 + $0xef] sm:$0xff]
      %v6939 = vld [vmem:[#allocation3 + $0xf7] sm:$0xff]
      %v6940 = vld [vmem:[#allocation3 + $0xff] sm:$0xff]
      %v6941 = vld [vmem:[#allocation3 + $0x107] sm:$0xff]
      %v6942 = vld [vmem:[#allocation3 + $0x10f] sm:$0xff]
      %v6943 = vld [vmem:[#allocation3 + $0x117] sm:$0xff]
      %v6944 = vld [vmem:[#allocation3 + $0x11f] sm:$0xff]
      %v6945 = vld [vmem:[#allocation3 + $0x127] sm:$0xff]
      %v6946 = vld [vmem:[#allocation3 + $0x12f] sm:$0xff]
      %v6947 = vld [vmem:[#allocation3 + $0x137] sm:$0xff]
      %v6948 = vld [vmem:[#allocation3 + $0x13f] sm:$0xff]
      %v6949 = vld [vmem:[#allocation3 + $0x147] sm:$0xff]
      %v6950 = vld [vmem:[#allocation3 + $0x14f] sm:$0xff]
      %v6951 = vld [vmem:[#allocation3 + $0x157] sm:$0xf]
      %s6952 = scalar_lea.vmem %s3, 192
      %v6953 = vld [vmem:[%s6952] sm:$0xff]
      %v6954 = vld [vmem:[%s6952 + $0x8] sm:$0xff]
      %v6955 = vld [vmem:[%s6952 + $0x10] sm:$0xff]
      %v6956 = vld [vmem:[%s6952 + $0x18] sm:$0xff]
      %v6957 = vld [vmem:[%s6952 + $0x20] sm:$0xff]
      %v6958 = vld [vmem:[%s6952 + $0x28] sm:$0xff]
      %v6959 = vld [vmem:[%s6952 + $0x30] sm:$0xff]
      %v6960 = vld [vmem:[%s6952 + $0x38] sm:$0xff]
      %v6962 = vsel %vm293, %v6911, 0
      %v6965 = vsel %vm293, %v6912, 0
      %v6968 = vsel %vm293, %v6913, 0
      %v6971 = vsel %vm293, %v6914, 0
      %v6974 = vsel %vm293, %v6915, 0
      %v6977 = vsel %vm293, %v6916, 0
      %v6980 = vsel %vm293, %v6917, 0
      %v6983 = vsel %vm293, %v6918, 0
      %v6986 = vsel %vm293, %v6919, 0
      %v6989 = vsel %vm293, %v6920, 0
      %v6992 = vsel %vm293, %v6921, 0
      %v6995 = vsel %vm293, %v6922, 0
      %v6998 = vsel %vm293, %v6923, 0
      %v7001 = vsel %vm293, %v6924, 0
      %v7004 = vsel %vm293, %v6925, 0
      %v7007 = vsel %vm293, %v6926, 0
      %v7010 = vsel %vm293, %v6927, 0
      %v7013 = vsel %vm293, %v6928, 0
      %v7016 = vsel %vm293, %v6929, 0
      %v7019 = vsel %vm293, %v6930, 0
      %v7022 = vsel %vm293, %v6931, 0
      %v7025 = vsel %vm293, %v6932, 0
      %v7028 = vsel %vm293, %v6933, 0
      %v7031 = vsel %vm293, %v6934, 0
      %v7034 = vsel %vm293, %v6935, 0
      %v7037 = vsel %vm293, %v6936, 0
      %v7040 = vsel %vm293, %v6937, 0
      %v7043 = vsel %vm293, %v6938, 0
      %v7046 = vsel %vm293, %v6939, 0
      %v7049 = vsel %vm293, %v6940, 0
      %v7052 = vsel %vm293, %v6941, 0
      %v7055 = vsel %vm293, %v6942, 0
      %v7058 = vsel %vm293, %v6943, 0
      %v7061 = vsel %vm293, %v6944, 0
      %v7064 = vsel %vm293, %v6945, 0
      %v7067 = vsel %vm293, %v6946, 0
      %v7070 = vsel %vm293, %v6947, 0
      %v7073 = vsel %vm293, %v6948, 0
      %v7076 = vsel %vm293, %v6949, 0
      %v7079 = vsel %vm293, %v6950, 0
      %v7082 = vsel %vm293, %v6951, 0
      %7084 = vmatprep.subr.mxu0 0.0
      %7085 = vmatpush1.msra.mxu0 0.0
      %7086 = vmatprep.subr.mxu0 0.0
      %7087 = vmatpush1.msra.mxu0 0.0
      %7088 = vmatprep.subr.mxu0 0.0
      %7089 = vmatpush1.msra.mxu0 0.0
      %7090 = vmatprep.subr.mxu0 0.0
      %7091 = vmatpush1.msra.mxu0 0.0
      %7092 = vmatprep.subr.mxu0 0.0
      %7093 = vmatpush1.msra.mxu0 0.0
      %7094 = vmatprep.subr.mxu0 0.0
      %7095 = vmatpush1.msra.mxu0 0.0
      %7096 = vmatprep.subr.mxu0 0.0
      %7097 = vmatpush1.msra.mxu0 0.0
      %7098 = vmatprep.subr.mxu0 0.0
      %7099 = vmatpush1.msra.mxu0 0.0
      %7100 = vmatprep.subr.mxu0 0.0
      %7101 = vmatpush1.msra.mxu0 %v6960
      %7102 = vmatprep.subr.mxu0 0.0
      %7103 = vmatpush1.msra.mxu0 %v6959
      %7104 = vmatprep.subr.mxu0 0.0
      %7105 = vmatpush1.msra.mxu0 %v6958
      %7106 = vmatprep.subr.mxu0 0.0
      %7107 = vmatpush1.msra.mxu0 %v6957
      %7108 = vmatprep.subr.mxu0 0.0
      %7109 = vmatpush1.msra.mxu0 %v6956
      %7110 = vmatprep.subr.mxu0 0.0
      %7111 = vmatpush1.msra.mxu0 %v6955
      %7112 = vmatprep.subr.mxu0 0.0
      %7113 = vmatpush1.msra.mxu0 %v6954
      %7114 = vmatprep.subr.mxu0 0.0
      %7115 = vmatpush1.msra.mxu0 %v6953
      %7116 = vmatprep.subr.mxu0 0.0
      %7117 = vmatpush2.msra.mxu0 0.0
      %7118 = vmatprep.subr.mxu0 0.0
      %7119 = vmatpush2.msra.mxu0 0.0
      %7120 = vmatprep.subr.mxu0 0.0
      %7121 = vmatpush2.msra.mxu0 0.0
      %7122 = vmatprep.subr.mxu0 0.0
      %7123 = vmatpush2.msra.mxu0 0.0
      %7124 = vmatprep.subr.mxu0 0.0
      %7125 = vmatpush2.msra.mxu0 0.0
      %7126 = vmatprep.subr.mxu0 0.0
      %7127 = vmatpush2.msra.mxu0 0.0
      %7128 = vmatprep.subr.mxu0 0.0
      %7129 = vmatpush2.msra.mxu0 0.0
      %7130 = vmatprep.subr.mxu0 0.0
      %7131 = vmatpush2.msra.mxu0 0.0
      %7132 = vmatprep.subr.mxu0 0.0
      %7133 = vmatpush2.msra.mxu0 0.0
      %7134 = vmatprep.subr.mxu0 0.0
      %7135 = vmatpush2.msra.mxu0 0.0
      %7136 = vmatprep.subr.mxu0 0.0
      %7137 = vmatpush2.msra.mxu0 0.0
      %7138 = vmatprep.subr.mxu0 0.0
      %7139 = vmatpush2.msra.mxu0 0.0
      %7140 = vmatprep.subr.mxu0 0.0
      %7141 = vmatpush2.msra.mxu0 0.0
      %7142 = vmatprep.subr.mxu0 0.0
      %7143 = vmatpush2.msra.mxu0 0.0
      %7144 = vmatprep.subr.mxu0 0.0
      %7145 = vmatpush2.msra.mxu0 0.0
      %7146 = vmatprep.subr.mxu0 0.0
      %7147 = vmatpush2.msra.mxu0 0.0
      %7148 = vmatprep.mubr.f32.mxu0 0.0
      %7149 = vmatmul.mubr.f32.gmra.mxu0 %v6962
      %v7150 = vpop.f32.mrf.mxu0
      %v7151 = vadd.f32 0.0, %v7150
      %v7152 = vpop.f32.mrf.mxu0
      %7153 = vmatprep.mubr.f32.mxu0 0.0
      %7154 = vmatmul.mubr.f32.gmra.mxu0 %v6965
      %v7155 = vpop.f32.mrf.mxu0
      %v7156 = vadd.f32 0.0, %v7155
      %v7157 = vpop.f32.mrf.mxu0
      %7158 = vmatprep.mubr.f32.mxu0 0.0
      %7159 = vmatmul.mubr.f32.gmra.mxu0 %v6968
      %v7160 = vpop.f32.mrf.mxu0
      %v7161 = vadd.f32 0.0, %v7160
      %v7162 = vpop.f32.mrf.mxu0
      %7163 = vmatprep.mubr.f32.mxu0 0.0
      %7164 = vmatmul.mubr.f32.gmra.mxu0 %v6971
      %v7165 = vpop.f32.mrf.mxu0
      %v7166 = vadd.f32 0.0, %v7165
      %v7167 = vpop.f32.mrf.mxu0
      %7168 = vmatprep.mubr.f32.mxu0 0.0
      %7169 = vmatmul.mubr.f32.gmra.mxu0 %v6974
      %v7170 = vpop.f32.mrf.mxu0
      %v7171 = vadd.f32 0.0, %v7170
      %v7172 = vpop.f32.mrf.mxu0
      %7173 = vmatprep.mubr.f32.mxu0 0.0
      %7174 = vmatmul.mubr.f32.gmra.mxu0 %v6977
      %v7175 = vpop.f32.mrf.mxu0
      %v7176 = vadd.f32 0.0, %v7175
      %v7177 = vpop.f32.mrf.mxu0
      %7178 = vmatprep.mubr.f32.mxu0 0.0
      %7179 = vmatmul.mubr.f32.gmra.mxu0 %v6980
      %v7180 = vpop.f32.mrf.mxu0
      %v7181 = vadd.f32 0.0, %v7180
      %v7182 = vpop.f32.mrf.mxu0
      %7183 = vmatprep.mubr.f32.mxu0 0.0
      %7184 = vmatmul.mubr.f32.gmra.mxu0 %v6983
      %v7185 = vpop.f32.mrf.mxu0
      %v7186 = vadd.f32 0.0, %v7185
      %v7187 = vpop.f32.mrf.mxu0
      %7188 = vmatprep.mubr.f32.mxu0 0.0
      %7189 = vmatmul.mubr.f32.gmra.mxu0 %v6986
      %v7190 = vpop.f32.mrf.mxu0
      %v7191 = vadd.f32 0.0, %v7190
      %v7192 = vpop.f32.mrf.mxu0
      %7193 = vmatprep.mubr.f32.mxu0 0.0
      %7194 = vmatmul.mubr.f32.gmra.mxu0 %v6989
      %v7195 = vpop.f32.mrf.mxu0
      %v7196 = vadd.f32 0.0, %v7195
      %v7197 = vpop.f32.mrf.mxu0
      %7198 = vmatprep.mubr.f32.mxu0 0.0
      %7199 = vmatmul.mubr.f32.gmra.mxu0 %v6992
      %v7200 = vpop.f32.mrf.mxu0
      %v7201 = vadd.f32 0.0, %v7200
      %v7202 = vpop.f32.mrf.mxu0
      %7203 = vmatprep.mubr.f32.mxu0 0.0
      %7204 = vmatmul.mubr.f32.gmra.mxu0 %v6995
      %v7205 = vpop.f32.mrf.mxu0
      %v7206 = vadd.f32 0.0, %v7205
      %v7207 = vpop.f32.mrf.mxu0
      %7208 = vmatprep.mubr.f32.mxu0 0.0
      %7209 = vmatmul.mubr.f32.gmra.mxu0 %v6998
      %v7210 = vpop.f32.mrf.mxu0
      %v7211 = vadd.f32 0.0, %v7210
      %v7212 = vpop.f32.mrf.mxu0
      %7213 = vmatprep.mubr.f32.mxu0 0.0
      %7214 = vmatmul.mubr.f32.gmra.mxu0 %v7001
      %v7215 = vpop.f32.mrf.mxu0
      %v7216 = vadd.f32 0.0, %v7215
      %v7217 = vpop.f32.mrf.mxu0
      %7218 = vmatprep.mubr.f32.mxu0 0.0
      %7219 = vmatmul.mubr.f32.gmra.mxu0 %v7004
      %v7220 = vpop.f32.mrf.mxu0
      %v7221 = vadd.f32 0.0, %v7220
      %v7222 = vpop.f32.mrf.mxu0
      %7223 = vmatprep.mubr.f32.mxu0 0.0
      %7224 = vmatmul.mubr.f32.gmra.mxu0 %v7007
      %v7225 = vpop.f32.mrf.mxu0
      %v7226 = vadd.f32 0.0, %v7225
      %v7227 = vpop.f32.mrf.mxu0
      %7228 = vmatprep.mubr.f32.mxu0 0.0
      %7229 = vmatmul.mubr.f32.gmra.mxu0 %v7010
      %v7230 = vpop.f32.mrf.mxu0
      %v7231 = vadd.f32 0.0, %v7230
      %v7232 = vpop.f32.mrf.mxu0
      %7233 = vmatprep.mubr.f32.mxu0 0.0
      %7234 = vmatmul.mubr.f32.gmra.mxu0 %v7013
      %v7235 = vpop.f32.mrf.mxu0
      %v7236 = vadd.f32 0.0, %v7235
      %v7237 = vpop.f32.mrf.mxu0
      %7238 = vmatprep.mubr.f32.mxu0 0.0
      %7239 = vmatmul.mubr.f32.gmra.mxu0 %v7016
      %v7240 = vpop.f32.mrf.mxu0
      %v7241 = vadd.f32 0.0, %v7240
      %v7242 = vpop.f32.mrf.mxu0
      %7243 = vmatprep.mubr.f32.mxu0 0.0
      %7244 = vmatmul.mubr.f32.gmra.mxu0 %v7019
      %v7245 = vpop.f32.mrf.mxu0
      %v7246 = vadd.f32 0.0, %v7245
      %v7247 = vpop.f32.mrf.mxu0
      %7248 = vmatprep.mubr.f32.mxu0 0.0
      %7249 = vmatmul.mubr.f32.gmra.mxu0 %v7022
      %v7250 = vpop.f32.mrf.mxu0
      %v7251 = vadd.f32 0.0, %v7250
      %v7252 = vpop.f32.mrf.mxu0
      %7253 = vmatprep.mubr.f32.mxu0 0.0
      %7254 = vmatmul.mubr.f32.gmra.mxu0 %v7025
      %v7255 = vpop.f32.mrf.mxu0
      %v7256 = vadd.f32 0.0, %v7255
      %v7257 = vpop.f32.mrf.mxu0
      %7258 = vmatprep.mubr.f32.mxu0 0.0
      %7259 = vmatmul.mubr.f32.gmra.mxu0 %v7028
      %v7260 = vpop.f32.mrf.mxu0
      %v7261 = vadd.f32 0.0, %v7260
      %v7262 = vpop.f32.mrf.mxu0
      %7263 = vmatprep.mubr.f32.mxu0 0.0
      %7264 = vmatmul.mubr.f32.gmra.mxu0 %v7031
      %v7265 = vpop.f32.mrf.mxu0
      %v7266 = vadd.f32 0.0, %v7265
      %v7267 = vpop.f32.mrf.mxu0
      %7268 = vmatprep.mubr.f32.mxu0 0.0
      %7269 = vmatmul.mubr.f32.gmra.mxu0 %v7034
      %v7270 = vpop.f32.mrf.mxu0
      %v7271 = vadd.f32 0.0, %v7270
      %v7272 = vpop.f32.mrf.mxu0
      %7273 = vmatprep.mubr.f32.mxu0 0.0
      %7274 = vmatmul.mubr.f32.gmra.mxu0 %v7037
      %v7275 = vpop.f32.mrf.mxu0
      %v7276 = vadd.f32 0.0, %v7275
      %v7277 = vpop.f32.mrf.mxu0
      %7278 = vmatprep.mubr.f32.mxu0 0.0
      %7279 = vmatmul.mubr.f32.gmra.mxu0 %v7040
      %v7280 = vpop.f32.mrf.mxu0
      %v7281 = vadd.f32 0.0, %v7280
      %v7282 = vpop.f32.mrf.mxu0
      %7283 = vmatprep.mubr.f32.mxu0 0.0
      %7284 = vmatmul.mubr.f32.gmra.mxu0 %v7043
      %v7285 = vpop.f32.mrf.mxu0
      %v7286 = vadd.f32 0.0, %v7285
      %v7287 = vpop.f32.mrf.mxu0
      %7288 = vmatprep.mubr.f32.mxu0 0.0
      %7289 = vmatmul.mubr.f32.gmra.mxu0 %v7046
      %v7290 = vpop.f32.mrf.mxu0
      %v7291 = vadd.f32 0.0, %v7290
      %v7292 = vpop.f32.mrf.mxu0
      %7293 = vmatprep.mubr.f32.mxu0 0.0
      %7294 = vmatmul.mubr.f32.gmra.mxu0 %v7049
      %v7295 = vpop.f32.mrf.mxu0
      %v7296 = vadd.f32 0.0, %v7295
      %v7297 = vpop.f32.mrf.mxu0
      %7298 = vmatprep.mubr.f32.mxu0 0.0
      %7299 = vmatmul.mubr.f32.gmra.mxu0 %v7052
      %v7300 = vpop.f32.mrf.mxu0
      %v7301 = vadd.f32 0.0, %v7300
      %v7302 = vpop.f32.mrf.mxu0
      %7303 = vmatprep.mubr.f32.mxu0 0.0
      %7304 = vmatmul.mubr.f32.gmra.mxu0 %v7055
      %v7305 = vpop.f32.mrf.mxu0
      %v7306 = vadd.f32 0.0, %v7305
      %v7307 = vpop.f32.mrf.mxu0
      %7308 = vmatprep.mubr.f32.mxu0 0.0
      %7309 = vmatmul.mubr.f32.gmra.mxu0 %v7058
      %v7310 = vpop.f32.mrf.mxu0
      %v7311 = vadd.f32 0.0, %v7310
      %v7312 = vpop.f32.mrf.mxu0
      %7313 = vmatprep.mubr.f32.mxu0 0.0
      %7314 = vmatmul.mubr.f32.gmra.mxu0 %v7061
      %v7315 = vpop.f32.mrf.mxu0
      %v7316 = vadd.f32 0.0, %v7315
      %v7317 = vpop.f32.mrf.mxu0
      %7318 = vmatprep.mubr.f32.mxu0 0.0
      %7319 = vmatmul.mubr.f32.gmra.mxu0 %v7064
      %v7320 = vpop.f32.mrf.mxu0
      %v7321 = vadd.f32 0.0, %v7320
      %v7322 = vpop.f32.mrf.mxu0
      %7323 = vmatprep.mubr.f32.mxu0 0.0
      %7324 = vmatmul.mubr.f32.gmra.mxu0 %v7067
      %v7325 = vpop.f32.mrf.mxu0
      %v7326 = vadd.f32 0.0, %v7325
      %v7327 = vpop.f32.mrf.mxu0
      %7328 = vmatprep.mubr.f32.mxu0 0.0
      %7329 = vmatmul.mubr.f32.gmra.mxu0 %v7070
      %v7330 = vpop.f32.mrf.mxu0
      %v7331 = vadd.f32 0.0, %v7330
      %v7332 = vpop.f32.mrf.mxu0
      %7333 = vmatprep.mubr.f32.mxu0 0.0
      %7334 = vmatmul.mubr.f32.gmra.mxu0 %v7073
      %v7335 = vpop.f32.mrf.mxu0
      %v7336 = vadd.f32 0.0, %v7335
      %v7337 = vpop.f32.mrf.mxu0
      %7338 = vmatprep.mubr.f32.mxu0 0.0
      %7339 = vmatmul.mubr.f32.gmra.mxu0 %v7076
      %v7340 = vpop.f32.mrf.mxu0
      %v7341 = vadd.f32 0.0, %v7340
      %v7342 = vpop.f32.mrf.mxu0
      %7343 = vmatprep.mubr.f32.mxu0 0.0
      %7344 = vmatmul.mubr.f32.gmra.mxu0 %v7079
      %v7345 = vpop.f32.mrf.mxu0
      %v7346 = vadd.f32 0.0, %v7345
      %v7347 = vpop.f32.mrf.mxu0
      %7348 = vmatprep.mubr.f32.mxu0 0.0
      %7349 = vmatmul.mubr.f32.gmra.mxu0 %v7082
      %v7350 = vpop.f32.mrf.mxu0
      %v7351 = vadd.f32 0.0, %v7350
      %v7352 = vpop.f32.mrf.mxu0
      %7353 = vdwg.mxu0
      %v7354 = vadd.f32 %v6870, %v7151
      %v7355 = vadd.f32 %v6871, %v7156
      %v7356 = vadd.f32 %v6872, %v7161
      %v7357 = vadd.f32 %v6873, %v7166
      %v7358 = vadd.f32 %v6874, %v7171
      %v7359 = vadd.f32 %v6875, %v7176
      %v7360 = vadd.f32 %v6876, %v7181
      %v7361 = vadd.f32 %v6877, %v7186
      %v7362 = vadd.f32 %v6878, %v7191
      %v7363 = vadd.f32 %v6879, %v7196
      %v7364 = vadd.f32 %v6880, %v7201
      %v7365 = vadd.f32 %v6881, %v7206
      %v7366 = vadd.f32 %v6882, %v7211
      %v7367 = vadd.f32 %v6883, %v7216
      %v7368 = vadd.f32 %v6884, %v7221
      %v7369 = vadd.f32 %v6885, %v7226
      %v7370 = vadd.f32 %v6886, %v7231
      %v7371 = vadd.f32 %v6887, %v7236
      %v7372 = vadd.f32 %v6888, %v7241
      %v7373 = vadd.f32 %v6889, %v7246
      %v7374 = vadd.f32 %v6890, %v7251
      %v7375 = vadd.f32 %v6891, %v7256
      %v7376 = vadd.f32 %v6892, %v7261
      %v7377 = vadd.f32 %v6893, %v7266
      %v7378 = vadd.f32 %v6894, %v7271
      %v7379 = vadd.f32 %v6895, %v7276
      %v7380 = vadd.f32 %v6896, %v7281
      %v7381 = vadd.f32 %v6897, %v7286
      %v7382 = vadd.f32 %v6898, %v7291
      %v7383 = vadd.f32 %v6899, %v7296
      %v7384 = vadd.f32 %v6900, %v7301
      %v7385 = vadd.f32 %v6901, %v7306
      %v7386 = vadd.f32 %v6902, %v7311
      %v7387 = vadd.f32 %v6903, %v7316
      %v7388 = vadd.f32 %v6904, %v7321
      %v7389 = vadd.f32 %v6905, %v7326
      %v7390 = vadd.f32 %v6906, %v7331
      %v7391 = vadd.f32 %v6907, %v7336
      %v7392 = vadd.f32 %v6908, %v7341
      %v7393 = vadd.f32 %v6909, %v7346
      %v7394 = vadd.f32 %v6910, %v7351
      %v7395 = vld [vmem:[#allocation3 + $0x18] sm:$0xff]
      %v7396 = vld [vmem:[#allocation3 + $0x20] sm:$0xff]
      %v7397 = vld [vmem:[#allocation3 + $0x28] sm:$0xff]
      %v7398 = vld [vmem:[#allocation3 + $0x30] sm:$0xff]
      %v7399 = vld [vmem:[#allocation3 + $0x38] sm:$0xff]
      %v7400 = vld [vmem:[#allocation3 + $0x40] sm:$0xff]
      %v7401 = vld [vmem:[#allocation3 + $0x48] sm:$0xff]
      %v7402 = vld [vmem:[#allocation3 + $0x50] sm:$0xff]
      %v7403 = vld [vmem:[#allocation3 + $0x58] sm:$0xff]
      %v7404 = vld [vmem:[#allocation3 + $0x60] sm:$0xff]
      %v7405 = vld [vmem:[#allocation3 + $0x68] sm:$0xff]
      %v7406 = vld [vmem:[#allocation3 + $0x70] sm:$0xff]
      %v7407 = vld [vmem:[#allocation3 + $0x78] sm:$0xff]
      %v7408 = vld [vmem:[#allocation3 + $0x80] sm:$0xff]
      %v7409 = vld [vmem:[#allocation3 + $0x88] sm:$0xff]
      %v7410 = vld [vmem:[#allocation3 + $0x90] sm:$0xff]
      %v7411 = vld [vmem:[#allocation3 + $0x98] sm:$0xff]
      %v7412 = vld [vmem:[#allocation3 + $0xa0] sm:$0xff]
      %v7413 = vld [vmem:[#allocation3 + $0xa8] sm:$0xff]
      %v7414 = vld [vmem:[#allocation3 + $0xb0] sm:$0xff]
      %v7415 = vld [vmem:[#allocation3 + $0xb8] sm:$0xff]
      %v7416 = vld [vmem:[#allocation3 + $0xc0] sm:$0xff]
      %v7417 = vld [vmem:[#allocation3 + $0xc8] sm:$0xff]
      %v7418 = vld [vmem:[#allocation3 + $0xd0] sm:$0xff]
      %v7419 = vld [vmem:[#allocation3 + $0xd8] sm:$0xff]
      %v7420 = vld [vmem:[#allocation3 + $0xe0] sm:$0xff]
      %v7421 = vld [vmem:[#allocation3 + $0xe8] sm:$0xff]
      %v7422 = vld [vmem:[#allocation3 + $0xf0] sm:$0xff]
      %v7423 = vld [vmem:[#allocation3 + $0xf8] sm:$0xff]
      %v7424 = vld [vmem:[#allocation3 + $0x100] sm:$0xff]
      %v7425 = vld [vmem:[#allocation3 + $0x108] sm:$0xff]
      %v7426 = vld [vmem:[#allocation3 + $0x110] sm:$0xff]
      %v7427 = vld [vmem:[#allocation3 + $0x118] sm:$0xff]
      %v7428 = vld [vmem:[#allocation3 + $0x120] sm:$0xff]
      %v7429 = vld [vmem:[#allocation3 + $0x128] sm:$0xff]
      %v7430 = vld [vmem:[#allocation3 + $0x130] sm:$0xff]
      %v7431 = vld [vmem:[#allocation3 + $0x138] sm:$0xff]
      %v7432 = vld [vmem:[#allocation3 + $0x140] sm:$0xff]
      %v7433 = vld [vmem:[#allocation3 + $0x148] sm:$0xff]
      %v7434 = vld [vmem:[#allocation3 + $0x150] sm:$0xff]
      %v7435 = vld [vmem:[#allocation3 + $0x158] sm:$0xf]
      %s7436 = scalar_lea.vmem %s3, 256
      %v7437 = vld [vmem:[%s7436] sm:$0xff]
      %v7438 = vld [vmem:[%s7436 + $0x8] sm:$0xff]
      %v7439 = vld [vmem:[%s7436 + $0x10] sm:$0xff]
      %v7440 = vld [vmem:[%s7436 + $0x18] sm:$0xff]
      %v7441 = vld [vmem:[%s7436 + $0x20] sm:$0xff]
      %v7442 = vld [vmem:[%s7436 + $0x28] sm:$0xff]
      %v7443 = vld [vmem:[%s7436 + $0x30] sm:$0xff]
      %v7444 = vld [vmem:[%s7436 + $0x38] sm:$0xff]
      %v7446 = vsel %vm293, %v7395, 0
      %v7449 = vsel %vm293, %v7396, 0
      %v7452 = vsel %vm293, %v7397, 0
      %v7455 = vsel %vm293, %v7398, 0
      %v7458 = vsel %vm293, %v7399, 0
      %v7461 = vsel %vm293, %v7400, 0
      %v7464 = vsel %vm293, %v7401, 0
      %v7467 = vsel %vm293, %v7402, 0
      %v7470 = vsel %vm293, %v7403, 0
      %v7473 = vsel %vm293, %v7404, 0
      %v7476 = vsel %vm293, %v7405, 0
      %v7479 = vsel %vm293, %v7406, 0
      %v7482 = vsel %vm293, %v7407, 0
      %v7485 = vsel %vm293, %v7408, 0
      %v7488 = vsel %vm293, %v7409, 0
      %v7491 = vsel %vm293, %v7410, 0
      %v7494 = vsel %vm293, %v7411, 0
      %v7497 = vsel %vm293, %v7412, 0
      %v7500 = vsel %vm293, %v7413, 0
      %v7503 = vsel %vm293, %v7414, 0
      %v7506 = vsel %vm293, %v7415, 0
      %v7509 = vsel %vm293, %v7416, 0
      %v7512 = vsel %vm293, %v7417, 0
      %v7515 = vsel %vm293, %v7418, 0
      %v7518 = vsel %vm293, %v7419, 0
      %v7521 = vsel %vm293, %v7420, 0
      %v7524 = vsel %vm293, %v7421, 0
      %v7527 = vsel %vm293, %v7422, 0
      %v7530 = vsel %vm293, %v7423, 0
      %v7533 = vsel %vm293, %v7424, 0
      %v7536 = vsel %vm293, %v7425, 0
      %v7539 = vsel %vm293, %v7426, 0
      %v7542 = vsel %vm293, %v7427, 0
      %v7545 = vsel %vm293, %v7428, 0
      %v7548 = vsel %vm293, %v7429, 0
      %v7551 = vsel %vm293, %v7430, 0
      %v7554 = vsel %vm293, %v7431, 0
      %v7557 = vsel %vm293, %v7432, 0
      %v7560 = vsel %vm293, %v7433, 0
      %v7563 = vsel %vm293, %v7434, 0
      %v7566 = vsel %vm293, %v7435, 0
      %7568 = vmatprep.subr.mxu0 0.0
      %7569 = vmatpush1.msra.mxu0 0.0
      %7570 = vmatprep.subr.mxu0 0.0
      %7571 = vmatpush1.msra.mxu0 0.0
      %7572 = vmatprep.subr.mxu0 0.0
      %7573 = vmatpush1.msra.mxu0 0.0
      %7574 = vmatprep.subr.mxu0 0.0
      %7575 = vmatpush1.msra.mxu0 0.0
      %7576 = vmatprep.subr.mxu0 0.0
      %7577 = vmatpush1.msra.mxu0 0.0
      %7578 = vmatprep.subr.mxu0 0.0
      %7579 = vmatpush1.msra.mxu0 0.0
      %7580 = vmatprep.subr.mxu0 0.0
      %7581 = vmatpush1.msra.mxu0 0.0
      %7582 = vmatprep.subr.mxu0 0.0
      %7583 = vmatpush1.msra.mxu0 0.0
      %7584 = vmatprep.subr.mxu0 0.0
      %7585 = vmatpush1.msra.mxu0 %v7444
      %7586 = vmatprep.subr.mxu0 0.0
      %7587 = vmatpush1.msra.mxu0 %v7443
      %7588 = vmatprep.subr.mxu0 0.0
      %7589 = vmatpush1.msra.mxu0 %v7442
      %7590 = vmatprep.subr.mxu0 0.0
      %7591 = vmatpush1.msra.mxu0 %v7441
      %7592 = vmatprep.subr.mxu0 0.0
      %7593 = vmatpush1.msra.mxu0 %v7440
      %7594 = vmatprep.subr.mxu0 0.0
      %7595 = vmatpush1.msra.mxu0 %v7439
      %7596 = vmatprep.subr.mxu0 0.0
      %7597 = vmatpush1.msra.mxu0 %v7438
      %7598 = vmatprep.subr.mxu0 0.0
      %7599 = vmatpush1.msra.mxu0 %v7437
      %7600 = vmatprep.subr.mxu0 0.0
      %7601 = vmatpush2.msra.mxu0 0.0
      %7602 = vmatprep.subr.mxu0 0.0
      %7603 = vmatpush2.msra.mxu0 0.0
      %7604 = vmatprep.subr.mxu0 0.0
      %7605 = vmatpush2.msra.mxu0 0.0
      %7606 = vmatprep.subr.mxu0 0.0
      %7607 = vmatpush2.msra.mxu0 0.0
      %7608 = vmatprep.subr.mxu0 0.0
      %7609 = vmatpush2.msra.mxu0 0.0
      %7610 = vmatprep.subr.mxu0 0.0
      %7611 = vmatpush2.msra.mxu0 0.0
      %7612 = vmatprep.subr.mxu0 0.0
      %7613 = vmatpush2.msra.mxu0 0.0
      %7614 = vmatprep.subr.mxu0 0.0
      %7615 = vmatpush2.msra.mxu0 0.0
      %7616 = vmatprep.subr.mxu0 0.0
      %7617 = vmatpush2.msra.mxu0 0.0
      %7618 = vmatprep.subr.mxu0 0.0
      %7619 = vmatpush2.msra.mxu0 0.0
      %7620 = vmatprep.subr.mxu0 0.0
      %7621 = vmatpush2.msra.mxu0 0.0
      %7622 = vmatprep.subr.mxu0 0.0
      %7623 = vmatpush2.msra.mxu0 0.0
      %7624 = vmatprep.subr.mxu0 0.0
      %7625 = vmatpush2.msra.mxu0 0.0
      %7626 = vmatprep.subr.mxu0 0.0
      %7627 = vmatpush2.msra.mxu0 0.0
      %7628 = vmatprep.subr.mxu0 0.0
      %7629 = vmatpush2.msra.mxu0 0.0
      %7630 = vmatprep.subr.mxu0 0.0
      %7631 = vmatpush2.msra.mxu0 0.0
      %7632 = vmatprep.mubr.f32.mxu0 0.0
      %7633 = vmatmul.mubr.f32.gmra.mxu0 %v7446
      %v7634 = vpop.f32.mrf.mxu0
      %v7635 = vadd.f32 0.0, %v7634
      %v7636 = vpop.f32.mrf.mxu0
      %7637 = vmatprep.mubr.f32.mxu0 0.0
      %7638 = vmatmul.mubr.f32.gmra.mxu0 %v7449
      %v7639 = vpop.f32.mrf.mxu0
      %v7640 = vadd.f32 0.0, %v7639
      %v7641 = vpop.f32.mrf.mxu0
      %7642 = vmatprep.mubr.f32.mxu0 0.0
      %7643 = vmatmul.mubr.f32.gmra.mxu0 %v7452
      %v7644 = vpop.f32.mrf.mxu0
      %v7645 = vadd.f32 0.0, %v7644
      %v7646 = vpop.f32.mrf.mxu0
      %7647 = vmatprep.mubr.f32.mxu0 0.0
      %7648 = vmatmul.mubr.f32.gmra.mxu0 %v7455
      %v7649 = vpop.f32.mrf.mxu0
      %v7650 = vadd.f32 0.0, %v7649
      %v7651 = vpop.f32.mrf.mxu0
      %7652 = vmatprep.mubr.f32.mxu0 0.0
      %7653 = vmatmul.mubr.f32.gmra.mxu0 %v7458
      %v7654 = vpop.f32.mrf.mxu0
      %v7655 = vadd.f32 0.0, %v7654
      %v7656 = vpop.f32.mrf.mxu0
      %7657 = vmatprep.mubr.f32.mxu0 0.0
      %7658 = vmatmul.mubr.f32.gmra.mxu0 %v7461
      %v7659 = vpop.f32.mrf.mxu0
      %v7660 = vadd.f32 0.0, %v7659
      %v7661 = vpop.f32.mrf.mxu0
      %7662 = vmatprep.mubr.f32.mxu0 0.0
      %7663 = vmatmul.mubr.f32.gmra.mxu0 %v7464
      %v7664 = vpop.f32.mrf.mxu0
      %v7665 = vadd.f32 0.0, %v7664
      %v7666 = vpop.f32.mrf.mxu0
      %7667 = vmatprep.mubr.f32.mxu0 0.0
      %7668 = vmatmul.mubr.f32.gmra.mxu0 %v7467
      %v7669 = vpop.f32.mrf.mxu0
      %v7670 = vadd.f32 0.0, %v7669
      %v7671 = vpop.f32.mrf.mxu0
      %7672 = vmatprep.mubr.f32.mxu0 0.0
      %7673 = vmatmul.mubr.f32.gmra.mxu0 %v7470
      %v7674 = vpop.f32.mrf.mxu0
      %v7675 = vadd.f32 0.0, %v7674
      %v7676 = vpop.f32.mrf.mxu0
      %7677 = vmatprep.mubr.f32.mxu0 0.0
      %7678 = vmatmul.mubr.f32.gmra.mxu0 %v7473
      %v7679 = vpop.f32.mrf.mxu0
      %v7680 = vadd.f32 0.0, %v7679
      %v7681 = vpop.f32.mrf.mxu0
      %7682 = vmatprep.mubr.f32.mxu0 0.0
      %7683 = vmatmul.mubr.f32.gmra.mxu0 %v7476
      %v7684 = vpop.f32.mrf.mxu0
      %v7685 = vadd.f32 0.0, %v7684
      %v7686 = vpop.f32.mrf.mxu0
      %7687 = vmatprep.mubr.f32.mxu0 0.0
      %7688 = vmatmul.mubr.f32.gmra.mxu0 %v7479
      %v7689 = vpop.f32.mrf.mxu0
      %v7690 = vadd.f32 0.0, %v7689
      %v7691 = vpop.f32.mrf.mxu0
      %7692 = vmatprep.mubr.f32.mxu0 0.0
      %7693 = vmatmul.mubr.f32.gmra.mxu0 %v7482
      %v7694 = vpop.f32.mrf.mxu0
      %v7695 = vadd.f32 0.0, %v7694
      %v7696 = vpop.f32.mrf.mxu0
      %7697 = vmatprep.mubr.f32.mxu0 0.0
      %7698 = vmatmul.mubr.f32.gmra.mxu0 %v7485
      %v7699 = vpop.f32.mrf.mxu0
      %v7700 = vadd.f32 0.0, %v7699
      %v7701 = vpop.f32.mrf.mxu0
      %7702 = vmatprep.mubr.f32.mxu0 0.0
      %7703 = vmatmul.mubr.f32.gmra.mxu0 %v7488
      %v7704 = vpop.f32.mrf.mxu0
      %v7705 = vadd.f32 0.0, %v7704
      %v7706 = vpop.f32.mrf.mxu0
      %7707 = vmatprep.mubr.f32.mxu0 0.0
      %7708 = vmatmul.mubr.f32.gmra.mxu0 %v7491
      %v7709 = vpop.f32.mrf.mxu0
      %v7710 = vadd.f32 0.0, %v7709
      %v7711 = vpop.f32.mrf.mxu0
      %7712 = vmatprep.mubr.f32.mxu0 0.0
      %7713 = vmatmul.mubr.f32.gmra.mxu0 %v7494
      %v7714 = vpop.f32.mrf.mxu0
      %v7715 = vadd.f32 0.0, %v7714
      %v7716 = vpop.f32.mrf.mxu0
      %7717 = vmatprep.mubr.f32.mxu0 0.0
      %7718 = vmatmul.mubr.f32.gmra.mxu0 %v7497
      %v7719 = vpop.f32.mrf.mxu0
      %v7720 = vadd.f32 0.0, %v7719
      %v7721 = vpop.f32.mrf.mxu0
      %7722 = vmatprep.mubr.f32.mxu0 0.0
      %7723 = vmatmul.mubr.f32.gmra.mxu0 %v7500
      %v7724 = vpop.f32.mrf.mxu0
      %v7725 = vadd.f32 0.0, %v7724
      %v7726 = vpop.f32.mrf.mxu0
      %7727 = vmatprep.mubr.f32.mxu0 0.0
      %7728 = vmatmul.mubr.f32.gmra.mxu0 %v7503
      %v7729 = vpop.f32.mrf.mxu0
      %v7730 = vadd.f32 0.0, %v7729
      %v7731 = vpop.f32.mrf.mxu0
      %7732 = vmatprep.mubr.f32.mxu0 0.0
      %7733 = vmatmul.mubr.f32.gmra.mxu0 %v7506
      %v7734 = vpop.f32.mrf.mxu0
      %v7735 = vadd.f32 0.0, %v7734
      %v7736 = vpop.f32.mrf.mxu0
      %7737 = vmatprep.mubr.f32.mxu0 0.0
      %7738 = vmatmul.mubr.f32.gmra.mxu0 %v7509
      %v7739 = vpop.f32.mrf.mxu0
      %v7740 = vadd.f32 0.0, %v7739
      %v7741 = vpop.f32.mrf.mxu0
      %7742 = vmatprep.mubr.f32.mxu0 0.0
      %7743 = vmatmul.mubr.f32.gmra.mxu0 %v7512
      %v7744 = vpop.f32.mrf.mxu0
      %v7745 = vadd.f32 0.0, %v7744
      %v7746 = vpop.f32.mrf.mxu0
      %7747 = vmatprep.mubr.f32.mxu0 0.0
      %7748 = vmatmul.mubr.f32.gmra.mxu0 %v7515
      %v7749 = vpop.f32.mrf.mxu0
      %v7750 = vadd.f32 0.0, %v7749
      %v7751 = vpop.f32.mrf.mxu0
      %7752 = vmatprep.mubr.f32.mxu0 0.0
      %7753 = vmatmul.mubr.f32.gmra.mxu0 %v7518
      %v7754 = vpop.f32.mrf.mxu0
      %v7755 = vadd.f32 0.0, %v7754
      %v7756 = vpop.f32.mrf.mxu0
      %7757 = vmatprep.mubr.f32.mxu0 0.0
      %7758 = vmatmul.mubr.f32.gmra.mxu0 %v7521
      %v7759 = vpop.f32.mrf.mxu0
      %v7760 = vadd.f32 0.0, %v7759
      %v7761 = vpop.f32.mrf.mxu0
      %7762 = vmatprep.mubr.f32.mxu0 0.0
      %7763 = vmatmul.mubr.f32.gmra.mxu0 %v7524
      %v7764 = vpop.f32.mrf.mxu0
      %v7765 = vadd.f32 0.0, %v7764
      %v7766 = vpop.f32.mrf.mxu0
      %7767 = vmatprep.mubr.f32.mxu0 0.0
      %7768 = vmatmul.mubr.f32.gmra.mxu0 %v7527
      %v7769 = vpop.f32.mrf.mxu0
      %v7770 = vadd.f32 0.0, %v7769
      %v7771 = vpop.f32.mrf.mxu0
      %7772 = vmatprep.mubr.f32.mxu0 0.0
      %7773 = vmatmul.mubr.f32.gmra.mxu0 %v7530
      %v7774 = vpop.f32.mrf.mxu0
      %v7775 = vadd.f32 0.0, %v7774
      %v7776 = vpop.f32.mrf.mxu0
      %7777 = vmatprep.mubr.f32.mxu0 0.0
      %7778 = vmatmul.mubr.f32.gmra.mxu0 %v7533
      %v7779 = vpop.f32.mrf.mxu0
      %v7780 = vadd.f32 0.0, %v7779
      %v7781 = vpop.f32.mrf.mxu0
      %7782 = vmatprep.mubr.f32.mxu0 0.0
      %7783 = vmatmul.mubr.f32.gmra.mxu0 %v7536
      %v7784 = vpop.f32.mrf.mxu0
      %v7785 = vadd.f32 0.0, %v7784
      %v7786 = vpop.f32.mrf.mxu0
      %7787 = vmatprep.mubr.f32.mxu0 0.0
      %7788 = vmatmul.mubr.f32.gmra.mxu0 %v7539
      %v7789 = vpop.f32.mrf.mxu0
      %v7790 = vadd.f32 0.0, %v7789
      %v7791 = vpop.f32.mrf.mxu0
      %7792 = vmatprep.mubr.f32.mxu0 0.0
      %7793 = vmatmul.mubr.f32.gmra.mxu0 %v7542
      %v7794 = vpop.f32.mrf.mxu0
      %v7795 = vadd.f32 0.0, %v7794
      %v7796 = vpop.f32.mrf.mxu0
      %7797 = vmatprep.mubr.f32.mxu0 0.0
      %7798 = vmatmul.mubr.f32.gmra.mxu0 %v7545
      %v7799 = vpop.f32.mrf.mxu0
      %v7800 = vadd.f32 0.0, %v7799
      %v7801 = vpop.f32.mrf.mxu0
      %7802 = vmatprep.mubr.f32.mxu0 0.0
      %7803 = vmatmul.mubr.f32.gmra.mxu0 %v7548
      %v7804 = vpop.f32.mrf.mxu0
      %v7805 = vadd.f32 0.0, %v7804
      %v7806 = vpop.f32.mrf.mxu0
      %7807 = vmatprep.mubr.f32.mxu0 0.0
      %7808 = vmatmul.mubr.f32.gmra.mxu0 %v7551
      %v7809 = vpop.f32.mrf.mxu0
      %v7810 = vadd.f32 0.0, %v7809
      %v7811 = vpop.f32.mrf.mxu0
      %7812 = vmatprep.mubr.f32.mxu0 0.0
      %7813 = vmatmul.mubr.f32.gmra.mxu0 %v7554
      %v7814 = vpop.f32.mrf.mxu0
      %v7815 = vadd.f32 0.0, %v7814
      %v7816 = vpop.f32.mrf.mxu0
      %7817 = vmatprep.mubr.f32.mxu0 0.0
      %7818 = vmatmul.mubr.f32.gmra.mxu0 %v7557
      %v7819 = vpop.f32.mrf.mxu0
      %v7820 = vadd.f32 0.0, %v7819
      %v7821 = vpop.f32.mrf.mxu0
      %7822 = vmatprep.mubr.f32.mxu0 0.0
      %7823 = vmatmul.mubr.f32.gmra.mxu0 %v7560
      %v7824 = vpop.f32.mrf.mxu0
      %v7825 = vadd.f32 0.0, %v7824
      %v7826 = vpop.f32.mrf.mxu0
      %7827 = vmatprep.mubr.f32.mxu0 0.0
      %7828 = vmatmul.mubr.f32.gmra.mxu0 %v7563
      %v7829 = vpop.f32.mrf.mxu0
      %v7830 = vadd.f32 0.0, %v7829
      %v7831 = vpop.f32.mrf.mxu0
      %7832 = vmatprep.mubr.f32.mxu0 0.0
      %7833 = vmatmul.mubr.f32.gmra.mxu0 %v7566
      %v7834 = vpop.f32.mrf.mxu0
      %v7835 = vadd.f32 0.0, %v7834
      %v7836 = vpop.f32.mrf.mxu0
      %7837 = vdwg.mxu0
      %v7838 = vadd.f32 %v7354, %v7635
      %v7839 = vadd.f32 %v7355, %v7640
      %v7840 = vadd.f32 %v7356, %v7645
      %v7841 = vadd.f32 %v7357, %v7650
      %v7842 = vadd.f32 %v7358, %v7655
      %v7843 = vadd.f32 %v7359, %v7660
      %v7844 = vadd.f32 %v7360, %v7665
      %v7845 = vadd.f32 %v7361, %v7670
      %v7846 = vadd.f32 %v7362, %v7675
      %v7847 = vadd.f32 %v7363, %v7680
      %v7848 = vadd.f32 %v7364, %v7685
      %v7849 = vadd.f32 %v7365, %v7690
      %v7850 = vadd.f32 %v7366, %v7695
      %v7851 = vadd.f32 %v7367, %v7700
      %v7852 = vadd.f32 %v7368, %v7705
      %v7853 = vadd.f32 %v7369, %v7710
      %v7854 = vadd.f32 %v7370, %v7715
      %v7855 = vadd.f32 %v7371, %v7720
      %v7856 = vadd.f32 %v7372, %v7725
      %v7857 = vadd.f32 %v7373, %v7730
      %v7858 = vadd.f32 %v7374, %v7735
      %v7859 = vadd.f32 %v7375, %v7740
      %v7860 = vadd.f32 %v7376, %v7745
      %v7861 = vadd.f32 %v7377, %v7750
      %v7862 = vadd.f32 %v7378, %v7755
      %v7863 = vadd.f32 %v7379, %v7760
      %v7864 = vadd.f32 %v7380, %v7765
      %v7865 = vadd.f32 %v7381, %v7770
      %v7866 = vadd.f32 %v7382, %v7775
      %v7867 = vadd.f32 %v7383, %v7780
      %v7868 = vadd.f32 %v7384, %v7785
      %v7869 = vadd.f32 %v7385, %v7790
      %v7870 = vadd.f32 %v7386, %v7795
      %v7871 = vadd.f32 %v7387, %v7800
      %v7872 = vadd.f32 %v7388, %v7805
      %v7873 = vadd.f32 %v7389, %v7810
      %v7874 = vadd.f32 %v7390, %v7815
      %v7875 = vadd.f32 %v7391, %v7820
      %v7876 = vadd.f32 %v7392, %v7825
      %v7877 = vadd.f32 %v7393, %v7830
      %v7878 = vadd.f32 %v7394, %v7835
      %v7879 = vld [vmem:[#allocation3 + $0x19] sm:$0xff]
      %v7880 = vld [vmem:[#allocation3 + $0x21] sm:$0xff]
      %v7881 = vld [vmem:[#allocation3 + $0x29] sm:$0xff]
      %v7882 = vld [vmem:[#allocation3 + $0x31] sm:$0xff]
      %v7883 = vld [vmem:[#allocation3 + $0x39] sm:$0xff]
      %v7884 = vld [vmem:[#allocation3 + $0x41] sm:$0xff]
      %v7885 = vld [vmem:[#allocation3 + $0x49] sm:$0xff]
      %v7886 = vld [vmem:[#allocation3 + $0x51] sm:$0xff]
      %v7887 = vld [vmem:[#allocation3 + $0x59] sm:$0xff]
      %v7888 = vld [vmem:[#allocation3 + $0x61] sm:$0xff]
      %v7889 = vld [vmem:[#allocation3 + $0x69] sm:$0xff]
      %v7890 = vld [vmem:[#allocation3 + $0x71] sm:$0xff]
      %v7891 = vld [vmem:[#allocation3 + $0x79] sm:$0xff]
      %v7892 = vld [vmem:[#allocation3 + $0x81] sm:$0xff]
      %v7893 = vld [vmem:[#allocation3 + $0x89] sm:$0xff]
      %v7894 = vld [vmem:[#allocation3 + $0x91] sm:$0xff]
      %v7895 = vld [vmem:[#allocation3 + $0x99] sm:$0xff]
      %v7896 = vld [vmem:[#allocation3 + $0xa1] sm:$0xff]
      %v7897 = vld [vmem:[#allocation3 + $0xa9] sm:$0xff]
      %v7898 = vld [vmem:[#allocation3 + $0xb1] sm:$0xff]
      %v7899 = vld [vmem:[#allocation3 + $0xb9] sm:$0xff]
      %v7900 = vld [vmem:[#allocation3 + $0xc1] sm:$0xff]
      %v7901 = vld [vmem:[#allocation3 + $0xc9] sm:$0xff]
      %v7902 = vld [vmem:[#allocation3 + $0xd1] sm:$0xff]
      %v7903 = vld [vmem:[#allocation3 + $0xd9] sm:$0xff]
      %v7904 = vld [vmem:[#allocation3 + $0xe1] sm:$0xff]
      %v7905 = vld [vmem:[#allocation3 + $0xe9] sm:$0xff]
      %v7906 = vld [vmem:[#allocation3 + $0xf1] sm:$0xff]
      %v7907 = vld [vmem:[#allocation3 + $0xf9] sm:$0xff]
      %v7908 = vld [vmem:[#allocation3 + $0x101] sm:$0xff]
      %v7909 = vld [vmem:[#allocation3 + $0x109] sm:$0xff]
      %v7910 = vld [vmem:[#allocation3 + $0x111] sm:$0xff]
      %v7911 = vld [vmem:[#allocation3 + $0x119] sm:$0xff]
      %v7912 = vld [vmem:[#allocation3 + $0x121] sm:$0xff]
      %v7913 = vld [vmem:[#allocation3 + $0x129] sm:$0xff]
      %v7914 = vld [vmem:[#allocation3 + $0x131] sm:$0xff]
      %v7915 = vld [vmem:[#allocation3 + $0x139] sm:$0xff]
      %v7916 = vld [vmem:[#allocation3 + $0x141] sm:$0xff]
      %v7917 = vld [vmem:[#allocation3 + $0x149] sm:$0xff]
      %v7918 = vld [vmem:[#allocation3 + $0x151] sm:$0xff]
      %v7919 = vld [vmem:[#allocation3 + $0x159] sm:$0xf]
      %s7920 = scalar_lea.vmem %s3, 320
      %v7921 = vld [vmem:[%s7920] sm:$0xff]
      %v7922 = vld [vmem:[%s7920 + $0x8] sm:$0xff]
      %v7923 = vld [vmem:[%s7920 + $0x10] sm:$0xff]
      %v7924 = vld [vmem:[%s7920 + $0x18] sm:$0xff]
      %v7925 = vld [vmem:[%s7920 + $0x20] sm:$0xff]
      %v7926 = vld [vmem:[%s7920 + $0x28] sm:$0xff]
      %v7927 = vld [vmem:[%s7920 + $0x30] sm:$0xff]
      %v7928 = vld [vmem:[%s7920 + $0x38] sm:$0xff]
      %v7930 = vsel %vm293, %v7879, 0
      %v7933 = vsel %vm293, %v7880, 0
      %v7936 = vsel %vm293, %v7881, 0
      %v7939 = vsel %vm293, %v7882, 0
      %v7942 = vsel %vm293, %v7883, 0
      %v7945 = vsel %vm293, %v7884, 0
      %v7948 = vsel %vm293, %v7885, 0
      %v7951 = vsel %vm293, %v7886, 0
      %v7954 = vsel %vm293, %v7887, 0
      %v7957 = vsel %vm293, %v7888, 0
      %v7960 = vsel %vm293, %v7889, 0
      %v7963 = vsel %vm293, %v7890, 0
      %v7966 = vsel %vm293, %v7891, 0
      %v7969 = vsel %vm293, %v7892, 0
      %v7972 = vsel %vm293, %v7893, 0
      %v7975 = vsel %vm293, %v7894, 0
      %v7978 = vsel %vm293, %v7895, 0
      %v7981 = vsel %vm293, %v7896, 0
      %v7984 = vsel %vm293, %v7897, 0
      %v7987 = vsel %vm293, %v7898, 0
      %v7990 = vsel %vm293, %v7899, 0
      %v7993 = vsel %vm293, %v7900, 0
      %v7996 = vsel %vm293, %v7901, 0
      %v7999 = vsel %vm293, %v7902, 0
      %v8002 = vsel %vm293, %v7903, 0
      %v8005 = vsel %vm293, %v7904, 0
      %v8008 = vsel %vm293, %v7905, 0
      %v8011 = vsel %vm293, %v7906, 0
      %v8014 = vsel %vm293, %v7907, 0
      %v8017 = vsel %vm293, %v7908, 0
      %v8020 = vsel %vm293, %v7909, 0
      %v8023 = vsel %vm293, %v7910, 0
      %v8026 = vsel %vm293, %v7911, 0
      %v8029 = vsel %vm293, %v7912, 0
      %v8032 = vsel %vm293, %v7913, 0
      %v8035 = vsel %vm293, %v7914, 0
      %v8038 = vsel %vm293, %v7915, 0
      %v8041 = vsel %vm293, %v7916, 0
      %v8044 = vsel %vm293, %v7917, 0
      %v8047 = vsel %vm293, %v7918, 0
      %v8050 = vsel %vm293, %v7919, 0
      %8052 = vmatprep.subr.mxu0 0.0
      %8053 = vmatpush1.msra.mxu0 0.0
      %8054 = vmatprep.subr.mxu0 0.0
      %8055 = vmatpush1.msra.mxu0 0.0
      %8056 = vmatprep.subr.mxu0 0.0
      %8057 = vmatpush1.msra.mxu0 0.0
      %8058 = vmatprep.subr.mxu0 0.0
      %8059 = vmatpush1.msra.mxu0 0.0
      %8060 = vmatprep.subr.mxu0 0.0
      %8061 = vmatpush1.msra.mxu0 0.0
      %8062 = vmatprep.subr.mxu0 0.0
      %8063 = vmatpush1.msra.mxu0 0.0
      %8064 = vmatprep.subr.mxu0 0.0
      %8065 = vmatpush1.msra.mxu0 0.0
      %8066 = vmatprep.subr.mxu0 0.0
      %8067 = vmatpush1.msra.mxu0 0.0
      %8068 = vmatprep.subr.mxu0 0.0
      %8069 = vmatpush1.msra.mxu0 %v7928
      %8070 = vmatprep.subr.mxu0 0.0
      %8071 = vmatpush1.msra.mxu0 %v7927
      %8072 = vmatprep.subr.mxu0 0.0
      %8073 = vmatpush1.msra.mxu0 %v7926
      %8074 = vmatprep.subr.mxu0 0.0
      %8075 = vmatpush1.msra.mxu0 %v7925
      %8076 = vmatprep.subr.mxu0 0.0
      %8077 = vmatpush1.msra.mxu0 %v7924
      %8078 = vmatprep.subr.mxu0 0.0
      %8079 = vmatpush1.msra.mxu0 %v7923
      %8080 = vmatprep.subr.mxu0 0.0
      %8081 = vmatpush1.msra.mxu0 %v7922
      %8082 = vmatprep.subr.mxu0 0.0
      %8083 = vmatpush1.msra.mxu0 %v7921
      %8084 = vmatprep.subr.mxu0 0.0
      %8085 = vmatpush2.msra.mxu0 0.0
      %8086 = vmatprep.subr.mxu0 0.0
      %8087 = vmatpush2.msra.mxu0 0.0
      %8088 = vmatprep.subr.mxu0 0.0
      %8089 = vmatpush2.msra.mxu0 0.0
      %8090 = vmatprep.subr.mxu0 0.0
      %8091 = vmatpush2.msra.mxu0 0.0
      %8092 = vmatprep.subr.mxu0 0.0
      %8093 = vmatpush2.msra.mxu0 0.0
      %8094 = vmatprep.subr.mxu0 0.0
      %8095 = vmatpush2.msra.mxu0 0.0
      %8096 = vmatprep.subr.mxu0 0.0
      %8097 = vmatpush2.msra.mxu0 0.0
      %8098 = vmatprep.subr.mxu0 0.0
      %8099 = vmatpush2.msra.mxu0 0.0
      %8100 = vmatprep.subr.mxu0 0.0
      %8101 = vmatpush2.msra.mxu0 0.0
      %8102 = vmatprep.subr.mxu0 0.0
      %8103 = vmatpush2.msra.mxu0 0.0
      %8104 = vmatprep.subr.mxu0 0.0
      %8105 = vmatpush2.msra.mxu0 0.0
      %8106 = vmatprep.subr.mxu0 0.0
      %8107 = vmatpush2.msra.mxu0 0.0
      %8108 = vmatprep.subr.mxu0 0.0
      %8109 = vmatpush2.msra.mxu0 0.0
      %8110 = vmatprep.subr.mxu0 0.0
      %8111 = vmatpush2.msra.mxu0 0.0
      %8112 = vmatprep.subr.mxu0 0.0
      %8113 = vmatpush2.msra.mxu0 0.0
      %8114 = vmatprep.subr.mxu0 0.0
      %8115 = vmatpush2.msra.mxu0 0.0
      %8116 = vmatprep.mubr.f32.mxu0 0.0
      %8117 = vmatmul.mubr.f32.gmra.mxu0 %v7930
      %v8118 = vpop.f32.mrf.mxu0
      %v8119 = vadd.f32 0.0, %v8118
      %v8120 = vpop.f32.mrf.mxu0
      %8121 = vmatprep.mubr.f32.mxu0 0.0
      %8122 = vmatmul.mubr.f32.gmra.mxu0 %v7933
      %v8123 = vpop.f32.mrf.mxu0
      %v8124 = vadd.f32 0.0, %v8123
      %v8125 = vpop.f32.mrf.mxu0
      %8126 = vmatprep.mubr.f32.mxu0 0.0
      %8127 = vmatmul.mubr.f32.gmra.mxu0 %v7936
      %v8128 = vpop.f32.mrf.mxu0
      %v8129 = vadd.f32 0.0, %v8128
      %v8130 = vpop.f32.mrf.mxu0
      %8131 = vmatprep.mubr.f32.mxu0 0.0
      %8132 = vmatmul.mubr.f32.gmra.mxu0 %v7939
      %v8133 = vpop.f32.mrf.mxu0
      %v8134 = vadd.f32 0.0, %v8133
      %v8135 = vpop.f32.mrf.mxu0
      %8136 = vmatprep.mubr.f32.mxu0 0.0
      %8137 = vmatmul.mubr.f32.gmra.mxu0 %v7942
      %v8138 = vpop.f32.mrf.mxu0
      %v8139 = vadd.f32 0.0, %v8138
      %v8140 = vpop.f32.mrf.mxu0
      %8141 = vmatprep.mubr.f32.mxu0 0.0
      %8142 = vmatmul.mubr.f32.gmra.mxu0 %v7945
      %v8143 = vpop.f32.mrf.mxu0
      %v8144 = vadd.f32 0.0, %v8143
      %v8145 = vpop.f32.mrf.mxu0
      %8146 = vmatprep.mubr.f32.mxu0 0.0
      %8147 = vmatmul.mubr.f32.gmra.mxu0 %v7948
      %v8148 = vpop.f32.mrf.mxu0
      %v8149 = vadd.f32 0.0, %v8148
      %v8150 = vpop.f32.mrf.mxu0
      %8151 = vmatprep.mubr.f32.mxu0 0.0
      %8152 = vmatmul.mubr.f32.gmra.mxu0 %v7951
      %v8153 = vpop.f32.mrf.mxu0
      %v8154 = vadd.f32 0.0, %v8153
      %v8155 = vpop.f32.mrf.mxu0
      %8156 = vmatprep.mubr.f32.mxu0 0.0
      %8157 = vmatmul.mubr.f32.gmra.mxu0 %v7954
      %v8158 = vpop.f32.mrf.mxu0
      %v8159 = vadd.f32 0.0, %v8158
      %v8160 = vpop.f32.mrf.mxu0
      %8161 = vmatprep.mubr.f32.mxu0 0.0
      %8162 = vmatmul.mubr.f32.gmra.mxu0 %v7957
      %v8163 = vpop.f32.mrf.mxu0
      %v8164 = vadd.f32 0.0, %v8163
      %v8165 = vpop.f32.mrf.mxu0
      %8166 = vmatprep.mubr.f32.mxu0 0.0
      %8167 = vmatmul.mubr.f32.gmra.mxu0 %v7960
      %v8168 = vpop.f32.mrf.mxu0
      %v8169 = vadd.f32 0.0, %v8168
      %v8170 = vpop.f32.mrf.mxu0
      %8171 = vmatprep.mubr.f32.mxu0 0.0
      %8172 = vmatmul.mubr.f32.gmra.mxu0 %v7963
      %v8173 = vpop.f32.mrf.mxu0
      %v8174 = vadd.f32 0.0, %v8173
      %v8175 = vpop.f32.mrf.mxu0
      %8176 = vmatprep.mubr.f32.mxu0 0.0
      %8177 = vmatmul.mubr.f32.gmra.mxu0 %v7966
      %v8178 = vpop.f32.mrf.mxu0
      %v8179 = vadd.f32 0.0, %v8178
      %v8180 = vpop.f32.mrf.mxu0
      %8181 = vmatprep.mubr.f32.mxu0 0.0
      %8182 = vmatmul.mubr.f32.gmra.mxu0 %v7969
      %v8183 = vpop.f32.mrf.mxu0
      %v8184 = vadd.f32 0.0, %v8183
      %v8185 = vpop.f32.mrf.mxu0
      %8186 = vmatprep.mubr.f32.mxu0 0.0
      %8187 = vmatmul.mubr.f32.gmra.mxu0 %v7972
      %v8188 = vpop.f32.mrf.mxu0
      %v8189 = vadd.f32 0.0, %v8188
      %v8190 = vpop.f32.mrf.mxu0
      %8191 = vmatprep.mubr.f32.mxu0 0.0
      %8192 = vmatmul.mubr.f32.gmra.mxu0 %v7975
      %v8193 = vpop.f32.mrf.mxu0
      %v8194 = vadd.f32 0.0, %v8193
      %v8195 = vpop.f32.mrf.mxu0
      %8196 = vmatprep.mubr.f32.mxu0 0.0
      %8197 = vmatmul.mubr.f32.gmra.mxu0 %v7978
      %v8198 = vpop.f32.mrf.mxu0
      %v8199 = vadd.f32 0.0, %v8198
      %v8200 = vpop.f32.mrf.mxu0
      %8201 = vmatprep.mubr.f32.mxu0 0.0
      %8202 = vmatmul.mubr.f32.gmra.mxu0 %v7981
      %v8203 = vpop.f32.mrf.mxu0
      %v8204 = vadd.f32 0.0, %v8203
      %v8205 = vpop.f32.mrf.mxu0
      %8206 = vmatprep.mubr.f32.mxu0 0.0
      %8207 = vmatmul.mubr.f32.gmra.mxu0 %v7984
      %v8208 = vpop.f32.mrf.mxu0
      %v8209 = vadd.f32 0.0, %v8208
      %v8210 = vpop.f32.mrf.mxu0
      %8211 = vmatprep.mubr.f32.mxu0 0.0
      %8212 = vmatmul.mubr.f32.gmra.mxu0 %v7987
      %v8213 = vpop.f32.mrf.mxu0
      %v8214 = vadd.f32 0.0, %v8213
      %v8215 = vpop.f32.mrf.mxu0
      %8216 = vmatprep.mubr.f32.mxu0 0.0
      %8217 = vmatmul.mubr.f32.gmra.mxu0 %v7990
      %v8218 = vpop.f32.mrf.mxu0
      %v8219 = vadd.f32 0.0, %v8218
      %v8220 = vpop.f32.mrf.mxu0
      %8221 = vmatprep.mubr.f32.mxu0 0.0
      %8222 = vmatmul.mubr.f32.gmra.mxu0 %v7993
      %v8223 = vpop.f32.mrf.mxu0
      %v8224 = vadd.f32 0.0, %v8223
      %v8225 = vpop.f32.mrf.mxu0
      %8226 = vmatprep.mubr.f32.mxu0 0.0
      %8227 = vmatmul.mubr.f32.gmra.mxu0 %v7996
      %v8228 = vpop.f32.mrf.mxu0
      %v8229 = vadd.f32 0.0, %v8228
      %v8230 = vpop.f32.mrf.mxu0
      %8231 = vmatprep.mubr.f32.mxu0 0.0
      %8232 = vmatmul.mubr.f32.gmra.mxu0 %v7999
      %v8233 = vpop.f32.mrf.mxu0
      %v8234 = vadd.f32 0.0, %v8233
      %v8235 = vpop.f32.mrf.mxu0
      %8236 = vmatprep.mubr.f32.mxu0 0.0
      %8237 = vmatmul.mubr.f32.gmra.mxu0 %v8002
      %v8238 = vpop.f32.mrf.mxu0
      %v8239 = vadd.f32 0.0, %v8238
      %v8240 = vpop.f32.mrf.mxu0
      %8241 = vmatprep.mubr.f32.mxu0 0.0
      %8242 = vmatmul.mubr.f32.gmra.mxu0 %v8005
      %v8243 = vpop.f32.mrf.mxu0
      %v8244 = vadd.f32 0.0, %v8243
      %v8245 = vpop.f32.mrf.mxu0
      %8246 = vmatprep.mubr.f32.mxu0 0.0
      %8247 = vmatmul.mubr.f32.gmra.mxu0 %v8008
      %v8248 = vpop.f32.mrf.mxu0
      %v8249 = vadd.f32 0.0, %v8248
      %v8250 = vpop.f32.mrf.mxu0
      %8251 = vmatprep.mubr.f32.mxu0 0.0
      %8252 = vmatmul.mubr.f32.gmra.mxu0 %v8011
      %v8253 = vpop.f32.mrf.mxu0
      %v8254 = vadd.f32 0.0, %v8253
      %v8255 = vpop.f32.mrf.mxu0
      %8256 = vmatprep.mubr.f32.mxu0 0.0
      %8257 = vmatmul.mubr.f32.gmra.mxu0 %v8014
      %v8258 = vpop.f32.mrf.mxu0
      %v8259 = vadd.f32 0.0, %v8258
      %v8260 = vpop.f32.mrf.mxu0
      %8261 = vmatprep.mubr.f32.mxu0 0.0
      %8262 = vmatmul.mubr.f32.gmra.mxu0 %v8017
      %v8263 = vpop.f32.mrf.mxu0
      %v8264 = vadd.f32 0.0, %v8263
      %v8265 = vpop.f32.mrf.mxu0
      %8266 = vmatprep.mubr.f32.mxu0 0.0
      %8267 = vmatmul.mubr.f32.gmra.mxu0 %v8020
      %v8268 = vpop.f32.mrf.mxu0
      %v8269 = vadd.f32 0.0, %v8268
      %v8270 = vpop.f32.mrf.mxu0
      %8271 = vmatprep.mubr.f32.mxu0 0.0
      %8272 = vmatmul.mubr.f32.gmra.mxu0 %v8023
      %v8273 = vpop.f32.mrf.mxu0
      %v8274 = vadd.f32 0.0, %v8273
      %v8275 = vpop.f32.mrf.mxu0
      %8276 = vmatprep.mubr.f32.mxu0 0.0
      %8277 = vmatmul.mubr.f32.gmra.mxu0 %v8026
      %v8278 = vpop.f32.mrf.mxu0
      %v8279 = vadd.f32 0.0, %v8278
      %v8280 = vpop.f32.mrf.mxu0
      %8281 = vmatprep.mubr.f32.mxu0 0.0
      %8282 = vmatmul.mubr.f32.gmra.mxu0 %v8029
      %v8283 = vpop.f32.mrf.mxu0
      %v8284 = vadd.f32 0.0, %v8283
      %v8285 = vpop.f32.mrf.mxu0
      %8286 = vmatprep.mubr.f32.mxu0 0.0
      %8287 = vmatmul.mubr.f32.gmra.mxu0 %v8032
      %v8288 = vpop.f32.mrf.mxu0
      %v8289 = vadd.f32 0.0, %v8288
      %v8290 = vpop.f32.mrf.mxu0
      %8291 = vmatprep.mubr.f32.mxu0 0.0
      %8292 = vmatmul.mubr.f32.gmra.mxu0 %v8035
      %v8293 = vpop.f32.mrf.mxu0
      %v8294 = vadd.f32 0.0, %v8293
      %v8295 = vpop.f32.mrf.mxu0
      %8296 = vmatprep.mubr.f32.mxu0 0.0
      %8297 = vmatmul.mubr.f32.gmra.mxu0 %v8038
      %v8298 = vpop.f32.mrf.mxu0
      %v8299 = vadd.f32 0.0, %v8298
      %v8300 = vpop.f32.mrf.mxu0
      %8301 = vmatprep.mubr.f32.mxu0 0.0
      %8302 = vmatmul.mubr.f32.gmra.mxu0 %v8041
      %v8303 = vpop.f32.mrf.mxu0
      %v8304 = vadd.f32 0.0, %v8303
      %v8305 = vpop.f32.mrf.mxu0
      %8306 = vmatprep.mubr.f32.mxu0 0.0
      %8307 = vmatmul.mubr.f32.gmra.mxu0 %v8044
      %v8308 = vpop.f32.mrf.mxu0
      %v8309 = vadd.f32 0.0, %v8308
      %v8310 = vpop.f32.mrf.mxu0
      %8311 = vmatprep.mubr.f32.mxu0 0.0
      %8312 = vmatmul.mubr.f32.gmra.mxu0 %v8047
      %v8313 = vpop.f32.mrf.mxu0
      %v8314 = vadd.f32 0.0, %v8313
      %v8315 = vpop.f32.mrf.mxu0
      %8316 = vmatprep.mubr.f32.mxu0 0.0
      %8317 = vmatmul.mubr.f32.gmra.mxu0 %v8050
      %v8318 = vpop.f32.mrf.mxu0
      %v8319 = vadd.f32 0.0, %v8318
      %v8320 = vpop.f32.mrf.mxu0
      %8321 = vdwg.mxu0
      %v8322 = vadd.f32 %v7838, %v8119
      %v8323 = vadd.f32 %v7839, %v8124
      %v8324 = vadd.f32 %v7840, %v8129
      %v8325 = vadd.f32 %v7841, %v8134
      %v8326 = vadd.f32 %v7842, %v8139
      %v8327 = vadd.f32 %v7843, %v8144
      %v8328 = vadd.f32 %v7844, %v8149
      %v8329 = vadd.f32 %v7845, %v8154
      %v8330 = vadd.f32 %v7846, %v8159
      %v8331 = vadd.f32 %v7847, %v8164
      %v8332 = vadd.f32 %v7848, %v8169
      %v8333 = vadd.f32 %v7849, %v8174
      %v8334 = vadd.f32 %v7850, %v8179
      %v8335 = vadd.f32 %v7851, %v8184
      %v8336 = vadd.f32 %v7852, %v8189
      %v8337 = vadd.f32 %v7853, %v8194
      %v8338 = vadd.f32 %v7854, %v8199
      %v8339 = vadd.f32 %v7855, %v8204
      %v8340 = vadd.f32 %v7856, %v8209
      %v8341 = vadd.f32 %v7857, %v8214
      %v8342 = vadd.f32 %v7858, %v8219
      %v8343 = vadd.f32 %v7859, %v8224
      %v8344 = vadd.f32 %v7860, %v8229
      %v8345 = vadd.f32 %v7861, %v8234
      %v8346 = vadd.f32 %v7862, %v8239
      %v8347 = vadd.f32 %v7863, %v8244
      %v8348 = vadd.f32 %v7864, %v8249
      %v8349 = vadd.f32 %v7865, %v8254
      %v8350 = vadd.f32 %v7866, %v8259
      %v8351 = vadd.f32 %v7867, %v8264
      %v8352 = vadd.f32 %v7868, %v8269
      %v8353 = vadd.f32 %v7869, %v8274
      %v8354 = vadd.f32 %v7870, %v8279
      %v8355 = vadd.f32 %v7871, %v8284
      %v8356 = vadd.f32 %v7872, %v8289
      %v8357 = vadd.f32 %v7873, %v8294
      %v8358 = vadd.f32 %v7874, %v8299
      %v8359 = vadd.f32 %v7875, %v8304
      %v8360 = vadd.f32 %v7876, %v8309
      %v8361 = vadd.f32 %v7877, %v8314
      %v8362 = vadd.f32 %v7878, %v8319
      %v8363 = vld [vmem:[#allocation3 + $0x29] sm:$0xff]
      %v8364 = vld [vmem:[#allocation3 + $0x31] sm:$0xff]
      %v8365 = vld [vmem:[#allocation3 + $0x39] sm:$0xff]
      %v8366 = vld [vmem:[#allocation3 + $0x41] sm:$0xff]
      %v8367 = vld [vmem:[#allocation3 + $0x49] sm:$0xff]
      %v8368 = vld [vmem:[#allocation3 + $0x51] sm:$0xff]
      %v8369 = vld [vmem:[#allocation3 + $0x59] sm:$0xff]
      %v8370 = vld [vmem:[#allocation3 + $0x61] sm:$0xff]
      %v8371 = vld [vmem:[#allocation3 + $0x69] sm:$0xff]
      %v8372 = vld [vmem:[#allocation3 + $0x71] sm:$0xff]
      %v8373 = vld [vmem:[#allocation3 + $0x79] sm:$0xff]
      %v8374 = vld [vmem:[#allocation3 + $0x81] sm:$0xff]
      %v8375 = vld [vmem:[#allocation3 + $0x89] sm:$0xff]
      %v8376 = vld [vmem:[#allocation3 + $0x91] sm:$0xff]
      %v8377 = vld [vmem:[#allocation3 + $0x99] sm:$0xff]
      %v8378 = vld [vmem:[#allocation3 + $0xa1] sm:$0xff]
      %v8379 = vld [vmem:[#allocation3 + $0xa9] sm:$0xff]
      %v8380 = vld [vmem:[#allocation3 + $0xb1] sm:$0xff]
      %v8381 = vld [vmem:[#allocation3 + $0xb9] sm:$0xff]
      %v8382 = vld [vmem:[#allocation3 + $0xc1] sm:$0xff]
      %v8383 = vld [vmem:[#allocation3 + $0xc9] sm:$0xff]
      %v8384 = vld [vmem:[#allocation3 + $0xd1] sm:$0xff]
      %v8385 = vld [vmem:[#allocation3 + $0xd9] sm:$0xff]
      %v8386 = vld [vmem:[#allocation3 + $0xe1] sm:$0xff]
      %v8387 = vld [vmem:[#allocation3 + $0xe9] sm:$0xff]
      %v8388 = vld [vmem:[#allocation3 + $0xf1] sm:$0xff]
      %v8389 = vld [vmem:[#allocation3 + $0xf9] sm:$0xff]
      %v8390 = vld [vmem:[#allocation3 + $0x101] sm:$0xff]
      %v8391 = vld [vmem:[#allocation3 + $0x109] sm:$0xff]
      %v8392 = vld [vmem:[#allocation3 + $0x111] sm:$0xff]
      %v8393 = vld [vmem:[#allocation3 + $0x119] sm:$0xff]
      %v8394 = vld [vmem:[#allocation3 + $0x121] sm:$0xff]
      %v8395 = vld [vmem:[#allocation3 + $0x129] sm:$0xff]
      %v8396 = vld [vmem:[#allocation3 + $0x131] sm:$0xff]
      %v8397 = vld [vmem:[#allocation3 + $0x139] sm:$0xff]
      %v8398 = vld [vmem:[#allocation3 + $0x141] sm:$0xff]
      %v8399 = vld [vmem:[#allocation3 + $0x149] sm:$0xff]
      %v8400 = vld [vmem:[#allocation3 + $0x151] sm:$0xff]
      %v8401 = vld [vmem:[#allocation3 + $0x159] sm:$0xff]
      %v8402 = vld [vmem:[#allocation3 + $0x161] sm:$0xff]
      %v8403 = vld [vmem:[#allocation3 + $0x169] sm:$0xf]
      %s8404 = scalar_lea.vmem %s3, 384
      %v8405 = vld [vmem:[%s8404] sm:$0xff]
      %v8406 = vld [vmem:[%s8404 + $0x8] sm:$0xff]
      %v8407 = vld [vmem:[%s8404 + $0x10] sm:$0xff]
      %v8408 = vld [vmem:[%s8404 + $0x18] sm:$0xff]
      %v8409 = vld [vmem:[%s8404 + $0x20] sm:$0xff]
      %v8410 = vld [vmem:[%s8404 + $0x28] sm:$0xff]
      %v8411 = vld [vmem:[%s8404 + $0x30] sm:$0xff]
      %v8412 = vld [vmem:[%s8404 + $0x38] sm:$0xff]
      %v8414 = vsel %vm293, %v8363, 0
      %v8417 = vsel %vm293, %v8364, 0
      %v8420 = vsel %vm293, %v8365, 0
      %v8423 = vsel %vm293, %v8366, 0
      %v8426 = vsel %vm293, %v8367, 0
      %v8429 = vsel %vm293, %v8368, 0
      %v8432 = vsel %vm293, %v8369, 0
      %v8435 = vsel %vm293, %v8370, 0
      %v8438 = vsel %vm293, %v8371, 0
      %v8441 = vsel %vm293, %v8372, 0
      %v8444 = vsel %vm293, %v8373, 0
      %v8447 = vsel %vm293, %v8374, 0
      %v8450 = vsel %vm293, %v8375, 0
      %v8453 = vsel %vm293, %v8376, 0
      %v8456 = vsel %vm293, %v8377, 0
      %v8459 = vsel %vm293, %v8378, 0
      %v8462 = vsel %vm293, %v8379, 0
      %v8465 = vsel %vm293, %v8380, 0
      %v8468 = vsel %vm293, %v8381, 0
      %v8471 = vsel %vm293, %v8382, 0
      %v8474 = vsel %vm293, %v8383, 0
      %v8477 = vsel %vm293, %v8384, 0
      %v8480 = vsel %vm293, %v8385, 0
      %v8483 = vsel %vm293, %v8386, 0
      %v8486 = vsel %vm293, %v8387, 0
      %v8489 = vsel %vm293, %v8388, 0
      %v8492 = vsel %vm293, %v8389, 0
      %v8495 = vsel %vm293, %v8390, 0
      %v8498 = vsel %vm293, %v8391, 0
      %v8501 = vsel %vm293, %v8392, 0
      %v8504 = vsel %vm293, %v8393, 0
      %v8507 = vsel %vm293, %v8394, 0
      %v8510 = vsel %vm293, %v8395, 0
      %v8513 = vsel %vm293, %v8396, 0
      %v8516 = vsel %vm293, %v8397, 0
      %v8519 = vsel %vm293, %v8398, 0
      %v8522 = vsel %vm293, %v8399, 0
      %v8525 = vsel %vm293, %v8400, 0
      %v8528 = vsel %vm293, %v8401, 0
      %v8531 = vsel %vm293, %v8402, 0
      %v8534 = vsel %vm293, %v8403, 0
      %8536 = vmatprep.subr.mxu0 0.0
      %8537 = vmatpush1.msra.mxu0 0.0
      %8538 = vmatprep.subr.mxu0 0.0
      %8539 = vmatpush1.msra.mxu0 0.0
      %8540 = vmatprep.subr.mxu0 0.0
      %8541 = vmatpush1.msra.mxu0 0.0
      %8542 = vmatprep.subr.mxu0 0.0
      %8543 = vmatpush1.msra.mxu0 0.0
      %8544 = vmatprep.subr.mxu0 0.0
      %8545 = vmatpush1.msra.mxu0 0.0
      %8546 = vmatprep.subr.mxu0 0.0
      %8547 = vmatpush1.msra.mxu0 0.0
      %8548 = vmatprep.subr.mxu0 0.0
      %8549 = vmatpush1.msra.mxu0 0.0
      %8550 = vmatprep.subr.mxu0 0.0
      %8551 = vmatpush1.msra.mxu0 0.0
      %8552 = vmatprep.subr.mxu0 0.0
      %8553 = vmatpush1.msra.mxu0 %v8412
      %8554 = vmatprep.subr.mxu0 0.0
      %8555 = vmatpush1.msra.mxu0 %v8411
      %8556 = vmatprep.subr.mxu0 0.0
      %8557 = vmatpush1.msra.mxu0 %v8410
      %8558 = vmatprep.subr.mxu0 0.0
      %8559 = vmatpush1.msra.mxu0 %v8409
      %8560 = vmatprep.subr.mxu0 0.0
      %8561 = vmatpush1.msra.mxu0 %v8408
      %8562 = vmatprep.subr.mxu0 0.0
      %8563 = vmatpush1.msra.mxu0 %v8407
      %8564 = vmatprep.subr.mxu0 0.0
      %8565 = vmatpush1.msra.mxu0 %v8406
      %8566 = vmatprep.subr.mxu0 0.0
      %8567 = vmatpush1.msra.mxu0 %v8405
      %8568 = vmatprep.subr.mxu0 0.0
      %8569 = vmatpush2.msra.mxu0 0.0
      %8570 = vmatprep.subr.mxu0 0.0
      %8571 = vmatpush2.msra.mxu0 0.0
      %8572 = vmatprep.subr.mxu0 0.0
      %8573 = vmatpush2.msra.mxu0 0.0
      %8574 = vmatprep.subr.mxu0 0.0
      %8575 = vmatpush2.msra.mxu0 0.0
      %8576 = vmatprep.subr.mxu0 0.0
      %8577 = vmatpush2.msra.mxu0 0.0
      %8578 = vmatprep.subr.mxu0 0.0
      %8579 = vmatpush2.msra.mxu0 0.0
      %8580 = vmatprep.subr.mxu0 0.0
      %8581 = vmatpush2.msra.mxu0 0.0
      %8582 = vmatprep.subr.mxu0 0.0
      %8583 = vmatpush2.msra.mxu0 0.0
      %8584 = vmatprep.subr.mxu0 0.0
      %8585 = vmatpush2.msra.mxu0 0.0
      %8586 = vmatprep.subr.mxu0 0.0
      %8587 = vmatpush2.msra.mxu0 0.0
      %8588 = vmatprep.subr.mxu0 0.0
      %8589 = vmatpush2.msra.mxu0 0.0
      %8590 = vmatprep.subr.mxu0 0.0
      %8591 = vmatpush2.msra.mxu0 0.0
      %8592 = vmatprep.subr.mxu0 0.0
      %8593 = vmatpush2.msra.mxu0 0.0
      %8594 = vmatprep.subr.mxu0 0.0
      %8595 = vmatpush2.msra.mxu0 0.0
      %8596 = vmatprep.subr.mxu0 0.0
      %8597 = vmatpush2.msra.mxu0 0.0
      %8598 = vmatprep.subr.mxu0 0.0
      %8599 = vmatpush2.msra.mxu0 0.0
      %8600 = vmatprep.mubr.f32.mxu0 0.0
      %8601 = vmatmul.mubr.f32.gmra.mxu0 %v8414
      %v8602 = vpop.f32.mrf.mxu0
      %v8603 = vadd.f32 0.0, %v8602
      %v8604 = vpop.f32.mrf.mxu0
      %8605 = vmatprep.mubr.f32.mxu0 0.0
      %8606 = vmatmul.mubr.f32.gmra.mxu0 %v8417
      %v8607 = vpop.f32.mrf.mxu0
      %v8608 = vadd.f32 0.0, %v8607
      %v8609 = vpop.f32.mrf.mxu0
      %8610 = vmatprep.mubr.f32.mxu0 0.0
      %8611 = vmatmul.mubr.f32.gmra.mxu0 %v8420
      %v8612 = vpop.f32.mrf.mxu0
      %v8613 = vadd.f32 0.0, %v8612
      %v8614 = vpop.f32.mrf.mxu0
      %8615 = vmatprep.mubr.f32.mxu0 0.0
      %8616 = vmatmul.mubr.f32.gmra.mxu0 %v8423
      %v8617 = vpop.f32.mrf.mxu0
      %v8618 = vadd.f32 0.0, %v8617
      %v8619 = vpop.f32.mrf.mxu0
      %8620 = vmatprep.mubr.f32.mxu0 0.0
      %8621 = vmatmul.mubr.f32.gmra.mxu0 %v8426
      %v8622 = vpop.f32.mrf.mxu0
      %v8623 = vadd.f32 0.0, %v8622
      %v8624 = vpop.f32.mrf.mxu0
      %8625 = vmatprep.mubr.f32.mxu0 0.0
      %8626 = vmatmul.mubr.f32.gmra.mxu0 %v8429
      %v8627 = vpop.f32.mrf.mxu0
      %v8628 = vadd.f32 0.0, %v8627
      %v8629 = vpop.f32.mrf.mxu0
      %8630 = vmatprep.mubr.f32.mxu0 0.0
      %8631 = vmatmul.mubr.f32.gmra.mxu0 %v8432
      %v8632 = vpop.f32.mrf.mxu0
      %v8633 = vadd.f32 0.0, %v8632
      %v8634 = vpop.f32.mrf.mxu0
      %8635 = vmatprep.mubr.f32.mxu0 0.0
      %8636 = vmatmul.mubr.f32.gmra.mxu0 %v8435
      %v8637 = vpop.f32.mrf.mxu0
      %v8638 = vadd.f32 0.0, %v8637
      %v8639 = vpop.f32.mrf.mxu0
      %8640 = vmatprep.mubr.f32.mxu0 0.0
      %8641 = vmatmul.mubr.f32.gmra.mxu0 %v8438
      %v8642 = vpop.f32.mrf.mxu0
      %v8643 = vadd.f32 0.0, %v8642
      %v8644 = vpop.f32.mrf.mxu0
      %8645 = vmatprep.mubr.f32.mxu0 0.0
      %8646 = vmatmul.mubr.f32.gmra.mxu0 %v8441
      %v8647 = vpop.f32.mrf.mxu0
      %v8648 = vadd.f32 0.0, %v8647
      %v8649 = vpop.f32.mrf.mxu0
      %8650 = vmatprep.mubr.f32.mxu0 0.0
      %8651 = vmatmul.mubr.f32.gmra.mxu0 %v8444
      %v8652 = vpop.f32.mrf.mxu0
      %v8653 = vadd.f32 0.0, %v8652
      %v8654 = vpop.f32.mrf.mxu0
      %8655 = vmatprep.mubr.f32.mxu0 0.0
      %8656 = vmatmul.mubr.f32.gmra.mxu0 %v8447
      %v8657 = vpop.f32.mrf.mxu0
      %v8658 = vadd.f32 0.0, %v8657
      %v8659 = vpop.f32.mrf.mxu0
      %8660 = vmatprep.mubr.f32.mxu0 0.0
      %8661 = vmatmul.mubr.f32.gmra.mxu0 %v8450
      %v8662 = vpop.f32.mrf.mxu0
      %v8663 = vadd.f32 0.0, %v8662
      %v8664 = vpop.f32.mrf.mxu0
      %8665 = vmatprep.mubr.f32.mxu0 0.0
      %8666 = vmatmul.mubr.f32.gmra.mxu0 %v8453
      %v8667 = vpop.f32.mrf.mxu0
      %v8668 = vadd.f32 0.0, %v8667
      %v8669 = vpop.f32.mrf.mxu0
      %8670 = vmatprep.mubr.f32.mxu0 0.0
      %8671 = vmatmul.mubr.f32.gmra.mxu0 %v8456
      %v8672 = vpop.f32.mrf.mxu0
      %v8673 = vadd.f32 0.0, %v8672
      %v8674 = vpop.f32.mrf.mxu0
      %8675 = vmatprep.mubr.f32.mxu0 0.0
      %8676 = vmatmul.mubr.f32.gmra.mxu0 %v8459
      %v8677 = vpop.f32.mrf.mxu0
      %v8678 = vadd.f32 0.0, %v8677
      %v8679 = vpop.f32.mrf.mxu0
      %8680 = vmatprep.mubr.f32.mxu0 0.0
      %8681 = vmatmul.mubr.f32.gmra.mxu0 %v8462
      %v8682 = vpop.f32.mrf.mxu0
      %v8683 = vadd.f32 0.0, %v8682
      %v8684 = vpop.f32.mrf.mxu0
      %8685 = vmatprep.mubr.f32.mxu0 0.0
      %8686 = vmatmul.mubr.f32.gmra.mxu0 %v8465
      %v8687 = vpop.f32.mrf.mxu0
      %v8688 = vadd.f32 0.0, %v8687
      %v8689 = vpop.f32.mrf.mxu0
      %8690 = vmatprep.mubr.f32.mxu0 0.0
      %8691 = vmatmul.mubr.f32.gmra.mxu0 %v8468
      %v8692 = vpop.f32.mrf.mxu0
      %v8693 = vadd.f32 0.0, %v8692
      %v8694 = vpop.f32.mrf.mxu0
      %8695 = vmatprep.mubr.f32.mxu0 0.0
      %8696 = vmatmul.mubr.f32.gmra.mxu0 %v8471
      %v8697 = vpop.f32.mrf.mxu0
      %v8698 = vadd.f32 0.0, %v8697
      %v8699 = vpop.f32.mrf.mxu0
      %8700 = vmatprep.mubr.f32.mxu0 0.0
      %8701 = vmatmul.mubr.f32.gmra.mxu0 %v8474
      %v8702 = vpop.f32.mrf.mxu0
      %v8703 = vadd.f32 0.0, %v8702
      %v8704 = vpop.f32.mrf.mxu0
      %8705 = vmatprep.mubr.f32.mxu0 0.0
      %8706 = vmatmul.mubr.f32.gmra.mxu0 %v8477
      %v8707 = vpop.f32.mrf.mxu0
      %v8708 = vadd.f32 0.0, %v8707
      %v8709 = vpop.f32.mrf.mxu0
      %8710 = vmatprep.mubr.f32.mxu0 0.0
      %8711 = vmatmul.mubr.f32.gmra.mxu0 %v8480
      %v8712 = vpop.f32.mrf.mxu0
      %v8713 = vadd.f32 0.0, %v8712
      %v8714 = vpop.f32.mrf.mxu0
      %8715 = vmatprep.mubr.f32.mxu0 0.0
      %8716 = vmatmul.mubr.f32.gmra.mxu0 %v8483
      %v8717 = vpop.f32.mrf.mxu0
      %v8718 = vadd.f32 0.0, %v8717
      %v8719 = vpop.f32.mrf.mxu0
      %8720 = vmatprep.mubr.f32.mxu0 0.0
      %8721 = vmatmul.mubr.f32.gmra.mxu0 %v8486
      %v8722 = vpop.f32.mrf.mxu0
      %v8723 = vadd.f32 0.0, %v8722
      %v8724 = vpop.f32.mrf.mxu0
      %8725 = vmatprep.mubr.f32.mxu0 0.0
      %8726 = vmatmul.mubr.f32.gmra.mxu0 %v8489
      %v8727 = vpop.f32.mrf.mxu0
      %v8728 = vadd.f32 0.0, %v8727
      %v8729 = vpop.f32.mrf.mxu0
      %8730 = vmatprep.mubr.f32.mxu0 0.0
      %8731 = vmatmul.mubr.f32.gmra.mxu0 %v8492
      %v8732 = vpop.f32.mrf.mxu0
      %v8733 = vadd.f32 0.0, %v8732
      %v8734 = vpop.f32.mrf.mxu0
      %8735 = vmatprep.mubr.f32.mxu0 0.0
      %8736 = vmatmul.mubr.f32.gmra.mxu0 %v8495
      %v8737 = vpop.f32.mrf.mxu0
      %v8738 = vadd.f32 0.0, %v8737
      %v8739 = vpop.f32.mrf.mxu0
      %8740 = vmatprep.mubr.f32.mxu0 0.0
      %8741 = vmatmul.mubr.f32.gmra.mxu0 %v8498
      %v8742 = vpop.f32.mrf.mxu0
      %v8743 = vadd.f32 0.0, %v8742
      %v8744 = vpop.f32.mrf.mxu0
      %8745 = vmatprep.mubr.f32.mxu0 0.0
      %8746 = vmatmul.mubr.f32.gmra.mxu0 %v8501
      %v8747 = vpop.f32.mrf.mxu0
      %v8748 = vadd.f32 0.0, %v8747
      %v8749 = vpop.f32.mrf.mxu0
      %8750 = vmatprep.mubr.f32.mxu0 0.0
      %8751 = vmatmul.mubr.f32.gmra.mxu0 %v8504
      %v8752 = vpop.f32.mrf.mxu0
      %v8753 = vadd.f32 0.0, %v8752
      %v8754 = vpop.f32.mrf.mxu0
      %8755 = vmatprep.mubr.f32.mxu0 0.0
      %8756 = vmatmul.mubr.f32.gmra.mxu0 %v8507
      %v8757 = vpop.f32.mrf.mxu0
      %v8758 = vadd.f32 0.0, %v8757
      %v8759 = vpop.f32.mrf.mxu0
      %8760 = vmatprep.mubr.f32.mxu0 0.0
      %8761 = vmatmul.mubr.f32.gmra.mxu0 %v8510
      %v8762 = vpop.f32.mrf.mxu0
      %v8763 = vadd.f32 0.0, %v8762
      %v8764 = vpop.f32.mrf.mxu0
      %8765 = vmatprep.mubr.f32.mxu0 0.0
      %8766 = vmatmul.mubr.f32.gmra.mxu0 %v8513
      %v8767 = vpop.f32.mrf.mxu0
      %v8768 = vadd.f32 0.0, %v8767
      %v8769 = vpop.f32.mrf.mxu0
      %8770 = vmatprep.mubr.f32.mxu0 0.0
      %8771 = vmatmul.mubr.f32.gmra.mxu0 %v8516
      %v8772 = vpop.f32.mrf.mxu0
      %v8773 = vadd.f32 0.0, %v8772
      %v8774 = vpop.f32.mrf.mxu0
      %8775 = vmatprep.mubr.f32.mxu0 0.0
      %8776 = vmatmul.mubr.f32.gmra.mxu0 %v8519
      %v8777 = vpop.f32.mrf.mxu0
      %v8778 = vadd.f32 0.0, %v8777
      %v8779 = vpop.f32.mrf.mxu0
      %8780 = vmatprep.mubr.f32.mxu0 0.0
      %8781 = vmatmul.mubr.f32.gmra.mxu0 %v8522
      %v8782 = vpop.f32.mrf.mxu0
      %v8783 = vadd.f32 0.0, %v8782
      %v8784 = vpop.f32.mrf.mxu0
      %8785 = vmatprep.mubr.f32.mxu0 0.0
      %8786 = vmatmul.mubr.f32.gmra.mxu0 %v8525
      %v8787 = vpop.f32.mrf.mxu0
      %v8788 = vadd.f32 0.0, %v8787
      %v8789 = vpop.f32.mrf.mxu0
      %8790 = vmatprep.mubr.f32.mxu0 0.0
      %8791 = vmatmul.mubr.f32.gmra.mxu0 %v8528
      %v8792 = vpop.f32.mrf.mxu0
      %v8793 = vadd.f32 0.0, %v8792
      %v8794 = vpop.f32.mrf.mxu0
      %8795 = vmatprep.mubr.f32.mxu0 0.0
      %8796 = vmatmul.mubr.f32.gmra.mxu0 %v8531
      %v8797 = vpop.f32.mrf.mxu0
      %v8798 = vadd.f32 0.0, %v8797
      %v8799 = vpop.f32.mrf.mxu0
      %8800 = vmatprep.mubr.f32.mxu0 0.0
      %8801 = vmatmul.mubr.f32.gmra.mxu0 %v8534
      %v8802 = vpop.f32.mrf.mxu0
      %v8803 = vadd.f32 0.0, %v8802
      %v8804 = vpop.f32.mrf.mxu0
      %8805 = vdwg.mxu0
      %v8806 = vadd.f32 %v8322, %v8603
      %v8807 = vadd.f32 %v8323, %v8608
      %v8808 = vadd.f32 %v8324, %v8613
      %v8809 = vadd.f32 %v8325, %v8618
      %v8810 = vadd.f32 %v8326, %v8623
      %v8811 = vadd.f32 %v8327, %v8628
      %v8812 = vadd.f32 %v8328, %v8633
      %v8813 = vadd.f32 %v8329, %v8638
      %v8814 = vadd.f32 %v8330, %v8643
      %v8815 = vadd.f32 %v8331, %v8648
      %v8816 = vadd.f32 %v8332, %v8653
      %v8817 = vadd.f32 %v8333, %v8658
      %v8818 = vadd.f32 %v8334, %v8663
      %v8819 = vadd.f32 %v8335, %v8668
      %v8820 = vadd.f32 %v8336, %v8673
      %v8821 = vadd.f32 %v8337, %v8678
      %v8822 = vadd.f32 %v8338, %v8683
      %v8823 = vadd.f32 %v8339, %v8688
      %v8824 = vadd.f32 %v8340, %v8693
      %v8825 = vadd.f32 %v8341, %v8698
      %v8826 = vadd.f32 %v8342, %v8703
      %v8827 = vadd.f32 %v8343, %v8708
      %v8828 = vadd.f32 %v8344, %v8713
      %v8829 = vadd.f32 %v8345, %v8718
      %v8830 = vadd.f32 %v8346, %v8723
      %v8831 = vadd.f32 %v8347, %v8728
      %v8832 = vadd.f32 %v8348, %v8733
      %v8833 = vadd.f32 %v8349, %v8738
      %v8834 = vadd.f32 %v8350, %v8743
      %v8835 = vadd.f32 %v8351, %v8748
      %v8836 = vadd.f32 %v8352, %v8753
      %v8837 = vadd.f32 %v8353, %v8758
      %v8838 = vadd.f32 %v8354, %v8763
      %v8839 = vadd.f32 %v8355, %v8768
      %v8840 = vadd.f32 %v8356, %v8773
      %v8841 = vadd.f32 %v8357, %v8778
      %v8842 = vadd.f32 %v8358, %v8783
      %v8843 = vadd.f32 %v8359, %v8788
      %v8844 = vadd.f32 %v8360, %v8793
      %v8845 = vadd.f32 %v8361, %v8798
      %v8846 = vadd.f32 %v8362, %v8803
      %v8847 = vld [vmem:[#allocation3 + $0x2a] sm:$0xff]
      %v8848 = vld [vmem:[#allocation3 + $0x32] sm:$0xff]
      %v8849 = vld [vmem:[#allocation3 + $0x3a] sm:$0xff]
      %v8850 = vld [vmem:[#allocation3 + $0x42] sm:$0xff]
      %v8851 = vld [vmem:[#allocation3 + $0x4a] sm:$0xff]
      %v8852 = vld [vmem:[#allocation3 + $0x52] sm:$0xff]
      %v8853 = vld [vmem:[#allocation3 + $0x5a] sm:$0xff]
      %v8854 = vld [vmem:[#allocation3 + $0x62] sm:$0xff]
      %v8855 = vld [vmem:[#allocation3 + $0x6a] sm:$0xff]
      %v8856 = vld [vmem:[#allocation3 + $0x72] sm:$0xff]
      %v8857 = vld [vmem:[#allocation3 + $0x7a] sm:$0xff]
      %v8858 = vld [vmem:[#allocation3 + $0x82] sm:$0xff]
      %v8859 = vld [vmem:[#allocation3 + $0x8a] sm:$0xff]
      %v8860 = vld [vmem:[#allocation3 + $0x92] sm:$0xff]
      %v8861 = vld [vmem:[#allocation3 + $0x9a] sm:$0xff]
      %v8862 = vld [vmem:[#allocation3 + $0xa2] sm:$0xff]
      %v8863 = vld [vmem:[#allocation3 + $0xaa] sm:$0xff]
      %v8864 = vld [vmem:[#allocation3 + $0xb2] sm:$0xff]
      %v8865 = vld [vmem:[#allocation3 + $0xba] sm:$0xff]
      %v8866 = vld [vmem:[#allocation3 + $0xc2] sm:$0xff]
      %v8867 = vld [vmem:[#allocation3 + $0xca] sm:$0xff]
      %v8868 = vld [vmem:[#allocation3 + $0xd2] sm:$0xff]
      %v8869 = vld [vmem:[#allocation3 + $0xda] sm:$0xff]
      %v8870 = vld [vmem:[#allocation3 + $0xe2] sm:$0xff]
      %v8871 = vld [vmem:[#allocation3 + $0xea] sm:$0xff]
      %v8872 = vld [vmem:[#allocation3 + $0xf2] sm:$0xff]
      %v8873 = vld [vmem:[#allocation3 + $0xfa] sm:$0xff]
      %v8874 = vld [vmem:[#allocation3 + $0x102] sm:$0xff]
      %v8875 = vld [vmem:[#allocation3 + $0x10a] sm:$0xff]
      %v8876 = vld [vmem:[#allocation3 + $0x112] sm:$0xff]
      %v8877 = vld [vmem:[#allocation3 + $0x11a] sm:$0xff]
      %v8878 = vld [vmem:[#allocation3 + $0x122] sm:$0xff]
      %v8879 = vld [vmem:[#allocation3 + $0x12a] sm:$0xff]
      %v8880 = vld [vmem:[#allocation3 + $0x132] sm:$0xff]
      %v8881 = vld [vmem:[#allocation3 + $0x13a] sm:$0xff]
      %v8882 = vld [vmem:[#allocation3 + $0x142] sm:$0xff]
      %v8883 = vld [vmem:[#allocation3 + $0x14a] sm:$0xff]
      %v8884 = vld [vmem:[#allocation3 + $0x152] sm:$0xff]
      %v8885 = vld [vmem:[#allocation3 + $0x15a] sm:$0xff]
      %v8886 = vld [vmem:[#allocation3 + $0x162] sm:$0xff]
      %v8887 = vld [vmem:[#allocation3 + $0x16a] sm:$0xf]
      %s8888 = scalar_lea.vmem %s3, 448
      %v8889 = vld [vmem:[%s8888] sm:$0xff]
      %v8890 = vld [vmem:[%s8888 + $0x8] sm:$0xff]
      %v8891 = vld [vmem:[%s8888 + $0x10] sm:$0xff]
      %v8892 = vld [vmem:[%s8888 + $0x18] sm:$0xff]
      %v8893 = vld [vmem:[%s8888 + $0x20] sm:$0xff]
      %v8894 = vld [vmem:[%s8888 + $0x28] sm:$0xff]
      %v8895 = vld [vmem:[%s8888 + $0x30] sm:$0xff]
      %v8896 = vld [vmem:[%s8888 + $0x38] sm:$0xff]
      %v8898 = vsel %vm293, %v8847, 0
      %v8901 = vsel %vm293, %v8848, 0
      %v8904 = vsel %vm293, %v8849, 0
      %v8907 = vsel %vm293, %v8850, 0
      %v8910 = vsel %vm293, %v8851, 0
      %v8913 = vsel %vm293, %v8852, 0
      %v8916 = vsel %vm293, %v8853, 0
      %v8919 = vsel %vm293, %v8854, 0
      %v8922 = vsel %vm293, %v8855, 0
      %v8925 = vsel %vm293, %v8856, 0
      %v8928 = vsel %vm293, %v8857, 0
      %v8931 = vsel %vm293, %v8858, 0
      %v8934 = vsel %vm293, %v8859, 0
      %v8937 = vsel %vm293, %v8860, 0
      %v8940 = vsel %vm293, %v8861, 0
      %v8943 = vsel %vm293, %v8862, 0
      %v8946 = vsel %vm293, %v8863, 0
      %v8949 = vsel %vm293, %v8864, 0
      %v8952 = vsel %vm293, %v8865, 0
      %v8955 = vsel %vm293, %v8866, 0
      %v8958 = vsel %vm293, %v8867, 0
      %v8961 = vsel %vm293, %v8868, 0
      %v8964 = vsel %vm293, %v8869, 0
      %v8967 = vsel %vm293, %v8870, 0
      %v8970 = vsel %vm293, %v8871, 0
      %v8973 = vsel %vm293, %v8872, 0
      %v8976 = vsel %vm293, %v8873, 0
      %v8979 = vsel %vm293, %v8874, 0
      %v8982 = vsel %vm293, %v8875, 0
      %v8985 = vsel %vm293, %v8876, 0
      %v8988 = vsel %vm293, %v8877, 0
      %v8991 = vsel %vm293, %v8878, 0
      %v8994 = vsel %vm293, %v8879, 0
      %v8997 = vsel %vm293, %v8880, 0
      %v9000 = vsel %vm293, %v8881, 0
      %v9003 = vsel %vm293, %v8882, 0
      %v9006 = vsel %vm293, %v8883, 0
      %v9009 = vsel %vm293, %v8884, 0
      %v9012 = vsel %vm293, %v8885, 0
      %v9015 = vsel %vm293, %v8886, 0
      %v9018 = vsel %vm293, %v8887, 0
      %9020 = vmatprep.subr.mxu0 0.0
      %9021 = vmatpush1.msra.mxu0 0.0
      %9022 = vmatprep.subr.mxu0 0.0
      %9023 = vmatpush1.msra.mxu0 0.0
      %9024 = vmatprep.subr.mxu0 0.0
      %9025 = vmatpush1.msra.mxu0 0.0
      %9026 = vmatprep.subr.mxu0 0.0
      %9027 = vmatpush1.msra.mxu0 0.0
      %9028 = vmatprep.subr.mxu0 0.0
      %9029 = vmatpush1.msra.mxu0 0.0
      %9030 = vmatprep.subr.mxu0 0.0
      %9031 = vmatpush1.msra.mxu0 0.0
      %9032 = vmatprep.subr.mxu0 0.0
      %9033 = vmatpush1.msra.mxu0 0.0
      %9034 = vmatprep.subr.mxu0 0.0
      %9035 = vmatpush1.msra.mxu0 0.0
      %9036 = vmatprep.subr.mxu0 0.0
      %9037 = vmatpush1.msra.mxu0 %v8896
      %9038 = vmatprep.subr.mxu0 0.0
      %9039 = vmatpush1.msra.mxu0 %v8895
      %9040 = vmatprep.subr.mxu0 0.0
      %9041 = vmatpush1.msra.mxu0 %v8894
      %9042 = vmatprep.subr.mxu0 0.0
      %9043 = vmatpush1.msra.mxu0 %v8893
      %9044 = vmatprep.subr.mxu0 0.0
      %9045 = vmatpush1.msra.mxu0 %v8892
      %9046 = vmatprep.subr.mxu0 0.0
      %9047 = vmatpush1.msra.mxu0 %v8891
      %9048 = vmatprep.subr.mxu0 0.0
      %9049 = vmatpush1.msra.mxu0 %v8890
      %9050 = vmatprep.subr.mxu0 0.0
      %9051 = vmatpush1.msra.mxu0 %v8889
      %9052 = vmatprep.subr.mxu0 0.0
      %9053 = vmatpush2.msra.mxu0 0.0
      %9054 = vmatprep.subr.mxu0 0.0
      %9055 = vmatpush2.msra.mxu0 0.0
      %9056 = vmatprep.subr.mxu0 0.0
      %9057 = vmatpush2.msra.mxu0 0.0
      %9058 = vmatprep.subr.mxu0 0.0
      %9059 = vmatpush2.msra.mxu0 0.0
      %9060 = vmatprep.subr.mxu0 0.0
      %9061 = vmatpush2.msra.mxu0 0.0
      %9062 = vmatprep.subr.mxu0 0.0
      %9063 = vmatpush2.msra.mxu0 0.0
      %9064 = vmatprep.subr.mxu0 0.0
      %9065 = vmatpush2.msra.mxu0 0.0
      %9066 = vmatprep.subr.mxu0 0.0
      %9067 = vmatpush2.msra.mxu0 0.0
      %9068 = vmatprep.subr.mxu0 0.0
      %9069 = vmatpush2.msra.mxu0 0.0
      %9070 = vmatprep.subr.mxu0 0.0
      %9071 = vmatpush2.msra.mxu0 0.0
      %9072 = vmatprep.subr.mxu0 0.0
      %9073 = vmatpush2.msra.mxu0 0.0
      %9074 = vmatprep.subr.mxu0 0.0
      %9075 = vmatpush2.msra.mxu0 0.0
      %9076 = vmatprep.subr.mxu0 0.0
      %9077 = vmatpush2.msra.mxu0 0.0
      %9078 = vmatprep.subr.mxu0 0.0
      %9079 = vmatpush2.msra.mxu0 0.0
      %9080 = vmatprep.subr.mxu0 0.0
      %9081 = vmatpush2.msra.mxu0 0.0
      %9082 = vmatprep.subr.mxu0 0.0
      %9083 = vmatpush2.msra.mxu0 0.0
      %9084 = vmatprep.mubr.f32.mxu0 0.0
      %9085 = vmatmul.mubr.f32.gmra.mxu0 %v8898
      %v9086 = vpop.f32.mrf.mxu0
      %v9087 = vadd.f32 0.0, %v9086
      %v9088 = vpop.f32.mrf.mxu0
      %9089 = vmatprep.mubr.f32.mxu0 0.0
      %9090 = vmatmul.mubr.f32.gmra.mxu0 %v8901
      %v9091 = vpop.f32.mrf.mxu0
      %v9092 = vadd.f32 0.0, %v9091
      %v9093 = vpop.f32.mrf.mxu0
      %9094 = vmatprep.mubr.f32.mxu0 0.0
      %9095 = vmatmul.mubr.f32.gmra.mxu0 %v8904
      %v9096 = vpop.f32.mrf.mxu0
      %v9097 = vadd.f32 0.0, %v9096
      %v9098 = vpop.f32.mrf.mxu0
      %9099 = vmatprep.mubr.f32.mxu0 0.0
      %9100 = vmatmul.mubr.f32.gmra.mxu0 %v8907
      %v9101 = vpop.f32.mrf.mxu0
      %v9102 = vadd.f32 0.0, %v9101
      %v9103 = vpop.f32.mrf.mxu0
      %9104 = vmatprep.mubr.f32.mxu0 0.0
      %9105 = vmatmul.mubr.f32.gmra.mxu0 %v8910
      %v9106 = vpop.f32.mrf.mxu0
      %v9107 = vadd.f32 0.0, %v9106
      %v9108 = vpop.f32.mrf.mxu0
      %9109 = vmatprep.mubr.f32.mxu0 0.0
      %9110 = vmatmul.mubr.f32.gmra.mxu0 %v8913
      %v9111 = vpop.f32.mrf.mxu0
      %v9112 = vadd.f32 0.0, %v9111
      %v9113 = vpop.f32.mrf.mxu0
      %9114 = vmatprep.mubr.f32.mxu0 0.0
      %9115 = vmatmul.mubr.f32.gmra.mxu0 %v8916
      %v9116 = vpop.f32.mrf.mxu0
      %v9117 = vadd.f32 0.0, %v9116
      %v9118 = vpop.f32.mrf.mxu0
      %9119 = vmatprep.mubr.f32.mxu0 0.0
      %9120 = vmatmul.mubr.f32.gmra.mxu0 %v8919
      %v9121 = vpop.f32.mrf.mxu0
      %v9122 = vadd.f32 0.0, %v9121
      %v9123 = vpop.f32.mrf.mxu0
      %9124 = vmatprep.mubr.f32.mxu0 0.0
      %9125 = vmatmul.mubr.f32.gmra.mxu0 %v8922
      %v9126 = vpop.f32.mrf.mxu0
      %v9127 = vadd.f32 0.0, %v9126
      %v9128 = vpop.f32.mrf.mxu0
      %9129 = vmatprep.mubr.f32.mxu0 0.0
      %9130 = vmatmul.mubr.f32.gmra.mxu0 %v8925
      %v9131 = vpop.f32.mrf.mxu0
      %v9132 = vadd.f32 0.0, %v9131
      %v9133 = vpop.f32.mrf.mxu0
      %9134 = vmatprep.mubr.f32.mxu0 0.0
      %9135 = vmatmul.mubr.f32.gmra.mxu0 %v8928
      %v9136 = vpop.f32.mrf.mxu0
      %v9137 = vadd.f32 0.0, %v9136
      %v9138 = vpop.f32.mrf.mxu0
      %9139 = vmatprep.mubr.f32.mxu0 0.0
      %9140 = vmatmul.mubr.f32.gmra.mxu0 %v8931
      %v9141 = vpop.f32.mrf.mxu0
      %v9142 = vadd.f32 0.0, %v9141
      %v9143 = vpop.f32.mrf.mxu0
      %9144 = vmatprep.mubr.f32.mxu0 0.0
      %9145 = vmatmul.mubr.f32.gmra.mxu0 %v8934
      %v9146 = vpop.f32.mrf.mxu0
      %v9147 = vadd.f32 0.0, %v9146
      %v9148 = vpop.f32.mrf.mxu0
      %9149 = vmatprep.mubr.f32.mxu0 0.0
      %9150 = vmatmul.mubr.f32.gmra.mxu0 %v8937
      %v9151 = vpop.f32.mrf.mxu0
      %v9152 = vadd.f32 0.0, %v9151
      %v9153 = vpop.f32.mrf.mxu0
      %9154 = vmatprep.mubr.f32.mxu0 0.0
      %9155 = vmatmul.mubr.f32.gmra.mxu0 %v8940
      %v9156 = vpop.f32.mrf.mxu0
      %v9157 = vadd.f32 0.0, %v9156
      %v9158 = vpop.f32.mrf.mxu0
      %9159 = vmatprep.mubr.f32.mxu0 0.0
      %9160 = vmatmul.mubr.f32.gmra.mxu0 %v8943
      %v9161 = vpop.f32.mrf.mxu0
      %v9162 = vadd.f32 0.0, %v9161
      %v9163 = vpop.f32.mrf.mxu0
      %9164 = vmatprep.mubr.f32.mxu0 0.0
      %9165 = vmatmul.mubr.f32.gmra.mxu0 %v8946
      %v9166 = vpop.f32.mrf.mxu0
      %v9167 = vadd.f32 0.0, %v9166
      %v9168 = vpop.f32.mrf.mxu0
      %9169 = vmatprep.mubr.f32.mxu0 0.0
      %9170 = vmatmul.mubr.f32.gmra.mxu0 %v8949
      %v9171 = vpop.f32.mrf.mxu0
      %v9172 = vadd.f32 0.0, %v9171
      %v9173 = vpop.f32.mrf.mxu0
      %9174 = vmatprep.mubr.f32.mxu0 0.0
      %9175 = vmatmul.mubr.f32.gmra.mxu0 %v8952
      %v9176 = vpop.f32.mrf.mxu0
      %v9177 = vadd.f32 0.0, %v9176
      %v9178 = vpop.f32.mrf.mxu0
      %9179 = vmatprep.mubr.f32.mxu0 0.0
      %9180 = vmatmul.mubr.f32.gmra.mxu0 %v8955
      %v9181 = vpop.f32.mrf.mxu0
      %v9182 = vadd.f32 0.0, %v9181
      %v9183 = vpop.f32.mrf.mxu0
      %9184 = vmatprep.mubr.f32.mxu0 0.0
      %9185 = vmatmul.mubr.f32.gmra.mxu0 %v8958
      %v9186 = vpop.f32.mrf.mxu0
      %v9187 = vadd.f32 0.0, %v9186
      %v9188 = vpop.f32.mrf.mxu0
      %9189 = vmatprep.mubr.f32.mxu0 0.0
      %9190 = vmatmul.mubr.f32.gmra.mxu0 %v8961
      %v9191 = vpop.f32.mrf.mxu0
      %v9192 = vadd.f32 0.0, %v9191
      %v9193 = vpop.f32.mrf.mxu0
      %9194 = vmatprep.mubr.f32.mxu0 0.0
      %9195 = vmatmul.mubr.f32.gmra.mxu0 %v8964
      %v9196 = vpop.f32.mrf.mxu0
      %v9197 = vadd.f32 0.0, %v9196
      %v9198 = vpop.f32.mrf.mxu0
      %9199 = vmatprep.mubr.f32.mxu0 0.0
      %9200 = vmatmul.mubr.f32.gmra.mxu0 %v8967
      %v9201 = vpop.f32.mrf.mxu0
      %v9202 = vadd.f32 0.0, %v9201
      %v9203 = vpop.f32.mrf.mxu0
      %9204 = vmatprep.mubr.f32.mxu0 0.0
      %9205 = vmatmul.mubr.f32.gmra.mxu0 %v8970
      %v9206 = vpop.f32.mrf.mxu0
      %v9207 = vadd.f32 0.0, %v9206
      %v9208 = vpop.f32.mrf.mxu0
      %9209 = vmatprep.mubr.f32.mxu0 0.0
      %9210 = vmatmul.mubr.f32.gmra.mxu0 %v8973
      %v9211 = vpop.f32.mrf.mxu0
      %v9212 = vadd.f32 0.0, %v9211
      %v9213 = vpop.f32.mrf.mxu0
      %9214 = vmatprep.mubr.f32.mxu0 0.0
      %9215 = vmatmul.mubr.f32.gmra.mxu0 %v8976
      %v9216 = vpop.f32.mrf.mxu0
      %v9217 = vadd.f32 0.0, %v9216
      %v9218 = vpop.f32.mrf.mxu0
      %9219 = vmatprep.mubr.f32.mxu0 0.0
      %9220 = vmatmul.mubr.f32.gmra.mxu0 %v8979
      %v9221 = vpop.f32.mrf.mxu0
      %v9222 = vadd.f32 0.0, %v9221
      %v9223 = vpop.f32.mrf.mxu0
      %9224 = vmatprep.mubr.f32.mxu0 0.0
      %9225 = vmatmul.mubr.f32.gmra.mxu0 %v8982
      %v9226 = vpop.f32.mrf.mxu0
      %v9227 = vadd.f32 0.0, %v9226
      %v9228 = vpop.f32.mrf.mxu0
      %9229 = vmatprep.mubr.f32.mxu0 0.0
      %9230 = vmatmul.mubr.f32.gmra.mxu0 %v8985
      %v9231 = vpop.f32.mrf.mxu0
      %v9232 = vadd.f32 0.0, %v9231
      %v9233 = vpop.f32.mrf.mxu0
      %9234 = vmatprep.mubr.f32.mxu0 0.0
      %9235 = vmatmul.mubr.f32.gmra.mxu0 %v8988
      %v9236 = vpop.f32.mrf.mxu0
      %v9237 = vadd.f32 0.0, %v9236
      %v9238 = vpop.f32.mrf.mxu0
      %9239 = vmatprep.mubr.f32.mxu0 0.0
      %9240 = vmatmul.mubr.f32.gmra.mxu0 %v8991
      %v9241 = vpop.f32.mrf.mxu0
      %v9242 = vadd.f32 0.0, %v9241
      %v9243 = vpop.f32.mrf.mxu0
      %9244 = vmatprep.mubr.f32.mxu0 0.0
      %9245 = vmatmul.mubr.f32.gmra.mxu0 %v8994
      %v9246 = vpop.f32.mrf.mxu0
      %v9247 = vadd.f32 0.0, %v9246
      %v9248 = vpop.f32.mrf.mxu0
      %9249 = vmatprep.mubr.f32.mxu0 0.0
      %9250 = vmatmul.mubr.f32.gmra.mxu0 %v8997
      %v9251 = vpop.f32.mrf.mxu0
      %v9252 = vadd.f32 0.0, %v9251
      %v9253 = vpop.f32.mrf.mxu0
      %9254 = vmatprep.mubr.f32.mxu0 0.0
      %9255 = vmatmul.mubr.f32.gmra.mxu0 %v9000
      %v9256 = vpop.f32.mrf.mxu0
      %v9257 = vadd.f32 0.0, %v9256
      %v9258 = vpop.f32.mrf.mxu0
      %9259 = vmatprep.mubr.f32.mxu0 0.0
      %9260 = vmatmul.mubr.f32.gmra.mxu0 %v9003
      %v9261 = vpop.f32.mrf.mxu0
      %v9262 = vadd.f32 0.0, %v9261
      %v9263 = vpop.f32.mrf.mxu0
      %9264 = vmatprep.mubr.f32.mxu0 0.0
      %9265 = vmatmul.mubr.f32.gmra.mxu0 %v9006
      %v9266 = vpop.f32.mrf.mxu0
      %v9267 = vadd.f32 0.0, %v9266
      %v9268 = vpop.f32.mrf.mxu0
      %9269 = vmatprep.mubr.f32.mxu0 0.0
      %9270 = vmatmul.mubr.f32.gmra.mxu0 %v9009
      %v9271 = vpop.f32.mrf.mxu0
      %v9272 = vadd.f32 0.0, %v9271
      %v9273 = vpop.f32.mrf.mxu0
      %9274 = vmatprep.mubr.f32.mxu0 0.0
      %9275 = vmatmul.mubr.f32.gmra.mxu0 %v9012
      %v9276 = vpop.f32.mrf.mxu0
      %v9277 = vadd.f32 0.0, %v9276
      %v9278 = vpop.f32.mrf.mxu0
      %9279 = vmatprep.mubr.f32.mxu0 0.0
      %9280 = vmatmul.mubr.f32.gmra.mxu0 %v9015
      %v9281 = vpop.f32.mrf.mxu0
      %v9282 = vadd.f32 0.0, %v9281
      %v9283 = vpop.f32.mrf.mxu0
      %9284 = vmatprep.mubr.f32.mxu0 0.0
      %9285 = vmatmul.mubr.f32.gmra.mxu0 %v9018
      %v9286 = vpop.f32.mrf.mxu0
      %v9287 = vadd.f32 0.0, %v9286
      %v9288 = vpop.f32.mrf.mxu0
      %9289 = vdwg.mxu0
      %v9290 = vadd.f32 %v8806, %v9087
      %v9291 = vadd.f32 %v8807, %v9092
      %v9292 = vadd.f32 %v8808, %v9097
      %v9293 = vadd.f32 %v8809, %v9102
      %v9294 = vadd.f32 %v8810, %v9107
      %v9295 = vadd.f32 %v8811, %v9112
      %v9296 = vadd.f32 %v8812, %v9117
      %v9297 = vadd.f32 %v8813, %v9122
      %v9298 = vadd.f32 %v8814, %v9127
      %v9299 = vadd.f32 %v8815, %v9132
      %v9300 = vadd.f32 %v8816, %v9137
      %v9301 = vadd.f32 %v8817, %v9142
      %v9302 = vadd.f32 %v8818, %v9147
      %v9303 = vadd.f32 %v8819, %v9152
      %v9304 = vadd.f32 %v8820, %v9157
      %v9305 = vadd.f32 %v8821, %v9162
      %v9306 = vadd.f32 %v8822, %v9167
      %v9307 = vadd.f32 %v8823, %v9172
      %v9308 = vadd.f32 %v8824, %v9177
      %v9309 = vadd.f32 %v8825, %v9182
      %v9310 = vadd.f32 %v8826, %v9187
      %v9311 = vadd.f32 %v8827, %v9192
      %v9312 = vadd.f32 %v8828, %v9197
      %v9313 = vadd.f32 %v8829, %v9202
      %v9314 = vadd.f32 %v8830, %v9207
      %v9315 = vadd.f32 %v8831, %v9212
      %v9316 = vadd.f32 %v8832, %v9217
      %v9317 = vadd.f32 %v8833, %v9222
      %v9318 = vadd.f32 %v8834, %v9227
      %v9319 = vadd.f32 %v8835, %v9232
      %v9320 = vadd.f32 %v8836, %v9237
      %v9321 = vadd.f32 %v8837, %v9242
      %v9322 = vadd.f32 %v8838, %v9247
      %v9323 = vadd.f32 %v8839, %v9252
      %v9324 = vadd.f32 %v8840, %v9257
      %v9325 = vadd.f32 %v8841, %v9262
      %v9326 = vadd.f32 %v8842, %v9267
      %v9327 = vadd.f32 %v8843, %v9272
      %v9328 = vadd.f32 %v8844, %v9277
      %v9329 = vadd.f32 %v8845, %v9282
      %v9330 = vadd.f32 %v8846, %v9287
      %v9331 = vld [vmem:[#allocation3 + $0x2b] sm:$0xff]
      %v9332 = vld [vmem:[#allocation3 + $0x33] sm:$0xff]
      %v9333 = vld [vmem:[#allocation3 + $0x3b] sm:$0xff]
      %v9334 = vld [vmem:[#allocation3 + $0x43] sm:$0xff]
      %v9335 = vld [vmem:[#allocation3 + $0x4b] sm:$0xff]
      %v9336 = vld [vmem:[#allocation3 + $0x53] sm:$0xff]
      %v9337 = vld [vmem:[#allocation3 + $0x5b] sm:$0xff]
      %v9338 = vld [vmem:[#allocation3 + $0x63] sm:$0xff]
      %v9339 = vld [vmem:[#allocation3 + $0x6b] sm:$0xff]
      %v9340 = vld [vmem:[#allocation3 + $0x73] sm:$0xff]
      %v9341 = vld [vmem:[#allocation3 + $0x7b] sm:$0xff]
      %v9342 = vld [vmem:[#allocation3 + $0x83] sm:$0xff]
      %v9343 = vld [vmem:[#allocation3 + $0x8b] sm:$0xff]
      %v9344 = vld [vmem:[#allocation3 + $0x93] sm:$0xff]
      %v9345 = vld [vmem:[#allocation3 + $0x9b] sm:$0xff]
      %v9346 = vld [vmem:[#allocation3 + $0xa3] sm:$0xff]
      %v9347 = vld [vmem:[#allocation3 + $0xab] sm:$0xff]
      %v9348 = vld [vmem:[#allocation3 + $0xb3] sm:$0xff]
      %v9349 = vld [vmem:[#allocation3 + $0xbb] sm:$0xff]
      %v9350 = vld [vmem:[#allocation3 + $0xc3] sm:$0xff]
      %v9351 = vld [vmem:[#allocation3 + $0xcb] sm:$0xff]
      %v9352 = vld [vmem:[#allocation3 + $0xd3] sm:$0xff]
      %v9353 = vld [vmem:[#allocation3 + $0xdb] sm:$0xff]
      %v9354 = vld [vmem:[#allocation3 + $0xe3] sm:$0xff]
      %v9355 = vld [vmem:[#allocation3 + $0xeb] sm:$0xff]
      %v9356 = vld [vmem:[#allocation3 + $0xf3] sm:$0xff]
      %v9357 = vld [vmem:[#allocation3 + $0xfb] sm:$0xff]
      %v9358 = vld [vmem:[#allocation3 + $0x103] sm:$0xff]
      %v9359 = vld [vmem:[#allocation3 + $0x10b] sm:$0xff]
      %v9360 = vld [vmem:[#allocation3 + $0x113] sm:$0xff]
      %v9361 = vld [vmem:[#allocation3 + $0x11b] sm:$0xff]
      %v9362 = vld [vmem:[#allocation3 + $0x123] sm:$0xff]
      %v9363 = vld [vmem:[#allocation3 + $0x12b] sm:$0xff]
      %v9364 = vld [vmem:[#allocation3 + $0x133] sm:$0xff]
      %v9365 = vld [vmem:[#allocation3 + $0x13b] sm:$0xff]
      %v9366 = vld [vmem:[#allocation3 + $0x143] sm:$0xff]
      %v9367 = vld [vmem:[#allocation3 + $0x14b] sm:$0xff]
      %v9368 = vld [vmem:[#allocation3 + $0x153] sm:$0xff]
      %v9369 = vld [vmem:[#allocation3 + $0x15b] sm:$0xff]
      %v9370 = vld [vmem:[#allocation3 + $0x163] sm:$0xff]
      %v9371 = vld [vmem:[#allocation3 + $0x16b] sm:$0xf]
      %s9372 = scalar_lea.vmem %s3, 512
      %v9373 = vld [vmem:[%s9372] sm:$0xff]
      %v9374 = vld [vmem:[%s9372 + $0x8] sm:$0xff]
      %v9375 = vld [vmem:[%s9372 + $0x10] sm:$0xff]
      %v9376 = vld [vmem:[%s9372 + $0x18] sm:$0xff]
      %v9377 = vld [vmem:[%s9372 + $0x20] sm:$0xff]
      %v9378 = vld [vmem:[%s9372 + $0x28] sm:$0xff]
      %v9379 = vld [vmem:[%s9372 + $0x30] sm:$0xff]
      %v9380 = vld [vmem:[%s9372 + $0x38] sm:$0xff]
      %v9382 = vsel %vm293, %v9331, 0
      %v9385 = vsel %vm293, %v9332, 0
      %v9388 = vsel %vm293, %v9333, 0
      %v9391 = vsel %vm293, %v9334, 0
      %v9394 = vsel %vm293, %v9335, 0
      %v9397 = vsel %vm293, %v9336, 0
      %v9400 = vsel %vm293, %v9337, 0
      %v9403 = vsel %vm293, %v9338, 0
      %v9406 = vsel %vm293, %v9339, 0
      %v9409 = vsel %vm293, %v9340, 0
      %v9412 = vsel %vm293, %v9341, 0
      %v9415 = vsel %vm293, %v9342, 0
      %v9418 = vsel %vm293, %v9343, 0
      %v9421 = vsel %vm293, %v9344, 0
      %v9424 = vsel %vm293, %v9345, 0
      %v9427 = vsel %vm293, %v9346, 0
      %v9430 = vsel %vm293, %v9347, 0
      %v9433 = vsel %vm293, %v9348, 0
      %v9436 = vsel %vm293, %v9349, 0
      %v9439 = vsel %vm293, %v9350, 0
      %v9442 = vsel %vm293, %v9351, 0
      %v9445 = vsel %vm293, %v9352, 0
      %v9448 = vsel %vm293, %v9353, 0
      %v9451 = vsel %vm293, %v9354, 0
      %v9454 = vsel %vm293, %v9355, 0
      %v9457 = vsel %vm293, %v9356, 0
      %v9460 = vsel %vm293, %v9357, 0
      %v9463 = vsel %vm293, %v9358, 0
      %v9466 = vsel %vm293, %v9359, 0
      %v9469 = vsel %vm293, %v9360, 0
      %v9472 = vsel %vm293, %v9361, 0
      %v9475 = vsel %vm293, %v9362, 0
      %v9478 = vsel %vm293, %v9363, 0
      %v9481 = vsel %vm293, %v9364, 0
      %v9484 = vsel %vm293, %v9365, 0
      %v9487 = vsel %vm293, %v9366, 0
      %v9490 = vsel %vm293, %v9367, 0
      %v9493 = vsel %vm293, %v9368, 0
      %v9496 = vsel %vm293, %v9369, 0
      %v9499 = vsel %vm293, %v9370, 0
      %v9502 = vsel %vm293, %v9371, 0
      %9504 = vmatprep.subr.mxu0 0.0
      %9505 = vmatpush1.msra.mxu0 0.0
      %9506 = vmatprep.subr.mxu0 0.0
      %9507 = vmatpush1.msra.mxu0 0.0
      %9508 = vmatprep.subr.mxu0 0.0
      %9509 = vmatpush1.msra.mxu0 0.0
      %9510 = vmatprep.subr.mxu0 0.0
      %9511 = vmatpush1.msra.mxu0 0.0
      %9512 = vmatprep.subr.mxu0 0.0
      %9513 = vmatpush1.msra.mxu0 0.0
      %9514 = vmatprep.subr.mxu0 0.0
      %9515 = vmatpush1.msra.mxu0 0.0
      %9516 = vmatprep.subr.mxu0 0.0
      %9517 = vmatpush1.msra.mxu0 0.0
      %9518 = vmatprep.subr.mxu0 0.0
      %9519 = vmatpush1.msra.mxu0 0.0
      %9520 = vmatprep.subr.mxu0 0.0
      %9521 = vmatpush1.msra.mxu0 %v9380
      %9522 = vmatprep.subr.mxu0 0.0
      %9523 = vmatpush1.msra.mxu0 %v9379
      %9524 = vmatprep.subr.mxu0 0.0
      %9525 = vmatpush1.msra.mxu0 %v9378
      %9526 = vmatprep.subr.mxu0 0.0
      %9527 = vmatpush1.msra.mxu0 %v9377
      %9528 = vmatprep.subr.mxu0 0.0
      %9529 = vmatpush1.msra.mxu0 %v9376
      %9530 = vmatprep.subr.mxu0 0.0
      %9531 = vmatpush1.msra.mxu0 %v9375
      %9532 = vmatprep.subr.mxu0 0.0
      %9533 = vmatpush1.msra.mxu0 %v9374
      %9534 = vmatprep.subr.mxu0 0.0
      %9535 = vmatpush1.msra.mxu0 %v9373
      %9536 = vmatprep.subr.mxu0 0.0
      %9537 = vmatpush2.msra.mxu0 0.0
      %9538 = vmatprep.subr.mxu0 0.0
      %9539 = vmatpush2.msra.mxu0 0.0
      %9540 = vmatprep.subr.mxu0 0.0
      %9541 = vmatpush2.msra.mxu0 0.0
      %9542 = vmatprep.subr.mxu0 0.0
      %9543 = vmatpush2.msra.mxu0 0.0
      %9544 = vmatprep.subr.mxu0 0.0
      %9545 = vmatpush2.msra.mxu0 0.0
      %9546 = vmatprep.subr.mxu0 0.0
      %9547 = vmatpush2.msra.mxu0 0.0
      %9548 = vmatprep.subr.mxu0 0.0
      %9549 = vmatpush2.msra.mxu0 0.0
      %9550 = vmatprep.subr.mxu0 0.0
      %9551 = vmatpush2.msra.mxu0 0.0
      %9552 = vmatprep.subr.mxu0 0.0
      %9553 = vmatpush2.msra.mxu0 0.0
      %9554 = vmatprep.subr.mxu0 0.0
      %9555 = vmatpush2.msra.mxu0 0.0
      %9556 = vmatprep.subr.mxu0 0.0
      %9557 = vmatpush2.msra.mxu0 0.0
      %9558 = vmatprep.subr.mxu0 0.0
      %9559 = vmatpush2.msra.mxu0 0.0
      %9560 = vmatprep.subr.mxu0 0.0
      %9561 = vmatpush2.msra.mxu0 0.0
      %9562 = vmatprep.subr.mxu0 0.0
      %9563 = vmatpush2.msra.mxu0 0.0
      %9564 = vmatprep.subr.mxu0 0.0
      %9565 = vmatpush2.msra.mxu0 0.0
      %9566 = vmatprep.subr.mxu0 0.0
      %9567 = vmatpush2.msra.mxu0 0.0
      %9568 = vmatprep.mubr.f32.mxu0 0.0
      %9569 = vmatmul.mubr.f32.gmra.mxu0 %v9382
      %v9570 = vpop.f32.mrf.mxu0
      %v9571 = vadd.f32 0.0, %v9570
      %v9572 = vpop.f32.mrf.mxu0
      %9573 = vmatprep.mubr.f32.mxu0 0.0
      %9574 = vmatmul.mubr.f32.gmra.mxu0 %v9385
      %v9575 = vpop.f32.mrf.mxu0
      %v9576 = vadd.f32 0.0, %v9575
      %v9577 = vpop.f32.mrf.mxu0
      %9578 = vmatprep.mubr.f32.mxu0 0.0
      %9579 = vmatmul.mubr.f32.gmra.mxu0 %v9388
      %v9580 = vpop.f32.mrf.mxu0
      %v9581 = vadd.f32 0.0, %v9580
      %v9582 = vpop.f32.mrf.mxu0
      %9583 = vmatprep.mubr.f32.mxu0 0.0
      %9584 = vmatmul.mubr.f32.gmra.mxu0 %v9391
      %v9585 = vpop.f32.mrf.mxu0
      %v9586 = vadd.f32 0.0, %v9585
      %v9587 = vpop.f32.mrf.mxu0
      %9588 = vmatprep.mubr.f32.mxu0 0.0
      %9589 = vmatmul.mubr.f32.gmra.mxu0 %v9394
      %v9590 = vpop.f32.mrf.mxu0
      %v9591 = vadd.f32 0.0, %v9590
      %v9592 = vpop.f32.mrf.mxu0
      %9593 = vmatprep.mubr.f32.mxu0 0.0
      %9594 = vmatmul.mubr.f32.gmra.mxu0 %v9397
      %v9595 = vpop.f32.mrf.mxu0
      %v9596 = vadd.f32 0.0, %v9595
      %v9597 = vpop.f32.mrf.mxu0
      %9598 = vmatprep.mubr.f32.mxu0 0.0
      %9599 = vmatmul.mubr.f32.gmra.mxu0 %v9400
      %v9600 = vpop.f32.mrf.mxu0
      %v9601 = vadd.f32 0.0, %v9600
      %v9602 = vpop.f32.mrf.mxu0
      %9603 = vmatprep.mubr.f32.mxu0 0.0
      %9604 = vmatmul.mubr.f32.gmra.mxu0 %v9403
      %v9605 = vpop.f32.mrf.mxu0
      %v9606 = vadd.f32 0.0, %v9605
      %v9607 = vpop.f32.mrf.mxu0
      %9608 = vmatprep.mubr.f32.mxu0 0.0
      %9609 = vmatmul.mubr.f32.gmra.mxu0 %v9406
      %v9610 = vpop.f32.mrf.mxu0
      %v9611 = vadd.f32 0.0, %v9610
      %v9612 = vpop.f32.mrf.mxu0
      %9613 = vmatprep.mubr.f32.mxu0 0.0
      %9614 = vmatmul.mubr.f32.gmra.mxu0 %v9409
      %v9615 = vpop.f32.mrf.mxu0
      %v9616 = vadd.f32 0.0, %v9615
      %v9617 = vpop.f32.mrf.mxu0
      %9618 = vmatprep.mubr.f32.mxu0 0.0
      %9619 = vmatmul.mubr.f32.gmra.mxu0 %v9412
      %v9620 = vpop.f32.mrf.mxu0
      %v9621 = vadd.f32 0.0, %v9620
      %v9622 = vpop.f32.mrf.mxu0
      %9623 = vmatprep.mubr.f32.mxu0 0.0
      %9624 = vmatmul.mubr.f32.gmra.mxu0 %v9415
      %v9625 = vpop.f32.mrf.mxu0
      %v9626 = vadd.f32 0.0, %v9625
      %v9627 = vpop.f32.mrf.mxu0
      %9628 = vmatprep.mubr.f32.mxu0 0.0
      %9629 = vmatmul.mubr.f32.gmra.mxu0 %v9418
      %v9630 = vpop.f32.mrf.mxu0
      %v9631 = vadd.f32 0.0, %v9630
      %v9632 = vpop.f32.mrf.mxu0
      %9633 = vmatprep.mubr.f32.mxu0 0.0
      %9634 = vmatmul.mubr.f32.gmra.mxu0 %v9421
      %v9635 = vpop.f32.mrf.mxu0
      %v9636 = vadd.f32 0.0, %v9635
      %v9637 = vpop.f32.mrf.mxu0
      %9638 = vmatprep.mubr.f32.mxu0 0.0
      %9639 = vmatmul.mubr.f32.gmra.mxu0 %v9424
      %v9640 = vpop.f32.mrf.mxu0
      %v9641 = vadd.f32 0.0, %v9640
      %v9642 = vpop.f32.mrf.mxu0
      %9643 = vmatprep.mubr.f32.mxu0 0.0
      %9644 = vmatmul.mubr.f32.gmra.mxu0 %v9427
      %v9645 = vpop.f32.mrf.mxu0
      %v9646 = vadd.f32 0.0, %v9645
      %v9647 = vpop.f32.mrf.mxu0
      %9648 = vmatprep.mubr.f32.mxu0 0.0
      %9649 = vmatmul.mubr.f32.gmra.mxu0 %v9430
      %v9650 = vpop.f32.mrf.mxu0
      %v9651 = vadd.f32 0.0, %v9650
      %v9652 = vpop.f32.mrf.mxu0
      %9653 = vmatprep.mubr.f32.mxu0 0.0
      %9654 = vmatmul.mubr.f32.gmra.mxu0 %v9433
      %v9655 = vpop.f32.mrf.mxu0
      %v9656 = vadd.f32 0.0, %v9655
      %v9657 = vpop.f32.mrf.mxu0
      %9658 = vmatprep.mubr.f32.mxu0 0.0
      %9659 = vmatmul.mubr.f32.gmra.mxu0 %v9436
      %v9660 = vpop.f32.mrf.mxu0
      %v9661 = vadd.f32 0.0, %v9660
      %v9662 = vpop.f32.mrf.mxu0
      %9663 = vmatprep.mubr.f32.mxu0 0.0
      %9664 = vmatmul.mubr.f32.gmra.mxu0 %v9439
      %v9665 = vpop.f32.mrf.mxu0
      %v9666 = vadd.f32 0.0, %v9665
      %v9667 = vpop.f32.mrf.mxu0
      %9668 = vmatprep.mubr.f32.mxu0 0.0
      %9669 = vmatmul.mubr.f32.gmra.mxu0 %v9442
      %v9670 = vpop.f32.mrf.mxu0
      %v9671 = vadd.f32 0.0, %v9670
      %v9672 = vpop.f32.mrf.mxu0
      %9673 = vmatprep.mubr.f32.mxu0 0.0
      %9674 = vmatmul.mubr.f32.gmra.mxu0 %v9445
      %v9675 = vpop.f32.mrf.mxu0
      %v9676 = vadd.f32 0.0, %v9675
      %v9677 = vpop.f32.mrf.mxu0
      %9678 = vmatprep.mubr.f32.mxu0 0.0
      %9679 = vmatmul.mubr.f32.gmra.mxu0 %v9448
      %v9680 = vpop.f32.mrf.mxu0
      %v9681 = vadd.f32 0.0, %v9680
      %v9682 = vpop.f32.mrf.mxu0
      %9683 = vmatprep.mubr.f32.mxu0 0.0
      %9684 = vmatmul.mubr.f32.gmra.mxu0 %v9451
      %v9685 = vpop.f32.mrf.mxu0
      %v9686 = vadd.f32 0.0, %v9685
      %v9687 = vpop.f32.mrf.mxu0
      %9688 = vmatprep.mubr.f32.mxu0 0.0
      %9689 = vmatmul.mubr.f32.gmra.mxu0 %v9454
      %v9690 = vpop.f32.mrf.mxu0
      %v9691 = vadd.f32 0.0, %v9690
      %v9692 = vpop.f32.mrf.mxu0
      %9693 = vmatprep.mubr.f32.mxu0 0.0
      %9694 = vmatmul.mubr.f32.gmra.mxu0 %v9457
      %v9695 = vpop.f32.mrf.mxu0
      %v9696 = vadd.f32 0.0, %v9695
      %v9697 = vpop.f32.mrf.mxu0
      %9698 = vmatprep.mubr.f32.mxu0 0.0
      %9699 = vmatmul.mubr.f32.gmra.mxu0 %v9460
      %v9700 = vpop.f32.mrf.mxu0
      %v9701 = vadd.f32 0.0, %v9700
      %v9702 = vpop.f32.mrf.mxu0
      %9703 = vmatprep.mubr.f32.mxu0 0.0
      %9704 = vmatmul.mubr.f32.gmra.mxu0 %v9463
      %v9705 = vpop.f32.mrf.mxu0
      %v9706 = vadd.f32 0.0, %v9705
      %v9707 = vpop.f32.mrf.mxu0
      %9708 = vmatprep.mubr.f32.mxu0 0.0
      %9709 = vmatmul.mubr.f32.gmra.mxu0 %v9466
      %v9710 = vpop.f32.mrf.mxu0
      %v9711 = vadd.f32 0.0, %v9710
      %v9712 = vpop.f32.mrf.mxu0
      %9713 = vmatprep.mubr.f32.mxu0 0.0
      %9714 = vmatmul.mubr.f32.gmra.mxu0 %v9469
      %v9715 = vpop.f32.mrf.mxu0
      %v9716 = vadd.f32 0.0, %v9715
      %v9717 = vpop.f32.mrf.mxu0
      %9718 = vmatprep.mubr.f32.mxu0 0.0
      %9719 = vmatmul.mubr.f32.gmra.mxu0 %v9472
      %v9720 = vpop.f32.mrf.mxu0
      %v9721 = vadd.f32 0.0, %v9720
      %v9722 = vpop.f32.mrf.mxu0
      %9723 = vmatprep.mubr.f32.mxu0 0.0
      %9724 = vmatmul.mubr.f32.gmra.mxu0 %v9475
      %v9725 = vpop.f32.mrf.mxu0
      %v9726 = vadd.f32 0.0, %v9725
      %v9727 = vpop.f32.mrf.mxu0
      %9728 = vmatprep.mubr.f32.mxu0 0.0
      %9729 = vmatmul.mubr.f32.gmra.mxu0 %v9478
      %v9730 = vpop.f32.mrf.mxu0
      %v9731 = vadd.f32 0.0, %v9730
      %v9732 = vpop.f32.mrf.mxu0
      %9733 = vmatprep.mubr.f32.mxu0 0.0
      %9734 = vmatmul.mubr.f32.gmra.mxu0 %v9481
      %v9735 = vpop.f32.mrf.mxu0
      %v9736 = vadd.f32 0.0, %v9735
      %v9737 = vpop.f32.mrf.mxu0
      %9738 = vmatprep.mubr.f32.mxu0 0.0
      %9739 = vmatmul.mubr.f32.gmra.mxu0 %v9484
      %v9740 = vpop.f32.mrf.mxu0
      %v9741 = vadd.f32 0.0, %v9740
      %v9742 = vpop.f32.mrf.mxu0
      %9743 = vmatprep.mubr.f32.mxu0 0.0
      %9744 = vmatmul.mubr.f32.gmra.mxu0 %v9487
      %v9745 = vpop.f32.mrf.mxu0
      %v9746 = vadd.f32 0.0, %v9745
      %v9747 = vpop.f32.mrf.mxu0
      %9748 = vmatprep.mubr.f32.mxu0 0.0
      %9749 = vmatmul.mubr.f32.gmra.mxu0 %v9490
      %v9750 = vpop.f32.mrf.mxu0
      %v9751 = vadd.f32 0.0, %v9750
      %v9752 = vpop.f32.mrf.mxu0
      %9753 = vmatprep.mubr.f32.mxu0 0.0
      %9754 = vmatmul.mubr.f32.gmra.mxu0 %v9493
      %v9755 = vpop.f32.mrf.mxu0
      %v9756 = vadd.f32 0.0, %v9755
      %v9757 = vpop.f32.mrf.mxu0
      %9758 = vmatprep.mubr.f32.mxu0 0.0
      %9759 = vmatmul.mubr.f32.gmra.mxu0 %v9496
      %v9760 = vpop.f32.mrf.mxu0
      %v9761 = vadd.f32 0.0, %v9760
      %v9762 = vpop.f32.mrf.mxu0
      %9763 = vmatprep.mubr.f32.mxu0 0.0
      %9764 = vmatmul.mubr.f32.gmra.mxu0 %v9499
      %v9765 = vpop.f32.mrf.mxu0
      %v9766 = vadd.f32 0.0, %v9765
      %v9767 = vpop.f32.mrf.mxu0
      %9768 = vmatprep.mubr.f32.mxu0 0.0
      %9769 = vmatmul.mubr.f32.gmra.mxu0 %v9502
      %v9770 = vpop.f32.mrf.mxu0
      %v9771 = vadd.f32 0.0, %v9770
      %v9772 = vpop.f32.mrf.mxu0
      %9773 = vdwg.mxu0
      %v9774 = vadd.f32 %v9290, %v9571
      %v9775 = vadd.f32 %v9291, %v9576
      %v9776 = vadd.f32 %v9292, %v9581
      %v9777 = vadd.f32 %v9293, %v9586
      %v9778 = vadd.f32 %v9294, %v9591
      %v9779 = vadd.f32 %v9295, %v9596
      %v9780 = vadd.f32 %v9296, %v9601
      %v9781 = vadd.f32 %v9297, %v9606
      %v9782 = vadd.f32 %v9298, %v9611
      %v9783 = vadd.f32 %v9299, %v9616
      %v9784 = vadd.f32 %v9300, %v9621
      %v9785 = vadd.f32 %v9301, %v9626
      %v9786 = vadd.f32 %v9302, %v9631
      %v9787 = vadd.f32 %v9303, %v9636
      %v9788 = vadd.f32 %v9304, %v9641
      %v9789 = vadd.f32 %v9305, %v9646
      %v9790 = vadd.f32 %v9306, %v9651
      %v9791 = vadd.f32 %v9307, %v9656
      %v9792 = vadd.f32 %v9308, %v9661
      %v9793 = vadd.f32 %v9309, %v9666
      %v9794 = vadd.f32 %v9310, %v9671
      %v9795 = vadd.f32 %v9311, %v9676
      %v9796 = vadd.f32 %v9312, %v9681
      %v9797 = vadd.f32 %v9313, %v9686
      %v9798 = vadd.f32 %v9314, %v9691
      %v9799 = vadd.f32 %v9315, %v9696
      %v9800 = vadd.f32 %v9316, %v9701
      %v9801 = vadd.f32 %v9317, %v9706
      %v9802 = vadd.f32 %v9318, %v9711
      %v9803 = vadd.f32 %v9319, %v9716
      %v9804 = vadd.f32 %v9320, %v9721
      %v9805 = vadd.f32 %v9321, %v9726
      %v9806 = vadd.f32 %v9322, %v9731
      %v9807 = vadd.f32 %v9323, %v9736
      %v9808 = vadd.f32 %v9324, %v9741
      %v9809 = vadd.f32 %v9325, %v9746
      %v9810 = vadd.f32 %v9326, %v9751
      %v9811 = vadd.f32 %v9327, %v9756
      %v9812 = vadd.f32 %v9328, %v9761
      %v9813 = vadd.f32 %v9329, %v9766
      %v9814 = vadd.f32 %v9330, %v9771
      %v9815 = vld [vmem:[%s4 + $0x4] sm:$0x1]
      %v9816 = vlaneseq
      %v9817 = vshrl.u32 %v9816, 7
      %v9818 = vsub.s32 0, %v9817
      %v9819 = vrot.slane %v9815, %v9818
      %v9820 = vadd.f32 %v9774, %v9819
      %v9821 = vadd.f32 %v9775, %v9819
      %v9822 = vadd.f32 %v9776, %v9819
      %v9823 = vadd.f32 %v9777, %v9819
      %v9824 = vadd.f32 %v9778, %v9819
      %v9825 = vadd.f32 %v9779, %v9819
      %v9826 = vadd.f32 %v9780, %v9819
      %v9827 = vadd.f32 %v9781, %v9819
      %v9828 = vadd.f32 %v9782, %v9819
      %v9829 = vadd.f32 %v9783, %v9819
      %v9830 = vadd.f32 %v9784, %v9819
      %v9831 = vadd.f32 %v9785, %v9819
      %v9832 = vadd.f32 %v9786, %v9819
      %v9833 = vadd.f32 %v9787, %v9819
      %v9834 = vadd.f32 %v9788, %v9819
      %v9835 = vadd.f32 %v9789, %v9819
      %v9836 = vadd.f32 %v9790, %v9819
      %v9837 = vadd.f32 %v9791, %v9819
      %v9838 = vadd.f32 %v9792, %v9819
      %v9839 = vadd.f32 %v9793, %v9819
      %v9840 = vadd.f32 %v9794, %v9819
      %v9841 = vadd.f32 %v9795, %v9819
      %v9842 = vadd.f32 %v9796, %v9819
      %v9843 = vadd.f32 %v9797, %v9819
      %v9844 = vadd.f32 %v9798, %v9819
      %v9845 = vadd.f32 %v9799, %v9819
      %v9846 = vadd.f32 %v9800, %v9819
      %v9847 = vadd.f32 %v9801, %v9819
      %v9848 = vadd.f32 %v9802, %v9819
      %v9849 = vadd.f32 %v9803, %v9819
      %v9850 = vadd.f32 %v9804, %v9819
      %v9851 = vadd.f32 %v9805, %v9819
      %v9852 = vadd.f32 %v9806, %v9819
      %v9853 = vadd.f32 %v9807, %v9819
      %v9854 = vadd.f32 %v9808, %v9819
      %v9855 = vadd.f32 %v9809, %v9819
      %v9856 = vadd.f32 %v9810, %v9819
      %v9857 = vadd.f32 %v9811, %v9819
      %v9858 = vadd.f32 %v9812, %v9819
      %v9859 = vadd.f32 %v9813, %v9819
      %v9860 = vadd.f32 %v9814, %v9819
      %v9861 = vld [vmem:[%s4 + $0x5] sm:$0x1]
      %v9862 = vlaneseq
      %v9863 = vshrl.u32 %v9862, 7
      %v9864 = vsub.s32 0, %v9863
      %v9865 = vrot.slane %v9861, %v9864
      %v9866 = vmul.f32 %v9820, %v9865
      %v9867 = vmul.f32 %v9821, %v9865
      %v9868 = vmul.f32 %v9822, %v9865
      %v9869 = vmul.f32 %v9823, %v9865
      %v9870 = vmul.f32 %v9824, %v9865
      %v9871 = vmul.f32 %v9825, %v9865
      %v9872 = vmul.f32 %v9826, %v9865
      %v9873 = vmul.f32 %v9827, %v9865
      %v9874 = vmul.f32 %v9828, %v9865
      %v9875 = vmul.f32 %v9829, %v9865
      %v9876 = vmul.f32 %v9830, %v9865
      %v9877 = vmul.f32 %v9831, %v9865
      %v9878 = vmul.f32 %v9832, %v9865
      %v9879 = vmul.f32 %v9833, %v9865
      %v9880 = vmul.f32 %v9834, %v9865
      %v9881 = vmul.f32 %v9835, %v9865
      %v9882 = vmul.f32 %v9836, %v9865
      %v9883 = vmul.f32 %v9837, %v9865
      %v9884 = vmul.f32 %v9838, %v9865
      %v9885 = vmul.f32 %v9839, %v9865
      %v9886 = vmul.f32 %v9840, %v9865
      %v9887 = vmul.f32 %v9841, %v9865
      %v9888 = vmul.f32 %v9842, %v9865
      %v9889 = vmul.f32 %v9843, %v9865
      %v9890 = vmul.f32 %v9844, %v9865
      %v9891 = vmul.f32 %v9845, %v9865
      %v9892 = vmul.f32 %v9846, %v9865
      %v9893 = vmul.f32 %v9847, %v9865
      %v9894 = vmul.f32 %v9848, %v9865
      %v9895 = vmul.f32 %v9849, %v9865
      %v9896 = vmul.f32 %v9850, %v9865
      %v9897 = vmul.f32 %v9851, %v9865
      %v9898 = vmul.f32 %v9852, %v9865
      %v9899 = vmul.f32 %v9853, %v9865
      %v9900 = vmul.f32 %v9854, %v9865
      %v9901 = vmul.f32 %v9855, %v9865
      %v9902 = vmul.f32 %v9856, %v9865
      %v9903 = vmul.f32 %v9857, %v9865
      %v9904 = vmul.f32 %v9858, %v9865
      %v9905 = vmul.f32 %v9859, %v9865
      %v9906 = vmul.f32 %v9860, %v9865
      %v9907 = vld [vmem:[%s4 + $0x6] sm:$0x1]
      %v9908 = vlaneseq
      %v9909 = vshrl.u32 %v9908, 7
      %v9910 = vsub.s32 0, %v9909
      %v9911 = vrot.slane %v9907, %v9910
      %v9912 = vadd.f32 %v9866, %v9911
      %v9913 = vadd.f32 %v9867, %v9911
      %v9914 = vadd.f32 %v9868, %v9911
      %v9915 = vadd.f32 %v9869, %v9911
      %v9916 = vadd.f32 %v9870, %v9911
      %v9917 = vadd.f32 %v9871, %v9911
      %v9918 = vadd.f32 %v9872, %v9911
      %v9919 = vadd.f32 %v9873, %v9911
      %v9920 = vadd.f32 %v9874, %v9911
      %v9921 = vadd.f32 %v9875, %v9911
      %v9922 = vadd.f32 %v9876, %v9911
      %v9923 = vadd.f32 %v9877, %v9911
      %v9924 = vadd.f32 %v9878, %v9911
      %v9925 = vadd.f32 %v9879, %v9911
      %v9926 = vadd.f32 %v9880, %v9911
      %v9927 = vadd.f32 %v9881, %v9911
      %v9928 = vadd.f32 %v9882, %v9911
      %v9929 = vadd.f32 %v9883, %v9911
      %v9930 = vadd.f32 %v9884, %v9911
      %v9931 = vadd.f32 %v9885, %v9911
      %v9932 = vadd.f32 %v9886, %v9911
      %v9933 = vadd.f32 %v9887, %v9911
      %v9934 = vadd.f32 %v9888, %v9911
      %v9935 = vadd.f32 %v9889, %v9911
      %v9936 = vadd.f32 %v9890, %v9911
      %v9937 = vadd.f32 %v9891, %v9911
      %v9938 = vadd.f32 %v9892, %v9911
      %v9939 = vadd.f32 %v9893, %v9911
      %v9940 = vadd.f32 %v9894, %v9911
      %v9941 = vadd.f32 %v9895, %v9911
      %v9942 = vadd.f32 %v9896, %v9911
      %v9943 = vadd.f32 %v9897, %v9911
      %v9944 = vadd.f32 %v9898, %v9911
      %v9945 = vadd.f32 %v9899, %v9911
      %v9946 = vadd.f32 %v9900, %v9911
      %v9947 = vadd.f32 %v9901, %v9911
      %v9948 = vadd.f32 %v9902, %v9911
      %v9949 = vadd.f32 %v9903, %v9911
      %v9950 = vadd.f32 %v9904, %v9911
      %v9951 = vadd.f32 %v9905, %v9911
      %v9952 = vadd.f32 %v9906, %v9911
      %v9953 = vmax.f32 %v9912, 0.0
      %v9954 = vmax.f32 %v9913, 0.0
      %v9955 = vmax.f32 %v9914, 0.0
      %v9956 = vmax.f32 %v9915, 0.0
      %v9957 = vmax.f32 %v9916, 0.0
      %v9958 = vmax.f32 %v9917, 0.0
      %v9959 = vmax.f32 %v9918, 0.0
      %v9960 = vmax.f32 %v9919, 0.0
      %v9961 = vmax.f32 %v9920, 0.0
      %v9962 = vmax.f32 %v9921, 0.0
      %v9963 = vmax.f32 %v9922, 0.0
      %v9964 = vmax.f32 %v9923, 0.0
      %v9965 = vmax.f32 %v9924, 0.0
      %v9966 = vmax.f32 %v9925, 0.0
      %v9967 = vmax.f32 %v9926, 0.0
      %v9968 = vmax.f32 %v9927, 0.0
      %v9969 = vmax.f32 %v9928, 0.0
      %v9970 = vmax.f32 %v9929, 0.0
      %v9971 = vmax.f32 %v9930, 0.0
      %v9972 = vmax.f32 %v9931, 0.0
      %v9973 = vmax.f32 %v9932, 0.0
      %v9974 = vmax.f32 %v9933, 0.0
      %v9975 = vmax.f32 %v9934, 0.0
      %v9976 = vmax.f32 %v9935, 0.0
      %v9977 = vmax.f32 %v9936, 0.0
      %v9978 = vmax.f32 %v9937, 0.0
      %v9979 = vmax.f32 %v9938, 0.0
      %v9980 = vmax.f32 %v9939, 0.0
      %v9981 = vmax.f32 %v9940, 0.0
      %v9982 = vmax.f32 %v9941, 0.0
      %v9983 = vmax.f32 %v9942, 0.0
      %v9984 = vmax.f32 %v9943, 0.0
      %v9985 = vmax.f32 %v9944, 0.0
      %v9986 = vmax.f32 %v9945, 0.0
      %v9987 = vmax.f32 %v9946, 0.0
      %v9988 = vmax.f32 %v9947, 0.0
      %v9989 = vmax.f32 %v9948, 0.0
      %v9990 = vmax.f32 %v9949, 0.0
      %v9991 = vmax.f32 %v9950, 0.0
      %v9992 = vmax.f32 %v9951, 0.0
      %v9993 = vmax.f32 %v9952, 0.0
      %9994 = vst.msk [vmem:[#allocation2 + $0x18] sm:$0xff] %vm293, %v9953
      %9995 = vst.msk [vmem:[#allocation2 + $0x20] sm:$0xff] %vm293, %v9954
      %9996 = vst.msk [vmem:[#allocation2 + $0x28] sm:$0xff] %vm293, %v9955
      %9997 = vst.msk [vmem:[#allocation2 + $0x30] sm:$0xff] %vm293, %v9956
      %9998 = vst.msk [vmem:[#allocation2 + $0x38] sm:$0xff] %vm293, %v9957
      %9999 = vst.msk [vmem:[#allocation2 + $0x40] sm:$0xff] %vm293, %v9958
      %10000 = vst.msk [vmem:[#allocation2 + $0x48] sm:$0xff] %vm293, %v9959
      %10001 = vst.msk [vmem:[#allocation2 + $0x50] sm:$0xff] %vm293, %v9960
      %10002 = vst.msk [vmem:[#allocation2 + $0x58] sm:$0xff] %vm293, %v9961
      %10003 = vst.msk [vmem:[#allocation2 + $0x60] sm:$0xff] %vm293, %v9962
      %10004 = vst.msk [vmem:[#allocation2 + $0x68] sm:$0xff] %vm293, %v9963
      %10005 = vst.msk [vmem:[#allocation2 + $0x70] sm:$0xff] %vm293, %v9964
      %10006 = vst.msk [vmem:[#allocation2 + $0x78] sm:$0xff] %vm293, %v9965
      %10007 = vst.msk [vmem:[#allocation2 + $0x80] sm:$0xff] %vm293, %v9966
      %10008 = vst.msk [vmem:[#allocation2 + $0x88] sm:$0xff] %vm293, %v9967
      %10009 = vst.msk [vmem:[#allocation2 + $0x90] sm:$0xff] %vm293, %v9968
      %10010 = vst.msk [vmem:[#allocation2 + $0x98] sm:$0xff] %vm293, %v9969
      %10011 = vst.msk [vmem:[#allocation2 + $0xa0] sm:$0xff] %vm293, %v9970
      %10012 = vst.msk [vmem:[#allocation2 + $0xa8] sm:$0xff] %vm293, %v9971
      %10013 = vst.msk [vmem:[#allocation2 + $0xb0] sm:$0xff] %vm293, %v9972
      %10014 = vst.msk [vmem:[#allocation2 + $0xb8] sm:$0xff] %vm293, %v9973
      %10015 = vst.msk [vmem:[#allocation2 + $0xc0] sm:$0xff] %vm293, %v9974
      %10016 = vst.msk [vmem:[#allocation2 + $0xc8] sm:$0xff] %vm293, %v9975
      %10017 = vst.msk [vmem:[#allocation2 + $0xd0] sm:$0xff] %vm293, %v9976
      %10018 = vst.msk [vmem:[#allocation2 + $0xd8] sm:$0xff] %vm293, %v9977
      %10019 = vst.msk [vmem:[#allocation2 + $0xe0] sm:$0xff] %vm293, %v9978
      %10020 = vst.msk [vmem:[#allocation2 + $0xe8] sm:$0xff] %vm293, %v9979
      %10021 = vst.msk [vmem:[#allocation2 + $0xf0] sm:$0xff] %vm293, %v9980
      %10022 = vst.msk [vmem:[#allocation2 + $0xf8] sm:$0xff] %vm293, %v9981
      %10023 = vst.msk [vmem:[#allocation2 + $0x100] sm:$0xff] %vm293, %v9982
      %10024 = vst.msk [vmem:[#allocation2 + $0x108] sm:$0xff] %vm293, %v9983
      %10025 = vst.msk [vmem:[#allocation2 + $0x110] sm:$0xff] %vm293, %v9984
      %10026 = vst.msk [vmem:[#allocation2 + $0x118] sm:$0xff] %vm293, %v9985
      %10027 = vst.msk [vmem:[#allocation2 + $0x120] sm:$0xff] %vm293, %v9986
      %10028 = vst.msk [vmem:[#allocation2 + $0x128] sm:$0xff] %vm293, %v9987
      %10029 = vst.msk [vmem:[#allocation2 + $0x130] sm:$0xff] %vm293, %v9988
      %10030 = vst.msk [vmem:[#allocation2 + $0x138] sm:$0xff] %vm293, %v9989
      %10031 = vst.msk [vmem:[#allocation2 + $0x140] sm:$0xff] %vm293, %v9990
      %10032 = vst.msk [vmem:[#allocation2 + $0x148] sm:$0xff] %vm293, %v9991
      %10033 = vst.msk [vmem:[#allocation2 + $0x150] sm:$0xff] %vm293, %v9992
      %10034 = vst.msk [vmem:[#allocation2 + $0x158] sm:$0xf] %vm1052, %v9993
      %v10035 = vld [vmem:[#allocation2 + $0x18] sm:$0xff]
      %v10036 = vld [vmem:[#allocation2 + $0x20] sm:$0xff]
      %v10037 = vld [vmem:[#allocation2 + $0x28] sm:$0xff]
      %v10038 = vld [vmem:[#allocation2 + $0x30] sm:$0xff]
      %v10039 = vld [vmem:[#allocation2 + $0x38] sm:$0xff]
      %v10040 = vld [vmem:[#allocation2 + $0x40] sm:$0xff]
      %v10041 = vld [vmem:[#allocation2 + $0x48] sm:$0xff]
      %v10042 = vld [vmem:[#allocation2 + $0x50] sm:$0xff]
      %v10043 = vld [vmem:[#allocation2 + $0x58] sm:$0xff]
      %v10044 = vld [vmem:[#allocation2 + $0x60] sm:$0xff]
      %v10045 = vld [vmem:[#allocation2 + $0x68] sm:$0xff]
      %v10046 = vld [vmem:[#allocation2 + $0x70] sm:$0xff]
      %v10047 = vld [vmem:[#allocation2 + $0x78] sm:$0xff]
      %v10048 = vld [vmem:[#allocation2 + $0x80] sm:$0xff]
      %v10049 = vld [vmem:[#allocation2 + $0x88] sm:$0xff]
      %v10050 = vld [vmem:[#allocation2 + $0x90] sm:$0xff]
      %v10051 = vld [vmem:[#allocation2 + $0x98] sm:$0xff]
      %v10052 = vld [vmem:[#allocation2 + $0xa0] sm:$0xff]
      %v10053 = vld [vmem:[#allocation2 + $0xa8] sm:$0xff]
      %v10054 = vld [vmem:[#allocation2 + $0xb0] sm:$0xff]
      %v10055 = vld [vmem:[#allocation2 + $0xb8] sm:$0xff]
      %v10056 = vld [vmem:[#allocation2 + $0xc0] sm:$0xff]
      %v10057 = vld [vmem:[#allocation2 + $0xc8] sm:$0xff]
      %v10058 = vld [vmem:[#allocation2 + $0xd0] sm:$0xff]
      %v10059 = vld [vmem:[#allocation2 + $0xd8] sm:$0xff]
      %v10060 = vld [vmem:[#allocation2 + $0xe0] sm:$0xff]
      %v10061 = vld [vmem:[#allocation2 + $0xe8] sm:$0xff]
      %v10062 = vld [vmem:[#allocation2 + $0xf0] sm:$0xff]
      %v10063 = vld [vmem:[#allocation2 + $0xf8] sm:$0xff]
      %v10064 = vld [vmem:[#allocation2 + $0x100] sm:$0xff]
      %v10065 = vld [vmem:[#allocation2 + $0x108] sm:$0xff]
      %v10066 = vld [vmem:[#allocation2 + $0x110] sm:$0xff]
      %v10067 = vld [vmem:[#allocation2 + $0x118] sm:$0xff]
      %v10068 = vld [vmem:[#allocation2 + $0x120] sm:$0xff]
      %v10069 = vld [vmem:[#allocation2 + $0x128] sm:$0xff]
      %v10070 = vld [vmem:[#allocation2 + $0x130] sm:$0xff]
      %v10071 = vld [vmem:[#allocation2 + $0x138] sm:$0xff]
      %v10072 = vld [vmem:[#allocation2 + $0x140] sm:$0xff]
      %v10073 = vld [vmem:[#allocation2 + $0x148] sm:$0xff]
      %v10074 = vld [vmem:[#allocation2 + $0x150] sm:$0xff]
      %v10075 = vld [vmem:[#allocation2 + $0x158] sm:$0xf]
      %v10076 = vld [vmem:[#allocation2 + $0x19] sm:$0xff]
      %v10077 = vld [vmem:[#allocation2 + $0x21] sm:$0xff]
      %v10078 = vld [vmem:[#allocation2 + $0x29] sm:$0xff]
      %v10079 = vld [vmem:[#allocation2 + $0x31] sm:$0xff]
      %v10080 = vld [vmem:[#allocation2 + $0x39] sm:$0xff]
      %v10081 = vld [vmem:[#allocation2 + $0x41] sm:$0xff]
      %v10082 = vld [vmem:[#allocation2 + $0x49] sm:$0xff]
      %v10083 = vld [vmem:[#allocation2 + $0x51] sm:$0xff]
      %v10084 = vld [vmem:[#allocation2 + $0x59] sm:$0xff]
      %v10085 = vld [vmem:[#allocation2 + $0x61] sm:$0xff]
      %v10086 = vld [vmem:[#allocation2 + $0x69] sm:$0xff]
      %v10087 = vld [vmem:[#allocation2 + $0x71] sm:$0xff]
      %v10088 = vld [vmem:[#allocation2 + $0x79] sm:$0xff]
      %v10089 = vld [vmem:[#allocation2 + $0x81] sm:$0xff]
      %v10090 = vld [vmem:[#allocation2 + $0x89] sm:$0xff]
      %v10091 = vld [vmem:[#allocation2 + $0x91] sm:$0xff]
      %v10092 = vld [vmem:[#allocation2 + $0x99] sm:$0xff]
      %v10093 = vld [vmem:[#allocation2 + $0xa1] sm:$0xff]
      %v10094 = vld [vmem:[#allocation2 + $0xa9] sm:$0xff]
      %v10095 = vld [vmem:[#allocation2 + $0xb1] sm:$0xff]
      %v10096 = vld [vmem:[#allocation2 + $0xb9] sm:$0xff]
      %v10097 = vld [vmem:[#allocation2 + $0xc1] sm:$0xff]
      %v10098 = vld [vmem:[#allocation2 + $0xc9] sm:$0xff]
      %v10099 = vld [vmem:[#allocation2 + $0xd1] sm:$0xff]
      %v10100 = vld [vmem:[#allocation2 + $0xd9] sm:$0xff]
      %v10101 = vld [vmem:[#allocation2 + $0xe1] sm:$0xff]
      %v10102 = vld [vmem:[#allocation2 + $0xe9] sm:$0xff]
      %v10103 = vld [vmem:[#allocation2 + $0xf1] sm:$0xff]
      %v10104 = vld [vmem:[#allocation2 + $0xf9] sm:$0xff]
      %v10105 = vld [vmem:[#allocation2 + $0x101] sm:$0xff]
      %v10106 = vld [vmem:[#allocation2 + $0x109] sm:$0xff]
      %v10107 = vld [vmem:[#allocation2 + $0x111] sm:$0xff]
      %v10108 = vld [vmem:[#allocation2 + $0x119] sm:$0xff]
      %v10109 = vld [vmem:[#allocation2 + $0x121] sm:$0xff]
      %v10110 = vld [vmem:[#allocation2 + $0x129] sm:$0xff]
      %v10111 = vld [vmem:[#allocation2 + $0x131] sm:$0xff]
      %v10112 = vld [vmem:[#allocation2 + $0x139] sm:$0xff]
      %v10113 = vld [vmem:[#allocation2 + $0x141] sm:$0xff]
      %v10114 = vld [vmem:[#allocation2 + $0x149] sm:$0xff]
      %v10115 = vld [vmem:[#allocation2 + $0x151] sm:$0xff]
      %v10116 = vld [vmem:[#allocation2 + $0x159] sm:$0xf]
      %v10117 = vmax.f32 %v10035, %v10076
      %v10118 = vmax.f32 %v10036, %v10077
      %v10119 = vmax.f32 %v10037, %v10078
      %v10120 = vmax.f32 %v10038, %v10079
      %v10121 = vmax.f32 %v10039, %v10080
      %v10122 = vmax.f32 %v10040, %v10081
      %v10123 = vmax.f32 %v10041, %v10082
      %v10124 = vmax.f32 %v10042, %v10083
      %v10125 = vmax.f32 %v10043, %v10084
      %v10126 = vmax.f32 %v10044, %v10085
      %v10127 = vmax.f32 %v10045, %v10086
      %v10128 = vmax.f32 %v10046, %v10087
      %v10129 = vmax.f32 %v10047, %v10088
      %v10130 = vmax.f32 %v10048, %v10089
      %v10131 = vmax.f32 %v10049, %v10090
      %v10132 = vmax.f32 %v10050, %v10091
      %v10133 = vmax.f32 %v10051, %v10092
      %v10134 = vmax.f32 %v10052, %v10093
      %v10135 = vmax.f32 %v10053, %v10094
      %v10136 = vmax.f32 %v10054, %v10095
      %v10137 = vmax.f32 %v10055, %v10096
      %v10138 = vmax.f32 %v10056, %v10097
      %v10139 = vmax.f32 %v10057, %v10098
      %v10140 = vmax.f32 %v10058, %v10099
      %v10141 = vmax.f32 %v10059, %v10100
      %v10142 = vmax.f32 %v10060, %v10101
      %v10143 = vmax.f32 %v10061, %v10102
      %v10144 = vmax.f32 %v10062, %v10103
      %v10145 = vmax.f32 %v10063, %v10104
      %v10146 = vmax.f32 %v10064, %v10105
      %v10147 = vmax.f32 %v10065, %v10106
      %v10148 = vmax.f32 %v10066, %v10107
      %v10149 = vmax.f32 %v10067, %v10108
      %v10150 = vmax.f32 %v10068, %v10109
      %v10151 = vmax.f32 %v10069, %v10110
      %v10152 = vmax.f32 %v10070, %v10111
      %v10153 = vmax.f32 %v10071, %v10112
      %v10154 = vmax.f32 %v10072, %v10113
      %v10155 = vmax.f32 %v10073, %v10114
      %v10156 = vmax.f32 %v10074, %v10115
      %v10157 = vmax.f32 %v10075, %v10116
      %v10158 = vld [vmem:[#allocation2 + $0x2a] sm:$0xff]
      %v10159 = vld [vmem:[#allocation2 + $0x32] sm:$0xff]
      %v10160 = vld [vmem:[#allocation2 + $0x3a] sm:$0xff]
      %v10161 = vld [vmem:[#allocation2 + $0x42] sm:$0xff]
      %v10162 = vld [vmem:[#allocation2 + $0x4a] sm:$0xff]
      %v10163 = vld [vmem:[#allocation2 + $0x52] sm:$0xff]
      %v10164 = vld [vmem:[#allocation2 + $0x5a] sm:$0xff]
      %v10165 = vld [vmem:[#allocation2 + $0x62] sm:$0xff]
      %v10166 = vld [vmem:[#allocation2 + $0x6a] sm:$0xff]
      %v10167 = vld [vmem:[#allocation2 + $0x72] sm:$0xff]
      %v10168 = vld [vmem:[#allocation2 + $0x7a] sm:$0xff]
      %v10169 = vld [vmem:[#allocation2 + $0x82] sm:$0xff]
      %v10170 = vld [vmem:[#allocation2 + $0x8a] sm:$0xff]
      %v10171 = vld [vmem:[#allocation2 + $0x92] sm:$0xff]
      %v10172 = vld [vmem:[#allocation2 + $0x9a] sm:$0xff]
      %v10173 = vld [vmem:[#allocation2 + $0xa2] sm:$0xff]
      %v10174 = vld [vmem:[#allocation2 + $0xaa] sm:$0xff]
      %v10175 = vld [vmem:[#allocation2 + $0xb2] sm:$0xff]
      %v10176 = vld [vmem:[#allocation2 + $0xba] sm:$0xff]
      %v10177 = vld [vmem:[#allocation2 + $0xc2] sm:$0xff]
      %v10178 = vld [vmem:[#allocation2 + $0xca] sm:$0xff]
      %v10179 = vld [vmem:[#allocation2 + $0xd2] sm:$0xff]
      %v10180 = vld [vmem:[#allocation2 + $0xda] sm:$0xff]
      %v10181 = vld [vmem:[#allocation2 + $0xe2] sm:$0xff]
      %v10182 = vld [vmem:[#allocation2 + $0xea] sm:$0xff]
      %v10183 = vld [vmem:[#allocation2 + $0xf2] sm:$0xff]
      %v10184 = vld [vmem:[#allocation2 + $0xfa] sm:$0xff]
      %v10185 = vld [vmem:[#allocation2 + $0x102] sm:$0xff]
      %v10186 = vld [vmem:[#allocation2 + $0x10a] sm:$0xff]
      %v10187 = vld [vmem:[#allocation2 + $0x112] sm:$0xff]
      %v10188 = vld [vmem:[#allocation2 + $0x11a] sm:$0xff]
      %v10189 = vld [vmem:[#allocation2 + $0x122] sm:$0xff]
      %v10190 = vld [vmem:[#allocation2 + $0x12a] sm:$0xff]
      %v10191 = vld [vmem:[#allocation2 + $0x132] sm:$0xff]
      %v10192 = vld [vmem:[#allocation2 + $0x13a] sm:$0xff]
      %v10193 = vld [vmem:[#allocation2 + $0x142] sm:$0xff]
      %v10194 = vld [vmem:[#allocation2 + $0x14a] sm:$0xff]
      %v10195 = vld [vmem:[#allocation2 + $0x152] sm:$0xff]
      %v10196 = vld [vmem:[#allocation2 + $0x15a] sm:$0xff]
      %v10197 = vld [vmem:[#allocation2 + $0x162] sm:$0xff]
      %v10198 = vld [vmem:[#allocation2 + $0x16a] sm:$0xf]
      %v10199 = vld [vmem:[#allocation2 + $0x2b] sm:$0xff]
      %v10200 = vld [vmem:[#allocation2 + $0x33] sm:$0xff]
      %v10201 = vld [vmem:[#allocation2 + $0x3b] sm:$0xff]
      %v10202 = vld [vmem:[#allocation2 + $0x43] sm:$0xff]
      %v10203 = vld [vmem:[#allocation2 + $0x4b] sm:$0xff]
      %v10204 = vld [vmem:[#allocation2 + $0x53] sm:$0xff]
      %v10205 = vld [vmem:[#allocation2 + $0x5b] sm:$0xff]
      %v10206 = vld [vmem:[#allocation2 + $0x63] sm:$0xff]
      %v10207 = vld [vmem:[#allocation2 + $0x6b] sm:$0xff]
      %v10208 = vld [vmem:[#allocation2 + $0x73] sm:$0xff]
      %v10209 = vld [vmem:[#allocation2 + $0x7b] sm:$0xff]
      %v10210 = vld [vmem:[#allocation2 + $0x83] sm:$0xff]
      %v10211 = vld [vmem:[#allocation2 + $0x8b] sm:$0xff]
      %v10212 = vld [vmem:[#allocation2 + $0x93] sm:$0xff]
      %v10213 = vld [vmem:[#allocation2 + $0x9b] sm:$0xff]
      %v10214 = vld [vmem:[#allocation2 + $0xa3] sm:$0xff]
      %v10215 = vld [vmem:[#allocation2 + $0xab] sm:$0xff]
      %v10216 = vld [vmem:[#allocation2 + $0xb3] sm:$0xff]
      %v10217 = vld [vmem:[#allocation2 + $0xbb] sm:$0xff]
      %v10218 = vld [vmem:[#allocation2 + $0xc3] sm:$0xff]
      %v10219 = vld [vmem:[#allocation2 + $0xcb] sm:$0xff]
      %v10220 = vld [vmem:[#allocation2 + $0xd3] sm:$0xff]
      %v10221 = vld [vmem:[#allocation2 + $0xdb] sm:$0xff]
      %v10222 = vld [vmem:[#allocation2 + $0xe3] sm:$0xff]
      %v10223 = vld [vmem:[#allocation2 + $0xeb] sm:$0xff]
      %v10224 = vld [vmem:[#allocation2 + $0xf3] sm:$0xff]
      %v10225 = vld [vmem:[#allocation2 + $0xfb] sm:$0xff]
      %v10226 = vld [vmem:[#allocation2 + $0x103] sm:$0xff]
      %v10227 = vld [vmem:[#allocation2 + $0x10b] sm:$0xff]
      %v10228 = vld [vmem:[#allocation2 + $0x113] sm:$0xff]
      %v10229 = vld [vmem:[#allocation2 + $0x11b] sm:$0xff]
      %v10230 = vld [vmem:[#allocation2 + $0x123] sm:$0xff]
      %v10231 = vld [vmem:[#allocation2 + $0x12b] sm:$0xff]
      %v10232 = vld [vmem:[#allocation2 + $0x133] sm:$0xff]
      %v10233 = vld [vmem:[#allocation2 + $0x13b] sm:$0xff]
      %v10234 = vld [vmem:[#allocation2 + $0x143] sm:$0xff]
      %v10235 = vld [vmem:[#allocation2 + $0x14b] sm:$0xff]
      %v10236 = vld [vmem:[#allocation2 + $0x153] sm:$0xff]
      %v10237 = vld [vmem:[#allocation2 + $0x15b] sm:$0xff]
      %v10238 = vld [vmem:[#allocation2 + $0x163] sm:$0xff]
      %v10239 = vld [vmem:[#allocation2 + $0x16b] sm:$0xf]
      %v10240 = vmax.f32 %v10158, %v10199
      %v10241 = vmax.f32 %v10159, %v10200
      %v10242 = vmax.f32 %v10160, %v10201
      %v10243 = vmax.f32 %v10161, %v10202
      %v10244 = vmax.f32 %v10162, %v10203
      %v10245 = vmax.f32 %v10163, %v10204
      %v10246 = vmax.f32 %v10164, %v10205
      %v10247 = vmax.f32 %v10165, %v10206
      %v10248 = vmax.f32 %v10166, %v10207
      %v10249 = vmax.f32 %v10167, %v10208
      %v10250 = vmax.f32 %v10168, %v10209
      %v10251 = vmax.f32 %v10169, %v10210
      %v10252 = vmax.f32 %v10170, %v10211
      %v10253 = vmax.f32 %v10171, %v10212
      %v10254 = vmax.f32 %v10172, %v10213
      %v10255 = vmax.f32 %v10173, %v10214
      %v10256 = vmax.f32 %v10174, %v10215
      %v10257 = vmax.f32 %v10175, %v10216
      %v10258 = vmax.f32 %v10176, %v10217
      %v10259 = vmax.f32 %v10177, %v10218
      %v10260 = vmax.f32 %v10178, %v10219
      %v10261 = vmax.f32 %v10179, %v10220
      %v10262 = vmax.f32 %v10180, %v10221
      %v10263 = vmax.f32 %v10181, %v10222
      %v10264 = vmax.f32 %v10182, %v10223
      %v10265 = vmax.f32 %v10183, %v10224
      %v10266 = vmax.f32 %v10184, %v10225
      %v10267 = vmax.f32 %v10185, %v10226
      %v10268 = vmax.f32 %v10186, %v10227
      %v10269 = vmax.f32 %v10187, %v10228
      %v10270 = vmax.f32 %v10188, %v10229
      %v10271 = vmax.f32 %v10189, %v10230
      %v10272 = vmax.f32 %v10190, %v10231
      %v10273 = vmax.f32 %v10191, %v10232
      %v10274 = vmax.f32 %v10192, %v10233
      %v10275 = vmax.f32 %v10193, %v10234
      %v10276 = vmax.f32 %v10194, %v10235
      %v10277 = vmax.f32 %v10195, %v10236
      %v10278 = vmax.f32 %v10196, %v10237
      %v10279 = vmax.f32 %v10197, %v10238
      %v10280 = vmax.f32 %v10198, %v10239
      %v10281 = vmax.f32 %v10117, %v10240
      %v10282 = vmax.f32 %v10118, %v10241
      %v10283 = vmax.f32 %v10119, %v10242
      %v10284 = vmax.f32 %v10120, %v10243
      %v10285 = vmax.f32 %v10121, %v10244
      %v10286 = vmax.f32 %v10122, %v10245
      %v10287 = vmax.f32 %v10123, %v10246
      %v10288 = vmax.f32 %v10124, %v10247
      %v10289 = vmax.f32 %v10125, %v10248
      %v10290 = vmax.f32 %v10126, %v10249
      %v10291 = vmax.f32 %v10127, %v10250
      %v10292 = vmax.f32 %v10128, %v10251
      %v10293 = vmax.f32 %v10129, %v10252
      %v10294 = vmax.f32 %v10130, %v10253
      %v10295 = vmax.f32 %v10131, %v10254
      %v10296 = vmax.f32 %v10132, %v10255
      %v10297 = vmax.f32 %v10133, %v10256
      %v10298 = vmax.f32 %v10134, %v10257
      %v10299 = vmax.f32 %v10135, %v10258
      %v10300 = vmax.f32 %v10136, %v10259
      %v10301 = vmax.f32 %v10137, %v10260
      %v10302 = vmax.f32 %v10138, %v10261
      %v10303 = vmax.f32 %v10139, %v10262
      %v10304 = vmax.f32 %v10140, %v10263
      %v10305 = vmax.f32 %v10141, %v10264
      %v10306 = vmax.f32 %v10142, %v10265
      %v10307 = vmax.f32 %v10143, %v10266
      %v10308 = vmax.f32 %v10144, %v10267
      %v10309 = vmax.f32 %v10145, %v10268
      %v10310 = vmax.f32 %v10146, %v10269
      %v10311 = vmax.f32 %v10147, %v10270
      %v10312 = vmax.f32 %v10148, %v10271
      %v10313 = vmax.f32 %v10149, %v10272
      %v10314 = vmax.f32 %v10150, %v10273
      %v10315 = vmax.f32 %v10151, %v10274
      %v10316 = vmax.f32 %v10152, %v10275
      %v10317 = vmax.f32 %v10153, %v10276
      %v10318 = vmax.f32 %v10154, %v10277
      %v10319 = vmax.f32 %v10155, %v10278
      %v10320 = vmax.f32 %v10156, %v10279
      %v10321 = vmax.f32 %v10157, %v10280
      %10363 = vrot.lane.b32.xlu0 %v10281, 64
      %v10364 = vpop.permute.xlu0 %10363
      %10365 = vrot.lane.b32.xlu0 %v10282, 64
      %v10366 = vpop.permute.xlu0 %10365
      %10367 = vrot.lane.b32.xlu0 %v10283, 64
      %v10368 = vpop.permute.xlu0 %10367
      %10369 = vrot.lane.b32.xlu0 %v10284, 64
      %v10370 = vpop.permute.xlu0 %10369
      %10371 = vrot.lane.b32.xlu0 %v10285, 64
      %v10372 = vpop.permute.xlu0 %10371
      %10373 = vrot.lane.b32.xlu0 %v10286, 64
      %v10374 = vpop.permute.xlu0 %10373
      %10375 = vrot.lane.b32.xlu0 %v10287, 64
      %v10376 = vpop.permute.xlu0 %10375
      %10377 = vrot.lane.b32.xlu0 %v10288, 64
      %v10378 = vpop.permute.xlu0 %10377
      %10379 = vrot.lane.b32.xlu0 %v10289, 64
      %v10380 = vpop.permute.xlu0 %10379
      %10381 = vrot.lane.b32.xlu0 %v10290, 64
      %v10382 = vpop.permute.xlu0 %10381
      %10383 = vrot.lane.b32.xlu0 %v10291, 64
      %v10384 = vpop.permute.xlu0 %10383
      %10385 = vrot.lane.b32.xlu0 %v10292, 64
      %v10386 = vpop.permute.xlu0 %10385
      %10387 = vrot.lane.b32.xlu0 %v10293, 64
      %v10388 = vpop.permute.xlu0 %10387
      %10389 = vrot.lane.b32.xlu0 %v10294, 64
      %v10390 = vpop.permute.xlu0 %10389
      %10391 = vrot.lane.b32.xlu0 %v10295, 64
      %v10392 = vpop.permute.xlu0 %10391
      %10393 = vrot.lane.b32.xlu0 %v10296, 64
      %v10394 = vpop.permute.xlu0 %10393
      %10395 = vrot.lane.b32.xlu0 %v10297, 64
      %v10396 = vpop.permute.xlu0 %10395
      %10397 = vrot.lane.b32.xlu0 %v10298, 64
      %v10398 = vpop.permute.xlu0 %10397
      %10399 = vrot.lane.b32.xlu0 %v10299, 64
      %v10400 = vpop.permute.xlu0 %10399
      %10401 = vrot.lane.b32.xlu0 %v10300, 64
      %v10402 = vpop.permute.xlu0 %10401
      %10403 = vrot.lane.b32.xlu0 %v10301, 64
      %v10404 = vpop.permute.xlu0 %10403
      %10405 = vrot.lane.b32.xlu0 %v10302, 64
      %v10406 = vpop.permute.xlu0 %10405
      %10407 = vrot.lane.b32.xlu0 %v10303, 64
      %v10408 = vpop.permute.xlu0 %10407
      %10409 = vrot.lane.b32.xlu0 %v10304, 64
      %v10410 = vpop.permute.xlu0 %10409
      %10411 = vrot.lane.b32.xlu0 %v10305, 64
      %v10412 = vpop.permute.xlu0 %10411
      %10413 = vrot.lane.b32.xlu0 %v10306, 64
      %v10414 = vpop.permute.xlu0 %10413
      %10415 = vrot.lane.b32.xlu0 %v10307, 64
      %v10416 = vpop.permute.xlu0 %10415
      %10417 = vrot.lane.b32.xlu0 %v10308, 64
      %v10418 = vpop.permute.xlu0 %10417
      %10419 = vrot.lane.b32.xlu0 %v10309, 64
      %v10420 = vpop.permute.xlu0 %10419
      %10421 = vrot.lane.b32.xlu0 %v10310, 64
      %v10422 = vpop.permute.xlu0 %10421
      %10423 = vrot.lane.b32.xlu0 %v10311, 64
      %v10424 = vpop.permute.xlu0 %10423
      %10425 = vrot.lane.b32.xlu0 %v10312, 64
      %v10426 = vpop.permute.xlu0 %10425
      %10427 = vrot.lane.b32.xlu0 %v10313, 64
      %v10428 = vpop.permute.xlu0 %10427
      %10429 = vrot.lane.b32.xlu0 %v10314, 64
      %v10430 = vpop.permute.xlu0 %10429
      %10431 = vrot.lane.b32.xlu0 %v10315, 64
      %v10432 = vpop.permute.xlu0 %10431
      %10433 = vrot.lane.b32.xlu0 %v10316, 64
      %v10434 = vpop.permute.xlu0 %10433
      %10435 = vrot.lane.b32.xlu0 %v10317, 64
      %v10436 = vpop.permute.xlu0 %10435
      %10437 = vrot.lane.b32.xlu0 %v10318, 64
      %v10438 = vpop.permute.xlu0 %10437
      %10439 = vrot.lane.b32.xlu0 %v10319, 64
      %v10440 = vpop.permute.xlu0 %10439
      %10441 = vrot.lane.b32.xlu0 %v10320, 64
      %v10442 = vpop.permute.xlu0 %10441
      %10443 = vrot.lane.b32.xlu0 %v10321, 64
      %v10444 = vpop.permute.xlu0 %10443
      %v10486 = vsel %vm293, %v9820, %v10364
      %v10487 = vsel %vm293, %v9821, %v10366
      %v10488 = vsel %vm293, %v9822, %v10368
      %v10489 = vsel %vm293, %v9823, %v10370
      %v10490 = vsel %vm293, %v9824, %v10372
      %v10491 = vsel %vm293, %v9825, %v10374
      %v10492 = vsel %vm293, %v9826, %v10376
      %v10493 = vsel %vm293, %v9827, %v10378
      %v10494 = vsel %vm293, %v9828, %v10380
      %v10495 = vsel %vm293, %v9829, %v10382
      %v10496 = vsel %vm293, %v9830, %v10384
      %v10497 = vsel %vm293, %v9831, %v10386
      %v10498 = vsel %vm293, %v9832, %v10388
      %v10499 = vsel %vm293, %v9833, %v10390
      %v10500 = vsel %vm293, %v9834, %v10392
      %v10501 = vsel %vm293, %v9835, %v10394
      %v10502 = vsel %vm293, %v9836, %v10396
      %v10503 = vsel %vm293, %v9837, %v10398
      %v10504 = vsel %vm293, %v9838, %v10400
      %v10505 = vsel %vm293, %v9839, %v10402
      %v10506 = vsel %vm293, %v9840, %v10404
      %v10507 = vsel %vm293, %v9841, %v10406
      %v10508 = vsel %vm293, %v9842, %v10408
      %v10509 = vsel %vm293, %v9843, %v10410
      %v10510 = vsel %vm293, %v9844, %v10412
      %v10511 = vsel %vm293, %v9845, %v10414
      %v10512 = vsel %vm293, %v9846, %v10416
      %v10513 = vsel %vm293, %v9847, %v10418
      %v10514 = vsel %vm293, %v9848, %v10420
      %v10515 = vsel %vm293, %v9849, %v10422
      %v10516 = vsel %vm293, %v9850, %v10424
      %v10517 = vsel %vm293, %v9851, %v10426
      %v10518 = vsel %vm293, %v9852, %v10428
      %v10519 = vsel %vm293, %v9853, %v10430
      %v10520 = vsel %vm293, %v9854, %v10432
      %v10521 = vsel %vm293, %v9855, %v10434
      %v10522 = vsel %vm293, %v9856, %v10436
      %v10523 = vsel %vm293, %v9857, %v10438
      %v10524 = vsel %vm293, %v9858, %v10440
      %v10525 = vsel %vm293, %v9859, %v10442
      %v10526 = vsel %vm293, %v9860, %v10444
      %10527 = vst [vmem:[%s251] sm:$0xff] %v10486
      %10528 = vst [vmem:[%s251 + $0x8] sm:$0xff] %v10487
      %10529 = vst [vmem:[%s251 + $0x10] sm:$0xff] %v10488
      %10530 = vst [vmem:[%s251 + $0x18] sm:$0xff] %v10489
      %10531 = vst [vmem:[%s251 + $0x20] sm:$0xff] %v10490
      %10532 = vst [vmem:[%s251 + $0x28] sm:$0xff] %v10491
      %10533 = vst [vmem:[%s251 + $0x30] sm:$0xff] %v10492
      %10534 = vst [vmem:[%s251 + $0x38] sm:$0xff] %v10493
      %10535 = vst [vmem:[%s251 + $0x40] sm:$0xff] %v10494
      %10536 = vst [vmem:[%s251 + $0x48] sm:$0xff] %v10495
      %10537 = vst [vmem:[%s251 + $0x50] sm:$0xff] %v10496
      %10538 = vst [vmem:[%s251 + $0x58] sm:$0xff] %v10497
      %10539 = vst [vmem:[%s251 + $0x60] sm:$0xff] %v10498
      %10540 = vst [vmem:[%s251 + $0x68] sm:$0xff] %v10499
      %10541 = vst [vmem:[%s251 + $0x70] sm:$0xff] %v10500
      %10542 = vst [vmem:[%s251 + $0x78] sm:$0xff] %v10501
      %10543 = vst [vmem:[%s251 + $0x80] sm:$0xff] %v10502
      %10544 = vst [vmem:[%s251 + $0x88] sm:$0xff] %v10503
      %10545 = vst [vmem:[%s251 + $0x90] sm:$0xff] %v10504
      %10546 = vst [vmem:[%s251 + $0x98] sm:$0xff] %v10505
      %10547 = vst [vmem:[%s251 + $0xa0] sm:$0xff] %v10506
      %10548 = vst [vmem:[%s251 + $0xa8] sm:$0xff] %v10507
      %10549 = vst [vmem:[%s251 + $0xb0] sm:$0xff] %v10508
      %10550 = vst [vmem:[%s251 + $0xb8] sm:$0xff] %v10509
      %10551 = vst [vmem:[%s251 + $0xc0] sm:$0xff] %v10510
      %10552 = vst [vmem:[%s251 + $0xc8] sm:$0xff] %v10511
      %10553 = vst [vmem:[%s251 + $0xd0] sm:$0xff] %v10512
      %10554 = vst [vmem:[%s251 + $0xd8] sm:$0xff] %v10513
      %10555 = vst [vmem:[%s251 + $0xe0] sm:$0xff] %v10514
      %10556 = vst [vmem:[%s251 + $0xe8] sm:$0xff] %v10515
      %10557 = vst [vmem:[%s251 + $0xf0] sm:$0xff] %v10516
      %10558 = vst [vmem:[%s251 + $0xf8] sm:$0xff] %v10517
      %10559 = vst [vmem:[%s251 + $0x100] sm:$0xff] %v10518
      %10560 = vst [vmem:[%s251 + $0x108] sm:$0xff] %v10519
      %10561 = vst [vmem:[%s251 + $0x110] sm:$0xff] %v10520
      %10562 = vst [vmem:[%s251 + $0x118] sm:$0xff] %v10521
      %10563 = vst [vmem:[%s251 + $0x120] sm:$0xff] %v10522
      %10564 = vst [vmem:[%s251 + $0x128] sm:$0xff] %v10523
      %10565 = vst [vmem:[%s251 + $0x130] sm:$0xff] %v10524
      %10566 = vst [vmem:[%s251 + $0x138] sm:$0xff] %v10525
      %10567 = vst [vmem:[%s251 + $0x140] sm:$0xf] %v10526
      %p10568 = scmp.lt.s32.totalorder %s17, 1
      %s10569 = scalar_select %p10568, %s17, 1
      %s10570 = smul.addr %s10569, 41
      %s10571 = smul.addr %s10570, 8
      %s10572 = scalar_lea.vmem %s6, %s10571
      // Predicated region
      $region45: #{down_forward.1} parent=43 // pred_check
        %p10573 = pneg %p166
      $region46: #{down_forward.1} parent=43 // pred_check_branch
        %10575 = sbr.rel (%p10573) target = $region48
      $region47: #{down_forward.1} parent=43 // pred_region
        _
      $region48: #{down_forward.1} parent=43 // pred_fallthru
        _
    $region44: #{down_forward.1} parent=5 // pred_fallthru
      _
    %p10576 = scmp.le.s32.totalorder 2, %s12
    // Predicated region
    $region49: #{down_forward.1} parent=5 // pred_check
      %p10577 = pneg %p10576
    $region50: #{down_forward.1} parent=5 // pred_check_branch
      %10579 = sbr.rel (%p10577) target = $region52
    $region51: #{down_forward.1} parent=5 // pred_region
      %s10580 = ssub.s32 %s12, 2
      // Predicated region
      $region53: #{down_forward.1} parent=51 // pred_check
        %p10581 = pneg %p172
      $region54: #{down_forward.1} parent=51 // pred_check_branch
        %10583 = sbr.rel (%p10581) target = $region56
      $region55: #{down_forward.1} parent=51 // pred_region
        %p10584 = scmp.lt.s32.totalorder %s18, 1
        %s10585 = scalar_select %p10584, %s18, 1
        %s10586 = smul.addr %s10585, 41
        %s10587 = smul.addr %s10586, 8
        %s10588 = scalar_lea.vmem %s6, %s10587
      $region56: #{down_forward.1} parent=51 // pred_fallthru
        _
    $region52: #{down_forward.1} parent=5 // pred_fallthru
      _
  $region6: #{down_forward.1} parent=0 // loop_footer
    %s16 = sadd.s32 1, %s12
  $region7: #{down_forward.1} parent=0 // loop_footer_branch
    %11 = sbr.rel target = $region3
  $region8: #{down_forward.1} parent=0 // loop_exit
    _

</llo_original>
